<compile_context>
chip_gen: v7x
topology: tpu7x:2x2x1
jax: 0.10.0
libtpu: 0.0.40
codegen_flags: <defaults>
</compile_context>

<pallas_src>
import functools

import jax
import jax.numpy as jnp
from jax.experimental import pallas as pl
from jax.experimental.pallas import tpu as pltpu

# TODO(synk): use 256 on v6e/v7x for MXU-bound (large C*KH*KW) layers; 128 keeps the
#             writeback minimal for the mem-bound layers exercised here.
_LANES = 128


# ----------------------------------------------------------------------------
# Pallas kernel: fused conv (per-tap shifted matmuls) + BN bias + ReLU
# ----------------------------------------------------------------------------
def _conv_bn_relu_kernel(x_ref, w_ref, b_ref, o_ref, *, th, wo_pad, c, kh, kw, stride):
    # x_ref: (S, S, Hps, Wps, C)  bf16  stride-phase-split padded image (batch squeezed)
    # w_ref: (KH*KW, C, O_pad)    bf16  BN-scale-folded conv weight (zero padded in O)
    # b_ref: (1, O_pad)           f32   folded BN bias (zero padded in O)
    # o_ref: (th*wo_pad, O_pad)   bf16  output rows of this h tile (lane + sublane dense)
    i = pl.program_id(1)
    row0 = i * th

    acc = None
    for dh in range(kh):
        for dw in range(kw):
            # All slices are unit stride: stride phases were split in the wrapper.
            xt = x_ref[dh % stride, dw % stride,
                       pl.ds(row0 + dh // stride, th),
                       pl.ds(dw // stride, wo_pad), :]
            xt = xt.reshape(th * wo_pad, c)   # wo_pad % 8 == 0 -> aligned collapse
            p = jnp.dot(xt, w_ref[dh * kw + dw], preferred_element_type=jnp.float32)
            acc = p if acc is None else acc + p

    y = acc + b_ref[...]                      # f32 bias add
    o_ref[...] = jnp.maximum(y, 0.0).astype(o_ref.dtype)   # ReLU, store bf16


# ----------------------------------------------------------------------------
# Helpers
# ----------------------------------------------------------------------------
def _vmem_budget():
    """Return (vmem_limit_bytes, accumulator byte cap) tuned per TPU generation."""
    try:
        phys = int(pltpu.get_tpu_info().vmem_capacity_bytes)
    except Exception:                       # unknown backend: assume smallest (v7x) VMEM
        phys = 64 * 1024 * 1024
    if phys <= 64 * 1024 * 1024:            # v7x-class: 64 MiB physical per TC
        return min(phys * 3 // 4, 48 * 1024 * 1024), 2 * 1024 * 1024
    # v5e / v6e: 128 MiB physical -> larger resident tiles reach the HBM roofline
    return min(phys * 3 // 4, 96 * 1024 * 1024), 6 * 1024 * 1024


def _pick_th(ho, wo_pad, max_rows):
    """Largest h-tile (in output rows) under the row budget; prefer exact divisors."""
    cap = max(1, min(ho, max_rows // max(wo_pad, 1)))
    div_best = 1
    for d in range(cap, 0, -1):
        if ho % d == 0:
            div_best = d
            break
    # An exact divisor avoids padded (wasted) rows; only go ragged if it buys a much
    # bigger tile (the pad rows are computed on zero input and sliced off outside).
    if div_best * 2 >= cap:
        return div_best
    return cap


def _spec(shape, index_map, single_buffer):
    if single_buffer:
        return pl.BlockSpec(shape, index_map, pipeline_mode=pl.Buffered(1))
    return pl.BlockSpec(shape, index_map)


# ----------------------------------------------------------------------------
# BasicConv2d forward (NCHW in / NCHW out by default, like the PyTorch module)
# ----------------------------------------------------------------------------
def basic_conv2d(x, weight, gamma, beta, running_mean, running_var, *,
                 stride=1, padding=0, eps=1e-3, compute_dtype=jnp.bfloat16,
                 out_layout="NCHW", max_tile_rows=None):
    """x: (N, C, H, W) f32; weight: (O, C, KH, KW) f32. Returns bf16 activations."""
    n, c, h, w = x.shape
    o, ci, kh, kw = weight.shape
    assert ci == c, (ci, c)
    s = int(stride)
    ho = (h + 2 * padding - kh) // s + 1
    wo = (w + 2 * padding - kw) // s + 1
    hp, wp = h + 2 * padding, w + 2 * padding

    # ---- one-time parameter folding (outside the hot loop) -------------------
    o_pad = -(-o // _LANES) * _LANES                      # lane-dense output columns
    scale = gamma / jnp.sqrt(running_var + eps)           # (O,)
    w_fold = weight * scale[:, None, None, None]          # fold BN scale into conv W
    w_fold = jnp.transpose(w_fold, (2, 3, 1, 0)).reshape(kh * kw, c, o)
    w_fold = jnp.pad(w_fold, ((0, 0), (0, 0), (0, o_pad - o))).astype(compute_dtype)
    bias = (beta - running_mean * scale).astype(jnp.float32)
    bias = jnp.pad(bias, (0, o_pad - o)).reshape(1, o_pad)

    # ---- NCHW -> padded NHWC bf16, split into stride phases ------------------
    x_nhwc = jnp.transpose(x, (0, 2, 3, 1)).astype(compute_dtype)
    x_nhwc = jnp.pad(x_nhwc, ((0, 0), (padding, padding),
                              (padding, padding), (0, 0)))
    hps, wps = -(-hp // s), -(-wp // s)
    x_ph = jnp.pad(x_nhwc, ((0, 0), (0, hps * s - hp), (0, wps * s - wp), (0, 0)))
    # (n, s, s, hps, wps, c); x_ph[b, ph, pw, r, q, c] == x_nhwc[b, r*s+ph, q*s+pw, c]
    x_ph = x_ph.reshape(n, hps, s, wps, s, c).transpose(0, 2, 4, 1, 3, 5)

    # ---- byte-based tile selection -------------------------------------------
    vmem_limit, acc_cap = _vmem_budget()
    wo_pad = -(-wo // 8) * 8                               # sublane-aligned output width
    # per output row in VMEM: f32 accumulator + double-buffered bf16 output block
    max_rows = max(acc_cap // (o_pad * 8), 8)
    if max_tile_rows is not None:
        max_rows = int(max_tile_rows)
    th = _pick_th(ho, wo_pad, max_rows)
    n_h = -(-ho // th)

    # pad phase slabs so every (possibly ragged / width-padded) tile read is in-bounds
    pad_h = max(0, n_h * th + (kh - 1) // s - hps)
    pad_w = max(0, wo_pad + (kw - 1) // s - wps)
    if pad_h or pad_w:
        x_ph = jnp.pad(x_ph, ((0, 0), (0, 0), (0, 0), (0, pad_h), (0, pad_w), (0, 0)))
        hps, wps = hps + pad_h, wps + pad_w

    kernel = functools.partial(_conv_bn_relu_kernel, th=th, wo_pad=wo_pad, c=c,
                               kh=kh, kw=kw, stride=s)

    flops = 2 * n * n_h * th * wo_pad * kh * kw * c * o_pad
    bytes_accessed = (x_ph.size * 2 + w_fold.size * 2 + bias.size * 4
                      + n * n_h * th * wo_pad * o_pad * 2)
    cost = pl.CostEstimate(flops=int(flops), transcendentals=0,
                           bytes_accessed=int(bytes_accessed))

    def _run(single_buffer_invariants):
        sb = single_buffer_invariants
        grid_spec = pltpu.PrefetchScalarGridSpec(
            num_scalar_prefetch=0,
            grid=(n, n_h),
            in_specs=[
                # full padded (phase-split) image per batch element; the index map
                # ignores the h axis so the slab stays resident across h tiles.
                _spec((None, s, s, hps, wps, c),
                      lambda b, i: (b, 0, 0, 0, 0, 0), sb and n == 1),
                _spec((kh * kw, c, o_pad), lambda b, i: (0, 0, 0), sb),
                _spec((1, o_pad), lambda b, i: (0, 0), sb),
            ],
            out_specs=pl.BlockSpec((None, th * wo_pad, o_pad), lambda b, i: (b, i, 0)),
        )
        return pl.pallas_call(
            kernel,
            out_shape=jax.ShapeDtypeStruct((n, n_h * th * wo_pad, o_pad), compute_dtype),
            grid_spec=grid_spec,
            compiler_params=pltpu.CompilerParams(
                dimension_semantics=("parallel", "parallel"),
                vmem_limit_bytes=int(vmem_limit)),
            cost_estimate=cost,
        )(x_ph, w_fold, bias)

    try:
        out = _run(True)
    except Exception:
        # installed jax may not support pipeline_mode / Buffered(1): default buffering
        out = _run(False)

    # drop channel / spatial padding; (N, n_h*th, Wo_pad, O_pad) -> (N, Ho, Wo, O)
    out = out.reshape(n, n_h * th, wo_pad, o_pad)[:, :ho, :wo, :o]
    if out_layout == "NHWC":
        return out
    return jnp.transpose(out, (0, 3, 1, 2))


# ----------------------------------------------------------------------------
if __name__ == "__main__":
    key = jax.random.PRNGKey(0)
    EPS = 1e-3

    def make_params(k, o, c, ks):
        k0, k1, k2, k3, k4 = jax.random.split(k, 5)
        weight = 0.1 * jax.random.normal(k0, (o, c, ks, ks), jnp.float32)
        gamma = 1.0 + 0.1 * jax.random.normal(k1, (o,), jnp.float32)
        beta = 0.1 * jax.random.normal(k2, (o,), jnp.float32)
        mean = 0.1 * jax.random.normal(k3, (o,), jnp.float32)
        var = jnp.abs(1.0 + 0.1 * jax.random.normal(k4, (o,), jnp.float32))
        return weight, gamma, beta, mean, var

    def reference(x, weight, gamma, beta, mean, var, stride, padding):
        conv = jax.lax.conv_general_dilated(
            x, weight, window_strides=(stride, stride),
            padding=((padding, padding), (padding, padding)),
            dimension_numbers=("NCHW", "OIHW", "NCHW"))
        sc = gamma / jnp.sqrt(var + EPS)
        bi = beta - mean * sc
        return jnp.maximum(conv * sc.reshape(1, -1, 1, 1) + bi.reshape(1, -1, 1, 1), 0.0)

    # ---- test 1: BasicConv2d(4, 8, kernel_size=3, padding=1), batch 2, 16x16 -----
    k0, k1 = jax.random.split(key)
    x1 = jax.random.normal(k0, (2, 4, 16, 16), jnp.float32)
    p1 = make_params(k1, 8, 4, 3)
    out1 = jax.block_until_ready(basic_conv2d(x1, *p1, stride=1, padding=1, eps=EPS))
    assert out1.shape == (2, 8, 16, 16), out1.shape
    assert out1.dtype == jnp.bfloat16, out1.dtype

    # tight check: reference using the same bf16 inputs / scale-folded weights
    sc1 = p1[1] / jnp.sqrt(p1[4] + EPS)
    bi1 = p1[2] - p1[3] * sc1
    wf1 = (p1[0] * sc1[:, None, None, None]).astype(jnp.bfloat16)
    conv_bf = jax.lax.conv_general_dilated(
        x1.astype(jnp.bfloat16), wf1, (1, 1), ((1, 1), (1, 1)),
        dimension_numbers=("NCHW", "OIHW", "NCHW"),
        preferred_element_type=jnp.float32)
    ref1_t = jnp.maximum(conv_bf + bi1.reshape(1, -1, 1, 1), 0.0)
    err1_t = float(jnp.max(jnp.abs(out1.astype(jnp.float32) - ref1_t)))
    assert err1_t < 2e-2, err1_t

    # loose check: pure-f32 PyTorch-equivalent reference (bf16 quantization noise)
    ref1 = reference(x1, *p1, stride=1, padding=1)
    err1 = float(jnp.max(jnp.abs(out1.astype(jnp.float32) - ref1)))
    assert err1 < 5e-2, err1

    # ---- test 2: stride-2 reduction conv (exercises the stride-phase path) -------
    k2, k3 = jax.random.split(k1)
    x2 = jax.random.normal(k2, (1, 8, 16, 16), jnp.float32)
    p2 = make_params(k3, 16, 8, 3)
    out2 = jax.block_until_ready(basic_conv2d(x2, *p2, stride=2, padding=0, eps=EPS))
    assert out2.shape == (1, 16, 7, 7), out2.shape
    ref2 = reference(x2, *p2, stride=2, padding=0)
    err2 = float(jnp.max(jnp.abs(out2.astype(jnp.float32) - ref2)))
    assert err2 < 7.5e-2, err2

    # ---- test 3: ragged h-tiling (non-divisor tile; pad rows/cols sliced off) ----
    k4, k5 = jax.random.split(k3)
    x3 = jax.random.normal(k4, (1, 4, 17, 17), jnp.float32)
    p3 = make_params(k5, 8, 4, 3)
    out3 = jax.block_until_ready(
        basic_conv2d(x3, *p3, stride=1, padding=1, eps=EPS, max_tile_rows=200))
    assert out3.shape == (1, 8, 17, 17), out3.shape
    ref3 = reference(x3, *p3, stride=1, padding=1)
    err3 = float(jnp.max(jnp.abs(out3.astype(jnp.float32) - ref3)))
    assert err3 < 7.5e-2, err3

    print("KERNEL_OK")
</pallas_src>

<mosaic_0001>
module attributes {stable_mosaic.version = 11 : i64} {
  func.func @_conv_bn_relu_kernel(%arg0: i32, %arg1: i32, %arg2: memref<1x1x1x18x18x4xbf16, #tpu.memory_space<vmem>>, %arg3: memref<9x4x128xbf16, #tpu.memory_space<vmem>>, %arg4: memref<1x128xf32, #tpu.memory_space<vmem>>, %arg5: memref<1x256x128xbf16, #tpu.memory_space<vmem>>) attributes {dimension_semantics = [#tpu.dimension_semantics<parallel>, #tpu.dimension_semantics<parallel>], iteration_bounds = array<i64: 2, 1>, scalar_prefetch = 0 : i64, scratch_operands = 0 : i64, tpu.core_type = #tpu.core_type<tc>, window_params = [{transform_indices = @transform_0, window_bounds = array<i64: 1, 1, 1, 18, 18, 4>}, {pipeline_mode = #tpu.pipeline_mode<synchronous>, transform_indices = @transform_1, window_bounds = array<i64: 9, 4, 128>}, {pipeline_mode = #tpu.pipeline_mode<synchronous>, transform_indices = @transform_2, window_bounds = array<i64: 1, 128>}, {transform_indices = @transform_3, window_bounds = array<i64: 1, 256, 128>}]} {
    %c16_i32 = arith.constant 16 : i32
    %0 = arith.muli %arg1, %c16_i32 : i32
    %c0_i32 = arith.constant 0 : i32
    %1 = arith.addi %0, %c0_i32 : i32
    %c0 = arith.constant 0 : index
    %c0_0 = arith.constant 0 : index
    %c0_1 = arith.constant 0 : index
    %2 = arith.index_cast %1 : i32 to index
    %c0_2 = arith.constant 0 : index
    %c0_3 = arith.constant 0 : index
    %3 = vector.load %arg2[%c0, %c0_0, %c0_1, %2, %c0_2, %c0_3] : memref<1x1x1x18x18x4xbf16, #tpu.memory_space<vmem>>, vector<1x1x1x16x16x4xbf16>
    %4 = vector.shape_cast %3 : vector<1x1x1x16x16x4xbf16> to vector<16x16x4xbf16>
    %5 = vector.shape_cast %4 : vector<16x16x4xbf16> to vector<256x4xbf16>
    %c0_4 = arith.constant 0 : index
    %c0_5 = arith.constant 0 : index
    %c0_6 = arith.constant 0 : index
    %6 = vector.load %arg3[%c0_4, %c0_5, %c0_6] : memref<9x4x128xbf16, #tpu.memory_space<vmem>>, vector<1x4x128xbf16>
    %7 = vector.shape_cast %6 : vector<1x4x128xbf16> to vector<4x128xbf16>
    %cst = arith.constant dense<0.000000e+00> : vector<256x128xf32>
    %8 = tpu.matmul %5, %7, %cst {dimension_numbers = #tpu.dot_dimension_numbers<[1], [0], [0], [1], [0, 0, 1, 1], [], []>} : vector<256x4xbf16>, vector<4x128xbf16>, vector<256x128xf32> -> vector<256x128xf32>
    %c0_i32_7 = arith.constant 0 : i32
    %9 = arith.addi %0, %c0_i32_7 : i32
    %c0_8 = arith.constant 0 : index
    %c0_9 = arith.constant 0 : index
    %c0_10 = arith.constant 0 : index
    %10 = arith.index_cast %9 : i32 to index
    %c1 = arith.constant 1 : index
    %c0_11 = arith.constant 0 : index
    %11 = vector.load %arg2[%c0_8, %c0_9, %c0_10, %10, %c1, %c0_11] : memref<1x1x1x18x18x4xbf16, #tpu.memory_space<vmem>>, vector<1x1x1x16x16x4xbf16>
    %12 = vector.shape_cast %11 : vector<1x1x1x16x16x4xbf16> to vector<16x16x4xbf16>
    %13 = vector.shape_cast %12 : vector<16x16x4xbf16> to vector<256x4xbf16>
    %c1_12 = arith.constant 1 : index
    %c0_13 = arith.constant 0 : index
    %c0_14 = arith.constant 0 : index
    %14 = vector.load %arg3[%c1_12, %c0_13, %c0_14] : memref<9x4x128xbf16, #tpu.memory_space<vmem>>, vector<1x4x128xbf16>
    %15 = vector.shape_cast %14 : vector<1x4x128xbf16> to vector<4x128xbf16>
    %cst_15 = arith.constant dense<0.000000e+00> : vector<256x128xf32>
    %16 = tpu.matmul %13, %15, %cst_15 {dimension_numbers = #tpu.dot_dimension_numbers<[1], [0], [0], [1], [0, 0, 1, 1], [], []>} : vector<256x4xbf16>, vector<4x128xbf16>, vector<256x128xf32> -> vector<256x128xf32>
    %17 = arith.addf %8, %16 : vector<256x128xf32>
    %c0_i32_16 = arith.constant 0 : i32
    %18 = arith.addi %0, %c0_i32_16 : i32
    %c0_17 = arith.constant 0 : index
    %c0_18 = arith.constant 0 : index
    %c0_19 = arith.constant 0 : index
    %19 = arith.index_cast %18 : i32 to index
    %c2 = arith.constant 2 : index
    %c0_20 = arith.constant 0 : index
    %20 = vector.load %arg2[%c0_17, %c0_18, %c0_19, %19, %c2, %c0_20] : memref<1x1x1x18x18x4xbf16, #tpu.memory_space<vmem>>, vector<1x1x1x16x16x4xbf16>
    %21 = vector.shape_cast %20 : vector<1x1x1x16x16x4xbf16> to vector<16x16x4xbf16>
    %22 = vector.shape_cast %21 : vector<16x16x4xbf16> to vector<256x4xbf16>
    %c2_21 = arith.constant 2 : index
    %c0_22 = arith.constant 0 : index
    %c0_23 = arith.constant 0 : index
    %23 = vector.load %arg3[%c2_21, %c0_22, %c0_23] : memref<9x4x128xbf16, #tpu.memory_space<vmem>>, vector<1x4x128xbf16>
    %24 = vector.shape_cast %23 : vector<1x4x128xbf16> to vector<4x128xbf16>
    %cst_24 = arith.constant dense<0.000000e+00> : vector<256x128xf32>
    %25 = tpu.matmul %22, %24, %cst_24 {dimension_numbers = #tpu.dot_dimension_numbers<[1], [0], [0], [1], [0, 0, 1, 1], [], []>} : vector<256x4xbf16>, vector<4x128xbf16>, vector<256x128xf32> -> vector<256x128xf32>
    %26 = arith.addf %17, %25 : vector<256x128xf32>
    %c1_i32 = arith.constant 1 : i32
    %27 = arith.addi %0, %c1_i32 : i32
    %c0_25 = arith.constant 0 : index
    %c0_26 = arith.constant 0 : index
    %c0_27 = arith.constant 0 : index
    %28 = arith.index_cast %27 : i32 to index
    %c0_28 = arith.constant 0 : index
    %c0_29 = arith.constant 0 : index
    %29 = vector.load %arg2[%c0_25, %c0_26, %c0_27, %28, %c0_28, %c0_29] : memref<1x1x1x18x18x4xbf16, #tpu.memory_space<vmem>>, vector<1x1x1x16x16x4xbf16>
    %30 = vector.shape_cast %29 : vector<1x1x1x16x16x4xbf16> to vector<16x16x4xbf16>
    %31 = vector.shape_cast %30 : vector<16x16x4xbf16> to vector<256x4xbf16>
    %c3 = arith.constant 3 : index
    %c0_30 = arith.constant 0 : index
    %c0_31 = arith.constant 0 : index
    %32 = vector.load %arg3[%c3, %c0_30, %c0_31] : memref<9x4x128xbf16, #tpu.memory_space<vmem>>, vector<1x4x128xbf16>
    %33 = vector.shape_cast %32 : vector<1x4x128xbf16> to vector<4x128xbf16>
    %cst_32 = arith.constant dense<0.000000e+00> : vector<256x128xf32>
    %34 = tpu.matmul %31, %33, %cst_32 {dimension_numbers = #tpu.dot_dimension_numbers<[1], [0], [0], [1], [0, 0, 1, 1], [], []>} : vector<256x4xbf16>, vector<4x128xbf16>, vector<256x128xf32> -> vector<256x128xf32>
    %35 = arith.addf %26, %34 : vector<256x128xf32>
    %c1_i32_33 = arith.constant 1 : i32
    %36 = arith.addi %0, %c1_i32_33 : i32
    %c0_34 = arith.constant 0 : index
    %c0_35 = arith.constant 0 : index
    %c0_36 = arith.constant 0 : index
    %37 = arith.index_cast %36 : i32 to index
    %c1_37 = arith.constant 1 : index
    %c0_38 = arith.constant 0 : index
    %38 = vector.load %arg2[%c0_34, %c0_35, %c0_36, %37, %c1_37, %c0_38] : memref<1x1x1x18x18x4xbf16, #tpu.memory_space<vmem>>, vector<1x1x1x16x16x4xbf16>
    %39 = vector.shape_cast %38 : vector<1x1x1x16x16x4xbf16> to vector<16x16x4xbf16>
    %40 = vector.shape_cast %39 : vector<16x16x4xbf16> to vector<256x4xbf16>
    %c4 = arith.constant 4 : index
    %c0_39 = arith.constant 0 : index
    %c0_40 = arith.constant 0 : index
    %41 = vector.load %arg3[%c4, %c0_39, %c0_40] : memref<9x4x128xbf16, #tpu.memory_space<vmem>>, vector<1x4x128xbf16>
    %42 = vector.shape_cast %41 : vector<1x4x128xbf16> to vector<4x128xbf16>
    %cst_41 = arith.constant dense<0.000000e+00> : vector<256x128xf32>
    %43 = tpu.matmul %40, %42, %cst_41 {dimension_numbers = #tpu.dot_dimension_numbers<[1], [0], [0], [1], [0, 0, 1, 1], [], []>} : vector<256x4xbf16>, vector<4x128xbf16>, vector<256x128xf32> -> vector<256x128xf32>
    %44 = arith.addf %35, %43 : vector<256x128xf32>
    %c1_i32_42 = arith.constant 1 : i32
    %45 = arith.addi %0, %c1_i32_42 : i32
    %c0_43 = arith.constant 0 : index
    %c0_44 = arith.constant 0 : index
    %c0_45 = arith.constant 0 : index
    %46 = arith.index_cast %45 : i32 to index
    %c2_46 = arith.constant 2 : index
    %c0_47 = arith.constant 0 : index
    %47 = vector.load %arg2[%c0_43, %c0_44, %c0_45, %46, %c2_46, %c0_47] : memref<1x1x1x18x18x4xbf16, #tpu.memory_space<vmem>>, vector<1x1x1x16x16x4xbf16>
    %48 = vector.shape_cast %47 : vector<1x1x1x16x16x4xbf16> to vector<16x16x4xbf16>
    %49 = vector.shape_cast %48 : vector<16x16x4xbf16> to vector<256x4xbf16>
    %c5 = arith.constant 5 : index
    %c0_48 = arith.constant 0 : index
    %c0_49 = arith.constant 0 : index
    %50 = vector.load %arg3[%c5, %c0_48, %c0_49] : memref<9x4x128xbf16, #tpu.memory_space<vmem>>, vector<1x4x128xbf16>
    %51 = vector.shape_cast %50 : vector<1x4x128xbf16> to vector<4x128xbf16>
    %cst_50 = arith.constant dense<0.000000e+00> : vector<256x128xf32>
    %52 = tpu.matmul %49, %51, %cst_50 {dimension_numbers = #tpu.dot_dimension_numbers<[1], [0], [0], [1], [0, 0, 1, 1], [], []>} : vector<256x4xbf16>, vector<4x128xbf16>, vector<256x128xf32> -> vector<256x128xf32>
    %53 = arith.addf %44, %52 : vector<256x128xf32>
    %c2_i32 = arith.constant 2 : i32
    %54 = arith.addi %0, %c2_i32 : i32
    %c0_51 = arith.constant 0 : index
    %c0_52 = arith.constant 0 : index
    %c0_53 = arith.constant 0 : index
    %55 = arith.index_cast %54 : i32 to index
    %c0_54 = arith.constant 0 : index
    %c0_55 = arith.constant 0 : index
    %56 = vector.load %arg2[%c0_51, %c0_52, %c0_53, %55, %c0_54, %c0_55] : memref<1x1x1x18x18x4xbf16, #tpu.memory_space<vmem>>, vector<1x1x1x16x16x4xbf16>
    %57 = vector.shape_cast %56 : vector<1x1x1x16x16x4xbf16> to vector<16x16x4xbf16>
    %58 = vector.shape_cast %57 : vector<16x16x4xbf16> to vector<256x4xbf16>
    %c6 = arith.constant 6 : index
    %c0_56 = arith.constant 0 : index
    %c0_57 = arith.constant 0 : index
    %59 = vector.load %arg3[%c6, %c0_56, %c0_57] : memref<9x4x128xbf16, #tpu.memory_space<vmem>>, vector<1x4x128xbf16>
    %60 = vector.shape_cast %59 : vector<1x4x128xbf16> to vector<4x128xbf16>
    %cst_58 = arith.constant dense<0.000000e+00> : vector<256x128xf32>
    %61 = tpu.matmul %58, %60, %cst_58 {dimension_numbers = #tpu.dot_dimension_numbers<[1], [0], [0], [1], [0, 0, 1, 1], [], []>} : vector<256x4xbf16>, vector<4x128xbf16>, vector<256x128xf32> -> vector<256x128xf32>
    %62 = arith.addf %53, %61 : vector<256x128xf32>
    %c2_i32_59 = arith.constant 2 : i32
    %63 = arith.addi %0, %c2_i32_59 : i32
    %c0_60 = arith.constant 0 : index
    %c0_61 = arith.constant 0 : index
    %c0_62 = arith.constant 0 : index
    %64 = arith.index_cast %63 : i32 to index
    %c1_63 = arith.constant 1 : index
    %c0_64 = arith.constant 0 : index
    %65 = vector.load %arg2[%c0_60, %c0_61, %c0_62, %64, %c1_63, %c0_64] : memref<1x1x1x18x18x4xbf16, #tpu.memory_space<vmem>>, vector<1x1x1x16x16x4xbf16>
    %66 = vector.shape_cast %65 : vector<1x1x1x16x16x4xbf16> to vector<16x16x4xbf16>
    %67 = vector.shape_cast %66 : vector<16x16x4xbf16> to vector<256x4xbf16>
    %c7 = arith.constant 7 : index
    %c0_65 = arith.constant 0 : index
    %c0_66 = arith.constant 0 : index
    %68 = vector.load %arg3[%c7, %c0_65, %c0_66] : memref<9x4x128xbf16, #tpu.memory_space<vmem>>, vector<1x4x128xbf16>
    %69 = vector.shape_cast %68 : vector<1x4x128xbf16> to vector<4x128xbf16>
    %cst_67 = arith.constant dense<0.000000e+00> : vector<256x128xf32>
    %70 = tpu.matmul %67, %69, %cst_67 {dimension_numbers = #tpu.dot_dimension_numbers<[1], [0], [0], [1], [0, 0, 1, 1], [], []>} : vector<256x4xbf16>, vector<4x128xbf16>, vector<256x128xf32> -> vector<256x128xf32>
    %71 = arith.addf %62, %70 : vector<256x128xf32>
    %c2_i32_68 = arith.constant 2 : i32
    %72 = arith.addi %0, %c2_i32_68 : i32
    %c0_69 = arith.constant 0 : index
    %c0_70 = arith.constant 0 : index
    %c0_71 = arith.constant 0 : index
    %73 = arith.index_cast %72 : i32 to index
    %c2_72 = arith.constant 2 : index
    %c0_73 = arith.constant 0 : index
    %74 = vector.load %arg2[%c0_69, %c0_70, %c0_71, %73, %c2_72, %c0_73] : memref<1x1x1x18x18x4xbf16, #tpu.memory_space<vmem>>, vector<1x1x1x16x16x4xbf16>
    %75 = vector.shape_cast %74 : vector<1x1x1x16x16x4xbf16> to vector<16x16x4xbf16>
    %76 = vector.shape_cast %75 : vector<16x16x4xbf16> to vector<256x4xbf16>
    %c8 = arith.constant 8 : index
    %c0_74 = arith.constant 0 : index
    %c0_75 = arith.constant 0 : index
    %77 = vector.load %arg3[%c8, %c0_74, %c0_75] : memref<9x4x128xbf16, #tpu.memory_space<vmem>>, vector<1x4x128xbf16>
    %78 = vector.shape_cast %77 : vector<1x4x128xbf16> to vector<4x128xbf16>
    %cst_76 = arith.constant dense<0.000000e+00> : vector<256x128xf32>
    %79 = tpu.matmul %76, %78, %cst_76 {dimension_numbers = #tpu.dot_dimension_numbers<[1], [0], [0], [1], [0, 0, 1, 1], [], []>} : vector<256x4xbf16>, vector<4x128xbf16>, vector<256x128xf32> -> vector<256x128xf32>
    %80 = arith.addf %71, %79 : vector<256x128xf32>
    %c0_77 = arith.constant 0 : index
    %c0_78 = arith.constant 0 : index
    %81 = vector.load %arg4[%c0_77, %c0_78] : memref<1x128xf32, #tpu.memory_space<vmem>>, vector<1x128xf32>
    %82 = vector.broadcast %81 : vector<1x128xf32> to vector<256x128xf32>
    %83 = arith.addf %80, %82 : vector<256x128xf32>
    %cst_79 = arith.constant 0.000000e+00 : f32
    %84 = vector.broadcast %cst_79 : f32 to vector<256x128xf32>
    %85 = arith.maximumf %83, %84 : vector<256x128xf32>
    %86 = arith.truncf %85 : vector<256x128xf32> to vector<256x128xbf16>
    %c0_80 = arith.constant 0 : index
    %c0_81 = arith.constant 0 : index
    %c0_82 = arith.constant 0 : index
    %87 = vector.load %arg5[%c0_80, %c0_81, %c0_82] : memref<1x256x128xbf16, #tpu.memory_space<vmem>>, vector<1x256x128xbf16>
    %88 = vector.shape_cast %87 : vector<1x256x128xbf16> to vector<256x128xbf16>
    %89 = vector.shape_cast %86 : vector<256x128xbf16> to vector<1x256x128xbf16>
    tpu.vector_store %arg5[%c0_80, %c0_81, %c0_82], %89 {strides = array<i32>} : memref<1x256x128xbf16, #tpu.memory_space<vmem>>, vector<1x256x128xbf16>,
    return
  }
  func.func @transform_0(%arg0: i32, %arg1: i32) -> (i32, i32, i32, i32, i32, i32) {
    %c0_i32 = arith.constant 0 : i32
    %c0_i32_0 = arith.constant 0 : i32
    %c0_i32_1 = arith.constant 0 : i32
    %c0_i32_2 = arith.constant 0 : i32
    %c0_i32_3 = arith.constant 0 : i32
    %c0_i32_4 = arith.constant 0 : i32
    return %arg0, %c0_i32, %c0_i32_0, %c0_i32_1, %c0_i32_2, %c0_i32_3 : i32, i32, i32, i32, i32, i32
  }
  func.func @transform_1(%arg0: i32, %arg1: i32) -> (i32, i32, i32) {
    %c0_i32 = arith.constant 0 : i32
    %c0_i32_0 = arith.constant 0 : i32
    %c0_i32_1 = arith.constant 0 : i32
    %c0_i32_2 = arith.constant 0 : i32
    return %c0_i32, %c0_i32_0, %c0_i32_1 : i32, i32, i32
  }
  func.func @transform_2(%arg0: i32, %arg1: i32) -> (i32, i32) {
    %c0_i32 = arith.constant 0 : i32
    %c0_i32_0 = arith.constant 0 : i32
    %c0_i32_1 = arith.constant 0 : i32
    return %c0_i32, %c0_i32_0 : i32, i32
  }
  func.func @transform_3(%arg0: i32, %arg1: i32) -> (i32, i32, i32) {
    %c0_i32 = arith.constant 0 : i32
    %c0_i32_0 = arith.constant 0 : i32
    return %arg0, %arg1, %c0_i32 : i32, i32, i32
  }
}

module attributes {stable_mosaic.version = 11 : i64} {
  func.func @_conv_bn_relu_kernel(%arg0: i32, %arg1: i32, %arg2: memref<1x1x1x18x18x4xbf16, #tpu.memory_space<vmem>>, %arg3: memref<9x4x128xbf16, #tpu.memory_space<vmem>>, %arg4: memref<1x128xf32, #tpu.memory_space<vmem>>, %arg5: memref<1x256x128xbf16, #tpu.memory_space<vmem>>) attributes {dimension_semantics = [#tpu.dimension_semantics<parallel>, #tpu.dimension_semantics<parallel>], iteration_bounds = array<i64: 2, 1>, scalar_prefetch = 0 : i64, scratch_operands = 0 : i64, tpu.core_type = #tpu.core_type<tc>, window_params = [{transform_indices = @transform_0, window_bounds = array<i64: 1, 1, 1, 18, 18, 4>}, {pipeline_mode = #tpu.pipeline_mode<synchronous>, transform_indices = @transform_1, window_bounds = array<i64: 9, 4, 128>}, {pipeline_mode = #tpu.pipeline_mode<synchronous>, transform_indices = @transform_2, window_bounds = array<i64: 1, 128>}, {transform_indices = @transform_3, window_bounds = array<i64: 1, 256, 128>}]} {
    %c16_i32 = arith.constant 16 : i32
    %0 = arith.muli %arg1, %c16_i32 : i32
    %c0_i32 = arith.constant 0 : i32
    %1 = arith.addi %0, %c0_i32 : i32
    %c0 = arith.constant 0 : index
    %c0_0 = arith.constant 0 : index
    %c0_1 = arith.constant 0 : index
    %2 = arith.index_cast %1 : i32 to index
    %c0_2 = arith.constant 0 : index
    %c0_3 = arith.constant 0 : index
    %3 = vector.load %arg2[%c0, %c0_0, %c0_1, %2, %c0_2, %c0_3] : memref<1x1x1x18x18x4xbf16, #tpu.memory_space<vmem>>, vector<1x1x1x16x16x4xbf16>
    %4 = vector.shape_cast %3 : vector<1x1x1x16x16x4xbf16> to vector<16x16x4xbf16>
    %5 = vector.shape_cast %4 : vector<16x16x4xbf16> to vector<256x4xbf16>
    %c0_4 = arith.constant 0 : index
    %c0_5 = arith.constant 0 : index
    %c0_6 = arith.constant 0 : index
    %6 = vector.load %arg3[%c0_4, %c0_5, %c0_6] : memref<9x4x128xbf16, #tpu.memory_space<vmem>>, vector<1x4x128xbf16>
    %7 = vector.shape_cast %6 : vector<1x4x128xbf16> to vector<4x128xbf16>
    %cst = arith.constant dense<0.000000e+00> : vector<256x128xf32>
    %8 = tpu.matmul %5, %7, %cst {dimension_numbers = #tpu.dot_dimension_numbers<[1], [0], [0], [1], [0, 0, 1, 1], [], []>} : vector<256x4xbf16>, vector<4x128xbf16>, vector<256x128xf32> -> vector<256x128xf32>
    %c0_i32_7 = arith.constant 0 : i32
    %9 = arith.addi %0, %c0_i32_7 : i32
    %c0_8 = arith.constant 0 : index
    %c0_9 = arith.constant 0 : index
    %c0_10 = arith.constant 0 : index
    %10 = arith.index_cast %9 : i32 to index
    %c1 = arith.constant 1 : index
    %c0_11 = arith.constant 0 : index
    %11 = vector.load %arg2[%c0_8, %c0_9, %c0_10, %10, %c1, %c0_11] : memref<1x1x1x18x18x4xbf16, #tpu.memory_space<vmem>>, vector<1x1x1x16x16x4xbf16>
    %12 = vector.shape_cast %11 : vector<1x1x1x16x16x4xbf16> to vector<16x16x4xbf16>
    %13 = vector.shape_cast %12 : vector<16x16x4xbf16> to vector<256x4xbf16>
    %c1_12 = arith.constant 1 : index
    %c0_13 = arith.constant 0 : index
    %c0_14 = arith.constant 0 : index
    %14 = vector.load %arg3[%c1_12, %c0_13, %c0_14] : memref<9x4x128xbf16, #tpu.memory_space<vmem>>, vector<1x4x128xbf16>
    %15 = vector.shape_cast %14 : vector<1x4x128xbf16> to vector<4x128xbf16>
    %cst_15 = arith.constant dense<0.000000e+00> : vector<256x128xf32>
    %16 = tpu.matmul %13, %15, %cst_15 {dimension_numbers = #tpu.dot_dimension_numbers<[1], [0], [0], [1], [0, 0, 1, 1], [], []>} : vector<256x4xbf16>, vector<4x128xbf16>, vector<256x128xf32> -> vector<256x128xf32>
    %17 = arith.addf %8, %16 : vector<256x128xf32>
    %c0_i32_16 = arith.constant 0 : i32
    %18 = arith.addi %0, %c0_i32_16 : i32
    %c0_17 = arith.constant 0 : index
    %c0_18 = arith.constant 0 : index
    %c0_19 = arith.constant 0 : index
    %19 = arith.index_cast %18 : i32 to index
    %c2 = arith.constant 2 : index
    %c0_20 = arith.constant 0 : index
    %20 = vector.load %arg2[%c0_17, %c0_18, %c0_19, %19, %c2, %c0_20] : memref<1x1x1x18x18x4xbf16, #tpu.memory_space<vmem>>, vector<1x1x1x16x16x4xbf16>
    %21 = vector.shape_cast %20 : vector<1x1x1x16x16x4xbf16> to vector<16x16x4xbf16>
    %22 = vector.shape_cast %21 : vector<16x16x4xbf16> to vector<256x4xbf16>
    %c2_21 = arith.constant 2 : index
    %c0_22 = arith.constant 0 : index
    %c0_23 = arith.constant 0 : index
    %23 = vector.load %arg3[%c2_21, %c0_22, %c0_23] : memref<9x4x128xbf16, #tpu.memory_space<vmem>>, vector<1x4x128xbf16>
    %24 = vector.shape_cast %23 : vector<1x4x128xbf16> to vector<4x128xbf16>
    %cst_24 = arith.constant dense<0.000000e+00> : vector<256x128xf32>
    %25 = tpu.matmul %22, %24, %cst_24 {dimension_numbers = #tpu.dot_dimension_numbers<[1], [0], [0], [1], [0, 0, 1, 1], [], []>} : vector<256x4xbf16>, vector<4x128xbf16>, vector<256x128xf32> -> vector<256x128xf32>
    %26 = arith.addf %17, %25 : vector<256x128xf32>
    %c1_i32 = arith.constant 1 : i32
    %27 = arith.addi %0, %c1_i32 : i32
    %c0_25 = arith.constant 0 : index
    %c0_26 = arith.constant 0 : index
    %c0_27 = arith.constant 0 : index
    %28 = arith.index_cast %27 : i32 to index
    %c0_28 = arith.constant 0 : index
    %c0_29 = arith.constant 0 : index
    %29 = vector.load %arg2[%c0_25, %c0_26, %c0_27, %28, %c0_28, %c0_29] : memref<1x1x1x18x18x4xbf16, #tpu.memory_space<vmem>>, vector<1x1x1x16x16x4xbf16>
    %30 = vector.shape_cast %29 : vector<1x1x1x16x16x4xbf16> to vector<16x16x4xbf16>
    %31 = vector.shape_cast %30 : vector<16x16x4xbf16> to vector<256x4xbf16>
    %c3 = arith.constant 3 : index
    %c0_30 = arith.constant 0 : index
    %c0_31 = arith.constant 0 : index
    %32 = vector.load %arg3[%c3, %c0_30, %c0_31] : memref<9x4x128xbf16, #tpu.memory_space<vmem>>, vector<1x4x128xbf16>
    %33 = vector.shape_cast %32 : vector<1x4x128xbf16> to vector<4x128xbf16>
    %cst_32 = arith.constant dense<0.000000e+00> : vector<256x128xf32>
    %34 = tpu.matmul %31, %33, %cst_32 {dimension_numbers = #tpu.dot_dimension_numbers<[1], [0], [0], [1], [0, 0, 1, 1], [], []>} : vector<256x4xbf16>, vector<4x128xbf16>, vector<256x128xf32> -> vector<256x128xf32>
    %35 = arith.addf %26, %34 : vector<256x128xf32>
    %c1_i32_33 = arith.constant 1 : i32
    %36 = arith.addi %0, %c1_i32_33 : i32
    %c0_34 = arith.constant 0 : index
    %c0_35 = arith.constant 0 : index
    %c0_36 = arith.constant 0 : index
    %37 = arith.index_cast %36 : i32 to index
    %c1_37 = arith.constant 1 : index
    %c0_38 = arith.constant 0 : index
    %38 = vector.load %arg2[%c0_34, %c0_35, %c0_36, %37, %c1_37, %c0_38] : memref<1x1x1x18x18x4xbf16, #tpu.memory_space<vmem>>, vector<1x1x1x16x16x4xbf16>
    %39 = vector.shape_cast %38 : vector<1x1x1x16x16x4xbf16> to vector<16x16x4xbf16>
    %40 = vector.shape_cast %39 : vector<16x16x4xbf16> to vector<256x4xbf16>
    %c4 = arith.constant 4 : index
    %c0_39 = arith.constant 0 : index
    %c0_40 = arith.constant 0 : index
    %41 = vector.load %arg3[%c4, %c0_39, %c0_40] : memref<9x4x128xbf16, #tpu.memory_space<vmem>>, vector<1x4x128xbf16>
    %42 = vector.shape_cast %41 : vector<1x4x128xbf16> to vector<4x128xbf16>
    %cst_41 = arith.constant dense<0.000000e+00> : vector<256x128xf32>
    %43 = tpu.matmul %40, %42, %cst_41 {dimension_numbers = #tpu.dot_dimension_numbers<[1], [0], [0], [1], [0, 0, 1, 1], [], []>} : vector<256x4xbf16>, vector<4x128xbf16>, vector<256x128xf32> -> vector<256x128xf32>
    %44 = arith.addf %35, %43 : vector<256x128xf32>
    %c1_i32_42 = arith.constant 1 : i32
    %45 = arith.addi %0, %c1_i32_42 : i32
    %c0_43 = arith.constant 0 : index
    %c0_44 = arith.constant 0 : index
    %c0_45 = arith.constant 0 : index
    %46 = arith.index_cast %45 : i32 to index
    %c2_46 = arith.constant 2 : index
    %c0_47 = arith.constant 0 : index
    %47 = vector.load %arg2[%c0_43, %c0_44, %c0_45, %46, %c2_46, %c0_47] : memref<1x1x1x18x18x4xbf16, #tpu.memory_space<vmem>>, vector<1x1x1x16x16x4xbf16>
    %48 = vector.shape_cast %47 : vector<1x1x1x16x16x4xbf16> to vector<16x16x4xbf16>
    %49 = vector.shape_cast %48 : vector<16x16x4xbf16> to vector<256x4xbf16>
    %c5 = arith.constant 5 : index
    %c0_48 = arith.constant 0 : index
    %c0_49 = arith.constant 0 : index
    %50 = vector.load %arg3[%c5, %c0_48, %c0_49] : memref<9x4x128xbf16, #tpu.memory_space<vmem>>, vector<1x4x128xbf16>
    %51 = vector.shape_cast %50 : vector<1x4x128xbf16> to vector<4x128xbf16>
    %cst_50 = arith.constant dense<0.000000e+00> : vector<256x128xf32>
    %52 = tpu.matmul %49, %51, %cst_50 {dimension_numbers = #tpu.dot_dimension_numbers<[1], [0], [0], [1], [0, 0, 1, 1], [], []>} : vector<256x4xbf16>, vector<4x128xbf16>, vector<256x128xf32> -> vector<256x128xf32>
    %53 = arith.addf %44, %52 : vector<256x128xf32>
    %c2_i32 = arith.constant 2 : i32
    %54 = arith.addi %0, %c2_i32 : i32
    %c0_51 = arith.constant 0 : index
    %c0_52 = arith.constant 0 : index
    %c0_53 = arith.constant 0 : index
    %55 = arith.index_cast %54 : i32 to index
    %c0_54 = arith.constant 0 : index
    %c0_55 = arith.constant 0 : index
    %56 = vector.load %arg2[%c0_51, %c0_52, %c0_53, %55, %c0_54, %c0_55] : memref<1x1x1x18x18x4xbf16, #tpu.memory_space<vmem>>, vector<1x1x1x16x16x4xbf16>
    %57 = vector.shape_cast %56 : vector<1x1x1x16x16x4xbf16> to vector<16x16x4xbf16>
    %58 = vector.shape_cast %57 : vector<16x16x4xbf16> to vector<256x4xbf16>
    %c6 = arith.constant 6 : index
    %c0_56 = arith.constant 0 : index
    %c0_57 = arith.constant 0 : index
    %59 = vector.load %arg3[%c6, %c0_56, %c0_57] : memref<9x4x128xbf16, #tpu.memory_space<vmem>>, vector<1x4x128xbf16>
    %60 = vector.shape_cast %59 : vector<1x4x128xbf16> to vector<4x128xbf16>
    %cst_58 = arith.constant dense<0.000000e+00> : vector<256x128xf32>
    %61 = tpu.matmul %58, %60, %cst_58 {dimension_numbers = #tpu.dot_dimension_numbers<[1], [0], [0], [1], [0, 0, 1, 1], [], []>} : vector<256x4xbf16>, vector<4x128xbf16>, vector<256x128xf32> -> vector<256x128xf32>
    %62 = arith.addf %53, %61 : vector<256x128xf32>
    %c2_i32_59 = arith.constant 2 : i32
    %63 = arith.addi %0, %c2_i32_59 : i32
    %c0_60 = arith.constant 0 : index
    %c0_61 = arith.constant 0 : index
    %c0_62 = arith.constant 0 : index
    %64 = arith.index_cast %63 : i32 to index
    %c1_63 = arith.constant 1 : index
    %c0_64 = arith.constant 0 : index
    %65 = vector.load %arg2[%c0_60, %c0_61, %c0_62, %64, %c1_63, %c0_64] : memref<1x1x1x18x18x4xbf16, #tpu.memory_space<vmem>>, vector<1x1x1x16x16x4xbf16>
    %66 = vector.shape_cast %65 : vector<1x1x1x16x16x4xbf16> to vector<16x16x4xbf16>
    %67 = vector.shape_cast %66 : vector<16x16x4xbf16> to vector<256x4xbf16>
    %c7 = arith.constant 7 : index
    %c0_65 = arith.constant 0 : index
    %c0_66 = arith.constant 0 : index
    %68 = vector.load %arg3[%c7, %c0_65, %c0_66] : memref<9x4x128xbf16, #tpu.memory_space<vmem>>, vector<1x4x128xbf16>
    %69 = vector.shape_cast %68 : vector<1x4x128xbf16> to vector<4x128xbf16>
    %cst_67 = arith.constant dense<0.000000e+00> : vector<256x128xf32>
    %70 = tpu.matmul %67, %69, %cst_67 {dimension_numbers = #tpu.dot_dimension_numbers<[1], [0], [0], [1], [0, 0, 1, 1], [], []>} : vector<256x4xbf16>, vector<4x128xbf16>, vector<256x128xf32> -> vector<256x128xf32>
    %71 = arith.addf %62, %70 : vector<256x128xf32>
    %c2_i32_68 = arith.constant 2 : i32
    %72 = arith.addi %0, %c2_i32_68 : i32
    %c0_69 = arith.constant 0 : index
    %c0_70 = arith.constant 0 : index
    %c0_71 = arith.constant 0 : index
    %73 = arith.index_cast %72 : i32 to index
    %c2_72 = arith.constant 2 : index
    %c0_73 = arith.constant 0 : index
    %74 = vector.load %arg2[%c0_69, %c0_70, %c0_71, %73, %c2_72, %c0_73] : memref<1x1x1x18x18x4xbf16, #tpu.memory_space<vmem>>, vector<1x1x1x16x16x4xbf16>
    %75 = vector.shape_cast %74 : vector<1x1x1x16x16x4xbf16> to vector<16x16x4xbf16>
    %76 = vector.shape_cast %75 : vector<16x16x4xbf16> to vector<256x4xbf16>
    %c8 = arith.constant 8 : index
    %c0_74 = arith.constant 0 : index
    %c0_75 = arith.constant 0 : index
    %77 = vector.load %arg3[%c8, %c0_74, %c0_75] : memref<9x4x128xbf16, #tpu.memory_space<vmem>>, vector<1x4x128xbf16>
    %78 = vector.shape_cast %77 : vector<1x4x128xbf16> to vector<4x128xbf16>
    %cst_76 = arith.constant dense<0.000000e+00> : vector<256x128xf32>
    %79 = tpu.matmul %76, %78, %cst_76 {dimension_numbers = #tpu.dot_dimension_numbers<[1], [0], [0], [1], [0, 0, 1, 1], [], []>} : vector<256x4xbf16>, vector<4x128xbf16>, vector<256x128xf32> -> vector<256x128xf32>
    %80 = arith.addf %71, %79 : vector<256x128xf32>
    %c0_77 = arith.constant 0 : index
    %c0_78 = arith.constant 0 : index
    %81 = vector.load %arg4[%c0_77, %c0_78] : memref<1x128xf32, #tpu.memory_space<vmem>>, vector<1x128xf32>
    %82 = vector.broadcast %81 : vector<1x128xf32> to vector<256x128xf32>
    %83 = arith.addf %80, %82 : vector<256x128xf32>
    %cst_79 = arith.constant 0.000000e+00 : f32
    %84 = vector.broadcast %cst_79 : f32 to vector<256x128xf32>
    %85 = arith.maximumf %83, %84 : vector<256x128xf32>
    %86 = arith.truncf %85 : vector<256x128xf32> to vector<256x128xbf16>
    %c0_80 = arith.constant 0 : index
    %c0_81 = arith.constant 0 : index
    %c0_82 = arith.constant 0 : index
    %87 = vector.load %arg5[%c0_80, %c0_81, %c0_82] : memref<1x256x128xbf16, #tpu.memory_space<vmem>>, vector<1x256x128xbf16>
    %88 = vector.shape_cast %87 : vector<1x256x128xbf16> to vector<256x128xbf16>
    %89 = vector.shape_cast %86 : vector<256x128xbf16> to vector<1x256x128xbf16>
    tpu.vector_store %arg5[%c0_80, %c0_81, %c0_82], %89 {strides = array<i32>} : memref<1x256x128xbf16, #tpu.memory_space<vmem>>, vector<1x256x128xbf16>,
    return
  }
  func.func @transform_0(%arg0: i32, %arg1: i32) -> (i32, i32, i32, i32, i32, i32) {
    %c0_i32 = arith.constant 0 : i32
    %c0_i32_0 = arith.constant 0 : i32
    %c0_i32_1 = arith.constant 0 : i32
    %c0_i32_2 = arith.constant 0 : i32
    %c0_i32_3 = arith.constant 0 : i32
    %c0_i32_4 = arith.constant 0 : i32
    return %arg0, %c0_i32, %c0_i32_0, %c0_i32_1, %c0_i32_2, %c0_i32_3 : i32, i32, i32, i32, i32, i32
  }
  func.func @transform_1(%arg0: i32, %arg1: i32) -> (i32, i32, i32) {
    %c0_i32 = arith.constant 0 : i32
    %c0_i32_0 = arith.constant 0 : i32
    %c0_i32_1 = arith.constant 0 : i32
    %c0_i32_2 = arith.constant 0 : i32
    return %c0_i32, %c0_i32_0, %c0_i32_1 : i32, i32, i32
  }
  func.func @transform_2(%arg0: i32, %arg1: i32) -> (i32, i32) {
    %c0_i32 = arith.constant 0 : i32
    %c0_i32_0 = arith.constant 0 : i32
    %c0_i32_1 = arith.constant 0 : i32
    return %c0_i32, %c0_i32_0 : i32, i32
  }
  func.func @transform_3(%arg0: i32, %arg1: i32) -> (i32, i32, i32) {
    %c0_i32 = arith.constant 0 : i32
    %c0_i32_0 = arith.constant 0 : i32
    return %arg0, %arg1, %c0_i32 : i32, i32, i32
  }
}

</mosaic_0001>

<llo_original>
// kernel: tpu_custom_call.1
$region0: #{tpu_custom_call.1}
  #allocation0 [shape = 'u32[]', space=smem, size = 0x4, offset = 0x4, fixed_abs, tag = 'smem constant byte address 0x4 - core index']
  #allocation1 [shape = 'u32[144,128]{1,0:T(1,128)}', space=vmem, size = 0x12000, scoped, tag = 'internal scratch']
  %s0 = inlined_call_operand.vmem [shape: bf16[2,1,1,18,18,4], index: 0, kind: input, shape index: {}]
  %s1 = inlined_call_operand.vmem [shape: bf16[9,4,128], index: 1, kind: input, shape index: {}]
  %s2 = inlined_call_operand.vmem [shape: f32[1,128], index: 2, kind: input, shape index: {}]
  %s3 = inlined_call_operand.hbm [shape: bf16[2,256,128], index: 3, kind: output, shape index: {}]
  %s4 = sld [smem:[#allocation0]]
  $region45: #{tpu_custom_call.1} parent=0
    _
  %s6 = ssub.s32 1, %s4
  %s7 = scalar_select 0, %s6, %s4
  $region1: #{tpu_custom_call.1} parent=0
    #allocation2 [shape = 'u8[131072]{0}', space=vmem, size = 0x20000, scoped, tag = 'output window, operand 0']
    #allocation3 [shape = 's32[2]{0}', space=sflag, size = 0x8, scoped, tag = 'scoped memory for tpu_custom_call.1']
    %8 = vsyncpa [#allocation3], 0
    %s9 = scalar_lea.sflag [#allocation3], 1
    %10 = vsyncpa %s9, 0
    loop: start=0, step=1, limit=4
    $region2: #{tpu_custom_call.1} parent=1 // loop_pre_header
      _
    $region3: #{tpu_custom_call.1} parent=1 // loop_header
      %s12 = sphi 0, %s16
      %p13 = scmp.ge.s32.totalorder %s12, 4
      %s19 = sphi 0, %s31
      %s20 = sphi 0, %s27
      %s21 = sphi 0, %s19
      %s22 = sphi 0, %s20
      %s23 = sphi 0, %s21
      %s24 = sphi 0, %s22
      %s34 = sphi 0, %s36
      %s37 = sphi 0, %s34
      %s38 = sphi 0, %s37
      %s54 = sphi 0, %s38
      %s58 = sphi 0, %s58
      %s60 = sphi 0, %s58
      %s61 = sphi 0, %s60
      %s75 = sphi 0, %s61
      %s79 = sphi 0, %s79
      %s81 = sphi 0, %s79
      %s82 = sphi 0, %s81
      %s96 = sphi 0, %s82
      %s104 = sphi 0, %s106
      %s107 = sphi 0, %s104
      %s108 = sphi 0, %s107
      %s124 = sphi 0, %s108
    $region4: #{tpu_custom_call.1} parent=1 // loop_header_branch
      %15 = sbr.rel (%p13) target = $region8
    $region5: #{tpu_custom_call.1} parent=1 // loop_body
      %s17 = ssub.s32 %s12, 1
      %s18 = ssub.s32 %s12, 2
      %s25 = sadd.s32 1, %s20
      %p26 = scmp.ge.s32.totalorder %s25, 1
      %s27 = scalar_select %p26, 0, %s25
      %s28 = sadd.s32 1, %s19
      %s29 = scalar_select %p26, %s28, %s19
      %p30 = scmp.ge.s32.totalorder %s29, 2
      %s31 = scalar_select %p30, 0, %s29
      %s32 = ssub.s32 %s19, %s31
      %p33 = scmp.eq.s32.totalorder %s32, 0
      %s35 = sadd.s32 %s34, 1
      %s36 = scalar_select %p33, %s34, %s35
      %p39 = pneg %p33
      %p40 = scmp.eq.s32.totalorder %s12, 1
      %p41 = por %p39, %p40
      %p42 = scmp.ne.s32.totalorder %s34, %s37
      %p43 = scmp.eq.s32.totalorder %s12, 0
      %p44 = por %p42, %p43
      %p45 = scmp.ne.s32.totalorder %s34, %s37
      %p46 = scmp.eq.s32.totalorder %s17, 1
      %p47 = por %p45, %p46
      %p48 = scmp.ne.s32.totalorder %s37, %s38
      %p49 = scmp.eq.s32.totalorder %s17, 0
      %p50 = por %p48, %p49
      %p51 = scmp.ne.s32.totalorder %s37, %s38
      %p52 = scmp.eq.s32.totalorder %s18, 1
      %p53 = por %p51, %p52
      %p55 = scmp.ne.s32.totalorder %s38, %s54
      %p56 = scmp.eq.s32.totalorder %s18, 0
      %p57 = por %p55, %p56
      %s59 = sadd.s32 %s58, 1
      %p62 = scmp.eq.s32.totalorder %s12, 1
      %p63 = scmp.ne.s32.totalorder %s58, %s60
      %p64 = scmp.eq.s32.totalorder %s12, 0
      %p65 = por %p63, %p64
      %p66 = scmp.ne.s32.totalorder %s58, %s60
      %p67 = scmp.eq.s32.totalorder %s17, 1
      %p68 = por %p66, %p67
      %p69 = scmp.ne.s32.totalorder %s60, %s61
      %p70 = scmp.eq.s32.totalorder %s17, 0
      %p71 = por %p69, %p70
      %p72 = scmp.ne.s32.totalorder %s60, %s61
      %p73 = scmp.eq.s32.totalorder %s18, 1
      %p74 = por %p72, %p73
      %p76 = scmp.ne.s32.totalorder %s61, %s75
      %p77 = scmp.eq.s32.totalorder %s18, 0
      %p78 = por %p76, %p77
      %s80 = sadd.s32 %s79, 1
      %p83 = scmp.eq.s32.totalorder %s12, 1
      %p84 = scmp.ne.s32.totalorder %s79, %s81
      %p85 = scmp.eq.s32.totalorder %s12, 0
      %p86 = por %p84, %p85
      %p87 = scmp.ne.s32.totalorder %s79, %s81
      %p88 = scmp.eq.s32.totalorder %s17, 1
      %p89 = por %p87, %p88
      %p90 = scmp.ne.s32.totalorder %s81, %s82
      %p91 = scmp.eq.s32.totalorder %s17, 0
      %p92 = por %p90, %p91
      %p93 = scmp.ne.s32.totalorder %s81, %s82
      %p94 = scmp.eq.s32.totalorder %s18, 1
      %p95 = por %p93, %p94
      %p97 = scmp.ne.s32.totalorder %s82, %s96
      %p98 = scmp.eq.s32.totalorder %s18, 0
      %p99 = por %p97, %p98
      %s100 = ssub.s32 %s19, %s31
      %s101 = ssub.s32 %s20, %s27
      %s102 = sor.u32 %s100, %s101
      %p103 = scmp.eq.s32.totalorder %s102, 0
      %s105 = sadd.s32 %s104, 1
      %s106 = scalar_select %p103, %s104, %s105
      %p109 = pneg %p103
      %p110 = scmp.eq.s32.totalorder %s12, 1
      %p111 = por %p109, %p110
      %p112 = scmp.ne.s32.totalorder %s104, %s107
      %p113 = scmp.eq.s32.totalorder %s12, 0
      %p114 = por %p112, %p113
      %p115 = scmp.ne.s32.totalorder %s104, %s107
      %p116 = scmp.eq.s32.totalorder %s17, 1
      %p117 = por %p115, %p116
      %p118 = scmp.ne.s32.totalorder %s107, %s108
      %p119 = scmp.eq.s32.totalorder %s17, 0
      %p120 = por %p118, %p119
      %p121 = scmp.ne.s32.totalorder %s107, %s108
      %p122 = scmp.eq.s32.totalorder %s18, 1
      %p123 = por %p121, %p122
      %p125 = scmp.ne.s32.totalorder %s108, %s124
      %p126 = scmp.eq.s32.totalorder %s18, 0
      %p127 = por %p125, %p126
      %p128 = scmp.le.s32.totalorder 1, %s12
      %p129 = scmp.lt.s32.totalorder %s12, 3
      %p130 = pnand %p128, %p129
      %p131 = pneg %p130
      // Predicated region
      $region9: #{tpu_custom_call.1} parent=5 // pred_check
        _
      $region10: #{tpu_custom_call.1} parent=5 // pred_check_branch
        %133 = sbr.rel (%p130) target = $region12
      $region11: #{tpu_custom_call.1} parent=5 // pred_region
        %s134 = ssub.s32 %s12, 1
        // Predicated region
        $region13: #{tpu_custom_call.1} parent=11 // pred_check
          %p135 = pneg %p71
        $region14: #{tpu_custom_call.1} parent=11 // pred_check_branch
          %137 = sbr.rel (%p135) target = $region16
        $region15: #{tpu_custom_call.1} parent=11 // pred_region
          _
        $region16: #{tpu_custom_call.1} parent=11 // pred_fallthru
          _
        // Predicated region
        $region17: #{tpu_custom_call.1} parent=11 // pred_check
          %p138 = pneg %p92
        $region18: #{tpu_custom_call.1} parent=11 // pred_check_branch
          %140 = sbr.rel (%p138) target = $region20
        $region19: #{tpu_custom_call.1} parent=11 // pred_region
          _
        $region20: #{tpu_custom_call.1} parent=11 // pred_fallthru
          _
      $region12: #{tpu_custom_call.1} parent=5 // pred_fallthru
        _
      %p141 = scmp.lt.s32.totalorder %s12, 2
      // Predicated region
      $region21: #{tpu_custom_call.1} parent=5 // pred_check
        %p142 = pneg %p141
      $region22: #{tpu_custom_call.1} parent=5 // pred_check_branch
        %144 = sbr.rel (%p142) target = $region24
      $region23: #{tpu_custom_call.1} parent=5 // pred_region
        // Predicated region
        $region25: #{tpu_custom_call.1} parent=23 // pred_check
          %p145 = pneg %p44
        $region26: #{tpu_custom_call.1} parent=23 // pred_check_branch
          %147 = sbr.rel (%p145) target = $region28
        $region27: #{tpu_custom_call.1} parent=23 // pred_region
          %p148 = scmp.lt.s32.totalorder %s19, 1
          %s149 = scalar_select %p148, %s19, 1
          %s150 = smul.addr %s149, 54
          %s151 = smul.addr %s150, 4
          %s152 = scalar_lea.vmem %s0, %s151
        $region28: #{tpu_custom_call.1} parent=23 // pred_fallthru
          _
      $region24: #{tpu_custom_call.1} parent=5 // pred_fallthru
        _
      %p153 = scmp.le.s32.totalorder 1, %s12
      %p154 = scmp.lt.s32.totalorder %s12, 3
      %p155 = pnand %p153, %p154
      %p156 = pneg %p155
      // Predicated region
      $region29: #{tpu_custom_call.1} parent=5 // pred_check
        _
      $region30: #{tpu_custom_call.1} parent=5 // pred_check_branch
        %158 = sbr.rel (%p155) target = $region32
      $region31: #{tpu_custom_call.1} parent=5 // pred_region
        %s159 = ssub.s32 %s12, 1
        %p160 = scmp.lt.s32.totalorder %s21, 1
        %s161 = scalar_select %p160, %s21, 1
        %s162 = smul.addr %s161, 54
        %s163 = smul.addr %s162, 4
        %s164 = scalar_lea.vmem %s0, %s163
        %p165 = pneg %p50
        %p166 = pneg %p47
        %p167 = pneg %p71
        %p168 = pneg %p68
        %p169 = pneg %p92
        %p170 = pneg %p89
        %p171 = pneg %p120
        %p172 = pneg %p117
        %s173 = sand.u32 %s107, 1
        %s174 = scalar_lea.sflag [#allocation3], %s173
        %s175 = sand.u32 %s107, 1
        %s176 = smul.addr %s175, 128
        %s177 = scalar_lea.vmem [#allocation2], %s176
        %p178 = scmp.lt.s32.totalorder %s21, 1
        %s179 = scalar_select %p178, %s21, 1
        %s180 = smul.addr %s179, 54
        %s181 = smul.addr %s180, 4
        %s182 = scalar_lea.vmem %s0, %s181
        %s183 = smul.u32 32, %s22
        %s185 = smul.u32 %s22, 16
        %s186 = smul.u32 %s185, 3
        %s187 = smul.addr %s186, 4
        %s188 = scalar_lea.vmem %s182, %s187
        %v189 = vld [vmem:[%s188] sm:$0xf]
        %v190 = vld [vmem:[%s188 + $0x4] sm:$0xf]
        %v191 = vld [vmem:[%s188 + $0xc] sm:$0xf]
        %v192 = vld [vmem:[%s188 + $0x10] sm:$0xf]
        %v193 = vld [vmem:[%s188 + $0x18] sm:$0xf]
        %v194 = vld [vmem:[%s188 + $0x1c] sm:$0xf]
        %v195 = vld [vmem:[%s188 + $0x24] sm:$0xf]
        %v196 = vld [vmem:[%s188 + $0x28] sm:$0xf]
        %v197 = vld [vmem:[%s188 + $0x30] sm:$0xf]
        %v198 = vld [vmem:[%s188 + $0x34] sm:$0xf]
        %v199 = vld [vmem:[%s188 + $0x3c] sm:$0xf]
        %v200 = vld [vmem:[%s188 + $0x40] sm:$0xf]
        %v201 = vld [vmem:[%s188 + $0x48] sm:$0xf]
        %v202 = vld [vmem:[%s188 + $0x4c] sm:$0xf]
        %v203 = vld [vmem:[%s188 + $0x54] sm:$0xf]
        %v204 = vld [vmem:[%s188 + $0x58] sm:$0xf]
        %v205 = vld [vmem:[%s188 + $0x60] sm:$0xf]
        %v206 = vld [vmem:[%s188 + $0x64] sm:$0xf]
        %v207 = vld [vmem:[%s188 + $0x6c] sm:$0xf]
        %v208 = vld [vmem:[%s188 + $0x70] sm:$0xf]
        %v209 = vld [vmem:[%s188 + $0x78] sm:$0xf]
        %v210 = vld [vmem:[%s188 + $0x7c] sm:$0xf]
        %v211 = vld [vmem:[%s188 + $0x84] sm:$0xf]
        %v212 = vld [vmem:[%s188 + $0x88] sm:$0xf]
        %v213 = vld [vmem:[%s188 + $0x90] sm:$0xf]
        %v214 = vld [vmem:[%s188 + $0x94] sm:$0xf]
        %v215 = vld [vmem:[%s188 + $0x9c] sm:$0xf]
        %v216 = vld [vmem:[%s188 + $0xa0] sm:$0xf]
        %v217 = vld [vmem:[%s188 + $0xa8] sm:$0xf]
        %v218 = vld [vmem:[%s188 + $0xac] sm:$0xf]
        %v219 = vld [vmem:[%s188 + $0xb4] sm:$0xf]
        %v220 = vld [vmem:[%s188 + $0xb8] sm:$0xf]
        %v221 = vld [vmem:[%s1] sm:$0x3]
        %v222 = vld [vmem:[%s188 + $0x8] sm:$0x1]
        %v223 = vld [vmem:[%s188 + $0x14] sm:$0x1]
        %v224 = vld [vmem:[%s188 + $0x20] sm:$0x1]
        %v225 = vld [vmem:[%s188 + $0x2c] sm:$0x1]
        %v226 = vld [vmem:[%s188 + $0x38] sm:$0x1]
        %v227 = vld [vmem:[%s188 + $0x44] sm:$0x1]
        %v228 = vld [vmem:[%s188 + $0x50] sm:$0x1]
        %v229 = vld [vmem:[%s188 + $0x5c] sm:$0x1]
        %v230 = vld [vmem:[%s188 + $0x68] sm:$0x1]
        %v231 = vld [vmem:[%s188 + $0x74] sm:$0x1]
        %v232 = vld [vmem:[%s188 + $0x80] sm:$0x1]
        %v233 = vld [vmem:[%s188 + $0x8c] sm:$0x1]
        %v234 = vld [vmem:[%s188 + $0x98] sm:$0x1]
        %v235 = vld [vmem:[%s188 + $0xa4] sm:$0x1]
        %v236 = vld [vmem:[%s188 + $0xb0] sm:$0x1]
        %v237 = vld [vmem:[%s188 + $0xbc] sm:$0x1]
        %vm238 = vsmask.f32 3328
        %vm239 = vsmask.f32 7440
        %vm240 = vmor %vm238, %vm239
        %v242 = vshrl.u32 %v189, 16
        %v244 = vrot.slane %v242, 4
        %v245 = vshll.u32 %v189, 16
        %v247 = vrot.slane %v245, 5
        %v248 = vor.u32 %v244, %v247
        %v249 = vrot.slane %v248, 4
        %v251 = vshll.u32 %v190, 16
        %v253 = vrot.slane %v251, 5
        %v254 = vsel %vm240, %v249, %v253
        %v255 = vshrl.u32 %v190, 16
        %v257 = vrot.slane %v255, 4
        %v258 = vor.u32 %v257, %v253
        %v259 = vrot.slane %v258, 4
        %v261 = vshll.u32 %v222, 16
        %v263 = vrot.slane %v261, 5
        %v264 = vsel %vm240, %v259, %v263
        %v266 = vshrl.u32 %v191, 16
        %v268 = vrot.slane %v266, 4
        %v269 = vshll.u32 %v191, 16
        %v271 = vrot.slane %v269, 5
        %v272 = vor.u32 %v268, %v271
        %v273 = vrot.slane %v272, 4
        %v275 = vshll.u32 %v192, 16
        %v277 = vrot.slane %v275, 5
        %v278 = vsel %vm240, %v273, %v277
        %v279 = vshrl.u32 %v192, 16
        %v281 = vrot.slane %v279, 4
        %v282 = vor.u32 %v281, %v277
        %v283 = vrot.slane %v282, 4
        %v285 = vshll.u32 %v223, 16
        %v287 = vrot.slane %v285, 5
        %v288 = vsel %vm240, %v283, %v287
        %v290 = vshrl.u32 %v193, 16
        %v292 = vrot.slane %v290, 4
        %v293 = vshll.u32 %v193, 16
        %v295 = vrot.slane %v293, 5
        %v296 = vor.u32 %v292, %v295
        %v297 = vrot.slane %v296, 4
        %v299 = vshll.u32 %v194, 16
        %v301 = vrot.slane %v299, 5
        %v302 = vsel %vm240, %v297, %v301
        %v303 = vshrl.u32 %v194, 16
        %v305 = vrot.slane %v303, 4
        %v306 = vor.u32 %v305, %v301
        %v307 = vrot.slane %v306, 4
        %v309 = vshll.u32 %v224, 16
        %v311 = vrot.slane %v309, 5
        %v312 = vsel %vm240, %v307, %v311
        %v314 = vshrl.u32 %v195, 16
        %v316 = vrot.slane %v314, 4
        %v317 = vshll.u32 %v195, 16
        %v319 = vrot.slane %v317, 5
        %v320 = vor.u32 %v316, %v319
        %v321 = vrot.slane %v320, 4
        %v323 = vshll.u32 %v196, 16
        %v325 = vrot.slane %v323, 5
        %v326 = vsel %vm240, %v321, %v325
        %v327 = vshrl.u32 %v196, 16
        %v329 = vrot.slane %v327, 4
        %v330 = vor.u32 %v329, %v325
        %v331 = vrot.slane %v330, 4
        %v333 = vshll.u32 %v225, 16
        %v335 = vrot.slane %v333, 5
        %v336 = vsel %vm240, %v331, %v335
        %v338 = vshrl.u32 %v197, 16
        %v340 = vrot.slane %v338, 4
        %v341 = vshll.u32 %v197, 16
        %v343 = vrot.slane %v341, 5
        %v344 = vor.u32 %v340, %v343
        %v345 = vrot.slane %v344, 4
        %v347 = vshll.u32 %v198, 16
        %v349 = vrot.slane %v347, 5
        %v350 = vsel %vm240, %v345, %v349
        %v351 = vshrl.u32 %v198, 16
        %v353 = vrot.slane %v351, 4
        %v354 = vor.u32 %v353, %v349
        %v355 = vrot.slane %v354, 4
        %v357 = vshll.u32 %v226, 16
        %v359 = vrot.slane %v357, 5
        %v360 = vsel %vm240, %v355, %v359
        %v362 = vshrl.u32 %v199, 16
        %v364 = vrot.slane %v362, 4
        %v365 = vshll.u32 %v199, 16
        %v367 = vrot.slane %v365, 5
        %v368 = vor.u32 %v364, %v367
        %v369 = vrot.slane %v368, 4
        %v371 = vshll.u32 %v200, 16
        %v373 = vrot.slane %v371, 5
        %v374 = vsel %vm240, %v369, %v373
        %v375 = vshrl.u32 %v200, 16
        %v377 = vrot.slane %v375, 4
        %v378 = vor.u32 %v377, %v373
        %v379 = vrot.slane %v378, 4
        %v381 = vshll.u32 %v227, 16
        %v383 = vrot.slane %v381, 5
        %v384 = vsel %vm240, %v379, %v383
        %v386 = vshrl.u32 %v201, 16
        %v388 = vrot.slane %v386, 4
        %v389 = vshll.u32 %v201, 16
        %v391 = vrot.slane %v389, 5
        %v392 = vor.u32 %v388, %v391
        %v393 = vrot.slane %v392, 4
        %v395 = vshll.u32 %v202, 16
        %v397 = vrot.slane %v395, 5
        %v398 = vsel %vm240, %v393, %v397
        %v399 = vshrl.u32 %v202, 16
        %v401 = vrot.slane %v399, 4
        %v402 = vor.u32 %v401, %v397
        %v403 = vrot.slane %v402, 4
        %v405 = vshll.u32 %v228, 16
        %v407 = vrot.slane %v405, 5
        %v408 = vsel %vm240, %v403, %v407
        %v410 = vshrl.u32 %v203, 16
        %v412 = vrot.slane %v410, 4
        %v413 = vshll.u32 %v203, 16
        %v415 = vrot.slane %v413, 5
        %v416 = vor.u32 %v412, %v415
        %v417 = vrot.slane %v416, 4
        %v419 = vshll.u32 %v204, 16
        %v421 = vrot.slane %v419, 5
        %v422 = vsel %vm240, %v417, %v421
        %v423 = vshrl.u32 %v204, 16
        %v425 = vrot.slane %v423, 4
        %v426 = vor.u32 %v425, %v421
        %v427 = vrot.slane %v426, 4
        %v429 = vshll.u32 %v229, 16
        %v431 = vrot.slane %v429, 5
        %v432 = vsel %vm240, %v427, %v431
        %v434 = vshrl.u32 %v205, 16
        %v436 = vrot.slane %v434, 4
        %v437 = vshll.u32 %v205, 16
        %v439 = vrot.slane %v437, 5
        %v440 = vor.u32 %v436, %v439
        %v441 = vrot.slane %v440, 4
        %v443 = vshll.u32 %v206, 16
        %v445 = vrot.slane %v443, 5
        %v446 = vsel %vm240, %v441, %v445
        %v447 = vshrl.u32 %v206, 16
        %v449 = vrot.slane %v447, 4
        %v450 = vor.u32 %v449, %v445
        %v451 = vrot.slane %v450, 4
        %v453 = vshll.u32 %v230, 16
        %v455 = vrot.slane %v453, 5
        %v456 = vsel %vm240, %v451, %v455
        %v458 = vshrl.u32 %v207, 16
        %v460 = vrot.slane %v458, 4
        %v461 = vshll.u32 %v207, 16
        %v463 = vrot.slane %v461, 5
        %v464 = vor.u32 %v460, %v463
        %v465 = vrot.slane %v464, 4
        %v467 = vshll.u32 %v208, 16
        %v469 = vrot.slane %v467, 5
        %v470 = vsel %vm240, %v465, %v469
        %v471 = vshrl.u32 %v208, 16
        %v473 = vrot.slane %v471, 4
        %v474 = vor.u32 %v473, %v469
        %v475 = vrot.slane %v474, 4
        %v477 = vshll.u32 %v231, 16
        %v479 = vrot.slane %v477, 5
        %v480 = vsel %vm240, %v475, %v479
        %v482 = vshrl.u32 %v209, 16
        %v484 = vrot.slane %v482, 4
        %v485 = vshll.u32 %v209, 16
        %v487 = vrot.slane %v485, 5
        %v488 = vor.u32 %v484, %v487
        %v489 = vrot.slane %v488, 4
        %v491 = vshll.u32 %v210, 16
        %v493 = vrot.slane %v491, 5
        %v494 = vsel %vm240, %v489, %v493
        %v495 = vshrl.u32 %v210, 16
        %v497 = vrot.slane %v495, 4
        %v498 = vor.u32 %v497, %v493
        %v499 = vrot.slane %v498, 4
        %v501 = vshll.u32 %v232, 16
        %v503 = vrot.slane %v501, 5
        %v504 = vsel %vm240, %v499, %v503
        %v506 = vshrl.u32 %v211, 16
        %v508 = vrot.slane %v506, 4
        %v509 = vshll.u32 %v211, 16
        %v511 = vrot.slane %v509, 5
        %v512 = vor.u32 %v508, %v511
        %v513 = vrot.slane %v512, 4
        %v515 = vshll.u32 %v212, 16
        %v517 = vrot.slane %v515, 5
        %v518 = vsel %vm240, %v513, %v517
        %v519 = vshrl.u32 %v212, 16
        %v521 = vrot.slane %v519, 4
        %v522 = vor.u32 %v521, %v517
        %v523 = vrot.slane %v522, 4
        %v525 = vshll.u32 %v233, 16
        %v527 = vrot.slane %v525, 5
        %v528 = vsel %vm240, %v523, %v527
        %v530 = vshrl.u32 %v213, 16
        %v532 = vrot.slane %v530, 4
        %v533 = vshll.u32 %v213, 16
        %v535 = vrot.slane %v533, 5
        %v536 = vor.u32 %v532, %v535
        %v537 = vrot.slane %v536, 4
        %v539 = vshll.u32 %v214, 16
        %v541 = vrot.slane %v539, 5
        %v542 = vsel %vm240, %v537, %v541
        %v543 = vshrl.u32 %v214, 16
        %v545 = vrot.slane %v543, 4
        %v546 = vor.u32 %v545, %v541
        %v547 = vrot.slane %v546, 4
        %v549 = vshll.u32 %v234, 16
        %v551 = vrot.slane %v549, 5
        %v552 = vsel %vm240, %v547, %v551
        %v554 = vshrl.u32 %v215, 16
        %v556 = vrot.slane %v554, 4
        %v557 = vshll.u32 %v215, 16
        %v559 = vrot.slane %v557, 5
        %v560 = vor.u32 %v556, %v559
        %v561 = vrot.slane %v560, 4
        %v563 = vshll.u32 %v216, 16
        %v565 = vrot.slane %v563, 5
        %v566 = vsel %vm240, %v561, %v565
        %v567 = vshrl.u32 %v216, 16
        %v569 = vrot.slane %v567, 4
        %v570 = vor.u32 %v569, %v565
        %v571 = vrot.slane %v570, 4
        %v573 = vshll.u32 %v235, 16
        %v575 = vrot.slane %v573, 5
        %v576 = vsel %vm240, %v571, %v575
        %v578 = vshrl.u32 %v217, 16
        %v580 = vrot.slane %v578, 4
        %v581 = vshll.u32 %v217, 16
        %v583 = vrot.slane %v581, 5
        %v584 = vor.u32 %v580, %v583
        %v585 = vrot.slane %v584, 4
        %v587 = vshll.u32 %v218, 16
        %v589 = vrot.slane %v587, 5
        %v590 = vsel %vm240, %v585, %v589
        %v591 = vshrl.u32 %v218, 16
        %v593 = vrot.slane %v591, 4
        %v594 = vor.u32 %v593, %v589
        %v595 = vrot.slane %v594, 4
        %v597 = vshll.u32 %v236, 16
        %v599 = vrot.slane %v597, 5
        %v600 = vsel %vm240, %v595, %v599
        %v602 = vshrl.u32 %v219, 16
        %v604 = vrot.slane %v602, 4
        %v605 = vshll.u32 %v219, 16
        %v607 = vrot.slane %v605, 5
        %v608 = vor.u32 %v604, %v607
        %v609 = vrot.slane %v608, 4
        %v611 = vshll.u32 %v220, 16
        %v613 = vrot.slane %v611, 5
        %v614 = vsel %vm240, %v609, %v613
        %v615 = vshrl.u32 %v220, 16
        %v617 = vrot.slane %v615, 4
        %v618 = vor.u32 %v617, %v613
        %v619 = vrot.slane %v618, 4
        %v621 = vshll.u32 %v237, 16
        %v623 = vrot.slane %v621, 5
        %v624 = vsel %vm240, %v619, %v623
        %s625 = scalar_lea.vmem %s1, 2
        %v626 = vld [vmem:[%s625] sm:$0x3]
        %v627 = vunpack.c.l.b16 %v254
        %v628 = vunpack.c.l.b16 %v264
        %v629 = vunpack.c.l.b16 %v278
        %v630 = vunpack.c.l.b16 %v288
        %v631 = vunpack.c.l.b16 %v302
        %v632 = vunpack.c.l.b16 %v312
        %v633 = vunpack.c.l.b16 %v326
        %v634 = vunpack.c.l.b16 %v336
        %v635 = vunpack.c.l.b16 %v350
        %v636 = vunpack.c.l.b16 %v360
        %v637 = vunpack.c.l.b16 %v374
        %v638 = vunpack.c.l.b16 %v384
        %v639 = vunpack.c.l.b16 %v398
        %v640 = vunpack.c.l.b16 %v408
        %v641 = vunpack.c.l.b16 %v422
        %v642 = vunpack.c.l.b16 %v432
        %v643 = vunpack.c.l.b16 %v446
        %v644 = vunpack.c.l.b16 %v456
        %v645 = vunpack.c.l.b16 %v470
        %v646 = vunpack.c.l.b16 %v480
        %v647 = vunpack.c.l.b16 %v494
        %v648 = vunpack.c.l.b16 %v504
        %v649 = vunpack.c.l.b16 %v518
        %v650 = vunpack.c.l.b16 %v528
        %v651 = vunpack.c.l.b16 %v542
        %v652 = vunpack.c.l.b16 %v552
        %v653 = vunpack.c.l.b16 %v566
        %v654 = vunpack.c.l.b16 %v576
        %v655 = vunpack.c.l.b16 %v590
        %v656 = vunpack.c.l.b16 %v600
        %v657 = vunpack.c.l.b16 %v614
        %v658 = vunpack.c.l.b16 %v624
        %v659 = vpack.c.b16 %v628, %v627
        %v660 = vpack.c.b16 %v630, %v629
        %v661 = vpack.c.b16 %v632, %v631
        %v662 = vpack.c.b16 %v634, %v633
        %v663 = vpack.c.b16 %v636, %v635
        %v664 = vpack.c.b16 %v638, %v637
        %v665 = vpack.c.b16 %v640, %v639
        %v666 = vpack.c.b16 %v642, %v641
        %v667 = vpack.c.b16 %v644, %v643
        %v668 = vpack.c.b16 %v646, %v645
        %v669 = vpack.c.b16 %v648, %v647
        %v670 = vpack.c.b16 %v650, %v649
        %v671 = vpack.c.b16 %v652, %v651
        %v672 = vpack.c.b16 %v654, %v653
        %v673 = vpack.c.b16 %v656, %v655
        %v674 = vpack.c.b16 %v658, %v657
        %vm675 = vcmask 31744
        %v677 = vsel %vm675, %v659, 0
        %v680 = vsel %vm675, %v660, 0
        %v683 = vsel %vm675, %v661, 0
        %v686 = vsel %vm675, %v662, 0
        %v689 = vsel %vm675, %v663, 0
        %v692 = vsel %vm675, %v664, 0
        %v695 = vsel %vm675, %v665, 0
        %v698 = vsel %vm675, %v666, 0
        %v701 = vsel %vm675, %v667, 0
        %v704 = vsel %vm675, %v668, 0
        %v707 = vsel %vm675, %v669, 0
        %v710 = vsel %vm675, %v670, 0
        %v713 = vsel %vm675, %v671, 0
        %v716 = vsel %vm675, %v672, 0
        %v719 = vsel %vm675, %v673, 0
        %v722 = vsel %vm675, %v674, 0
        %vm724 = vcmask 1041408
        %v726 = vsel %vm724, %v626, 0
        %728 = vmatprep.subr.bf16.mxu0 0
        %729 = vmatpush1.bf16.msra.mxu0 %v726
        %730 = vmatprep.subr.bf16.mxu0 0
        %731 = vmatpush1.bf16.msra.mxu0 0
        %732 = vmatprep.subr.bf16.mxu0 0
        %733 = vmatpush1.bf16.msra.mxu0 0
        %734 = vmatprep.subr.bf16.mxu0 0
        %735 = vmatpush1.bf16.msra.mxu0 0
        %736 = vmatprep.subr.bf16.mxu0 0
        %737 = vmatpush1.bf16.msra.mxu0 0
        %738 = vmatprep.subr.bf16.mxu0 0
        %739 = vmatpush1.bf16.msra.mxu0 0
        %740 = vmatprep.subr.bf16.mxu0 0
        %741 = vmatpush1.bf16.msra.mxu0 0
        %742 = vmatprep.subr.bf16.mxu0 0
        %743 = vmatpush1.bf16.msra.mxu0 0
        %744 = vmatprep.subr.bf16.mxu0 0
        %745 = vmatpush1.bf16.msra.mxu0 0
        %746 = vmatprep.subr.bf16.mxu0 0
        %747 = vmatpush1.bf16.msra.mxu0 0
        %748 = vmatprep.subr.bf16.mxu0 0
        %749 = vmatpush1.bf16.msra.mxu0 0
        %750 = vmatprep.subr.bf16.mxu0 0
        %751 = vmatpush1.bf16.msra.mxu0 0
        %752 = vmatprep.subr.bf16.mxu0 0
        %753 = vmatpush1.bf16.msra.mxu0 0
        %754 = vmatprep.subr.bf16.mxu0 0
        %755 = vmatpush1.bf16.msra.mxu0 0
        %756 = vmatprep.subr.bf16.mxu0 0
        %757 = vmatpush1.bf16.msra.mxu0 0
        %758 = vmatprep.subr.bf16.mxu0 0
        %759 = vmatpush1.bf16.msra.mxu0 0
        %760 = vmatprep.mubr.bf16.mxu0 0
        %761 = vmatmul.mubr.bf16.gmra.mrb[0].mxu0 %v677
        %v762 = vpop.f32.mrb[0].mxu0
        %v763 = vadd.f32 0.0, %v762
        %v764 = vpop.f32.mrb[0].mxu0
        %v765 = vpop.f32.mrb[0].mxu0
        %v766 = vadd.f32 0.0, %v765
        %v767 = vpop.f32.mrb[0].mxu0
        %768 = vmatprep.mubr.bf16.mxu0 0
        %769 = vmatmul.mubr.bf16.gmra.mrb[0].mxu0 %v680
        %v770 = vpop.f32.mrb[0].mxu0
        %v771 = vadd.f32 0.0, %v770
        %v772 = vpop.f32.mrb[0].mxu0
        %v773 = vpop.f32.mrb[0].mxu0
        %v774 = vadd.f32 0.0, %v773
        %v775 = vpop.f32.mrb[0].mxu0
        %776 = vmatprep.mubr.bf16.mxu0 0
        %777 = vmatmul.mubr.bf16.gmra.mrb[0].mxu0 %v683
        %v778 = vpop.f32.mrb[0].mxu0
        %v779 = vadd.f32 0.0, %v778
        %v780 = vpop.f32.mrb[0].mxu0
        %v781 = vpop.f32.mrb[0].mxu0
        %v782 = vadd.f32 0.0, %v781
        %v783 = vpop.f32.mrb[0].mxu0
        %784 = vmatprep.mubr.bf16.mxu0 0
        %785 = vmatmul.mubr.bf16.gmra.mrb[0].mxu0 %v686
        %v786 = vpop.f32.mrb[0].mxu0
        %v787 = vadd.f32 0.0, %v786
        %v788 = vpop.f32.mrb[0].mxu0
        %v789 = vpop.f32.mrb[0].mxu0
        %v790 = vadd.f32 0.0, %v789
        %v791 = vpop.f32.mrb[0].mxu0
        %792 = vmatprep.mubr.bf16.mxu0 0
        %793 = vmatmul.mubr.bf16.gmra.mrb[0].mxu0 %v689
        %v794 = vpop.f32.mrb[0].mxu0
        %v795 = vadd.f32 0.0, %v794
        %v796 = vpop.f32.mrb[0].mxu0
        %v797 = vpop.f32.mrb[0].mxu0
        %v798 = vadd.f32 0.0, %v797
        %v799 = vpop.f32.mrb[0].mxu0
        %800 = vmatprep.mubr.bf16.mxu0 0
        %801 = vmatmul.mubr.bf16.gmra.mrb[0].mxu0 %v692
        %v802 = vpop.f32.mrb[0].mxu0
        %v803 = vadd.f32 0.0, %v802
        %v804 = vpop.f32.mrb[0].mxu0
        %v805 = vpop.f32.mrb[0].mxu0
        %v806 = vadd.f32 0.0, %v805
        %v807 = vpop.f32.mrb[0].mxu0
        %808 = vmatprep.mubr.bf16.mxu0 0
        %809 = vmatmul.mubr.bf16.gmra.mrb[0].mxu0 %v695
        %v810 = vpop.f32.mrb[0].mxu0
        %v811 = vadd.f32 0.0, %v810
        %v812 = vpop.f32.mrb[0].mxu0
        %v813 = vpop.f32.mrb[0].mxu0
        %v814 = vadd.f32 0.0, %v813
        %v815 = vpop.f32.mrb[0].mxu0
        %816 = vmatprep.mubr.bf16.mxu0 0
        %817 = vmatmul.mubr.bf16.gmra.mrb[0].mxu0 %v698
        %v818 = vpop.f32.mrb[0].mxu0
        %v819 = vadd.f32 0.0, %v818
        %v820 = vpop.f32.mrb[0].mxu0
        %v821 = vpop.f32.mrb[0].mxu0
        %v822 = vadd.f32 0.0, %v821
        %v823 = vpop.f32.mrb[0].mxu0
        %824 = vmatprep.mubr.bf16.mxu0 0
        %825 = vmatmul.mubr.bf16.gmra.mrb[0].mxu0 %v701
        %v826 = vpop.f32.mrb[0].mxu0
        %v827 = vadd.f32 0.0, %v826
        %v828 = vpop.f32.mrb[0].mxu0
        %v829 = vpop.f32.mrb[0].mxu0
        %v830 = vadd.f32 0.0, %v829
        %v831 = vpop.f32.mrb[0].mxu0
        %832 = vmatprep.mubr.bf16.mxu0 0
        %833 = vmatmul.mubr.bf16.gmra.mrb[0].mxu0 %v704
        %v834 = vpop.f32.mrb[0].mxu0
        %v835 = vadd.f32 0.0, %v834
        %v836 = vpop.f32.mrb[0].mxu0
        %v837 = vpop.f32.mrb[0].mxu0
        %v838 = vadd.f32 0.0, %v837
        %v839 = vpop.f32.mrb[0].mxu0
        %840 = vmatprep.mubr.bf16.mxu0 0
        %841 = vmatmul.mubr.bf16.gmra.mrb[0].mxu0 %v707
        %v842 = vpop.f32.mrb[0].mxu0
        %v843 = vadd.f32 0.0, %v842
        %v844 = vpop.f32.mrb[0].mxu0
        %v845 = vpop.f32.mrb[0].mxu0
        %v846 = vadd.f32 0.0, %v845
        %v847 = vpop.f32.mrb[0].mxu0
        %848 = vmatprep.mubr.bf16.mxu0 0
        %849 = vmatmul.mubr.bf16.gmra.mrb[0].mxu0 %v710
        %v850 = vpop.f32.mrb[0].mxu0
        %v851 = vadd.f32 0.0, %v850
        %v852 = vpop.f32.mrb[0].mxu0
        %v853 = vpop.f32.mrb[0].mxu0
        %v854 = vadd.f32 0.0, %v853
        %v855 = vpop.f32.mrb[0].mxu0
        %856 = vmatprep.mubr.bf16.mxu0 0
        %857 = vmatmul.mubr.bf16.gmra.mrb[0].mxu0 %v713
        %v858 = vpop.f32.mrb[0].mxu0
        %v859 = vadd.f32 0.0, %v858
        %v860 = vpop.f32.mrb[0].mxu0
        %v861 = vpop.f32.mrb[0].mxu0
        %v862 = vadd.f32 0.0, %v861
        %v863 = vpop.f32.mrb[0].mxu0
        %864 = vmatprep.mubr.bf16.mxu0 0
        %865 = vmatmul.mubr.bf16.gmra.mrb[0].mxu0 %v716
        %v866 = vpop.f32.mrb[0].mxu0
        %v867 = vadd.f32 0.0, %v866
        %v868 = vpop.f32.mrb[0].mxu0
        %v869 = vpop.f32.mrb[0].mxu0
        %v870 = vadd.f32 0.0, %v869
        %v871 = vpop.f32.mrb[0].mxu0
        %872 = vmatprep.mubr.bf16.mxu0 0
        %873 = vmatmul.mubr.bf16.gmra.mrb[0].mxu0 %v719
        %v874 = vpop.f32.mrb[0].mxu0
        %v875 = vadd.f32 0.0, %v874
        %v876 = vpop.f32.mrb[0].mxu0
        %v877 = vpop.f32.mrb[0].mxu0
        %v878 = vadd.f32 0.0, %v877
        %v879 = vpop.f32.mrb[0].mxu0
        %880 = vmatprep.mubr.bf16.mxu0 0
        %881 = vmatmul.mubr.bf16.gmra.mrb[0].mxu0 %v722
        %v882 = vpop.f32.mrb[0].mxu0
        %v883 = vadd.f32 0.0, %v882
        %v884 = vpop.f32.mrb[0].mxu0
        %v885 = vpop.f32.mrb[0].mxu0
        %v886 = vadd.f32 0.0, %v885
        %v887 = vpop.f32.mrb[0].mxu0
        %888 = vdwg.mxu0
        %v921 = vunpack.c.l.b16 %v189
        %v922 = vunpack.c.l.b16 %v190
        %v923 = vunpack.c.l.b16 %v191
        %v924 = vunpack.c.l.b16 %v192
        %v925 = vunpack.c.l.b16 %v193
        %v926 = vunpack.c.l.b16 %v194
        %v927 = vunpack.c.l.b16 %v195
        %v928 = vunpack.c.l.b16 %v196
        %v929 = vunpack.c.l.b16 %v197
        %v930 = vunpack.c.l.b16 %v198
        %v931 = vunpack.c.l.b16 %v199
        %v932 = vunpack.c.l.b16 %v200
        %v933 = vunpack.c.l.b16 %v201
        %v934 = vunpack.c.l.b16 %v202
        %v935 = vunpack.c.l.b16 %v203
        %v936 = vunpack.c.l.b16 %v204
        %v937 = vunpack.c.l.b16 %v205
        %v938 = vunpack.c.l.b16 %v206
        %v939 = vunpack.c.l.b16 %v207
        %v940 = vunpack.c.l.b16 %v208
        %v941 = vunpack.c.l.b16 %v209
        %v942 = vunpack.c.l.b16 %v210
        %v943 = vunpack.c.l.b16 %v211
        %v944 = vunpack.c.l.b16 %v212
        %v945 = vunpack.c.l.b16 %v213
        %v946 = vunpack.c.l.b16 %v214
        %v947 = vunpack.c.l.b16 %v215
        %v948 = vunpack.c.l.b16 %v216
        %v949 = vunpack.c.l.b16 %v217
        %v950 = vunpack.c.l.b16 %v218
        %v951 = vunpack.c.l.b16 %v219
        %v952 = vunpack.c.l.b16 %v220
        %v953 = vpack.c.b16 %v922, %v921
        %v954 = vpack.c.b16 %v924, %v923
        %v955 = vpack.c.b16 %v926, %v925
        %v956 = vpack.c.b16 %v928, %v927
        %v957 = vpack.c.b16 %v930, %v929
        %v958 = vpack.c.b16 %v932, %v931
        %v959 = vpack.c.b16 %v934, %v933
        %v960 = vpack.c.b16 %v936, %v935
        %v961 = vpack.c.b16 %v938, %v937
        %v962 = vpack.c.b16 %v940, %v939
        %v963 = vpack.c.b16 %v942, %v941
        %v964 = vpack.c.b16 %v944, %v943
        %v965 = vpack.c.b16 %v946, %v945
        %v966 = vpack.c.b16 %v948, %v947
        %v967 = vpack.c.b16 %v950, %v949
        %v968 = vpack.c.b16 %v952, %v951
        %v970 = vsel %vm675, %v953, 0
        %v973 = vsel %vm675, %v954, 0
        %v976 = vsel %vm675, %v955, 0
        %v979 = vsel %vm675, %v956, 0
        %v982 = vsel %vm675, %v957, 0
        %v985 = vsel %vm675, %v958, 0
        %v988 = vsel %vm675, %v959, 0
        %v991 = vsel %vm675, %v960, 0
        %v994 = vsel %vm675, %v961, 0
        %v997 = vsel %vm675, %v962, 0
        %v1000 = vsel %vm675, %v963, 0
        %v1003 = vsel %vm675, %v964, 0
        %v1006 = vsel %vm675, %v965, 0
        %v1009 = vsel %vm675, %v966, 0
        %v1012 = vsel %vm675, %v967, 0
        %v1015 = vsel %vm675, %v968, 0
        %v1018 = vsel %vm724, %v221, 0
        %1020 = vmatprep.subr.bf16.mxu0 0
        %1021 = vmatpush1.bf16.msra.mxu0 %v1018
        %1022 = vmatprep.subr.bf16.mxu0 0
        %1023 = vmatpush1.bf16.msra.mxu0 0
        %1024 = vmatprep.subr.bf16.mxu0 0
        %1025 = vmatpush1.bf16.msra.mxu0 0
        %1026 = vmatprep.subr.bf16.mxu0 0
        %1027 = vmatpush1.bf16.msra.mxu0 0
        %1028 = vmatprep.subr.bf16.mxu0 0
        %1029 = vmatpush1.bf16.msra.mxu0 0
        %1030 = vmatprep.subr.bf16.mxu0 0
        %1031 = vmatpush1.bf16.msra.mxu0 0
        %1032 = vmatprep.subr.bf16.mxu0 0
        %1033 = vmatpush1.bf16.msra.mxu0 0
        %1034 = vmatprep.subr.bf16.mxu0 0
        %1035 = vmatpush1.bf16.msra.mxu0 0
        %1036 = vmatprep.subr.bf16.mxu0 0
        %1037 = vmatpush1.bf16.msra.mxu0 0
        %1038 = vmatprep.subr.bf16.mxu0 0
        %1039 = vmatpush1.bf16.msra.mxu0 0
        %1040 = vmatprep.subr.bf16.mxu0 0
        %1041 = vmatpush1.bf16.msra.mxu0 0
        %1042 = vmatprep.subr.bf16.mxu0 0
        %1043 = vmatpush1.bf16.msra.mxu0 0
        %1044 = vmatprep.subr.bf16.mxu0 0
        %1045 = vmatpush1.bf16.msra.mxu0 0
        %1046 = vmatprep.subr.bf16.mxu0 0
        %1047 = vmatpush1.bf16.msra.mxu0 0
        %1048 = vmatprep.subr.bf16.mxu0 0
        %1049 = vmatpush1.bf16.msra.mxu0 0
        %1050 = vmatprep.subr.bf16.mxu0 0
        %1051 = vmatpush1.bf16.msra.mxu0 0
        %1052 = vmatprep.mubr.bf16.mxu0 0
        %1053 = vmatmul.mubr.bf16.gmra.mrb[0].mxu0 %v970
        %v1054 = vpop.f32.mrb[0].mxu0
        %v1055 = vadd.f32 %v763, %v1054
        %v1056 = vpop.f32.mrb[0].mxu0
        %v1057 = vpop.f32.mrb[0].mxu0
        %v1058 = vadd.f32 %v766, %v1057
        %v1059 = vpop.f32.mrb[0].mxu0
        %1060 = vmatprep.mubr.bf16.mxu0 0
        %1061 = vmatmul.mubr.bf16.gmra.mrb[0].mxu0 %v973
        %v1062 = vpop.f32.mrb[0].mxu0
        %v1063 = vadd.f32 %v771, %v1062
        %v1064 = vpop.f32.mrb[0].mxu0
        %v1065 = vpop.f32.mrb[0].mxu0
        %v1066 = vadd.f32 %v774, %v1065
        %v1067 = vpop.f32.mrb[0].mxu0
        %1068 = vmatprep.mubr.bf16.mxu0 0
        %1069 = vmatmul.mubr.bf16.gmra.mrb[0].mxu0 %v976
        %v1070 = vpop.f32.mrb[0].mxu0
        %v1071 = vadd.f32 %v779, %v1070
        %v1072 = vpop.f32.mrb[0].mxu0
        %v1073 = vpop.f32.mrb[0].mxu0
        %v1074 = vadd.f32 %v782, %v1073
        %v1075 = vpop.f32.mrb[0].mxu0
        %1076 = vmatprep.mubr.bf16.mxu0 0
        %1077 = vmatmul.mubr.bf16.gmra.mrb[0].mxu0 %v979
        %v1078 = vpop.f32.mrb[0].mxu0
        %v1079 = vadd.f32 %v787, %v1078
        %v1080 = vpop.f32.mrb[0].mxu0
        %v1081 = vpop.f32.mrb[0].mxu0
        %v1082 = vadd.f32 %v790, %v1081
        %v1083 = vpop.f32.mrb[0].mxu0
        %1084 = vmatprep.mubr.bf16.mxu0 0
        %1085 = vmatmul.mubr.bf16.gmra.mrb[0].mxu0 %v982
        %v1086 = vpop.f32.mrb[0].mxu0
        %v1087 = vadd.f32 %v795, %v1086
        %v1088 = vpop.f32.mrb[0].mxu0
        %v1089 = vpop.f32.mrb[0].mxu0
        %v1090 = vadd.f32 %v798, %v1089
        %v1091 = vpop.f32.mrb[0].mxu0
        %1092 = vmatprep.mubr.bf16.mxu0 0
        %1093 = vmatmul.mubr.bf16.gmra.mrb[0].mxu0 %v985
        %v1094 = vpop.f32.mrb[0].mxu0
        %v1095 = vadd.f32 %v803, %v1094
        %v1096 = vpop.f32.mrb[0].mxu0
        %v1097 = vpop.f32.mrb[0].mxu0
        %v1098 = vadd.f32 %v806, %v1097
        %v1099 = vpop.f32.mrb[0].mxu0
        %1100 = vmatprep.mubr.bf16.mxu0 0
        %1101 = vmatmul.mubr.bf16.gmra.mrb[0].mxu0 %v988
        %v1102 = vpop.f32.mrb[0].mxu0
        %v1103 = vadd.f32 %v811, %v1102
        %v1104 = vpop.f32.mrb[0].mxu0
        %v1105 = vpop.f32.mrb[0].mxu0
        %v1106 = vadd.f32 %v814, %v1105
        %v1107 = vpop.f32.mrb[0].mxu0
        %1108 = vmatprep.mubr.bf16.mxu0 0
        %1109 = vmatmul.mubr.bf16.gmra.mrb[0].mxu0 %v991
        %v1110 = vpop.f32.mrb[0].mxu0
        %v1111 = vadd.f32 %v819, %v1110
        %v1112 = vpop.f32.mrb[0].mxu0
        %v1113 = vpop.f32.mrb[0].mxu0
        %v1114 = vadd.f32 %v822, %v1113
        %v1115 = vpop.f32.mrb[0].mxu0
        %1116 = vmatprep.mubr.bf16.mxu0 0
        %1117 = vmatmul.mubr.bf16.gmra.mrb[0].mxu0 %v994
        %v1118 = vpop.f32.mrb[0].mxu0
        %v1119 = vadd.f32 %v827, %v1118
        %v1120 = vpop.f32.mrb[0].mxu0
        %v1121 = vpop.f32.mrb[0].mxu0
        %v1122 = vadd.f32 %v830, %v1121
        %v1123 = vpop.f32.mrb[0].mxu0
        %1124 = vmatprep.mubr.bf16.mxu0 0
        %1125 = vmatmul.mubr.bf16.gmra.mrb[0].mxu0 %v997
        %v1126 = vpop.f32.mrb[0].mxu0
        %v1127 = vadd.f32 %v835, %v1126
        %v1128 = vpop.f32.mrb[0].mxu0
        %v1129 = vpop.f32.mrb[0].mxu0
        %v1130 = vadd.f32 %v838, %v1129
        %v1131 = vpop.f32.mrb[0].mxu0
        %1132 = vmatprep.mubr.bf16.mxu0 0
        %1133 = vmatmul.mubr.bf16.gmra.mrb[0].mxu0 %v1000
        %v1134 = vpop.f32.mrb[0].mxu0
        %v1135 = vadd.f32 %v843, %v1134
        %v1136 = vpop.f32.mrb[0].mxu0
        %v1137 = vpop.f32.mrb[0].mxu0
        %v1138 = vadd.f32 %v846, %v1137
        %v1139 = vpop.f32.mrb[0].mxu0
        %1140 = vmatprep.mubr.bf16.mxu0 0
        %1141 = vmatmul.mubr.bf16.gmra.mrb[0].mxu0 %v1003
        %v1142 = vpop.f32.mrb[0].mxu0
        %v1143 = vadd.f32 %v851, %v1142
        %v1144 = vpop.f32.mrb[0].mxu0
        %v1145 = vpop.f32.mrb[0].mxu0
        %v1146 = vadd.f32 %v854, %v1145
        %v1147 = vpop.f32.mrb[0].mxu0
        %1148 = vmatprep.mubr.bf16.mxu0 0
        %1149 = vmatmul.mubr.bf16.gmra.mrb[0].mxu0 %v1006
        %v1150 = vpop.f32.mrb[0].mxu0
        %v1151 = vadd.f32 %v859, %v1150
        %v1152 = vpop.f32.mrb[0].mxu0
        %v1153 = vpop.f32.mrb[0].mxu0
        %v1154 = vadd.f32 %v862, %v1153
        %v1155 = vpop.f32.mrb[0].mxu0
        %1156 = vmatprep.mubr.bf16.mxu0 0
        %1157 = vmatmul.mubr.bf16.gmra.mrb[0].mxu0 %v1009
        %v1158 = vpop.f32.mrb[0].mxu0
        %v1159 = vadd.f32 %v867, %v1158
        %v1160 = vpop.f32.mrb[0].mxu0
        %v1161 = vpop.f32.mrb[0].mxu0
        %v1162 = vadd.f32 %v870, %v1161
        %v1163 = vpop.f32.mrb[0].mxu0
        %1164 = vmatprep.mubr.bf16.mxu0 0
        %1165 = vmatmul.mubr.bf16.gmra.mrb[0].mxu0 %v1012
        %v1166 = vpop.f32.mrb[0].mxu0
        %v1167 = vadd.f32 %v875, %v1166
        %v1168 = vpop.f32.mrb[0].mxu0
        %v1169 = vpop.f32.mrb[0].mxu0
        %v1170 = vadd.f32 %v878, %v1169
        %v1171 = vpop.f32.mrb[0].mxu0
        %1172 = vmatprep.mubr.bf16.mxu0 0
        %1173 = vmatmul.mubr.bf16.gmra.mrb[0].mxu0 %v1015
        %v1174 = vpop.f32.mrb[0].mxu0
        %v1175 = vadd.f32 %v883, %v1174
        %v1176 = vpop.f32.mrb[0].mxu0
        %v1177 = vpop.f32.mrb[0].mxu0
        %v1178 = vadd.f32 %v886, %v1177
        %v1179 = vpop.f32.mrb[0].mxu0
        %1180 = vdwg.mxu0
        %v1181 = vld [vmem:[%s188] sm:$0xe]
        %v1182 = vld [vmem:[%s188 + $0xc] sm:$0xe]
        %v1183 = vld [vmem:[%s188 + $0x18] sm:$0xe]
        %v1184 = vld [vmem:[%s188 + $0x24] sm:$0xe]
        %v1185 = vld [vmem:[%s188 + $0x30] sm:$0xe]
        %v1186 = vld [vmem:[%s188 + $0x3c] sm:$0xe]
        %v1187 = vld [vmem:[%s188 + $0x48] sm:$0xe]
        %v1188 = vld [vmem:[%s188 + $0x54] sm:$0xe]
        %v1189 = vld [vmem:[%s188 + $0x60] sm:$0xe]
        %v1190 = vld [vmem:[%s188 + $0x6c] sm:$0xe]
        %v1191 = vld [vmem:[%s188 + $0x78] sm:$0xe]
        %v1192 = vld [vmem:[%s188 + $0x84] sm:$0xe]
        %v1193 = vld [vmem:[%s188 + $0x90] sm:$0xe]
        %v1194 = vld [vmem:[%s188 + $0x9c] sm:$0xe]
        %v1195 = vld [vmem:[%s188 + $0xa8] sm:$0xe]
        %v1196 = vld [vmem:[%s188 + $0xb4] sm:$0xe]
        %vm1229 = vcmask 1042432
        %vm1230 = vcmask 1046532
        %vm1231 = vmor %vm1229, %vm1230
        %v1232 = vrot.slane %v1181, 5
        %v1233 = vrot.slane %v1232, 4
        %v1234 = vrot.slane %v190, 5
        %v1235 = vsel %vm1231, %v1233, %v1234
        %v1236 = vrot.slane %v1234, 4
        %v1237 = vrot.slane %v222, 5
        %v1238 = vsel %vm1231, %v1236, %v1237
        %v1239 = vrot.slane %v1182, 5
        %v1240 = vrot.slane %v1239, 4
        %v1241 = vrot.slane %v192, 5
        %v1242 = vsel %vm1231, %v1240, %v1241
        %v1243 = vrot.slane %v1241, 4
        %v1244 = vrot.slane %v223, 5
        %v1245 = vsel %vm1231, %v1243, %v1244
        %v1246 = vrot.slane %v1183, 5
        %v1247 = vrot.slane %v1246, 4
        %v1248 = vrot.slane %v194, 5
        %v1249 = vsel %vm1231, %v1247, %v1248
        %v1250 = vrot.slane %v1248, 4
        %v1251 = vrot.slane %v224, 5
        %v1252 = vsel %vm1231, %v1250, %v1251
        %v1253 = vrot.slane %v1184, 5
        %v1254 = vrot.slane %v1253, 4
        %v1255 = vrot.slane %v196, 5
        %v1256 = vsel %vm1231, %v1254, %v1255
        %v1257 = vrot.slane %v1255, 4
        %v1258 = vrot.slane %v225, 5
        %v1259 = vsel %vm1231, %v1257, %v1258
        %v1260 = vrot.slane %v1185, 5
        %v1261 = vrot.slane %v1260, 4
        %v1262 = vrot.slane %v198, 5
        %v1263 = vsel %vm1231, %v1261, %v1262
        %v1264 = vrot.slane %v1262, 4
        %v1265 = vrot.slane %v226, 5
        %v1266 = vsel %vm1231, %v1264, %v1265
        %v1267 = vrot.slane %v1186, 5
        %v1268 = vrot.slane %v1267, 4
        %v1269 = vrot.slane %v200, 5
        %v1270 = vsel %vm1231, %v1268, %v1269
        %v1271 = vrot.slane %v1269, 4
        %v1272 = vrot.slane %v227, 5
        %v1273 = vsel %vm1231, %v1271, %v1272
        %v1274 = vrot.slane %v1187, 5
        %v1275 = vrot.slane %v1274, 4
        %v1276 = vrot.slane %v202, 5
        %v1277 = vsel %vm1231, %v1275, %v1276
        %v1278 = vrot.slane %v1276, 4
        %v1279 = vrot.slane %v228, 5
        %v1280 = vsel %vm1231, %v1278, %v1279
        %v1281 = vrot.slane %v1188, 5
        %v1282 = vrot.slane %v1281, 4
        %v1283 = vrot.slane %v204, 5
        %v1284 = vsel %vm1231, %v1282, %v1283
        %v1285 = vrot.slane %v1283, 4
        %v1286 = vrot.slane %v229, 5
        %v1287 = vsel %vm1231, %v1285, %v1286
        %v1288 = vrot.slane %v1189, 5
        %v1289 = vrot.slane %v1288, 4
        %v1290 = vrot.slane %v206, 5
        %v1291 = vsel %vm1231, %v1289, %v1290
        %v1292 = vrot.slane %v1290, 4
        %v1293 = vrot.slane %v230, 5
        %v1294 = vsel %vm1231, %v1292, %v1293
        %v1295 = vrot.slane %v1190, 5
        %v1296 = vrot.slane %v1295, 4
        %v1297 = vrot.slane %v208, 5
        %v1298 = vsel %vm1231, %v1296, %v1297
        %v1299 = vrot.slane %v1297, 4
        %v1300 = vrot.slane %v231, 5
        %v1301 = vsel %vm1231, %v1299, %v1300
        %v1302 = vrot.slane %v1191, 5
        %v1303 = vrot.slane %v1302, 4
        %v1304 = vrot.slane %v210, 5
        %v1305 = vsel %vm1231, %v1303, %v1304
        %v1306 = vrot.slane %v1304, 4
        %v1307 = vrot.slane %v232, 5
        %v1308 = vsel %vm1231, %v1306, %v1307
        %v1309 = vrot.slane %v1192, 5
        %v1310 = vrot.slane %v1309, 4
        %v1311 = vrot.slane %v212, 5
        %v1312 = vsel %vm1231, %v1310, %v1311
        %v1313 = vrot.slane %v1311, 4
        %v1314 = vrot.slane %v233, 5
        %v1315 = vsel %vm1231, %v1313, %v1314
        %v1316 = vrot.slane %v1193, 5
        %v1317 = vrot.slane %v1316, 4
        %v1318 = vrot.slane %v214, 5
        %v1319 = vsel %vm1231, %v1317, %v1318
        %v1320 = vrot.slane %v1318, 4
        %v1321 = vrot.slane %v234, 5
        %v1322 = vsel %vm1231, %v1320, %v1321
        %v1323 = vrot.slane %v1194, 5
        %v1324 = vrot.slane %v1323, 4
        %v1325 = vrot.slane %v216, 5
        %v1326 = vsel %vm1231, %v1324, %v1325
        %v1327 = vrot.slane %v1325, 4
        %v1328 = vrot.slane %v235, 5
        %v1329 = vsel %vm1231, %v1327, %v1328
        %v1330 = vrot.slane %v1195, 5
        %v1331 = vrot.slane %v1330, 4
        %v1332 = vrot.slane %v218, 5
        %v1333 = vsel %vm1231, %v1331, %v1332
        %v1334 = vrot.slane %v1332, 4
        %v1335 = vrot.slane %v236, 5
        %v1336 = vsel %vm1231, %v1334, %v1335
        %v1337 = vrot.slane %v1196, 5
        %v1338 = vrot.slane %v1337, 4
        %v1339 = vrot.slane %v220, 5
        %v1340 = vsel %vm1231, %v1338, %v1339
        %v1341 = vrot.slane %v1339, 4
        %v1342 = vrot.slane %v237, 5
        %v1343 = vsel %vm1231, %v1341, %v1342
        %s1344 = scalar_lea.vmem %s1, 4
        %v1345 = vld [vmem:[%s1344] sm:$0x3]
        %v1346 = vunpack.c.l.b16 %v1235
        %v1347 = vunpack.c.l.b16 %v1238
        %v1348 = vunpack.c.l.b16 %v1242
        %v1349 = vunpack.c.l.b16 %v1245
        %v1350 = vunpack.c.l.b16 %v1249
        %v1351 = vunpack.c.l.b16 %v1252
        %v1352 = vunpack.c.l.b16 %v1256
        %v1353 = vunpack.c.l.b16 %v1259
        %v1354 = vunpack.c.l.b16 %v1263
        %v1355 = vunpack.c.l.b16 %v1266
        %v1356 = vunpack.c.l.b16 %v1270
        %v1357 = vunpack.c.l.b16 %v1273
        %v1358 = vunpack.c.l.b16 %v1277
        %v1359 = vunpack.c.l.b16 %v1280
        %v1360 = vunpack.c.l.b16 %v1284
        %v1361 = vunpack.c.l.b16 %v1287
        %v1362 = vunpack.c.l.b16 %v1291
        %v1363 = vunpack.c.l.b16 %v1294
        %v1364 = vunpack.c.l.b16 %v1298
        %v1365 = vunpack.c.l.b16 %v1301
        %v1366 = vunpack.c.l.b16 %v1305
        %v1367 = vunpack.c.l.b16 %v1308
        %v1368 = vunpack.c.l.b16 %v1312
        %v1369 = vunpack.c.l.b16 %v1315
        %v1370 = vunpack.c.l.b16 %v1319
        %v1371 = vunpack.c.l.b16 %v1322
        %v1372 = vunpack.c.l.b16 %v1326
        %v1373 = vunpack.c.l.b16 %v1329
        %v1374 = vunpack.c.l.b16 %v1333
        %v1375 = vunpack.c.l.b16 %v1336
        %v1376 = vunpack.c.l.b16 %v1340
        %v1377 = vunpack.c.l.b16 %v1343
        %v1378 = vpack.c.b16 %v1347, %v1346
        %v1379 = vpack.c.b16 %v1349, %v1348
        %v1380 = vpack.c.b16 %v1351, %v1350
        %v1381 = vpack.c.b16 %v1353, %v1352
        %v1382 = vpack.c.b16 %v1355, %v1354
        %v1383 = vpack.c.b16 %v1357, %v1356
        %v1384 = vpack.c.b16 %v1359, %v1358
        %v1385 = vpack.c.b16 %v1361, %v1360
        %v1386 = vpack.c.b16 %v1363, %v1362
        %v1387 = vpack.c.b16 %v1365, %v1364
        %v1388 = vpack.c.b16 %v1367, %v1366
        %v1389 = vpack.c.b16 %v1369, %v1368
        %v1390 = vpack.c.b16 %v1371, %v1370
        %v1391 = vpack.c.b16 %v1373, %v1372
        %v1392 = vpack.c.b16 %v1375, %v1374
        %v1393 = vpack.c.b16 %v1377, %v1376
        %v1395 = vsel %vm675, %v1378, 0
        %v1398 = vsel %vm675, %v1379, 0
        %v1401 = vsel %vm675, %v1380, 0
        %v1404 = vsel %vm675, %v1381, 0
        %v1407 = vsel %vm675, %v1382, 0
        %v1410 = vsel %vm675, %v1383, 0
        %v1413 = vsel %vm675, %v1384, 0
        %v1416 = vsel %vm675, %v1385, 0
        %v1419 = vsel %vm675, %v1386, 0
        %v1422 = vsel %vm675, %v1387, 0
        %v1425 = vsel %vm675, %v1388, 0
        %v1428 = vsel %vm675, %v1389, 0
        %v1431 = vsel %vm675, %v1390, 0
        %v1434 = vsel %vm675, %v1391, 0
        %v1437 = vsel %vm675, %v1392, 0
        %v1440 = vsel %vm675, %v1393, 0
        %v1443 = vsel %vm724, %v1345, 0
        %1445 = vmatprep.subr.bf16.mxu0 0
        %1446 = vmatpush1.bf16.msra.mxu0 %v1443
        %1447 = vmatprep.subr.bf16.mxu0 0
        %1448 = vmatpush1.bf16.msra.mxu0 0
        %1449 = vmatprep.subr.bf16.mxu0 0
        %1450 = vmatpush1.bf16.msra.mxu0 0
        %1451 = vmatprep.subr.bf16.mxu0 0
        %1452 = vmatpush1.bf16.msra.mxu0 0
        %1453 = vmatprep.subr.bf16.mxu0 0
        %1454 = vmatpush1.bf16.msra.mxu0 0
        %1455 = vmatprep.subr.bf16.mxu0 0
        %1456 = vmatpush1.bf16.msra.mxu0 0
        %1457 = vmatprep.subr.bf16.mxu0 0
        %1458 = vmatpush1.bf16.msra.mxu0 0
        %1459 = vmatprep.subr.bf16.mxu0 0
        %1460 = vmatpush1.bf16.msra.mxu0 0
        %1461 = vmatprep.subr.bf16.mxu0 0
        %1462 = vmatpush1.bf16.msra.mxu0 0
        %1463 = vmatprep.subr.bf16.mxu0 0
        %1464 = vmatpush1.bf16.msra.mxu0 0
        %1465 = vmatprep.subr.bf16.mxu0 0
        %1466 = vmatpush1.bf16.msra.mxu0 0
        %1467 = vmatprep.subr.bf16.mxu0 0
        %1468 = vmatpush1.bf16.msra.mxu0 0
        %1469 = vmatprep.subr.bf16.mxu0 0
        %1470 = vmatpush1.bf16.msra.mxu0 0
        %1471 = vmatprep.subr.bf16.mxu0 0
        %1472 = vmatpush1.bf16.msra.mxu0 0
        %1473 = vmatprep.subr.bf16.mxu0 0
        %1474 = vmatpush1.bf16.msra.mxu0 0
        %1475 = vmatprep.subr.bf16.mxu0 0
        %1476 = vmatpush1.bf16.msra.mxu0 0
        %1477 = vmatprep.mubr.bf16.mxu0 0
        %1478 = vmatmul.mubr.bf16.gmra.mrb[0].mxu0 %v1395
        %v1479 = vpop.f32.mrb[0].mxu0
        %v1480 = vadd.f32 0.0, %v1479
        %v1481 = vpop.f32.mrb[0].mxu0
        %v1482 = vpop.f32.mrb[0].mxu0
        %v1483 = vadd.f32 0.0, %v1482
        %v1484 = vpop.f32.mrb[0].mxu0
        %1485 = vmatprep.mubr.bf16.mxu0 0
        %1486 = vmatmul.mubr.bf16.gmra.mrb[0].mxu0 %v1398
        %v1487 = vpop.f32.mrb[0].mxu0
        %v1488 = vadd.f32 0.0, %v1487
        %v1489 = vpop.f32.mrb[0].mxu0
        %v1490 = vpop.f32.mrb[0].mxu0
        %v1491 = vadd.f32 0.0, %v1490
        %v1492 = vpop.f32.mrb[0].mxu0
        %1493 = vmatprep.mubr.bf16.mxu0 0
        %1494 = vmatmul.mubr.bf16.gmra.mrb[0].mxu0 %v1401
        %v1495 = vpop.f32.mrb[0].mxu0
        %v1496 = vadd.f32 0.0, %v1495
        %v1497 = vpop.f32.mrb[0].mxu0
        %v1498 = vpop.f32.mrb[0].mxu0
        %v1499 = vadd.f32 0.0, %v1498
        %v1500 = vpop.f32.mrb[0].mxu0
        %1501 = vmatprep.mubr.bf16.mxu0 0
        %1502 = vmatmul.mubr.bf16.gmra.mrb[0].mxu0 %v1404
        %v1503 = vpop.f32.mrb[0].mxu0
        %v1504 = vadd.f32 0.0, %v1503
        %v1505 = vpop.f32.mrb[0].mxu0
        %v1506 = vpop.f32.mrb[0].mxu0
        %v1507 = vadd.f32 0.0, %v1506
        %v1508 = vpop.f32.mrb[0].mxu0
        %1509 = vmatprep.mubr.bf16.mxu0 0
        %1510 = vmatmul.mubr.bf16.gmra.mrb[0].mxu0 %v1407
        %v1511 = vpop.f32.mrb[0].mxu0
        %v1512 = vadd.f32 0.0, %v1511
        %v1513 = vpop.f32.mrb[0].mxu0
        %v1514 = vpop.f32.mrb[0].mxu0
        %v1515 = vadd.f32 0.0, %v1514
        %v1516 = vpop.f32.mrb[0].mxu0
        %1517 = vmatprep.mubr.bf16.mxu0 0
        %1518 = vmatmul.mubr.bf16.gmra.mrb[0].mxu0 %v1410
        %v1519 = vpop.f32.mrb[0].mxu0
        %v1520 = vadd.f32 0.0, %v1519
        %v1521 = vpop.f32.mrb[0].mxu0
        %v1522 = vpop.f32.mrb[0].mxu0
        %v1523 = vadd.f32 0.0, %v1522
        %v1524 = vpop.f32.mrb[0].mxu0
        %1525 = vmatprep.mubr.bf16.mxu0 0
        %1526 = vmatmul.mubr.bf16.gmra.mrb[0].mxu0 %v1413
        %v1527 = vpop.f32.mrb[0].mxu0
        %v1528 = vadd.f32 0.0, %v1527
        %v1529 = vpop.f32.mrb[0].mxu0
        %v1530 = vpop.f32.mrb[0].mxu0
        %v1531 = vadd.f32 0.0, %v1530
        %v1532 = vpop.f32.mrb[0].mxu0
        %1533 = vmatprep.mubr.bf16.mxu0 0
        %1534 = vmatmul.mubr.bf16.gmra.mrb[0].mxu0 %v1416
        %v1535 = vpop.f32.mrb[0].mxu0
        %v1536 = vadd.f32 0.0, %v1535
        %v1537 = vpop.f32.mrb[0].mxu0
        %v1538 = vpop.f32.mrb[0].mxu0
        %v1539 = vadd.f32 0.0, %v1538
        %v1540 = vpop.f32.mrb[0].mxu0
        %1541 = vmatprep.mubr.bf16.mxu0 0
        %1542 = vmatmul.mubr.bf16.gmra.mrb[0].mxu0 %v1419
        %v1543 = vpop.f32.mrb[0].mxu0
        %v1544 = vadd.f32 0.0, %v1543
        %v1545 = vpop.f32.mrb[0].mxu0
        %v1546 = vpop.f32.mrb[0].mxu0
        %v1547 = vadd.f32 0.0, %v1546
        %v1548 = vpop.f32.mrb[0].mxu0
        %1549 = vmatprep.mubr.bf16.mxu0 0
        %1550 = vmatmul.mubr.bf16.gmra.mrb[0].mxu0 %v1422
        %v1551 = vpop.f32.mrb[0].mxu0
        %v1552 = vadd.f32 0.0, %v1551
        %v1553 = vpop.f32.mrb[0].mxu0
        %v1554 = vpop.f32.mrb[0].mxu0
        %v1555 = vadd.f32 0.0, %v1554
        %v1556 = vpop.f32.mrb[0].mxu0
        %1557 = vmatprep.mubr.bf16.mxu0 0
        %1558 = vmatmul.mubr.bf16.gmra.mrb[0].mxu0 %v1425
        %v1559 = vpop.f32.mrb[0].mxu0
        %v1560 = vadd.f32 0.0, %v1559
        %v1561 = vpop.f32.mrb[0].mxu0
        %v1562 = vpop.f32.mrb[0].mxu0
        %v1563 = vadd.f32 0.0, %v1562
        %v1564 = vpop.f32.mrb[0].mxu0
        %1565 = vmatprep.mubr.bf16.mxu0 0
        %1566 = vmatmul.mubr.bf16.gmra.mrb[0].mxu0 %v1428
        %v1567 = vpop.f32.mrb[0].mxu0
        %v1568 = vadd.f32 0.0, %v1567
        %v1569 = vpop.f32.mrb[0].mxu0
        %v1570 = vpop.f32.mrb[0].mxu0
        %v1571 = vadd.f32 0.0, %v1570
        %v1572 = vpop.f32.mrb[0].mxu0
        %1573 = vmatprep.mubr.bf16.mxu0 0
        %1574 = vmatmul.mubr.bf16.gmra.mrb[0].mxu0 %v1431
        %v1575 = vpop.f32.mrb[0].mxu0
        %v1576 = vadd.f32 0.0, %v1575
        %v1577 = vpop.f32.mrb[0].mxu0
        %v1578 = vpop.f32.mrb[0].mxu0
        %v1579 = vadd.f32 0.0, %v1578
        %v1580 = vpop.f32.mrb[0].mxu0
        %1581 = vmatprep.mubr.bf16.mxu0 0
        %1582 = vmatmul.mubr.bf16.gmra.mrb[0].mxu0 %v1434
        %v1583 = vpop.f32.mrb[0].mxu0
        %v1584 = vadd.f32 0.0, %v1583
        %v1585 = vpop.f32.mrb[0].mxu0
        %v1586 = vpop.f32.mrb[0].mxu0
        %v1587 = vadd.f32 0.0, %v1586
        %v1588 = vpop.f32.mrb[0].mxu0
        %1589 = vmatprep.mubr.bf16.mxu0 0
        %1590 = vmatmul.mubr.bf16.gmra.mrb[0].mxu0 %v1437
        %v1591 = vpop.f32.mrb[0].mxu0
        %v1592 = vadd.f32 0.0, %v1591
        %v1593 = vpop.f32.mrb[0].mxu0
        %v1594 = vpop.f32.mrb[0].mxu0
        %v1595 = vadd.f32 0.0, %v1594
        %v1596 = vpop.f32.mrb[0].mxu0
        %1597 = vmatprep.mubr.bf16.mxu0 0
        %1598 = vmatmul.mubr.bf16.gmra.mrb[0].mxu0 %v1440
        %v1599 = vpop.f32.mrb[0].mxu0
        %v1600 = vadd.f32 0.0, %v1599
        %v1601 = vpop.f32.mrb[0].mxu0
        %v1602 = vpop.f32.mrb[0].mxu0
        %v1603 = vadd.f32 0.0, %v1602
        %v1604 = vpop.f32.mrb[0].mxu0
        %1605 = vdwg.mxu0
        %v1606 = vadd.f32 %v1055, %v1480
        %v1607 = vadd.f32 %v1058, %v1483
        %v1608 = vadd.f32 %v1063, %v1488
        %v1609 = vadd.f32 %v1066, %v1491
        %v1610 = vadd.f32 %v1071, %v1496
        %v1611 = vadd.f32 %v1074, %v1499
        %v1612 = vadd.f32 %v1079, %v1504
        %v1613 = vadd.f32 %v1082, %v1507
        %v1614 = vadd.f32 %v1087, %v1512
        %v1615 = vadd.f32 %v1090, %v1515
        %v1616 = vadd.f32 %v1095, %v1520
        %v1617 = vadd.f32 %v1098, %v1523
        %v1618 = vadd.f32 %v1103, %v1528
        %v1619 = vadd.f32 %v1106, %v1531
        %v1620 = vadd.f32 %v1111, %v1536
        %v1621 = vadd.f32 %v1114, %v1539
        %v1622 = vadd.f32 %v1119, %v1544
        %v1623 = vadd.f32 %v1122, %v1547
        %v1624 = vadd.f32 %v1127, %v1552
        %v1625 = vadd.f32 %v1130, %v1555
        %v1626 = vadd.f32 %v1135, %v1560
        %v1627 = vadd.f32 %v1138, %v1563
        %v1628 = vadd.f32 %v1143, %v1568
        %v1629 = vadd.f32 %v1146, %v1571
        %v1630 = vadd.f32 %v1151, %v1576
        %v1631 = vadd.f32 %v1154, %v1579
        %v1632 = vadd.f32 %v1159, %v1584
        %v1633 = vadd.f32 %v1162, %v1587
        %v1634 = vadd.f32 %v1167, %v1592
        %v1635 = vadd.f32 %v1170, %v1595
        %v1636 = vadd.f32 %v1175, %v1600
        %v1637 = vadd.f32 %v1178, %v1603
        %s1638 = sadd.s32 %s185, 1
        %s1639 = smul.u32 %s1638, 3
        %s1640 = smul.addr %s1639, 4
        %s1641 = scalar_lea.vmem %s182, %s1640
        %v1642 = vld [vmem:[%s1641] sm:$0xf]
        %v1643 = vld [vmem:[%s1641 + $0x4] sm:$0xf]
        %v1644 = vld [vmem:[%s1641 + $0xc] sm:$0xf]
        %v1645 = vld [vmem:[%s1641 + $0x10] sm:$0xf]
        %v1646 = vld [vmem:[%s1641 + $0x18] sm:$0xf]
        %v1647 = vld [vmem:[%s1641 + $0x1c] sm:$0xf]
        %v1648 = vld [vmem:[%s1641 + $0x24] sm:$0xf]
        %v1649 = vld [vmem:[%s1641 + $0x28] sm:$0xf]
        %v1650 = vld [vmem:[%s1641 + $0x30] sm:$0xf]
        %v1651 = vld [vmem:[%s1641 + $0x34] sm:$0xf]
        %v1652 = vld [vmem:[%s1641 + $0x3c] sm:$0xf]
        %v1653 = vld [vmem:[%s1641 + $0x40] sm:$0xf]
        %v1654 = vld [vmem:[%s1641 + $0x48] sm:$0xf]
        %v1655 = vld [vmem:[%s1641 + $0x4c] sm:$0xf]
        %v1656 = vld [vmem:[%s1641 + $0x54] sm:$0xf]
        %v1657 = vld [vmem:[%s1641 + $0x58] sm:$0xf]
        %v1658 = vld [vmem:[%s1641 + $0x60] sm:$0xf]
        %v1659 = vld [vmem:[%s1641 + $0x64] sm:$0xf]
        %v1660 = vld [vmem:[%s1641 + $0x6c] sm:$0xf]
        %v1661 = vld [vmem:[%s1641 + $0x70] sm:$0xf]
        %v1662 = vld [vmem:[%s1641 + $0x78] sm:$0xf]
        %v1663 = vld [vmem:[%s1641 + $0x7c] sm:$0xf]
        %v1664 = vld [vmem:[%s1641 + $0x84] sm:$0xf]
        %v1665 = vld [vmem:[%s1641 + $0x88] sm:$0xf]
        %v1666 = vld [vmem:[%s1641 + $0x90] sm:$0xf]
        %v1667 = vld [vmem:[%s1641 + $0x94] sm:$0xf]
        %v1668 = vld [vmem:[%s1641 + $0x9c] sm:$0xf]
        %v1669 = vld [vmem:[%s1641 + $0xa0] sm:$0xf]
        %v1670 = vld [vmem:[%s1641 + $0xa8] sm:$0xf]
        %v1671 = vld [vmem:[%s1641 + $0xac] sm:$0xf]
        %v1672 = vld [vmem:[%s1641 + $0xb4] sm:$0xf]
        %v1673 = vld [vmem:[%s1641 + $0xb8] sm:$0xf]
        %s1674 = scalar_lea.vmem %s1, 6
        %v1675 = vld [vmem:[%s1674] sm:$0x3]
        %v1708 = vunpack.c.l.b16 %v1642
        %v1709 = vunpack.c.l.b16 %v1643
        %v1710 = vunpack.c.l.b16 %v1644
        %v1711 = vunpack.c.l.b16 %v1645
        %v1712 = vunpack.c.l.b16 %v1646
        %v1713 = vunpack.c.l.b16 %v1647
        %v1714 = vunpack.c.l.b16 %v1648
        %v1715 = vunpack.c.l.b16 %v1649
        %v1716 = vunpack.c.l.b16 %v1650
        %v1717 = vunpack.c.l.b16 %v1651
        %v1718 = vunpack.c.l.b16 %v1652
        %v1719 = vunpack.c.l.b16 %v1653
        %v1720 = vunpack.c.l.b16 %v1654
        %v1721 = vunpack.c.l.b16 %v1655
        %v1722 = vunpack.c.l.b16 %v1656
        %v1723 = vunpack.c.l.b16 %v1657
        %v1724 = vunpack.c.l.b16 %v1658
        %v1725 = vunpack.c.l.b16 %v1659
        %v1726 = vunpack.c.l.b16 %v1660
        %v1727 = vunpack.c.l.b16 %v1661
        %v1728 = vunpack.c.l.b16 %v1662
        %v1729 = vunpack.c.l.b16 %v1663
        %v1730 = vunpack.c.l.b16 %v1664
        %v1731 = vunpack.c.l.b16 %v1665
        %v1732 = vunpack.c.l.b16 %v1666
        %v1733 = vunpack.c.l.b16 %v1667
        %v1734 = vunpack.c.l.b16 %v1668
        %v1735 = vunpack.c.l.b16 %v1669
        %v1736 = vunpack.c.l.b16 %v1670
        %v1737 = vunpack.c.l.b16 %v1671
        %v1738 = vunpack.c.l.b16 %v1672
        %v1739 = vunpack.c.l.b16 %v1673
        %v1740 = vpack.c.b16 %v1709, %v1708
        %v1741 = vpack.c.b16 %v1711, %v1710
        %v1742 = vpack.c.b16 %v1713, %v1712
        %v1743 = vpack.c.b16 %v1715, %v1714
        %v1744 = vpack.c.b16 %v1717, %v1716
        %v1745 = vpack.c.b16 %v1719, %v1718
        %v1746 = vpack.c.b16 %v1721, %v1720
        %v1747 = vpack.c.b16 %v1723, %v1722
        %v1748 = vpack.c.b16 %v1725, %v1724
        %v1749 = vpack.c.b16 %v1727, %v1726
        %v1750 = vpack.c.b16 %v1729, %v1728
        %v1751 = vpack.c.b16 %v1731, %v1730
        %v1752 = vpack.c.b16 %v1733, %v1732
        %v1753 = vpack.c.b16 %v1735, %v1734
        %v1754 = vpack.c.b16 %v1737, %v1736
        %v1755 = vpack.c.b16 %v1739, %v1738
        %v1757 = vsel %vm675, %v1740, 0
        %v1760 = vsel %vm675, %v1741, 0
        %v1763 = vsel %vm675, %v1742, 0
        %v1766 = vsel %vm675, %v1743, 0
        %v1769 = vsel %vm675, %v1744, 0
        %v1772 = vsel %vm675, %v1745, 0
        %v1775 = vsel %vm675, %v1746, 0
        %v1778 = vsel %vm675, %v1747, 0
        %v1781 = vsel %vm675, %v1748, 0
        %v1784 = vsel %vm675, %v1749, 0
        %v1787 = vsel %vm675, %v1750, 0
        %v1790 = vsel %vm675, %v1751, 0
        %v1793 = vsel %vm675, %v1752, 0
        %v1796 = vsel %vm675, %v1753, 0
        %v1799 = vsel %vm675, %v1754, 0
        %v1802 = vsel %vm675, %v1755, 0
        %v1805 = vsel %vm724, %v1675, 0
        %1807 = vmatprep.subr.bf16.mxu0 0
        %1808 = vmatpush1.bf16.msra.mxu0 %v1805
        %1809 = vmatprep.subr.bf16.mxu0 0
        %1810 = vmatpush1.bf16.msra.mxu0 0
        %1811 = vmatprep.subr.bf16.mxu0 0
        %1812 = vmatpush1.bf16.msra.mxu0 0
        %1813 = vmatprep.subr.bf16.mxu0 0
        %1814 = vmatpush1.bf16.msra.mxu0 0
        %1815 = vmatprep.subr.bf16.mxu0 0
        %1816 = vmatpush1.bf16.msra.mxu0 0
        %1817 = vmatprep.subr.bf16.mxu0 0
        %1818 = vmatpush1.bf16.msra.mxu0 0
        %1819 = vmatprep.subr.bf16.mxu0 0
        %1820 = vmatpush1.bf16.msra.mxu0 0
        %1821 = vmatprep.subr.bf16.mxu0 0
        %1822 = vmatpush1.bf16.msra.mxu0 0
        %1823 = vmatprep.subr.bf16.mxu0 0
        %1824 = vmatpush1.bf16.msra.mxu0 0
        %1825 = vmatprep.subr.bf16.mxu0 0
        %1826 = vmatpush1.bf16.msra.mxu0 0
        %1827 = vmatprep.subr.bf16.mxu0 0
        %1828 = vmatpush1.bf16.msra.mxu0 0
        %1829 = vmatprep.subr.bf16.mxu0 0
        %1830 = vmatpush1.bf16.msra.mxu0 0
        %1831 = vmatprep.subr.bf16.mxu0 0
        %1832 = vmatpush1.bf16.msra.mxu0 0
        %1833 = vmatprep.subr.bf16.mxu0 0
        %1834 = vmatpush1.bf16.msra.mxu0 0
        %1835 = vmatprep.subr.bf16.mxu0 0
        %1836 = vmatpush1.bf16.msra.mxu0 0
        %1837 = vmatprep.subr.bf16.mxu0 0
        %1838 = vmatpush1.bf16.msra.mxu0 0
        %1839 = vmatprep.mubr.bf16.mxu0 0
        %1840 = vmatmul.mubr.bf16.gmra.mrb[0].mxu0 %v1757
        %v1841 = vpop.f32.mrb[0].mxu0
        %v1842 = vadd.f32 0.0, %v1841
        %v1843 = vpop.f32.mrb[0].mxu0
        %v1844 = vpop.f32.mrb[0].mxu0
        %v1845 = vadd.f32 0.0, %v1844
        %v1846 = vpop.f32.mrb[0].mxu0
        %1847 = vmatprep.mubr.bf16.mxu0 0
        %1848 = vmatmul.mubr.bf16.gmra.mrb[0].mxu0 %v1760
        %v1849 = vpop.f32.mrb[0].mxu0
        %v1850 = vadd.f32 0.0, %v1849
        %v1851 = vpop.f32.mrb[0].mxu0
        %v1852 = vpop.f32.mrb[0].mxu0
        %v1853 = vadd.f32 0.0, %v1852
        %v1854 = vpop.f32.mrb[0].mxu0
        %1855 = vmatprep.mubr.bf16.mxu0 0
        %1856 = vmatmul.mubr.bf16.gmra.mrb[0].mxu0 %v1763
        %v1857 = vpop.f32.mrb[0].mxu0
        %v1858 = vadd.f32 0.0, %v1857
        %v1859 = vpop.f32.mrb[0].mxu0
        %v1860 = vpop.f32.mrb[0].mxu0
        %v1861 = vadd.f32 0.0, %v1860
        %v1862 = vpop.f32.mrb[0].mxu0
        %1863 = vmatprep.mubr.bf16.mxu0 0
        %1864 = vmatmul.mubr.bf16.gmra.mrb[0].mxu0 %v1766
        %v1865 = vpop.f32.mrb[0].mxu0
        %v1866 = vadd.f32 0.0, %v1865
        %v1867 = vpop.f32.mrb[0].mxu0
        %v1868 = vpop.f32.mrb[0].mxu0
        %v1869 = vadd.f32 0.0, %v1868
        %v1870 = vpop.f32.mrb[0].mxu0
        %1871 = vmatprep.mubr.bf16.mxu0 0
        %1872 = vmatmul.mubr.bf16.gmra.mrb[0].mxu0 %v1769
        %v1873 = vpop.f32.mrb[0].mxu0
        %v1874 = vadd.f32 0.0, %v1873
        %v1875 = vpop.f32.mrb[0].mxu0
        %v1876 = vpop.f32.mrb[0].mxu0
        %v1877 = vadd.f32 0.0, %v1876
        %v1878 = vpop.f32.mrb[0].mxu0
        %1879 = vmatprep.mubr.bf16.mxu0 0
        %1880 = vmatmul.mubr.bf16.gmra.mrb[0].mxu0 %v1772
        %v1881 = vpop.f32.mrb[0].mxu0
        %v1882 = vadd.f32 0.0, %v1881
        %v1883 = vpop.f32.mrb[0].mxu0
        %v1884 = vpop.f32.mrb[0].mxu0
        %v1885 = vadd.f32 0.0, %v1884
        %v1886 = vpop.f32.mrb[0].mxu0
        %1887 = vmatprep.mubr.bf16.mxu0 0
        %1888 = vmatmul.mubr.bf16.gmra.mrb[0].mxu0 %v1775
        %v1889 = vpop.f32.mrb[0].mxu0
        %v1890 = vadd.f32 0.0, %v1889
        %v1891 = vpop.f32.mrb[0].mxu0
        %v1892 = vpop.f32.mrb[0].mxu0
        %v1893 = vadd.f32 0.0, %v1892
        %v1894 = vpop.f32.mrb[0].mxu0
        %1895 = vmatprep.mubr.bf16.mxu0 0
        %1896 = vmatmul.mubr.bf16.gmra.mrb[0].mxu0 %v1778
        %v1897 = vpop.f32.mrb[0].mxu0
        %v1898 = vadd.f32 0.0, %v1897
        %v1899 = vpop.f32.mrb[0].mxu0
        %v1900 = vpop.f32.mrb[0].mxu0
        %v1901 = vadd.f32 0.0, %v1900
        %v1902 = vpop.f32.mrb[0].mxu0
        %1903 = vmatprep.mubr.bf16.mxu0 0
        %1904 = vmatmul.mubr.bf16.gmra.mrb[0].mxu0 %v1781
        %v1905 = vpop.f32.mrb[0].mxu0
        %v1906 = vadd.f32 0.0, %v1905
        %v1907 = vpop.f32.mrb[0].mxu0
        %v1908 = vpop.f32.mrb[0].mxu0
        %v1909 = vadd.f32 0.0, %v1908
        %v1910 = vpop.f32.mrb[0].mxu0
        %1911 = vmatprep.mubr.bf16.mxu0 0
        %1912 = vmatmul.mubr.bf16.gmra.mrb[0].mxu0 %v1784
        %v1913 = vpop.f32.mrb[0].mxu0
        %v1914 = vadd.f32 0.0, %v1913
        %v1915 = vpop.f32.mrb[0].mxu0
        %v1916 = vpop.f32.mrb[0].mxu0
        %v1917 = vadd.f32 0.0, %v1916
        %v1918 = vpop.f32.mrb[0].mxu0
        %1919 = vmatprep.mubr.bf16.mxu0 0
        %1920 = vmatmul.mubr.bf16.gmra.mrb[0].mxu0 %v1787
        %v1921 = vpop.f32.mrb[0].mxu0
        %v1922 = vadd.f32 0.0, %v1921
        %v1923 = vpop.f32.mrb[0].mxu0
        %v1924 = vpop.f32.mrb[0].mxu0
        %v1925 = vadd.f32 0.0, %v1924
        %v1926 = vpop.f32.mrb[0].mxu0
        %1927 = vmatprep.mubr.bf16.mxu0 0
        %1928 = vmatmul.mubr.bf16.gmra.mrb[0].mxu0 %v1790
        %v1929 = vpop.f32.mrb[0].mxu0
        %v1930 = vadd.f32 0.0, %v1929
        %v1931 = vpop.f32.mrb[0].mxu0
        %v1932 = vpop.f32.mrb[0].mxu0
        %v1933 = vadd.f32 0.0, %v1932
        %v1934 = vpop.f32.mrb[0].mxu0
        %1935 = vmatprep.mubr.bf16.mxu0 0
        %1936 = vmatmul.mubr.bf16.gmra.mrb[0].mxu0 %v1793
        %v1937 = vpop.f32.mrb[0].mxu0
        %v1938 = vadd.f32 0.0, %v1937
        %v1939 = vpop.f32.mrb[0].mxu0
        %v1940 = vpop.f32.mrb[0].mxu0
        %v1941 = vadd.f32 0.0, %v1940
        %v1942 = vpop.f32.mrb[0].mxu0
        %1943 = vmatprep.mubr.bf16.mxu0 0
        %1944 = vmatmul.mubr.bf16.gmra.mrb[0].mxu0 %v1796
        %v1945 = vpop.f32.mrb[0].mxu0
        %v1946 = vadd.f32 0.0, %v1945
        %v1947 = vpop.f32.mrb[0].mxu0
        %v1948 = vpop.f32.mrb[0].mxu0
        %v1949 = vadd.f32 0.0, %v1948
        %v1950 = vpop.f32.mrb[0].mxu0
        %1951 = vmatprep.mubr.bf16.mxu0 0
        %1952 = vmatmul.mubr.bf16.gmra.mrb[0].mxu0 %v1799
        %v1953 = vpop.f32.mrb[0].mxu0
        %v1954 = vadd.f32 0.0, %v1953
        %v1955 = vpop.f32.mrb[0].mxu0
        %v1956 = vpop.f32.mrb[0].mxu0
        %v1957 = vadd.f32 0.0, %v1956
        %v1958 = vpop.f32.mrb[0].mxu0
        %1959 = vmatprep.mubr.bf16.mxu0 0
        %1960 = vmatmul.mubr.bf16.gmra.mrb[0].mxu0 %v1802
        %v1961 = vpop.f32.mrb[0].mxu0
        %v1962 = vadd.f32 0.0, %v1961
        %v1963 = vpop.f32.mrb[0].mxu0
        %v1964 = vpop.f32.mrb[0].mxu0
        %v1965 = vadd.f32 0.0, %v1964
        %v1966 = vpop.f32.mrb[0].mxu0
        %1967 = vdwg.mxu0
        %v1968 = vadd.f32 %v1606, %v1842
        %v1969 = vadd.f32 %v1607, %v1845
        %v1970 = vadd.f32 %v1608, %v1850
        %v1971 = vadd.f32 %v1609, %v1853
        %v1972 = vadd.f32 %v1610, %v1858
        %v1973 = vadd.f32 %v1611, %v1861
        %v1974 = vadd.f32 %v1612, %v1866
        %v1975 = vadd.f32 %v1613, %v1869
        %v1976 = vadd.f32 %v1614, %v1874
        %v1977 = vadd.f32 %v1615, %v1877
        %v1978 = vadd.f32 %v1616, %v1882
        %v1979 = vadd.f32 %v1617, %v1885
        %v1980 = vadd.f32 %v1618, %v1890
        %v1981 = vadd.f32 %v1619, %v1893
        %v1982 = vadd.f32 %v1620, %v1898
        %v1983 = vadd.f32 %v1621, %v1901
        %v1984 = vadd.f32 %v1622, %v1906
        %v1985 = vadd.f32 %v1623, %v1909
        %v1986 = vadd.f32 %v1624, %v1914
        %v1987 = vadd.f32 %v1625, %v1917
        %v1988 = vadd.f32 %v1626, %v1922
        %v1989 = vadd.f32 %v1627, %v1925
        %v1990 = vadd.f32 %v1628, %v1930
        %v1991 = vadd.f32 %v1629, %v1933
        %v1992 = vadd.f32 %v1630, %v1938
        %v1993 = vadd.f32 %v1631, %v1941
        %v1994 = vadd.f32 %v1632, %v1946
        %v1995 = vadd.f32 %v1633, %v1949
        %v1996 = vadd.f32 %v1634, %v1954
        %v1997 = vadd.f32 %v1635, %v1957
        %v1998 = vadd.f32 %v1636, %v1962
        %v1999 = vadd.f32 %v1637, %v1965
        %v2000 = vld [vmem:[%s1641] sm:$0xf]
        %v2001 = vld [vmem:[%s1641 + $0x4] sm:$0xf]
        %v2002 = vld [vmem:[%s1641 + $0x8] sm:$0x1]
        %v2003 = vld [vmem:[%s1641 + $0xc] sm:$0xf]
        %v2004 = vld [vmem:[%s1641 + $0x10] sm:$0xf]
        %v2005 = vld [vmem:[%s1641 + $0x14] sm:$0x1]
        %v2006 = vld [vmem:[%s1641 + $0x18] sm:$0xf]
        %v2007 = vld [vmem:[%s1641 + $0x1c] sm:$0xf]
        %v2008 = vld [vmem:[%s1641 + $0x20] sm:$0x1]
        %v2009 = vld [vmem:[%s1641 + $0x24] sm:$0xf]
        %v2010 = vld [vmem:[%s1641 + $0x28] sm:$0xf]
        %v2011 = vld [vmem:[%s1641 + $0x2c] sm:$0x1]
        %v2012 = vld [vmem:[%s1641 + $0x30] sm:$0xf]
        %v2013 = vld [vmem:[%s1641 + $0x34] sm:$0xf]
        %v2014 = vld [vmem:[%s1641 + $0x38] sm:$0x1]
        %v2015 = vld [vmem:[%s1641 + $0x3c] sm:$0xf]
        %v2016 = vld [vmem:[%s1641 + $0x40] sm:$0xf]
        %v2017 = vld [vmem:[%s1641 + $0x44] sm:$0x1]
        %v2018 = vld [vmem:[%s1641 + $0x48] sm:$0xf]
        %v2019 = vld [vmem:[%s1641 + $0x4c] sm:$0xf]
        %v2020 = vld [vmem:[%s1641 + $0x50] sm:$0x1]
        %v2021 = vld [vmem:[%s1641 + $0x54] sm:$0xf]
        %v2022 = vld [vmem:[%s1641 + $0x58] sm:$0xf]
        %v2023 = vld [vmem:[%s1641 + $0x5c] sm:$0x1]
        %v2024 = vld [vmem:[%s1641 + $0x60] sm:$0xf]
        %v2025 = vld [vmem:[%s1641 + $0x64] sm:$0xf]
        %v2026 = vld [vmem:[%s1641 + $0x68] sm:$0x1]
        %v2027 = vld [vmem:[%s1641 + $0x6c] sm:$0xf]
        %v2028 = vld [vmem:[%s1641 + $0x70] sm:$0xf]
        %v2029 = vld [vmem:[%s1641 + $0x74] sm:$0x1]
        %v2030 = vld [vmem:[%s1641 + $0x78] sm:$0xf]
        %v2031 = vld [vmem:[%s1641 + $0x7c] sm:$0xf]
        %v2032 = vld [vmem:[%s1641 + $0x80] sm:$0x1]
        %v2033 = vld [vmem:[%s1641 + $0x84] sm:$0xf]
        %v2034 = vld [vmem:[%s1641 + $0x88] sm:$0xf]
        %v2035 = vld [vmem:[%s1641 + $0x8c] sm:$0x1]
        %v2036 = vld [vmem:[%s1641 + $0x90] sm:$0xf]
        %v2037 = vld [vmem:[%s1641 + $0x94] sm:$0xf]
        %v2038 = vld [vmem:[%s1641 + $0x98] sm:$0x1]
        %v2039 = vld [vmem:[%s1641 + $0x9c] sm:$0xf]
        %v2040 = vld [vmem:[%s1641 + $0xa0] sm:$0xf]
        %v2041 = vld [vmem:[%s1641 + $0xa4] sm:$0x1]
        %v2042 = vld [vmem:[%s1641 + $0xa8] sm:$0xf]
        %v2043 = vld [vmem:[%s1641 + $0xac] sm:$0xf]
        %v2044 = vld [vmem:[%s1641 + $0xb0] sm:$0x1]
        %v2045 = vld [vmem:[%s1641 + $0xb4] sm:$0xf]
        %v2046 = vld [vmem:[%s1641 + $0xb8] sm:$0xf]
        %v2047 = vld [vmem:[%s1641 + $0xbc] sm:$0x1]
        %v2049 = vshrl.u32 %v2000, 16
        %v2051 = vrot.slane %v2049, 4
        %v2052 = vshll.u32 %v2000, 16
        %v2054 = vrot.slane %v2052, 5
        %v2055 = vor.u32 %v2051, %v2054
        %v2056 = vrot.slane %v2055, 4
        %v2058 = vshll.u32 %v2001, 16
        %v2060 = vrot.slane %v2058, 5
        %v2061 = vsel %vm240, %v2056, %v2060
        %v2062 = vshrl.u32 %v2001, 16
        %v2064 = vrot.slane %v2062, 4
        %v2065 = vor.u32 %v2064, %v2060
        %v2066 = vrot.slane %v2065, 4
        %v2068 = vshll.u32 %v2002, 16
        %v2070 = vrot.slane %v2068, 5
        %v2071 = vsel %vm240, %v2066, %v2070
        %v2073 = vshrl.u32 %v2003, 16
        %v2075 = vrot.slane %v2073, 4
        %v2076 = vshll.u32 %v2003, 16
        %v2078 = vrot.slane %v2076, 5
        %v2079 = vor.u32 %v2075, %v2078
        %v2080 = vrot.slane %v2079, 4
        %v2082 = vshll.u32 %v2004, 16
        %v2084 = vrot.slane %v2082, 5
        %v2085 = vsel %vm240, %v2080, %v2084
        %v2086 = vshrl.u32 %v2004, 16
        %v2088 = vrot.slane %v2086, 4
        %v2089 = vor.u32 %v2088, %v2084
        %v2090 = vrot.slane %v2089, 4
        %v2092 = vshll.u32 %v2005, 16
        %v2094 = vrot.slane %v2092, 5
        %v2095 = vsel %vm240, %v2090, %v2094
        %v2097 = vshrl.u32 %v2006, 16
        %v2099 = vrot.slane %v2097, 4
        %v2100 = vshll.u32 %v2006, 16
        %v2102 = vrot.slane %v2100, 5
        %v2103 = vor.u32 %v2099, %v2102
        %v2104 = vrot.slane %v2103, 4
        %v2106 = vshll.u32 %v2007, 16
        %v2108 = vrot.slane %v2106, 5
        %v2109 = vsel %vm240, %v2104, %v2108
        %v2110 = vshrl.u32 %v2007, 16
        %v2112 = vrot.slane %v2110, 4
        %v2113 = vor.u32 %v2112, %v2108
        %v2114 = vrot.slane %v2113, 4
        %v2116 = vshll.u32 %v2008, 16
        %v2118 = vrot.slane %v2116, 5
        %v2119 = vsel %vm240, %v2114, %v2118
        %v2121 = vshrl.u32 %v2009, 16
        %v2123 = vrot.slane %v2121, 4
        %v2124 = vshll.u32 %v2009, 16
        %v2126 = vrot.slane %v2124, 5
        %v2127 = vor.u32 %v2123, %v2126
        %v2128 = vrot.slane %v2127, 4
        %v2130 = vshll.u32 %v2010, 16
        %v2132 = vrot.slane %v2130, 5
        %v2133 = vsel %vm240, %v2128, %v2132
        %v2134 = vshrl.u32 %v2010, 16
        %v2136 = vrot.slane %v2134, 4
        %v2137 = vor.u32 %v2136, %v2132
        %v2138 = vrot.slane %v2137, 4
        %v2140 = vshll.u32 %v2011, 16
        %v2142 = vrot.slane %v2140, 5
        %v2143 = vsel %vm240, %v2138, %v2142
        %v2145 = vshrl.u32 %v2012, 16
        %v2147 = vrot.slane %v2145, 4
        %v2148 = vshll.u32 %v2012, 16
        %v2150 = vrot.slane %v2148, 5
        %v2151 = vor.u32 %v2147, %v2150
        %v2152 = vrot.slane %v2151, 4
        %v2154 = vshll.u32 %v2013, 16
        %v2156 = vrot.slane %v2154, 5
        %v2157 = vsel %vm240, %v2152, %v2156
        %v2158 = vshrl.u32 %v2013, 16
        %v2160 = vrot.slane %v2158, 4
        %v2161 = vor.u32 %v2160, %v2156
        %v2162 = vrot.slane %v2161, 4
        %v2164 = vshll.u32 %v2014, 16
        %v2166 = vrot.slane %v2164, 5
        %v2167 = vsel %vm240, %v2162, %v2166
        %v2169 = vshrl.u32 %v2015, 16
        %v2171 = vrot.slane %v2169, 4
        %v2172 = vshll.u32 %v2015, 16
        %v2174 = vrot.slane %v2172, 5
        %v2175 = vor.u32 %v2171, %v2174
        %v2176 = vrot.slane %v2175, 4
        %v2178 = vshll.u32 %v2016, 16
        %v2180 = vrot.slane %v2178, 5
        %v2181 = vsel %vm240, %v2176, %v2180
        %v2182 = vshrl.u32 %v2016, 16
        %v2184 = vrot.slane %v2182, 4
        %v2185 = vor.u32 %v2184, %v2180
        %v2186 = vrot.slane %v2185, 4
        %v2188 = vshll.u32 %v2017, 16
        %v2190 = vrot.slane %v2188, 5
        %v2191 = vsel %vm240, %v2186, %v2190
        %v2193 = vshrl.u32 %v2018, 16
        %v2195 = vrot.slane %v2193, 4
        %v2196 = vshll.u32 %v2018, 16
        %v2198 = vrot.slane %v2196, 5
        %v2199 = vor.u32 %v2195, %v2198
        %v2200 = vrot.slane %v2199, 4
        %v2202 = vshll.u32 %v2019, 16
        %v2204 = vrot.slane %v2202, 5
        %v2205 = vsel %vm240, %v2200, %v2204
        %v2206 = vshrl.u32 %v2019, 16
        %v2208 = vrot.slane %v2206, 4
        %v2209 = vor.u32 %v2208, %v2204
        %v2210 = vrot.slane %v2209, 4
        %v2212 = vshll.u32 %v2020, 16
        %v2214 = vrot.slane %v2212, 5
        %v2215 = vsel %vm240, %v2210, %v2214
        %v2217 = vshrl.u32 %v2021, 16
        %v2219 = vrot.slane %v2217, 4
        %v2220 = vshll.u32 %v2021, 16
        %v2222 = vrot.slane %v2220, 5
        %v2223 = vor.u32 %v2219, %v2222
        %v2224 = vrot.slane %v2223, 4
        %v2226 = vshll.u32 %v2022, 16
        %v2228 = vrot.slane %v2226, 5
        %v2229 = vsel %vm240, %v2224, %v2228
        %v2230 = vshrl.u32 %v2022, 16
        %v2232 = vrot.slane %v2230, 4
        %v2233 = vor.u32 %v2232, %v2228
        %v2234 = vrot.slane %v2233, 4
        %v2236 = vshll.u32 %v2023, 16
        %v2238 = vrot.slane %v2236, 5
        %v2239 = vsel %vm240, %v2234, %v2238
        %v2241 = vshrl.u32 %v2024, 16
        %v2243 = vrot.slane %v2241, 4
        %v2244 = vshll.u32 %v2024, 16
        %v2246 = vrot.slane %v2244, 5
        %v2247 = vor.u32 %v2243, %v2246
        %v2248 = vrot.slane %v2247, 4
        %v2250 = vshll.u32 %v2025, 16
        %v2252 = vrot.slane %v2250, 5
        %v2253 = vsel %vm240, %v2248, %v2252
        %v2254 = vshrl.u32 %v2025, 16
        %v2256 = vrot.slane %v2254, 4
        %v2257 = vor.u32 %v2256, %v2252
        %v2258 = vrot.slane %v2257, 4
        %v2260 = vshll.u32 %v2026, 16
        %v2262 = vrot.slane %v2260, 5
        %v2263 = vsel %vm240, %v2258, %v2262
        %v2265 = vshrl.u32 %v2027, 16
        %v2267 = vrot.slane %v2265, 4
        %v2268 = vshll.u32 %v2027, 16
        %v2270 = vrot.slane %v2268, 5
        %v2271 = vor.u32 %v2267, %v2270
        %v2272 = vrot.slane %v2271, 4
        %v2274 = vshll.u32 %v2028, 16
        %v2276 = vrot.slane %v2274, 5
        %v2277 = vsel %vm240, %v2272, %v2276
        %v2278 = vshrl.u32 %v2028, 16
        %v2280 = vrot.slane %v2278, 4
        %v2281 = vor.u32 %v2280, %v2276
        %v2282 = vrot.slane %v2281, 4
        %v2284 = vshll.u32 %v2029, 16
        %v2286 = vrot.slane %v2284, 5
        %v2287 = vsel %vm240, %v2282, %v2286
        %v2289 = vshrl.u32 %v2030, 16
        %v2291 = vrot.slane %v2289, 4
        %v2292 = vshll.u32 %v2030, 16
        %v2294 = vrot.slane %v2292, 5
        %v2295 = vor.u32 %v2291, %v2294
        %v2296 = vrot.slane %v2295, 4
        %v2298 = vshll.u32 %v2031, 16
        %v2300 = vrot.slane %v2298, 5
        %v2301 = vsel %vm240, %v2296, %v2300
        %v2302 = vshrl.u32 %v2031, 16
        %v2304 = vrot.slane %v2302, 4
        %v2305 = vor.u32 %v2304, %v2300
        %v2306 = vrot.slane %v2305, 4
        %v2308 = vshll.u32 %v2032, 16
        %v2310 = vrot.slane %v2308, 5
        %v2311 = vsel %vm240, %v2306, %v2310
        %v2313 = vshrl.u32 %v2033, 16
        %v2315 = vrot.slane %v2313, 4
        %v2316 = vshll.u32 %v2033, 16
        %v2318 = vrot.slane %v2316, 5
        %v2319 = vor.u32 %v2315, %v2318
        %v2320 = vrot.slane %v2319, 4
        %v2322 = vshll.u32 %v2034, 16
        %v2324 = vrot.slane %v2322, 5
        %v2325 = vsel %vm240, %v2320, %v2324
        %v2326 = vshrl.u32 %v2034, 16
        %v2328 = vrot.slane %v2326, 4
        %v2329 = vor.u32 %v2328, %v2324
        %v2330 = vrot.slane %v2329, 4
        %v2332 = vshll.u32 %v2035, 16
        %v2334 = vrot.slane %v2332, 5
        %v2335 = vsel %vm240, %v2330, %v2334
        %v2337 = vshrl.u32 %v2036, 16
        %v2339 = vrot.slane %v2337, 4
        %v2340 = vshll.u32 %v2036, 16
        %v2342 = vrot.slane %v2340, 5
        %v2343 = vor.u32 %v2339, %v2342
        %v2344 = vrot.slane %v2343, 4
        %v2346 = vshll.u32 %v2037, 16
        %v2348 = vrot.slane %v2346, 5
        %v2349 = vsel %vm240, %v2344, %v2348
        %v2350 = vshrl.u32 %v2037, 16
        %v2352 = vrot.slane %v2350, 4
        %v2353 = vor.u32 %v2352, %v2348
        %v2354 = vrot.slane %v2353, 4
        %v2356 = vshll.u32 %v2038, 16
        %v2358 = vrot.slane %v2356, 5
        %v2359 = vsel %vm240, %v2354, %v2358
        %v2361 = vshrl.u32 %v2039, 16
        %v2363 = vrot.slane %v2361, 4
        %v2364 = vshll.u32 %v2039, 16
        %v2366 = vrot.slane %v2364, 5
        %v2367 = vor.u32 %v2363, %v2366
        %v2368 = vrot.slane %v2367, 4
        %v2370 = vshll.u32 %v2040, 16
        %v2372 = vrot.slane %v2370, 5
        %v2373 = vsel %vm240, %v2368, %v2372
        %v2374 = vshrl.u32 %v2040, 16
        %v2376 = vrot.slane %v2374, 4
        %v2377 = vor.u32 %v2376, %v2372
        %v2378 = vrot.slane %v2377, 4
        %v2380 = vshll.u32 %v2041, 16
        %v2382 = vrot.slane %v2380, 5
        %v2383 = vsel %vm240, %v2378, %v2382
        %v2385 = vshrl.u32 %v2042, 16
        %v2387 = vrot.slane %v2385, 4
        %v2388 = vshll.u32 %v2042, 16
        %v2390 = vrot.slane %v2388, 5
        %v2391 = vor.u32 %v2387, %v2390
        %v2392 = vrot.slane %v2391, 4
        %v2394 = vshll.u32 %v2043, 16
        %v2396 = vrot.slane %v2394, 5
        %v2397 = vsel %vm240, %v2392, %v2396
        %v2398 = vshrl.u32 %v2043, 16
        %v2400 = vrot.slane %v2398, 4
        %v2401 = vor.u32 %v2400, %v2396
        %v2402 = vrot.slane %v2401, 4
        %v2404 = vshll.u32 %v2044, 16
        %v2406 = vrot.slane %v2404, 5
        %v2407 = vsel %vm240, %v2402, %v2406
        %v2409 = vshrl.u32 %v2045, 16
        %v2411 = vrot.slane %v2409, 4
        %v2412 = vshll.u32 %v2045, 16
        %v2414 = vrot.slane %v2412, 5
        %v2415 = vor.u32 %v2411, %v2414
        %v2416 = vrot.slane %v2415, 4
        %v2418 = vshll.u32 %v2046, 16
        %v2420 = vrot.slane %v2418, 5
        %v2421 = vsel %vm240, %v2416, %v2420
        %v2422 = vshrl.u32 %v2046, 16
        %v2424 = vrot.slane %v2422, 4
        %v2425 = vor.u32 %v2424, %v2420
        %v2426 = vrot.slane %v2425, 4
        %v2428 = vshll.u32 %v2047, 16
        %v2430 = vrot.slane %v2428, 5
        %v2431 = vsel %vm240, %v2426, %v2430
        %s2432 = scalar_lea.vmem %s1, 8
        %v2433 = vld [vmem:[%s2432] sm:$0x3]
        %v2434 = vunpack.c.l.b16 %v2061
        %v2435 = vunpack.c.l.b16 %v2071
        %v2436 = vunpack.c.l.b16 %v2085
        %v2437 = vunpack.c.l.b16 %v2095
        %v2438 = vunpack.c.l.b16 %v2109
        %v2439 = vunpack.c.l.b16 %v2119
        %v2440 = vunpack.c.l.b16 %v2133
        %v2441 = vunpack.c.l.b16 %v2143
        %v2442 = vunpack.c.l.b16 %v2157
        %v2443 = vunpack.c.l.b16 %v2167
        %v2444 = vunpack.c.l.b16 %v2181
        %v2445 = vunpack.c.l.b16 %v2191
        %v2446 = vunpack.c.l.b16 %v2205
        %v2447 = vunpack.c.l.b16 %v2215
        %v2448 = vunpack.c.l.b16 %v2229
        %v2449 = vunpack.c.l.b16 %v2239
        %v2450 = vunpack.c.l.b16 %v2253
        %v2451 = vunpack.c.l.b16 %v2263
        %v2452 = vunpack.c.l.b16 %v2277
        %v2453 = vunpack.c.l.b16 %v2287
        %v2454 = vunpack.c.l.b16 %v2301
        %v2455 = vunpack.c.l.b16 %v2311
        %v2456 = vunpack.c.l.b16 %v2325
        %v2457 = vunpack.c.l.b16 %v2335
        %v2458 = vunpack.c.l.b16 %v2349
        %v2459 = vunpack.c.l.b16 %v2359
        %v2460 = vunpack.c.l.b16 %v2373
        %v2461 = vunpack.c.l.b16 %v2383
        %v2462 = vunpack.c.l.b16 %v2397
        %v2463 = vunpack.c.l.b16 %v2407
        %v2464 = vunpack.c.l.b16 %v2421
        %v2465 = vunpack.c.l.b16 %v2431
        %v2466 = vpack.c.b16 %v2435, %v2434
        %v2467 = vpack.c.b16 %v2437, %v2436
        %v2468 = vpack.c.b16 %v2439, %v2438
        %v2469 = vpack.c.b16 %v2441, %v2440
        %v2470 = vpack.c.b16 %v2443, %v2442
        %v2471 = vpack.c.b16 %v2445, %v2444
        %v2472 = vpack.c.b16 %v2447, %v2446
        %v2473 = vpack.c.b16 %v2449, %v2448
        %v2474 = vpack.c.b16 %v2451, %v2450
        %v2475 = vpack.c.b16 %v2453, %v2452
        %v2476 = vpack.c.b16 %v2455, %v2454
        %v2477 = vpack.c.b16 %v2457, %v2456
        %v2478 = vpack.c.b16 %v2459, %v2458
        %v2479 = vpack.c.b16 %v2461, %v2460
        %v2480 = vpack.c.b16 %v2463, %v2462
        %v2481 = vpack.c.b16 %v2465, %v2464
        %v2483 = vsel %vm675, %v2466, 0
        %v2486 = vsel %vm675, %v2467, 0
        %v2489 = vsel %vm675, %v2468, 0
        %v2492 = vsel %vm675, %v2469, 0
        %v2495 = vsel %vm675, %v2470, 0
        %v2498 = vsel %vm675, %v2471, 0
        %v2501 = vsel %vm675, %v2472, 0
        %v2504 = vsel %vm675, %v2473, 0
        %v2507 = vsel %vm675, %v2474, 0
        %v2510 = vsel %vm675, %v2475, 0
        %v2513 = vsel %vm675, %v2476, 0
        %v2516 = vsel %vm675, %v2477, 0
        %v2519 = vsel %vm675, %v2478, 0
        %v2522 = vsel %vm675, %v2479, 0
        %v2525 = vsel %vm675, %v2480, 0
        %v2528 = vsel %vm675, %v2481, 0
        %v2531 = vsel %vm724, %v2433, 0
        %2533 = vmatprep.subr.bf16.mxu0 0
        %2534 = vmatpush1.bf16.msra.mxu0 %v2531
        %2535 = vmatprep.subr.bf16.mxu0 0
        %2536 = vmatpush1.bf16.msra.mxu0 0
        %2537 = vmatprep.subr.bf16.mxu0 0
        %2538 = vmatpush1.bf16.msra.mxu0 0
        %2539 = vmatprep.subr.bf16.mxu0 0
        %2540 = vmatpush1.bf16.msra.mxu0 0
        %2541 = vmatprep.subr.bf16.mxu0 0
        %2542 = vmatpush1.bf16.msra.mxu0 0
        %2543 = vmatprep.subr.bf16.mxu0 0
        %2544 = vmatpush1.bf16.msra.mxu0 0
        %2545 = vmatprep.subr.bf16.mxu0 0
        %2546 = vmatpush1.bf16.msra.mxu0 0
        %2547 = vmatprep.subr.bf16.mxu0 0
        %2548 = vmatpush1.bf16.msra.mxu0 0
        %2549 = vmatprep.subr.bf16.mxu0 0
        %2550 = vmatpush1.bf16.msra.mxu0 0
        %2551 = vmatprep.subr.bf16.mxu0 0
        %2552 = vmatpush1.bf16.msra.mxu0 0
        %2553 = vmatprep.subr.bf16.mxu0 0
        %2554 = vmatpush1.bf16.msra.mxu0 0
        %2555 = vmatprep.subr.bf16.mxu0 0
        %2556 = vmatpush1.bf16.msra.mxu0 0
        %2557 = vmatprep.subr.bf16.mxu0 0
        %2558 = vmatpush1.bf16.msra.mxu0 0
        %2559 = vmatprep.subr.bf16.mxu0 0
        %2560 = vmatpush1.bf16.msra.mxu0 0
        %2561 = vmatprep.subr.bf16.mxu0 0
        %2562 = vmatpush1.bf16.msra.mxu0 0
        %2563 = vmatprep.subr.bf16.mxu0 0
        %2564 = vmatpush1.bf16.msra.mxu0 0
        %2565 = vmatprep.mubr.bf16.mxu0 0
        %2566 = vmatmul.mubr.bf16.gmra.mrb[0].mxu0 %v2483
        %v2567 = vpop.f32.mrb[0].mxu0
        %v2568 = vadd.f32 0.0, %v2567
        %v2569 = vpop.f32.mrb[0].mxu0
        %v2570 = vpop.f32.mrb[0].mxu0
        %v2571 = vadd.f32 0.0, %v2570
        %v2572 = vpop.f32.mrb[0].mxu0
        %2573 = vmatprep.mubr.bf16.mxu0 0
        %2574 = vmatmul.mubr.bf16.gmra.mrb[0].mxu0 %v2486
        %v2575 = vpop.f32.mrb[0].mxu0
        %v2576 = vadd.f32 0.0, %v2575
        %v2577 = vpop.f32.mrb[0].mxu0
        %v2578 = vpop.f32.mrb[0].mxu0
        %v2579 = vadd.f32 0.0, %v2578
        %v2580 = vpop.f32.mrb[0].mxu0
        %2581 = vmatprep.mubr.bf16.mxu0 0
        %2582 = vmatmul.mubr.bf16.gmra.mrb[0].mxu0 %v2489
        %v2583 = vpop.f32.mrb[0].mxu0
        %v2584 = vadd.f32 0.0, %v2583
        %v2585 = vpop.f32.mrb[0].mxu0
        %v2586 = vpop.f32.mrb[0].mxu0
        %v2587 = vadd.f32 0.0, %v2586
        %v2588 = vpop.f32.mrb[0].mxu0
        %2589 = vmatprep.mubr.bf16.mxu0 0
        %2590 = vmatmul.mubr.bf16.gmra.mrb[0].mxu0 %v2492
        %v2591 = vpop.f32.mrb[0].mxu0
        %v2592 = vadd.f32 0.0, %v2591
        %v2593 = vpop.f32.mrb[0].mxu0
        %v2594 = vpop.f32.mrb[0].mxu0
        %v2595 = vadd.f32 0.0, %v2594
        %v2596 = vpop.f32.mrb[0].mxu0
        %2597 = vmatprep.mubr.bf16.mxu0 0
        %2598 = vmatmul.mubr.bf16.gmra.mrb[0].mxu0 %v2495
        %v2599 = vpop.f32.mrb[0].mxu0
        %v2600 = vadd.f32 0.0, %v2599
        %v2601 = vpop.f32.mrb[0].mxu0
        %v2602 = vpop.f32.mrb[0].mxu0
        %v2603 = vadd.f32 0.0, %v2602
        %v2604 = vpop.f32.mrb[0].mxu0
        %2605 = vmatprep.mubr.bf16.mxu0 0
        %2606 = vmatmul.mubr.bf16.gmra.mrb[0].mxu0 %v2498
        %v2607 = vpop.f32.mrb[0].mxu0
        %v2608 = vadd.f32 0.0, %v2607
        %v2609 = vpop.f32.mrb[0].mxu0
        %v2610 = vpop.f32.mrb[0].mxu0
        %v2611 = vadd.f32 0.0, %v2610
        %v2612 = vpop.f32.mrb[0].mxu0
        %2613 = vmatprep.mubr.bf16.mxu0 0
        %2614 = vmatmul.mubr.bf16.gmra.mrb[0].mxu0 %v2501
        %v2615 = vpop.f32.mrb[0].mxu0
        %v2616 = vadd.f32 0.0, %v2615
        %v2617 = vpop.f32.mrb[0].mxu0
        %v2618 = vpop.f32.mrb[0].mxu0
        %v2619 = vadd.f32 0.0, %v2618
        %v2620 = vpop.f32.mrb[0].mxu0
        %2621 = vmatprep.mubr.bf16.mxu0 0
        %2622 = vmatmul.mubr.bf16.gmra.mrb[0].mxu0 %v2504
        %v2623 = vpop.f32.mrb[0].mxu0
        %v2624 = vadd.f32 0.0, %v2623
        %v2625 = vpop.f32.mrb[0].mxu0
        %v2626 = vpop.f32.mrb[0].mxu0
        %v2627 = vadd.f32 0.0, %v2626
        %v2628 = vpop.f32.mrb[0].mxu0
        %2629 = vmatprep.mubr.bf16.mxu0 0
        %2630 = vmatmul.mubr.bf16.gmra.mrb[0].mxu0 %v2507
        %v2631 = vpop.f32.mrb[0].mxu0
        %v2632 = vadd.f32 0.0, %v2631
        %v2633 = vpop.f32.mrb[0].mxu0
        %v2634 = vpop.f32.mrb[0].mxu0
        %v2635 = vadd.f32 0.0, %v2634
        %v2636 = vpop.f32.mrb[0].mxu0
        %2637 = vmatprep.mubr.bf16.mxu0 0
        %2638 = vmatmul.mubr.bf16.gmra.mrb[0].mxu0 %v2510
        %v2639 = vpop.f32.mrb[0].mxu0
        %v2640 = vadd.f32 0.0, %v2639
        %v2641 = vpop.f32.mrb[0].mxu0
        %v2642 = vpop.f32.mrb[0].mxu0
        %v2643 = vadd.f32 0.0, %v2642
        %v2644 = vpop.f32.mrb[0].mxu0
        %2645 = vmatprep.mubr.bf16.mxu0 0
        %2646 = vmatmul.mubr.bf16.gmra.mrb[0].mxu0 %v2513
        %v2647 = vpop.f32.mrb[0].mxu0
        %v2648 = vadd.f32 0.0, %v2647
        %v2649 = vpop.f32.mrb[0].mxu0
        %v2650 = vpop.f32.mrb[0].mxu0
        %v2651 = vadd.f32 0.0, %v2650
        %v2652 = vpop.f32.mrb[0].mxu0
        %2653 = vmatprep.mubr.bf16.mxu0 0
        %2654 = vmatmul.mubr.bf16.gmra.mrb[0].mxu0 %v2516
        %v2655 = vpop.f32.mrb[0].mxu0
        %v2656 = vadd.f32 0.0, %v2655
        %v2657 = vpop.f32.mrb[0].mxu0
        %v2658 = vpop.f32.mrb[0].mxu0
        %v2659 = vadd.f32 0.0, %v2658
        %v2660 = vpop.f32.mrb[0].mxu0
        %2661 = vmatprep.mubr.bf16.mxu0 0
        %2662 = vmatmul.mubr.bf16.gmra.mrb[0].mxu0 %v2519
        %v2663 = vpop.f32.mrb[0].mxu0
        %v2664 = vadd.f32 0.0, %v2663
        %v2665 = vpop.f32.mrb[0].mxu0
        %v2666 = vpop.f32.mrb[0].mxu0
        %v2667 = vadd.f32 0.0, %v2666
        %v2668 = vpop.f32.mrb[0].mxu0
        %2669 = vmatprep.mubr.bf16.mxu0 0
        %2670 = vmatmul.mubr.bf16.gmra.mrb[0].mxu0 %v2522
        %v2671 = vpop.f32.mrb[0].mxu0
        %v2672 = vadd.f32 0.0, %v2671
        %v2673 = vpop.f32.mrb[0].mxu0
        %v2674 = vpop.f32.mrb[0].mxu0
        %v2675 = vadd.f32 0.0, %v2674
        %v2676 = vpop.f32.mrb[0].mxu0
        %2677 = vmatprep.mubr.bf16.mxu0 0
        %2678 = vmatmul.mubr.bf16.gmra.mrb[0].mxu0 %v2525
        %v2679 = vpop.f32.mrb[0].mxu0
        %v2680 = vadd.f32 0.0, %v2679
        %v2681 = vpop.f32.mrb[0].mxu0
        %v2682 = vpop.f32.mrb[0].mxu0
        %v2683 = vadd.f32 0.0, %v2682
        %v2684 = vpop.f32.mrb[0].mxu0
        %2685 = vmatprep.mubr.bf16.mxu0 0
        %2686 = vmatmul.mubr.bf16.gmra.mrb[0].mxu0 %v2528
        %v2687 = vpop.f32.mrb[0].mxu0
        %v2688 = vadd.f32 0.0, %v2687
        %v2689 = vpop.f32.mrb[0].mxu0
        %v2690 = vpop.f32.mrb[0].mxu0
        %v2691 = vadd.f32 0.0, %v2690
        %v2692 = vpop.f32.mrb[0].mxu0
        %2693 = vdwg.mxu0
        %v2694 = vadd.f32 %v1968, %v2568
        %v2695 = vadd.f32 %v1969, %v2571
        %v2696 = vadd.f32 %v1970, %v2576
        %v2697 = vadd.f32 %v1971, %v2579
        %v2698 = vadd.f32 %v1972, %v2584
        %v2699 = vadd.f32 %v1973, %v2587
        %v2700 = vadd.f32 %v1974, %v2592
        %v2701 = vadd.f32 %v1975, %v2595
        %v2702 = vadd.f32 %v1976, %v2600
        %v2703 = vadd.f32 %v1977, %v2603
        %v2704 = vadd.f32 %v1978, %v2608
        %v2705 = vadd.f32 %v1979, %v2611
        %v2706 = vadd.f32 %v1980, %v2616
        %v2707 = vadd.f32 %v1981, %v2619
        %v2708 = vadd.f32 %v1982, %v2624
        %v2709 = vadd.f32 %v1983, %v2627
        %v2710 = vadd.f32 %v1984, %v2632
        %v2711 = vadd.f32 %v1985, %v2635
        %v2712 = vadd.f32 %v1986, %v2640
        %v2713 = vadd.f32 %v1987, %v2643
        %v2714 = vadd.f32 %v1988, %v2648
        %v2715 = vadd.f32 %v1989, %v2651
        %v2716 = vadd.f32 %v1990, %v2656
        %v2717 = vadd.f32 %v1991, %v2659
        %v2718 = vadd.f32 %v1992, %v2664
        %v2719 = vadd.f32 %v1993, %v2667
        %v2720 = vadd.f32 %v1994, %v2672
        %v2721 = vadd.f32 %v1995, %v2675
        %v2722 = vadd.f32 %v1996, %v2680
        %v2723 = vadd.f32 %v1997, %v2683
        %v2724 = vadd.f32 %v1998, %v2688
        %v2725 = vadd.f32 %v1999, %v2691
        %v2726 = vld [vmem:[%s1641] sm:$0xe]
        %v2727 = vld [vmem:[%s1641 + $0xc] sm:$0xe]
        %v2728 = vld [vmem:[%s1641 + $0x18] sm:$0xe]
        %v2729 = vld [vmem:[%s1641 + $0x24] sm:$0xe]
        %v2730 = vld [vmem:[%s1641 + $0x30] sm:$0xe]
        %v2731 = vld [vmem:[%s1641 + $0x3c] sm:$0xe]
        %v2732 = vld [vmem:[%s1641 + $0x48] sm:$0xe]
        %v2733 = vld [vmem:[%s1641 + $0x54] sm:$0xe]
        %v2734 = vld [vmem:[%s1641 + $0x60] sm:$0xe]
        %v2735 = vld [vmem:[%s1641 + $0x6c] sm:$0xe]
        %v2736 = vld [vmem:[%s1641 + $0x78] sm:$0xe]
        %v2737 = vld [vmem:[%s1641 + $0x84] sm:$0xe]
        %v2738 = vld [vmem:[%s1641 + $0x90] sm:$0xe]
        %v2739 = vld [vmem:[%s1641 + $0x9c] sm:$0xe]
        %v2740 = vld [vmem:[%s1641 + $0xa8] sm:$0xe]
        %v2741 = vld [vmem:[%s1641 + $0xb4] sm:$0xe]
        %v2790 = vrot.slane %v2726, 5
        %v2791 = vrot.slane %v2790, 4
        %v2792 = vrot.slane %v2001, 5
        %v2793 = vsel %vm1231, %v2791, %v2792
        %v2794 = vrot.slane %v2792, 4
        %v2795 = vrot.slane %v2002, 5
        %v2796 = vsel %vm1231, %v2794, %v2795
        %v2797 = vrot.slane %v2727, 5
        %v2798 = vrot.slane %v2797, 4
        %v2799 = vrot.slane %v2004, 5
        %v2800 = vsel %vm1231, %v2798, %v2799
        %v2801 = vrot.slane %v2799, 4
        %v2802 = vrot.slane %v2005, 5
        %v2803 = vsel %vm1231, %v2801, %v2802
        %v2804 = vrot.slane %v2728, 5
        %v2805 = vrot.slane %v2804, 4
        %v2806 = vrot.slane %v2007, 5
        %v2807 = vsel %vm1231, %v2805, %v2806
        %v2808 = vrot.slane %v2806, 4
        %v2809 = vrot.slane %v2008, 5
        %v2810 = vsel %vm1231, %v2808, %v2809
        %v2811 = vrot.slane %v2729, 5
        %v2812 = vrot.slane %v2811, 4
        %v2813 = vrot.slane %v2010, 5
        %v2814 = vsel %vm1231, %v2812, %v2813
        %v2815 = vrot.slane %v2813, 4
        %v2816 = vrot.slane %v2011, 5
        %v2817 = vsel %vm1231, %v2815, %v2816
        %v2818 = vrot.slane %v2730, 5
        %v2819 = vrot.slane %v2818, 4
        %v2820 = vrot.slane %v2013, 5
        %v2821 = vsel %vm1231, %v2819, %v2820
        %v2822 = vrot.slane %v2820, 4
        %v2823 = vrot.slane %v2014, 5
        %v2824 = vsel %vm1231, %v2822, %v2823
        %v2825 = vrot.slane %v2731, 5
        %v2826 = vrot.slane %v2825, 4
        %v2827 = vrot.slane %v2016, 5
        %v2828 = vsel %vm1231, %v2826, %v2827
        %v2829 = vrot.slane %v2827, 4
        %v2830 = vrot.slane %v2017, 5
        %v2831 = vsel %vm1231, %v2829, %v2830
        %v2832 = vrot.slane %v2732, 5
        %v2833 = vrot.slane %v2832, 4
        %v2834 = vrot.slane %v2019, 5
        %v2835 = vsel %vm1231, %v2833, %v2834
        %v2836 = vrot.slane %v2834, 4
        %v2837 = vrot.slane %v2020, 5
        %v2838 = vsel %vm1231, %v2836, %v2837
        %v2839 = vrot.slane %v2733, 5
        %v2840 = vrot.slane %v2839, 4
        %v2841 = vrot.slane %v2022, 5
        %v2842 = vsel %vm1231, %v2840, %v2841
        %v2843 = vrot.slane %v2841, 4
        %v2844 = vrot.slane %v2023, 5
        %v2845 = vsel %vm1231, %v2843, %v2844
        %v2846 = vrot.slane %v2734, 5
        %v2847 = vrot.slane %v2846, 4
        %v2848 = vrot.slane %v2025, 5
        %v2849 = vsel %vm1231, %v2847, %v2848
        %v2850 = vrot.slane %v2848, 4
        %v2851 = vrot.slane %v2026, 5
        %v2852 = vsel %vm1231, %v2850, %v2851
        %v2853 = vrot.slane %v2735, 5
        %v2854 = vrot.slane %v2853, 4
        %v2855 = vrot.slane %v2028, 5
        %v2856 = vsel %vm1231, %v2854, %v2855
        %v2857 = vrot.slane %v2855, 4
        %v2858 = vrot.slane %v2029, 5
        %v2859 = vsel %vm1231, %v2857, %v2858
        %v2860 = vrot.slane %v2736, 5
        %v2861 = vrot.slane %v2860, 4
        %v2862 = vrot.slane %v2031, 5
        %v2863 = vsel %vm1231, %v2861, %v2862
        %v2864 = vrot.slane %v2862, 4
        %v2865 = vrot.slane %v2032, 5
        %v2866 = vsel %vm1231, %v2864, %v2865
        %v2867 = vrot.slane %v2737, 5
        %v2868 = vrot.slane %v2867, 4
        %v2869 = vrot.slane %v2034, 5
        %v2870 = vsel %vm1231, %v2868, %v2869
        %v2871 = vrot.slane %v2869, 4
        %v2872 = vrot.slane %v2035, 5
        %v2873 = vsel %vm1231, %v2871, %v2872
        %v2874 = vrot.slane %v2738, 5
        %v2875 = vrot.slane %v2874, 4
        %v2876 = vrot.slane %v2037, 5
        %v2877 = vsel %vm1231, %v2875, %v2876
        %v2878 = vrot.slane %v2876, 4
        %v2879 = vrot.slane %v2038, 5
        %v2880 = vsel %vm1231, %v2878, %v2879
        %v2881 = vrot.slane %v2739, 5
        %v2882 = vrot.slane %v2881, 4
        %v2883 = vrot.slane %v2040, 5
        %v2884 = vsel %vm1231, %v2882, %v2883
        %v2885 = vrot.slane %v2883, 4
        %v2886 = vrot.slane %v2041, 5
        %v2887 = vsel %vm1231, %v2885, %v2886
        %v2888 = vrot.slane %v2740, 5
        %v2889 = vrot.slane %v2888, 4
        %v2890 = vrot.slane %v2043, 5
        %v2891 = vsel %vm1231, %v2889, %v2890
        %v2892 = vrot.slane %v2890, 4
        %v2893 = vrot.slane %v2044, 5
        %v2894 = vsel %vm1231, %v2892, %v2893
        %v2895 = vrot.slane %v2741, 5
        %v2896 = vrot.slane %v2895, 4
        %v2897 = vrot.slane %v2046, 5
        %v2898 = vsel %vm1231, %v2896, %v2897
        %v2899 = vrot.slane %v2897, 4
        %v2900 = vrot.slane %v2047, 5
        %v2901 = vsel %vm1231, %v2899, %v2900
        %s2902 = scalar_lea.vmem %s1, 10
        %v2903 = vld [vmem:[%s2902] sm:$0x3]
        %v2904 = vunpack.c.l.b16 %v2793
        %v2905 = vunpack.c.l.b16 %v2796
        %v2906 = vunpack.c.l.b16 %v2800
        %v2907 = vunpack.c.l.b16 %v2803
        %v2908 = vunpack.c.l.b16 %v2807
        %v2909 = vunpack.c.l.b16 %v2810
        %v2910 = vunpack.c.l.b16 %v2814
        %v2911 = vunpack.c.l.b16 %v2817
        %v2912 = vunpack.c.l.b16 %v2821
        %v2913 = vunpack.c.l.b16 %v2824
        %v2914 = vunpack.c.l.b16 %v2828
        %v2915 = vunpack.c.l.b16 %v2831
        %v2916 = vunpack.c.l.b16 %v2835
        %v2917 = vunpack.c.l.b16 %v2838
        %v2918 = vunpack.c.l.b16 %v2842
        %v2919 = vunpack.c.l.b16 %v2845
        %v2920 = vunpack.c.l.b16 %v2849
        %v2921 = vunpack.c.l.b16 %v2852
        %v2922 = vunpack.c.l.b16 %v2856
        %v2923 = vunpack.c.l.b16 %v2859
        %v2924 = vunpack.c.l.b16 %v2863
        %v2925 = vunpack.c.l.b16 %v2866
        %v2926 = vunpack.c.l.b16 %v2870
        %v2927 = vunpack.c.l.b16 %v2873
        %v2928 = vunpack.c.l.b16 %v2877
        %v2929 = vunpack.c.l.b16 %v2880
        %v2930 = vunpack.c.l.b16 %v2884
        %v2931 = vunpack.c.l.b16 %v2887
        %v2932 = vunpack.c.l.b16 %v2891
        %v2933 = vunpack.c.l.b16 %v2894
        %v2934 = vunpack.c.l.b16 %v2898
        %v2935 = vunpack.c.l.b16 %v2901
        %v2936 = vpack.c.b16 %v2905, %v2904
        %v2937 = vpack.c.b16 %v2907, %v2906
        %v2938 = vpack.c.b16 %v2909, %v2908
        %v2939 = vpack.c.b16 %v2911, %v2910
        %v2940 = vpack.c.b16 %v2913, %v2912
        %v2941 = vpack.c.b16 %v2915, %v2914
        %v2942 = vpack.c.b16 %v2917, %v2916
        %v2943 = vpack.c.b16 %v2919, %v2918
        %v2944 = vpack.c.b16 %v2921, %v2920
        %v2945 = vpack.c.b16 %v2923, %v2922
        %v2946 = vpack.c.b16 %v2925, %v2924
        %v2947 = vpack.c.b16 %v2927, %v2926
        %v2948 = vpack.c.b16 %v2929, %v2928
        %v2949 = vpack.c.b16 %v2931, %v2930
        %v2950 = vpack.c.b16 %v2933, %v2932
        %v2951 = vpack.c.b16 %v2935, %v2934
        %v2953 = vsel %vm675, %v2936, 0
        %v2956 = vsel %vm675, %v2937, 0
        %v2959 = vsel %vm675, %v2938, 0
        %v2962 = vsel %vm675, %v2939, 0
        %v2965 = vsel %vm675, %v2940, 0
        %v2968 = vsel %vm675, %v2941, 0
        %v2971 = vsel %vm675, %v2942, 0
        %v2974 = vsel %vm675, %v2943, 0
        %v2977 = vsel %vm675, %v2944, 0
        %v2980 = vsel %vm675, %v2945, 0
        %v2983 = vsel %vm675, %v2946, 0
        %v2986 = vsel %vm675, %v2947, 0
        %v2989 = vsel %vm675, %v2948, 0
        %v2992 = vsel %vm675, %v2949, 0
        %v2995 = vsel %vm675, %v2950, 0
        %v2998 = vsel %vm675, %v2951, 0
        %v3001 = vsel %vm724, %v2903, 0
        %3003 = vmatprep.subr.bf16.mxu0 0
        %3004 = vmatpush1.bf16.msra.mxu0 %v3001
        %3005 = vmatprep.subr.bf16.mxu0 0
        %3006 = vmatpush1.bf16.msra.mxu0 0
        %3007 = vmatprep.subr.bf16.mxu0 0
        %3008 = vmatpush1.bf16.msra.mxu0 0
        %3009 = vmatprep.subr.bf16.mxu0 0
        %3010 = vmatpush1.bf16.msra.mxu0 0
        %3011 = vmatprep.subr.bf16.mxu0 0
        %3012 = vmatpush1.bf16.msra.mxu0 0
        %3013 = vmatprep.subr.bf16.mxu0 0
        %3014 = vmatpush1.bf16.msra.mxu0 0
        %3015 = vmatprep.subr.bf16.mxu0 0
        %3016 = vmatpush1.bf16.msra.mxu0 0
        %3017 = vmatprep.subr.bf16.mxu0 0
        %3018 = vmatpush1.bf16.msra.mxu0 0
        %3019 = vmatprep.subr.bf16.mxu0 0
        %3020 = vmatpush1.bf16.msra.mxu0 0
        %3021 = vmatprep.subr.bf16.mxu0 0
        %3022 = vmatpush1.bf16.msra.mxu0 0
        %3023 = vmatprep.subr.bf16.mxu0 0
        %3024 = vmatpush1.bf16.msra.mxu0 0
        %3025 = vmatprep.subr.bf16.mxu0 0
        %3026 = vmatpush1.bf16.msra.mxu0 0
        %3027 = vmatprep.subr.bf16.mxu0 0
        %3028 = vmatpush1.bf16.msra.mxu0 0
        %3029 = vmatprep.subr.bf16.mxu0 0
        %3030 = vmatpush1.bf16.msra.mxu0 0
        %3031 = vmatprep.subr.bf16.mxu0 0
        %3032 = vmatpush1.bf16.msra.mxu0 0
        %3033 = vmatprep.subr.bf16.mxu0 0
        %3034 = vmatpush1.bf16.msra.mxu0 0
        %3035 = vmatprep.mubr.bf16.mxu0 0
        %3036 = vmatmul.mubr.bf16.gmra.mrb[0].mxu0 %v2953
        %v3037 = vpop.f32.mrb[0].mxu0
        %v3038 = vadd.f32 0.0, %v3037
        %v3039 = vpop.f32.mrb[0].mxu0
        %v3040 = vpop.f32.mrb[0].mxu0
        %v3041 = vadd.f32 0.0, %v3040
        %v3042 = vpop.f32.mrb[0].mxu0
        %3043 = vmatprep.mubr.bf16.mxu0 0
        %3044 = vmatmul.mubr.bf16.gmra.mrb[0].mxu0 %v2956
        %v3045 = vpop.f32.mrb[0].mxu0
        %v3046 = vadd.f32 0.0, %v3045
        %v3047 = vpop.f32.mrb[0].mxu0
        %v3048 = vpop.f32.mrb[0].mxu0
        %v3049 = vadd.f32 0.0, %v3048
        %v3050 = vpop.f32.mrb[0].mxu0
        %3051 = vmatprep.mubr.bf16.mxu0 0
        %3052 = vmatmul.mubr.bf16.gmra.mrb[0].mxu0 %v2959
        %v3053 = vpop.f32.mrb[0].mxu0
        %v3054 = vadd.f32 0.0, %v3053
        %v3055 = vpop.f32.mrb[0].mxu0
        %v3056 = vpop.f32.mrb[0].mxu0
        %v3057 = vadd.f32 0.0, %v3056
        %v3058 = vpop.f32.mrb[0].mxu0
        %3059 = vmatprep.mubr.bf16.mxu0 0
        %3060 = vmatmul.mubr.bf16.gmra.mrb[0].mxu0 %v2962
        %v3061 = vpop.f32.mrb[0].mxu0
        %v3062 = vadd.f32 0.0, %v3061
        %v3063 = vpop.f32.mrb[0].mxu0
        %v3064 = vpop.f32.mrb[0].mxu0
        %v3065 = vadd.f32 0.0, %v3064
        %v3066 = vpop.f32.mrb[0].mxu0
        %3067 = vmatprep.mubr.bf16.mxu0 0
        %3068 = vmatmul.mubr.bf16.gmra.mrb[0].mxu0 %v2965
        %v3069 = vpop.f32.mrb[0].mxu0
        %v3070 = vadd.f32 0.0, %v3069
        %v3071 = vpop.f32.mrb[0].mxu0
        %v3072 = vpop.f32.mrb[0].mxu0
        %v3073 = vadd.f32 0.0, %v3072
        %v3074 = vpop.f32.mrb[0].mxu0
        %3075 = vmatprep.mubr.bf16.mxu0 0
        %3076 = vmatmul.mubr.bf16.gmra.mrb[0].mxu0 %v2968
        %v3077 = vpop.f32.mrb[0].mxu0
        %v3078 = vadd.f32 0.0, %v3077
        %v3079 = vpop.f32.mrb[0].mxu0
        %v3080 = vpop.f32.mrb[0].mxu0
        %v3081 = vadd.f32 0.0, %v3080
        %v3082 = vpop.f32.mrb[0].mxu0
        %3083 = vmatprep.mubr.bf16.mxu0 0
        %3084 = vmatmul.mubr.bf16.gmra.mrb[0].mxu0 %v2971
        %v3085 = vpop.f32.mrb[0].mxu0
        %v3086 = vadd.f32 0.0, %v3085
        %v3087 = vpop.f32.mrb[0].mxu0
        %v3088 = vpop.f32.mrb[0].mxu0
        %v3089 = vadd.f32 0.0, %v3088
        %v3090 = vpop.f32.mrb[0].mxu0
        %3091 = vmatprep.mubr.bf16.mxu0 0
        %3092 = vmatmul.mubr.bf16.gmra.mrb[0].mxu0 %v2974
        %v3093 = vpop.f32.mrb[0].mxu0
        %v3094 = vadd.f32 0.0, %v3093
        %v3095 = vpop.f32.mrb[0].mxu0
        %v3096 = vpop.f32.mrb[0].mxu0
        %v3097 = vadd.f32 0.0, %v3096
        %v3098 = vpop.f32.mrb[0].mxu0
        %3099 = vmatprep.mubr.bf16.mxu0 0
        %3100 = vmatmul.mubr.bf16.gmra.mrb[0].mxu0 %v2977
        %v3101 = vpop.f32.mrb[0].mxu0
        %v3102 = vadd.f32 0.0, %v3101
        %v3103 = vpop.f32.mrb[0].mxu0
        %v3104 = vpop.f32.mrb[0].mxu0
        %v3105 = vadd.f32 0.0, %v3104
        %v3106 = vpop.f32.mrb[0].mxu0
        %3107 = vmatprep.mubr.bf16.mxu0 0
        %3108 = vmatmul.mubr.bf16.gmra.mrb[0].mxu0 %v2980
        %v3109 = vpop.f32.mrb[0].mxu0
        %v3110 = vadd.f32 0.0, %v3109
        %v3111 = vpop.f32.mrb[0].mxu0
        %v3112 = vpop.f32.mrb[0].mxu0
        %v3113 = vadd.f32 0.0, %v3112
        %v3114 = vpop.f32.mrb[0].mxu0
        %3115 = vmatprep.mubr.bf16.mxu0 0
        %3116 = vmatmul.mubr.bf16.gmra.mrb[0].mxu0 %v2983
        %v3117 = vpop.f32.mrb[0].mxu0
        %v3118 = vadd.f32 0.0, %v3117
        %v3119 = vpop.f32.mrb[0].mxu0
        %v3120 = vpop.f32.mrb[0].mxu0
        %v3121 = vadd.f32 0.0, %v3120
        %v3122 = vpop.f32.mrb[0].mxu0
        %3123 = vmatprep.mubr.bf16.mxu0 0
        %3124 = vmatmul.mubr.bf16.gmra.mrb[0].mxu0 %v2986
        %v3125 = vpop.f32.mrb[0].mxu0
        %v3126 = vadd.f32 0.0, %v3125
        %v3127 = vpop.f32.mrb[0].mxu0
        %v3128 = vpop.f32.mrb[0].mxu0
        %v3129 = vadd.f32 0.0, %v3128
        %v3130 = vpop.f32.mrb[0].mxu0
        %3131 = vmatprep.mubr.bf16.mxu0 0
        %3132 = vmatmul.mubr.bf16.gmra.mrb[0].mxu0 %v2989
        %v3133 = vpop.f32.mrb[0].mxu0
        %v3134 = vadd.f32 0.0, %v3133
        %v3135 = vpop.f32.mrb[0].mxu0
        %v3136 = vpop.f32.mrb[0].mxu0
        %v3137 = vadd.f32 0.0, %v3136
        %v3138 = vpop.f32.mrb[0].mxu0
        %3139 = vmatprep.mubr.bf16.mxu0 0
        %3140 = vmatmul.mubr.bf16.gmra.mrb[0].mxu0 %v2992
        %v3141 = vpop.f32.mrb[0].mxu0
        %v3142 = vadd.f32 0.0, %v3141
        %v3143 = vpop.f32.mrb[0].mxu0
        %v3144 = vpop.f32.mrb[0].mxu0
        %v3145 = vadd.f32 0.0, %v3144
        %v3146 = vpop.f32.mrb[0].mxu0
        %3147 = vmatprep.mubr.bf16.mxu0 0
        %3148 = vmatmul.mubr.bf16.gmra.mrb[0].mxu0 %v2995
        %v3149 = vpop.f32.mrb[0].mxu0
        %v3150 = vadd.f32 0.0, %v3149
        %v3151 = vpop.f32.mrb[0].mxu0
        %v3152 = vpop.f32.mrb[0].mxu0
        %v3153 = vadd.f32 0.0, %v3152
        %v3154 = vpop.f32.mrb[0].mxu0
        %3155 = vmatprep.mubr.bf16.mxu0 0
        %3156 = vmatmul.mubr.bf16.gmra.mrb[0].mxu0 %v2998
        %v3157 = vpop.f32.mrb[0].mxu0
        %v3158 = vadd.f32 0.0, %v3157
        %v3159 = vpop.f32.mrb[0].mxu0
        %v3160 = vpop.f32.mrb[0].mxu0
        %v3161 = vadd.f32 0.0, %v3160
        %v3162 = vpop.f32.mrb[0].mxu0
        %3163 = vdwg.mxu0
        %v3164 = vadd.f32 %v2694, %v3038
        %v3165 = vadd.f32 %v2695, %v3041
        %v3166 = vadd.f32 %v2696, %v3046
        %v3167 = vadd.f32 %v2697, %v3049
        %v3168 = vadd.f32 %v2698, %v3054
        %v3169 = vadd.f32 %v2699, %v3057
        %v3170 = vadd.f32 %v2700, %v3062
        %v3171 = vadd.f32 %v2701, %v3065
        %v3172 = vadd.f32 %v2702, %v3070
        %v3173 = vadd.f32 %v2703, %v3073
        %v3174 = vadd.f32 %v2704, %v3078
        %v3175 = vadd.f32 %v2705, %v3081
        %v3176 = vadd.f32 %v2706, %v3086
        %v3177 = vadd.f32 %v2707, %v3089
        %v3178 = vadd.f32 %v2708, %v3094
        %v3179 = vadd.f32 %v2709, %v3097
        %v3180 = vadd.f32 %v2710, %v3102
        %v3181 = vadd.f32 %v2711, %v3105
        %v3182 = vadd.f32 %v2712, %v3110
        %v3183 = vadd.f32 %v2713, %v3113
        %v3184 = vadd.f32 %v2714, %v3118
        %v3185 = vadd.f32 %v2715, %v3121
        %v3186 = vadd.f32 %v2716, %v3126
        %v3187 = vadd.f32 %v2717, %v3129
        %v3188 = vadd.f32 %v2718, %v3134
        %v3189 = vadd.f32 %v2719, %v3137
        %v3190 = vadd.f32 %v2720, %v3142
        %v3191 = vadd.f32 %v2721, %v3145
        %v3192 = vadd.f32 %v2722, %v3150
        %v3193 = vadd.f32 %v2723, %v3153
        %v3194 = vadd.f32 %v2724, %v3158
        %v3195 = vadd.f32 %v2725, %v3161
        %s3196 = sadd.s32 %s185, 2
        %s3197 = smul.u32 %s3196, 3
        %s3198 = smul.addr %s3197, 4
        %s3199 = scalar_lea.vmem %s182, %s3198
        %v3200 = vld [vmem:[%s3199] sm:$0xf]
        %v3201 = vld [vmem:[%s3199 + $0x4] sm:$0xf]
        %v3202 = vld [vmem:[%s3199 + $0xc] sm:$0xf]
        %v3203 = vld [vmem:[%s3199 + $0x10] sm:$0xf]
        %v3204 = vld [vmem:[%s3199 + $0x18] sm:$0xf]
        %v3205 = vld [vmem:[%s3199 + $0x1c] sm:$0xf]
        %v3206 = vld [vmem:[%s3199 + $0x24] sm:$0xf]
        %v3207 = vld [vmem:[%s3199 + $0x28] sm:$0xf]
        %v3208 = vld [vmem:[%s3199 + $0x30] sm:$0xf]
        %v3209 = vld [vmem:[%s3199 + $0x34] sm:$0xf]
        %v3210 = vld [vmem:[%s3199 + $0x3c] sm:$0xf]
        %v3211 = vld [vmem:[%s3199 + $0x40] sm:$0xf]
        %v3212 = vld [vmem:[%s3199 + $0x48] sm:$0xf]
        %v3213 = vld [vmem:[%s3199 + $0x4c] sm:$0xf]
        %v3214 = vld [vmem:[%s3199 + $0x54] sm:$0xf]
        %v3215 = vld [vmem:[%s3199 + $0x58] sm:$0xf]
        %v3216 = vld [vmem:[%s3199 + $0x60] sm:$0xf]
        %v3217 = vld [vmem:[%s3199 + $0x64] sm:$0xf]
        %v3218 = vld [vmem:[%s3199 + $0x6c] sm:$0xf]
        %v3219 = vld [vmem:[%s3199 + $0x70] sm:$0xf]
        %v3220 = vld [vmem:[%s3199 + $0x78] sm:$0xf]
        %v3221 = vld [vmem:[%s3199 + $0x7c] sm:$0xf]
        %v3222 = vld [vmem:[%s3199 + $0x84] sm:$0xf]
        %v3223 = vld [vmem:[%s3199 + $0x88] sm:$0xf]
        %v3224 = vld [vmem:[%s3199 + $0x90] sm:$0xf]
        %v3225 = vld [vmem:[%s3199 + $0x94] sm:$0xf]
        %v3226 = vld [vmem:[%s3199 + $0x9c] sm:$0xf]
        %v3227 = vld [vmem:[%s3199 + $0xa0] sm:$0xf]
        %v3228 = vld [vmem:[%s3199 + $0xa8] sm:$0xf]
        %v3229 = vld [vmem:[%s3199 + $0xac] sm:$0xf]
        %v3230 = vld [vmem:[%s3199 + $0xb4] sm:$0xf]
        %v3231 = vld [vmem:[%s3199 + $0xb8] sm:$0xf]
        %s3232 = scalar_lea.vmem %s1, 12
        %v3233 = vld [vmem:[%s3232] sm:$0x3]
        %v3266 = vunpack.c.l.b16 %v3200
        %v3267 = vunpack.c.l.b16 %v3201
        %v3268 = vunpack.c.l.b16 %v3202
        %v3269 = vunpack.c.l.b16 %v3203
        %v3270 = vunpack.c.l.b16 %v3204
        %v3271 = vunpack.c.l.b16 %v3205
        %v3272 = vunpack.c.l.b16 %v3206
        %v3273 = vunpack.c.l.b16 %v3207
        %v3274 = vunpack.c.l.b16 %v3208
        %v3275 = vunpack.c.l.b16 %v3209
        %v3276 = vunpack.c.l.b16 %v3210
        %v3277 = vunpack.c.l.b16 %v3211
        %v3278 = vunpack.c.l.b16 %v3212
        %v3279 = vunpack.c.l.b16 %v3213
        %v3280 = vunpack.c.l.b16 %v3214
        %v3281 = vunpack.c.l.b16 %v3215
        %v3282 = vunpack.c.l.b16 %v3216
        %v3283 = vunpack.c.l.b16 %v3217
        %v3284 = vunpack.c.l.b16 %v3218
        %v3285 = vunpack.c.l.b16 %v3219
        %v3286 = vunpack.c.l.b16 %v3220
        %v3287 = vunpack.c.l.b16 %v3221
        %v3288 = vunpack.c.l.b16 %v3222
        %v3289 = vunpack.c.l.b16 %v3223
        %v3290 = vunpack.c.l.b16 %v3224
        %v3291 = vunpack.c.l.b16 %v3225
        %v3292 = vunpack.c.l.b16 %v3226
        %v3293 = vunpack.c.l.b16 %v3227
        %v3294 = vunpack.c.l.b16 %v3228
        %v3295 = vunpack.c.l.b16 %v3229
        %v3296 = vunpack.c.l.b16 %v3230
        %v3297 = vunpack.c.l.b16 %v3231
        %v3298 = vpack.c.b16 %v3267, %v3266
        %v3299 = vpack.c.b16 %v3269, %v3268
        %v3300 = vpack.c.b16 %v3271, %v3270
        %v3301 = vpack.c.b16 %v3273, %v3272
        %v3302 = vpack.c.b16 %v3275, %v3274
        %v3303 = vpack.c.b16 %v3277, %v3276
        %v3304 = vpack.c.b16 %v3279, %v3278
        %v3305 = vpack.c.b16 %v3281, %v3280
        %v3306 = vpack.c.b16 %v3283, %v3282
        %v3307 = vpack.c.b16 %v3285, %v3284
        %v3308 = vpack.c.b16 %v3287, %v3286
        %v3309 = vpack.c.b16 %v3289, %v3288
        %v3310 = vpack.c.b16 %v3291, %v3290
        %v3311 = vpack.c.b16 %v3293, %v3292
        %v3312 = vpack.c.b16 %v3295, %v3294
        %v3313 = vpack.c.b16 %v3297, %v3296
        %v3315 = vsel %vm675, %v3298, 0
        %v3318 = vsel %vm675, %v3299, 0
        %v3321 = vsel %vm675, %v3300, 0
        %v3324 = vsel %vm675, %v3301, 0
        %v3327 = vsel %vm675, %v3302, 0
        %v3330 = vsel %vm675, %v3303, 0
        %v3333 = vsel %vm675, %v3304, 0
        %v3336 = vsel %vm675, %v3305, 0
        %v3339 = vsel %vm675, %v3306, 0
        %v3342 = vsel %vm675, %v3307, 0
        %v3345 = vsel %vm675, %v3308, 0
        %v3348 = vsel %vm675, %v3309, 0
        %v3351 = vsel %vm675, %v3310, 0
        %v3354 = vsel %vm675, %v3311, 0
        %v3357 = vsel %vm675, %v3312, 0
        %v3360 = vsel %vm675, %v3313, 0
        %v3363 = vsel %vm724, %v3233, 0
        %3365 = vmatprep.subr.bf16.mxu0 0
        %3366 = vmatpush1.bf16.msra.mxu0 %v3363
        %3367 = vmatprep.subr.bf16.mxu0 0
        %3368 = vmatpush1.bf16.msra.mxu0 0
        %3369 = vmatprep.subr.bf16.mxu0 0
        %3370 = vmatpush1.bf16.msra.mxu0 0
        %3371 = vmatprep.subr.bf16.mxu0 0
        %3372 = vmatpush1.bf16.msra.mxu0 0
        %3373 = vmatprep.subr.bf16.mxu0 0
        %3374 = vmatpush1.bf16.msra.mxu0 0
        %3375 = vmatprep.subr.bf16.mxu0 0
        %3376 = vmatpush1.bf16.msra.mxu0 0
        %3377 = vmatprep.subr.bf16.mxu0 0
        %3378 = vmatpush1.bf16.msra.mxu0 0
        %3379 = vmatprep.subr.bf16.mxu0 0
        %3380 = vmatpush1.bf16.msra.mxu0 0
        %3381 = vmatprep.subr.bf16.mxu0 0
        %3382 = vmatpush1.bf16.msra.mxu0 0
        %3383 = vmatprep.subr.bf16.mxu0 0
        %3384 = vmatpush1.bf16.msra.mxu0 0
        %3385 = vmatprep.subr.bf16.mxu0 0
        %3386 = vmatpush1.bf16.msra.mxu0 0
        %3387 = vmatprep.subr.bf16.mxu0 0
        %3388 = vmatpush1.bf16.msra.mxu0 0
        %3389 = vmatprep.subr.bf16.mxu0 0
        %3390 = vmatpush1.bf16.msra.mxu0 0
        %3391 = vmatprep.subr.bf16.mxu0 0
        %3392 = vmatpush1.bf16.msra.mxu0 0
        %3393 = vmatprep.subr.bf16.mxu0 0
        %3394 = vmatpush1.bf16.msra.mxu0 0
        %3395 = vmatprep.subr.bf16.mxu0 0
        %3396 = vmatpush1.bf16.msra.mxu0 0
        %3397 = vmatprep.mubr.bf16.mxu0 0
        %3398 = vmatmul.mubr.bf16.gmra.mrb[0].mxu0 %v3315
        %v3399 = vpop.f32.mrb[0].mxu0
        %v3400 = vadd.f32 0.0, %v3399
        %v3401 = vpop.f32.mrb[0].mxu0
        %v3402 = vpop.f32.mrb[0].mxu0
        %v3403 = vadd.f32 0.0, %v3402
        %v3404 = vpop.f32.mrb[0].mxu0
        %3405 = vmatprep.mubr.bf16.mxu0 0
        %3406 = vmatmul.mubr.bf16.gmra.mrb[0].mxu0 %v3318
        %v3407 = vpop.f32.mrb[0].mxu0
        %v3408 = vadd.f32 0.0, %v3407
        %v3409 = vpop.f32.mrb[0].mxu0
        %v3410 = vpop.f32.mrb[0].mxu0
        %v3411 = vadd.f32 0.0, %v3410
        %v3412 = vpop.f32.mrb[0].mxu0
        %3413 = vmatprep.mubr.bf16.mxu0 0
        %3414 = vmatmul.mubr.bf16.gmra.mrb[0].mxu0 %v3321
        %v3415 = vpop.f32.mrb[0].mxu0
        %v3416 = vadd.f32 0.0, %v3415
        %v3417 = vpop.f32.mrb[0].mxu0
        %v3418 = vpop.f32.mrb[0].mxu0
        %v3419 = vadd.f32 0.0, %v3418
        %v3420 = vpop.f32.mrb[0].mxu0
        %3421 = vmatprep.mubr.bf16.mxu0 0
        %3422 = vmatmul.mubr.bf16.gmra.mrb[0].mxu0 %v3324
        %v3423 = vpop.f32.mrb[0].mxu0
        %v3424 = vadd.f32 0.0, %v3423
        %v3425 = vpop.f32.mrb[0].mxu0
        %v3426 = vpop.f32.mrb[0].mxu0
        %v3427 = vadd.f32 0.0, %v3426
        %v3428 = vpop.f32.mrb[0].mxu0
        %3429 = vmatprep.mubr.bf16.mxu0 0
        %3430 = vmatmul.mubr.bf16.gmra.mrb[0].mxu0 %v3327
        %v3431 = vpop.f32.mrb[0].mxu0
        %v3432 = vadd.f32 0.0, %v3431
        %v3433 = vpop.f32.mrb[0].mxu0
        %v3434 = vpop.f32.mrb[0].mxu0
        %v3435 = vadd.f32 0.0, %v3434
        %v3436 = vpop.f32.mrb[0].mxu0
        %3437 = vmatprep.mubr.bf16.mxu0 0
        %3438 = vmatmul.mubr.bf16.gmra.mrb[0].mxu0 %v3330
        %v3439 = vpop.f32.mrb[0].mxu0
        %v3440 = vadd.f32 0.0, %v3439
        %v3441 = vpop.f32.mrb[0].mxu0
        %v3442 = vpop.f32.mrb[0].mxu0
        %v3443 = vadd.f32 0.0, %v3442
        %v3444 = vpop.f32.mrb[0].mxu0
        %3445 = vmatprep.mubr.bf16.mxu0 0
        %3446 = vmatmul.mubr.bf16.gmra.mrb[0].mxu0 %v3333
        %v3447 = vpop.f32.mrb[0].mxu0
        %v3448 = vadd.f32 0.0, %v3447
        %v3449 = vpop.f32.mrb[0].mxu0
        %v3450 = vpop.f32.mrb[0].mxu0
        %v3451 = vadd.f32 0.0, %v3450
        %v3452 = vpop.f32.mrb[0].mxu0
        %3453 = vmatprep.mubr.bf16.mxu0 0
        %3454 = vmatmul.mubr.bf16.gmra.mrb[0].mxu0 %v3336
        %v3455 = vpop.f32.mrb[0].mxu0
        %v3456 = vadd.f32 0.0, %v3455
        %v3457 = vpop.f32.mrb[0].mxu0
        %v3458 = vpop.f32.mrb[0].mxu0
        %v3459 = vadd.f32 0.0, %v3458
        %v3460 = vpop.f32.mrb[0].mxu0
        %3461 = vmatprep.mubr.bf16.mxu0 0
        %3462 = vmatmul.mubr.bf16.gmra.mrb[0].mxu0 %v3339
        %v3463 = vpop.f32.mrb[0].mxu0
        %v3464 = vadd.f32 0.0, %v3463
        %v3465 = vpop.f32.mrb[0].mxu0
        %v3466 = vpop.f32.mrb[0].mxu0
        %v3467 = vadd.f32 0.0, %v3466
        %v3468 = vpop.f32.mrb[0].mxu0
        %3469 = vmatprep.mubr.bf16.mxu0 0
        %3470 = vmatmul.mubr.bf16.gmra.mrb[0].mxu0 %v3342
        %v3471 = vpop.f32.mrb[0].mxu0
        %v3472 = vadd.f32 0.0, %v3471
        %v3473 = vpop.f32.mrb[0].mxu0
        %v3474 = vpop.f32.mrb[0].mxu0
        %v3475 = vadd.f32 0.0, %v3474
        %v3476 = vpop.f32.mrb[0].mxu0
        %3477 = vmatprep.mubr.bf16.mxu0 0
        %3478 = vmatmul.mubr.bf16.gmra.mrb[0].mxu0 %v3345
        %v3479 = vpop.f32.mrb[0].mxu0
        %v3480 = vadd.f32 0.0, %v3479
        %v3481 = vpop.f32.mrb[0].mxu0
        %v3482 = vpop.f32.mrb[0].mxu0
        %v3483 = vadd.f32 0.0, %v3482
        %v3484 = vpop.f32.mrb[0].mxu0
        %3485 = vmatprep.mubr.bf16.mxu0 0
        %3486 = vmatmul.mubr.bf16.gmra.mrb[0].mxu0 %v3348
        %v3487 = vpop.f32.mrb[0].mxu0
        %v3488 = vadd.f32 0.0, %v3487
        %v3489 = vpop.f32.mrb[0].mxu0
        %v3490 = vpop.f32.mrb[0].mxu0
        %v3491 = vadd.f32 0.0, %v3490
        %v3492 = vpop.f32.mrb[0].mxu0
        %3493 = vmatprep.mubr.bf16.mxu0 0
        %3494 = vmatmul.mubr.bf16.gmra.mrb[0].mxu0 %v3351
        %v3495 = vpop.f32.mrb[0].mxu0
        %v3496 = vadd.f32 0.0, %v3495
        %v3497 = vpop.f32.mrb[0].mxu0
        %v3498 = vpop.f32.mrb[0].mxu0
        %v3499 = vadd.f32 0.0, %v3498
        %v3500 = vpop.f32.mrb[0].mxu0
        %3501 = vmatprep.mubr.bf16.mxu0 0
        %3502 = vmatmul.mubr.bf16.gmra.mrb[0].mxu0 %v3354
        %v3503 = vpop.f32.mrb[0].mxu0
        %v3504 = vadd.f32 0.0, %v3503
        %v3505 = vpop.f32.mrb[0].mxu0
        %v3506 = vpop.f32.mrb[0].mxu0
        %v3507 = vadd.f32 0.0, %v3506
        %v3508 = vpop.f32.mrb[0].mxu0
        %3509 = vmatprep.mubr.bf16.mxu0 0
        %3510 = vmatmul.mubr.bf16.gmra.mrb[0].mxu0 %v3357
        %v3511 = vpop.f32.mrb[0].mxu0
        %v3512 = vadd.f32 0.0, %v3511
        %v3513 = vpop.f32.mrb[0].mxu0
        %v3514 = vpop.f32.mrb[0].mxu0
        %v3515 = vadd.f32 0.0, %v3514
        %v3516 = vpop.f32.mrb[0].mxu0
        %3517 = vmatprep.mubr.bf16.mxu0 0
        %3518 = vmatmul.mubr.bf16.gmra.mrb[0].mxu0 %v3360
        %v3519 = vpop.f32.mrb[0].mxu0
        %v3520 = vadd.f32 0.0, %v3519
        %v3521 = vpop.f32.mrb[0].mxu0
        %v3522 = vpop.f32.mrb[0].mxu0
        %v3523 = vadd.f32 0.0, %v3522
        %v3524 = vpop.f32.mrb[0].mxu0
        %3525 = vdwg.mxu0
        %v3526 = vadd.f32 %v3164, %v3400
        %v3527 = vadd.f32 %v3165, %v3403
        %v3528 = vadd.f32 %v3166, %v3408
        %v3529 = vadd.f32 %v3167, %v3411
        %v3530 = vadd.f32 %v3168, %v3416
        %v3531 = vadd.f32 %v3169, %v3419
        %v3532 = vadd.f32 %v3170, %v3424
        %v3533 = vadd.f32 %v3171, %v3427
        %v3534 = vadd.f32 %v3172, %v3432
        %v3535 = vadd.f32 %v3173, %v3435
        %v3536 = vadd.f32 %v3174, %v3440
        %v3537 = vadd.f32 %v3175, %v3443
        %v3538 = vadd.f32 %v3176, %v3448
        %v3539 = vadd.f32 %v3177, %v3451
        %v3540 = vadd.f32 %v3178, %v3456
        %v3541 = vadd.f32 %v3179, %v3459
        %v3542 = vadd.f32 %v3180, %v3464
        %v3543 = vadd.f32 %v3181, %v3467
        %v3544 = vadd.f32 %v3182, %v3472
        %v3545 = vadd.f32 %v3183, %v3475
        %v3546 = vadd.f32 %v3184, %v3480
        %v3547 = vadd.f32 %v3185, %v3483
        %v3548 = vadd.f32 %v3186, %v3488
        %v3549 = vadd.f32 %v3187, %v3491
        %v3550 = vadd.f32 %v3188, %v3496
        %v3551 = vadd.f32 %v3189, %v3499
        %v3552 = vadd.f32 %v3190, %v3504
        %v3553 = vadd.f32 %v3191, %v3507
        %v3554 = vadd.f32 %v3192, %v3512
        %v3555 = vadd.f32 %v3193, %v3515
        %v3556 = vadd.f32 %v3194, %v3520
        %v3557 = vadd.f32 %v3195, %v3523
        %v3558 = vld [vmem:[%s3199] sm:$0xf]
        %v3559 = vld [vmem:[%s3199 + $0x4] sm:$0xf]
        %v3560 = vld [vmem:[%s3199 + $0x8] sm:$0x1]
        %v3561 = vld [vmem:[%s3199 + $0xc] sm:$0xf]
        %v3562 = vld [vmem:[%s3199 + $0x10] sm:$0xf]
        %v3563 = vld [vmem:[%s3199 + $0x14] sm:$0x1]
        %v3564 = vld [vmem:[%s3199 + $0x18] sm:$0xf]
        %v3565 = vld [vmem:[%s3199 + $0x1c] sm:$0xf]
        %v3566 = vld [vmem:[%s3199 + $0x20] sm:$0x1]
        %v3567 = vld [vmem:[%s3199 + $0x24] sm:$0xf]
        %v3568 = vld [vmem:[%s3199 + $0x28] sm:$0xf]
        %v3569 = vld [vmem:[%s3199 + $0x2c] sm:$0x1]
        %v3570 = vld [vmem:[%s3199 + $0x30] sm:$0xf]
        %v3571 = vld [vmem:[%s3199 + $0x34] sm:$0xf]
        %v3572 = vld [vmem:[%s3199 + $0x38] sm:$0x1]
        %v3573 = vld [vmem:[%s3199 + $0x3c] sm:$0xf]
        %v3574 = vld [vmem:[%s3199 + $0x40] sm:$0xf]
        %v3575 = vld [vmem:[%s3199 + $0x44] sm:$0x1]
        %v3576 = vld [vmem:[%s3199 + $0x48] sm:$0xf]
        %v3577 = vld [vmem:[%s3199 + $0x4c] sm:$0xf]
        %v3578 = vld [vmem:[%s3199 + $0x50] sm:$0x1]
        %v3579 = vld [vmem:[%s3199 + $0x54] sm:$0xf]
        %v3580 = vld [vmem:[%s3199 + $0x58] sm:$0xf]
        %v3581 = vld [vmem:[%s3199 + $0x5c] sm:$0x1]
        %v3582 = vld [vmem:[%s3199 + $0x60] sm:$0xf]
        %v3583 = vld [vmem:[%s3199 + $0x64] sm:$0xf]
        %v3584 = vld [vmem:[%s3199 + $0x68] sm:$0x1]
        %v3585 = vld [vmem:[%s3199 + $0x6c] sm:$0xf]
        %v3586 = vld [vmem:[%s3199 + $0x70] sm:$0xf]
        %v3587 = vld [vmem:[%s3199 + $0x74] sm:$0x1]
        %v3588 = vld [vmem:[%s3199 + $0x78] sm:$0xf]
        %v3589 = vld [vmem:[%s3199 + $0x7c] sm:$0xf]
        %v3590 = vld [vmem:[%s3199 + $0x80] sm:$0x1]
        %v3591 = vld [vmem:[%s3199 + $0x84] sm:$0xf]
        %v3592 = vld [vmem:[%s3199 + $0x88] sm:$0xf]
        %v3593 = vld [vmem:[%s3199 + $0x8c] sm:$0x1]
        %v3594 = vld [vmem:[%s3199 + $0x90] sm:$0xf]
        %v3595 = vld [vmem:[%s3199 + $0x94] sm:$0xf]
        %v3596 = vld [vmem:[%s3199 + $0x98] sm:$0x1]
        %v3597 = vld [vmem:[%s3199 + $0x9c] sm:$0xf]
        %v3598 = vld [vmem:[%s3199 + $0xa0] sm:$0xf]
        %v3599 = vld [vmem:[%s3199 + $0xa4] sm:$0x1]
        %v3600 = vld [vmem:[%s3199 + $0xa8] sm:$0xf]
        %v3601 = vld [vmem:[%s3199 + $0xac] sm:$0xf]
        %v3602 = vld [vmem:[%s3199 + $0xb0] sm:$0x1]
        %v3603 = vld [vmem:[%s3199 + $0xb4] sm:$0xf]
        %v3604 = vld [vmem:[%s3199 + $0xb8] sm:$0xf]
        %v3605 = vld [vmem:[%s3199 + $0xbc] sm:$0x1]
        %v3607 = vshrl.u32 %v3558, 16
        %v3609 = vrot.slane %v3607, 4
        %v3610 = vshll.u32 %v3558, 16
        %v3612 = vrot.slane %v3610, 5
        %v3613 = vor.u32 %v3609, %v3612
        %v3614 = vrot.slane %v3613, 4
        %v3616 = vshll.u32 %v3559, 16
        %v3618 = vrot.slane %v3616, 5
        %v3619 = vsel %vm240, %v3614, %v3618
        %v3620 = vshrl.u32 %v3559, 16
        %v3622 = vrot.slane %v3620, 4
        %v3623 = vor.u32 %v3622, %v3618
        %v3624 = vrot.slane %v3623, 4
        %v3626 = vshll.u32 %v3560, 16
        %v3628 = vrot.slane %v3626, 5
        %v3629 = vsel %vm240, %v3624, %v3628
        %v3631 = vshrl.u32 %v3561, 16
        %v3633 = vrot.slane %v3631, 4
        %v3634 = vshll.u32 %v3561, 16
        %v3636 = vrot.slane %v3634, 5
        %v3637 = vor.u32 %v3633, %v3636
        %v3638 = vrot.slane %v3637, 4
        %v3640 = vshll.u32 %v3562, 16
        %v3642 = vrot.slane %v3640, 5
        %v3643 = vsel %vm240, %v3638, %v3642
        %v3644 = vshrl.u32 %v3562, 16
        %v3646 = vrot.slane %v3644, 4
        %v3647 = vor.u32 %v3646, %v3642
        %v3648 = vrot.slane %v3647, 4
        %v3650 = vshll.u32 %v3563, 16
        %v3652 = vrot.slane %v3650, 5
        %v3653 = vsel %vm240, %v3648, %v3652
        %v3655 = vshrl.u32 %v3564, 16
        %v3657 = vrot.slane %v3655, 4
        %v3658 = vshll.u32 %v3564, 16
        %v3660 = vrot.slane %v3658, 5
        %v3661 = vor.u32 %v3657, %v3660
        %v3662 = vrot.slane %v3661, 4
        %v3664 = vshll.u32 %v3565, 16
        %v3666 = vrot.slane %v3664, 5
        %v3667 = vsel %vm240, %v3662, %v3666
        %v3668 = vshrl.u32 %v3565, 16
        %v3670 = vrot.slane %v3668, 4
        %v3671 = vor.u32 %v3670, %v3666
        %v3672 = vrot.slane %v3671, 4
        %v3674 = vshll.u32 %v3566, 16
        %v3676 = vrot.slane %v3674, 5
        %v3677 = vsel %vm240, %v3672, %v3676
        %v3679 = vshrl.u32 %v3567, 16
        %v3681 = vrot.slane %v3679, 4
        %v3682 = vshll.u32 %v3567, 16
        %v3684 = vrot.slane %v3682, 5
        %v3685 = vor.u32 %v3681, %v3684
        %v3686 = vrot.slane %v3685, 4
        %v3688 = vshll.u32 %v3568, 16
        %v3690 = vrot.slane %v3688, 5
        %v3691 = vsel %vm240, %v3686, %v3690
        %v3692 = vshrl.u32 %v3568, 16
        %v3694 = vrot.slane %v3692, 4
        %v3695 = vor.u32 %v3694, %v3690
        %v3696 = vrot.slane %v3695, 4
        %v3698 = vshll.u32 %v3569, 16
        %v3700 = vrot.slane %v3698, 5
        %v3701 = vsel %vm240, %v3696, %v3700
        %v3703 = vshrl.u32 %v3570, 16
        %v3705 = vrot.slane %v3703, 4
        %v3706 = vshll.u32 %v3570, 16
        %v3708 = vrot.slane %v3706, 5
        %v3709 = vor.u32 %v3705, %v3708
        %v3710 = vrot.slane %v3709, 4
        %v3712 = vshll.u32 %v3571, 16
        %v3714 = vrot.slane %v3712, 5
        %v3715 = vsel %vm240, %v3710, %v3714
        %v3716 = vshrl.u32 %v3571, 16
        %v3718 = vrot.slane %v3716, 4
        %v3719 = vor.u32 %v3718, %v3714
        %v3720 = vrot.slane %v3719, 4
        %v3722 = vshll.u32 %v3572, 16
        %v3724 = vrot.slane %v3722, 5
        %v3725 = vsel %vm240, %v3720, %v3724
        %v3727 = vshrl.u32 %v3573, 16
        %v3729 = vrot.slane %v3727, 4
        %v3730 = vshll.u32 %v3573, 16
        %v3732 = vrot.slane %v3730, 5
        %v3733 = vor.u32 %v3729, %v3732
        %v3734 = vrot.slane %v3733, 4
        %v3736 = vshll.u32 %v3574, 16
        %v3738 = vrot.slane %v3736, 5
        %v3739 = vsel %vm240, %v3734, %v3738
        %v3740 = vshrl.u32 %v3574, 16
        %v3742 = vrot.slane %v3740, 4
        %v3743 = vor.u32 %v3742, %v3738
        %v3744 = vrot.slane %v3743, 4
        %v3746 = vshll.u32 %v3575, 16
        %v3748 = vrot.slane %v3746, 5
        %v3749 = vsel %vm240, %v3744, %v3748
        %v3751 = vshrl.u32 %v3576, 16
        %v3753 = vrot.slane %v3751, 4
        %v3754 = vshll.u32 %v3576, 16
        %v3756 = vrot.slane %v3754, 5
        %v3757 = vor.u32 %v3753, %v3756
        %v3758 = vrot.slane %v3757, 4
        %v3760 = vshll.u32 %v3577, 16
        %v3762 = vrot.slane %v3760, 5
        %v3763 = vsel %vm240, %v3758, %v3762
        %v3764 = vshrl.u32 %v3577, 16
        %v3766 = vrot.slane %v3764, 4
        %v3767 = vor.u32 %v3766, %v3762
        %v3768 = vrot.slane %v3767, 4
        %v3770 = vshll.u32 %v3578, 16
        %v3772 = vrot.slane %v3770, 5
        %v3773 = vsel %vm240, %v3768, %v3772
        %v3775 = vshrl.u32 %v3579, 16
        %v3777 = vrot.slane %v3775, 4
        %v3778 = vshll.u32 %v3579, 16
        %v3780 = vrot.slane %v3778, 5
        %v3781 = vor.u32 %v3777, %v3780
        %v3782 = vrot.slane %v3781, 4
        %v3784 = vshll.u32 %v3580, 16
        %v3786 = vrot.slane %v3784, 5
        %v3787 = vsel %vm240, %v3782, %v3786
        %v3788 = vshrl.u32 %v3580, 16
        %v3790 = vrot.slane %v3788, 4
        %v3791 = vor.u32 %v3790, %v3786
        %v3792 = vrot.slane %v3791, 4
        %v3794 = vshll.u32 %v3581, 16
        %v3796 = vrot.slane %v3794, 5
        %v3797 = vsel %vm240, %v3792, %v3796
        %v3799 = vshrl.u32 %v3582, 16
        %v3801 = vrot.slane %v3799, 4
        %v3802 = vshll.u32 %v3582, 16
        %v3804 = vrot.slane %v3802, 5
        %v3805 = vor.u32 %v3801, %v3804
        %v3806 = vrot.slane %v3805, 4
        %v3808 = vshll.u32 %v3583, 16
        %v3810 = vrot.slane %v3808, 5
        %v3811 = vsel %vm240, %v3806, %v3810
        %v3812 = vshrl.u32 %v3583, 16
        %v3814 = vrot.slane %v3812, 4
        %v3815 = vor.u32 %v3814, %v3810
        %v3816 = vrot.slane %v3815, 4
        %v3818 = vshll.u32 %v3584, 16
        %v3820 = vrot.slane %v3818, 5
        %v3821 = vsel %vm240, %v3816, %v3820
        %v3823 = vshrl.u32 %v3585, 16
        %v3825 = vrot.slane %v3823, 4
        %v3826 = vshll.u32 %v3585, 16
        %v3828 = vrot.slane %v3826, 5
        %v3829 = vor.u32 %v3825, %v3828
        %v3830 = vrot.slane %v3829, 4
        %v3832 = vshll.u32 %v3586, 16
        %v3834 = vrot.slane %v3832, 5
        %v3835 = vsel %vm240, %v3830, %v3834
        %v3836 = vshrl.u32 %v3586, 16
        %v3838 = vrot.slane %v3836, 4
        %v3839 = vor.u32 %v3838, %v3834
        %v3840 = vrot.slane %v3839, 4
        %v3842 = vshll.u32 %v3587, 16
        %v3844 = vrot.slane %v3842, 5
        %v3845 = vsel %vm240, %v3840, %v3844
        %v3847 = vshrl.u32 %v3588, 16
        %v3849 = vrot.slane %v3847, 4
        %v3850 = vshll.u32 %v3588, 16
        %v3852 = vrot.slane %v3850, 5
        %v3853 = vor.u32 %v3849, %v3852
        %v3854 = vrot.slane %v3853, 4
        %v3856 = vshll.u32 %v3589, 16
        %v3858 = vrot.slane %v3856, 5
        %v3859 = vsel %vm240, %v3854, %v3858
        %v3860 = vshrl.u32 %v3589, 16
        %v3862 = vrot.slane %v3860, 4
        %v3863 = vor.u32 %v3862, %v3858
        %v3864 = vrot.slane %v3863, 4
        %v3866 = vshll.u32 %v3590, 16
        %v3868 = vrot.slane %v3866, 5
        %v3869 = vsel %vm240, %v3864, %v3868
        %v3871 = vshrl.u32 %v3591, 16
        %v3873 = vrot.slane %v3871, 4
        %v3874 = vshll.u32 %v3591, 16
        %v3876 = vrot.slane %v3874, 5
        %v3877 = vor.u32 %v3873, %v3876
        %v3878 = vrot.slane %v3877, 4
        %v3880 = vshll.u32 %v3592, 16
        %v3882 = vrot.slane %v3880, 5
        %v3883 = vsel %vm240, %v3878, %v3882
        %v3884 = vshrl.u32 %v3592, 16
        %v3886 = vrot.slane %v3884, 4
        %v3887 = vor.u32 %v3886, %v3882
        %v3888 = vrot.slane %v3887, 4
        %v3890 = vshll.u32 %v3593, 16
        %v3892 = vrot.slane %v3890, 5
        %v3893 = vsel %vm240, %v3888, %v3892
        %v3895 = vshrl.u32 %v3594, 16
        %v3897 = vrot.slane %v3895, 4
        %v3898 = vshll.u32 %v3594, 16
        %v3900 = vrot.slane %v3898, 5
        %v3901 = vor.u32 %v3897, %v3900
        %v3902 = vrot.slane %v3901, 4
        %v3904 = vshll.u32 %v3595, 16
        %v3906 = vrot.slane %v3904, 5
        %v3907 = vsel %vm240, %v3902, %v3906
        %v3908 = vshrl.u32 %v3595, 16
        %v3910 = vrot.slane %v3908, 4
        %v3911 = vor.u32 %v3910, %v3906
        %v3912 = vrot.slane %v3911, 4
        %v3914 = vshll.u32 %v3596, 16
        %v3916 = vrot.slane %v3914, 5
        %v3917 = vsel %vm240, %v3912, %v3916
        %v3919 = vshrl.u32 %v3597, 16
        %v3921 = vrot.slane %v3919, 4
        %v3922 = vshll.u32 %v3597, 16
        %v3924 = vrot.slane %v3922, 5
        %v3925 = vor.u32 %v3921, %v3924
        %v3926 = vrot.slane %v3925, 4
        %v3928 = vshll.u32 %v3598, 16
        %v3930 = vrot.slane %v3928, 5
        %v3931 = vsel %vm240, %v3926, %v3930
        %v3932 = vshrl.u32 %v3598, 16
        %v3934 = vrot.slane %v3932, 4
        %v3935 = vor.u32 %v3934, %v3930
        %v3936 = vrot.slane %v3935, 4
        %v3938 = vshll.u32 %v3599, 16
        %v3940 = vrot.slane %v3938, 5
        %v3941 = vsel %vm240, %v3936, %v3940
        %v3943 = vshrl.u32 %v3600, 16
        %v3945 = vrot.slane %v3943, 4
        %v3946 = vshll.u32 %v3600, 16
        %v3948 = vrot.slane %v3946, 5
        %v3949 = vor.u32 %v3945, %v3948
        %v3950 = vrot.slane %v3949, 4
        %v3952 = vshll.u32 %v3601, 16
        %v3954 = vrot.slane %v3952, 5
        %v3955 = vsel %vm240, %v3950, %v3954
        %v3956 = vshrl.u32 %v3601, 16
        %v3958 = vrot.slane %v3956, 4
        %v3959 = vor.u32 %v3958, %v3954
        %v3960 = vrot.slane %v3959, 4
        %v3962 = vshll.u32 %v3602, 16
        %v3964 = vrot.slane %v3962, 5
        %v3965 = vsel %vm240, %v3960, %v3964
        %v3967 = vshrl.u32 %v3603, 16
        %v3969 = vrot.slane %v3967, 4
        %v3970 = vshll.u32 %v3603, 16
        %v3972 = vrot.slane %v3970, 5
        %v3973 = vor.u32 %v3969, %v3972
        %v3974 = vrot.slane %v3973, 4
        %v3976 = vshll.u32 %v3604, 16
        %v3978 = vrot.slane %v3976, 5
        %v3979 = vsel %vm240, %v3974, %v3978
        %v3980 = vshrl.u32 %v3604, 16
        %v3982 = vrot.slane %v3980, 4
        %v3983 = vor.u32 %v3982, %v3978
        %v3984 = vrot.slane %v3983, 4
        %v3986 = vshll.u32 %v3605, 16
        %v3988 = vrot.slane %v3986, 5
        %v3989 = vsel %vm240, %v3984, %v3988
        %s3990 = scalar_lea.vmem %s1, 14
        %v3991 = vld [vmem:[%s3990] sm:$0x3]
        %v3992 = vunpack.c.l.b16 %v3619
        %v3993 = vunpack.c.l.b16 %v3629
        %v3994 = vunpack.c.l.b16 %v3643
        %v3995 = vunpack.c.l.b16 %v3653
        %v3996 = vunpack.c.l.b16 %v3667
        %v3997 = vunpack.c.l.b16 %v3677
        %v3998 = vunpack.c.l.b16 %v3691
        %v3999 = vunpack.c.l.b16 %v3701
        %v4000 = vunpack.c.l.b16 %v3715
        %v4001 = vunpack.c.l.b16 %v3725
        %v4002 = vunpack.c.l.b16 %v3739
        %v4003 = vunpack.c.l.b16 %v3749
        %v4004 = vunpack.c.l.b16 %v3763
        %v4005 = vunpack.c.l.b16 %v3773
        %v4006 = vunpack.c.l.b16 %v3787
        %v4007 = vunpack.c.l.b16 %v3797
        %v4008 = vunpack.c.l.b16 %v3811
        %v4009 = vunpack.c.l.b16 %v3821
        %v4010 = vunpack.c.l.b16 %v3835
        %v4011 = vunpack.c.l.b16 %v3845
        %v4012 = vunpack.c.l.b16 %v3859
        %v4013 = vunpack.c.l.b16 %v3869
        %v4014 = vunpack.c.l.b16 %v3883
        %v4015 = vunpack.c.l.b16 %v3893
        %v4016 = vunpack.c.l.b16 %v3907
        %v4017 = vunpack.c.l.b16 %v3917
        %v4018 = vunpack.c.l.b16 %v3931
        %v4019 = vunpack.c.l.b16 %v3941
        %v4020 = vunpack.c.l.b16 %v3955
        %v4021 = vunpack.c.l.b16 %v3965
        %v4022 = vunpack.c.l.b16 %v3979
        %v4023 = vunpack.c.l.b16 %v3989
        %v4024 = vpack.c.b16 %v3993, %v3992
        %v4025 = vpack.c.b16 %v3995, %v3994
        %v4026 = vpack.c.b16 %v3997, %v3996
        %v4027 = vpack.c.b16 %v3999, %v3998
        %v4028 = vpack.c.b16 %v4001, %v4000
        %v4029 = vpack.c.b16 %v4003, %v4002
        %v4030 = vpack.c.b16 %v4005, %v4004
        %v4031 = vpack.c.b16 %v4007, %v4006
        %v4032 = vpack.c.b16 %v4009, %v4008
        %v4033 = vpack.c.b16 %v4011, %v4010
        %v4034 = vpack.c.b16 %v4013, %v4012
        %v4035 = vpack.c.b16 %v4015, %v4014
        %v4036 = vpack.c.b16 %v4017, %v4016
        %v4037 = vpack.c.b16 %v4019, %v4018
        %v4038 = vpack.c.b16 %v4021, %v4020
        %v4039 = vpack.c.b16 %v4023, %v4022
        %v4041 = vsel %vm675, %v4024, 0
        %v4044 = vsel %vm675, %v4025, 0
        %v4047 = vsel %vm675, %v4026, 0
        %v4050 = vsel %vm675, %v4027, 0
        %v4053 = vsel %vm675, %v4028, 0
        %v4056 = vsel %vm675, %v4029, 0
        %v4059 = vsel %vm675, %v4030, 0
        %v4062 = vsel %vm675, %v4031, 0
        %v4065 = vsel %vm675, %v4032, 0
        %v4068 = vsel %vm675, %v4033, 0
        %v4071 = vsel %vm675, %v4034, 0
        %v4074 = vsel %vm675, %v4035, 0
        %v4077 = vsel %vm675, %v4036, 0
        %v4080 = vsel %vm675, %v4037, 0
        %v4083 = vsel %vm675, %v4038, 0
        %v4086 = vsel %vm675, %v4039, 0
        %v4089 = vsel %vm724, %v3991, 0
        %4091 = vmatprep.subr.bf16.mxu0 0
        %4092 = vmatpush1.bf16.msra.mxu0 %v4089
        %4093 = vmatprep.subr.bf16.mxu0 0
        %4094 = vmatpush1.bf16.msra.mxu0 0
        %4095 = vmatprep.subr.bf16.mxu0 0
        %4096 = vmatpush1.bf16.msra.mxu0 0
        %4097 = vmatprep.subr.bf16.mxu0 0
        %4098 = vmatpush1.bf16.msra.mxu0 0
        %4099 = vmatprep.subr.bf16.mxu0 0
        %4100 = vmatpush1.bf16.msra.mxu0 0
        %4101 = vmatprep.subr.bf16.mxu0 0
        %4102 = vmatpush1.bf16.msra.mxu0 0
        %4103 = vmatprep.subr.bf16.mxu0 0
        %4104 = vmatpush1.bf16.msra.mxu0 0
        %4105 = vmatprep.subr.bf16.mxu0 0
        %4106 = vmatpush1.bf16.msra.mxu0 0
        %4107 = vmatprep.subr.bf16.mxu0 0
        %4108 = vmatpush1.bf16.msra.mxu0 0
        %4109 = vmatprep.subr.bf16.mxu0 0
        %4110 = vmatpush1.bf16.msra.mxu0 0
        %4111 = vmatprep.subr.bf16.mxu0 0
        %4112 = vmatpush1.bf16.msra.mxu0 0
        %4113 = vmatprep.subr.bf16.mxu0 0
        %4114 = vmatpush1.bf16.msra.mxu0 0
        %4115 = vmatprep.subr.bf16.mxu0 0
        %4116 = vmatpush1.bf16.msra.mxu0 0
        %4117 = vmatprep.subr.bf16.mxu0 0
        %4118 = vmatpush1.bf16.msra.mxu0 0
        %4119 = vmatprep.subr.bf16.mxu0 0
        %4120 = vmatpush1.bf16.msra.mxu0 0
        %4121 = vmatprep.subr.bf16.mxu0 0
        %4122 = vmatpush1.bf16.msra.mxu0 0
        %4123 = vmatprep.mubr.bf16.mxu0 0
        %4124 = vmatmul.mubr.bf16.gmra.mrb[0].mxu0 %v4041
        %v4125 = vpop.f32.mrb[0].mxu0
        %v4126 = vadd.f32 0.0, %v4125
        %v4127 = vpop.f32.mrb[0].mxu0
        %v4128 = vpop.f32.mrb[0].mxu0
        %v4129 = vadd.f32 0.0, %v4128
        %v4130 = vpop.f32.mrb[0].mxu0
        %4131 = vmatprep.mubr.bf16.mxu0 0
        %4132 = vmatmul.mubr.bf16.gmra.mrb[0].mxu0 %v4044
        %v4133 = vpop.f32.mrb[0].mxu0
        %v4134 = vadd.f32 0.0, %v4133
        %v4135 = vpop.f32.mrb[0].mxu0
        %v4136 = vpop.f32.mrb[0].mxu0
        %v4137 = vadd.f32 0.0, %v4136
        %v4138 = vpop.f32.mrb[0].mxu0
        %4139 = vmatprep.mubr.bf16.mxu0 0
        %4140 = vmatmul.mubr.bf16.gmra.mrb[0].mxu0 %v4047
        %v4141 = vpop.f32.mrb[0].mxu0
        %v4142 = vadd.f32 0.0, %v4141
        %v4143 = vpop.f32.mrb[0].mxu0
        %v4144 = vpop.f32.mrb[0].mxu0
        %v4145 = vadd.f32 0.0, %v4144
        %v4146 = vpop.f32.mrb[0].mxu0
        %4147 = vmatprep.mubr.bf16.mxu0 0
        %4148 = vmatmul.mubr.bf16.gmra.mrb[0].mxu0 %v4050
        %v4149 = vpop.f32.mrb[0].mxu0
        %v4150 = vadd.f32 0.0, %v4149
        %v4151 = vpop.f32.mrb[0].mxu0
        %v4152 = vpop.f32.mrb[0].mxu0
        %v4153 = vadd.f32 0.0, %v4152
        %v4154 = vpop.f32.mrb[0].mxu0
        %4155 = vmatprep.mubr.bf16.mxu0 0
        %4156 = vmatmul.mubr.bf16.gmra.mrb[0].mxu0 %v4053
        %v4157 = vpop.f32.mrb[0].mxu0
        %v4158 = vadd.f32 0.0, %v4157
        %v4159 = vpop.f32.mrb[0].mxu0
        %v4160 = vpop.f32.mrb[0].mxu0
        %v4161 = vadd.f32 0.0, %v4160
        %v4162 = vpop.f32.mrb[0].mxu0
        %4163 = vmatprep.mubr.bf16.mxu0 0
        %4164 = vmatmul.mubr.bf16.gmra.mrb[0].mxu0 %v4056
        %v4165 = vpop.f32.mrb[0].mxu0
        %v4166 = vadd.f32 0.0, %v4165
        %v4167 = vpop.f32.mrb[0].mxu0
        %v4168 = vpop.f32.mrb[0].mxu0
        %v4169 = vadd.f32 0.0, %v4168
        %v4170 = vpop.f32.mrb[0].mxu0
        %4171 = vmatprep.mubr.bf16.mxu0 0
        %4172 = vmatmul.mubr.bf16.gmra.mrb[0].mxu0 %v4059
        %v4173 = vpop.f32.mrb[0].mxu0
        %v4174 = vadd.f32 0.0, %v4173
        %v4175 = vpop.f32.mrb[0].mxu0
        %v4176 = vpop.f32.mrb[0].mxu0
        %v4177 = vadd.f32 0.0, %v4176
        %v4178 = vpop.f32.mrb[0].mxu0
        %4179 = vmatprep.mubr.bf16.mxu0 0
        %4180 = vmatmul.mubr.bf16.gmra.mrb[0].mxu0 %v4062
        %v4181 = vpop.f32.mrb[0].mxu0
        %v4182 = vadd.f32 0.0, %v4181
        %v4183 = vpop.f32.mrb[0].mxu0
        %v4184 = vpop.f32.mrb[0].mxu0
        %v4185 = vadd.f32 0.0, %v4184
        %v4186 = vpop.f32.mrb[0].mxu0
        %4187 = vmatprep.mubr.bf16.mxu0 0
        %4188 = vmatmul.mubr.bf16.gmra.mrb[0].mxu0 %v4065
        %v4189 = vpop.f32.mrb[0].mxu0
        %v4190 = vadd.f32 0.0, %v4189
        %v4191 = vpop.f32.mrb[0].mxu0
        %v4192 = vpop.f32.mrb[0].mxu0
        %v4193 = vadd.f32 0.0, %v4192
        %v4194 = vpop.f32.mrb[0].mxu0
        %4195 = vmatprep.mubr.bf16.mxu0 0
        %4196 = vmatmul.mubr.bf16.gmra.mrb[0].mxu0 %v4068
        %v4197 = vpop.f32.mrb[0].mxu0
        %v4198 = vadd.f32 0.0, %v4197
        %v4199 = vpop.f32.mrb[0].mxu0
        %v4200 = vpop.f32.mrb[0].mxu0
        %v4201 = vadd.f32 0.0, %v4200
        %v4202 = vpop.f32.mrb[0].mxu0
        %4203 = vmatprep.mubr.bf16.mxu0 0
        %4204 = vmatmul.mubr.bf16.gmra.mrb[0].mxu0 %v4071
        %v4205 = vpop.f32.mrb[0].mxu0
        %v4206 = vadd.f32 0.0, %v4205
        %v4207 = vpop.f32.mrb[0].mxu0
        %v4208 = vpop.f32.mrb[0].mxu0
        %v4209 = vadd.f32 0.0, %v4208
        %v4210 = vpop.f32.mrb[0].mxu0
        %4211 = vmatprep.mubr.bf16.mxu0 0
        %4212 = vmatmul.mubr.bf16.gmra.mrb[0].mxu0 %v4074
        %v4213 = vpop.f32.mrb[0].mxu0
        %v4214 = vadd.f32 0.0, %v4213
        %v4215 = vpop.f32.mrb[0].mxu0
        %v4216 = vpop.f32.mrb[0].mxu0
        %v4217 = vadd.f32 0.0, %v4216
        %v4218 = vpop.f32.mrb[0].mxu0
        %4219 = vmatprep.mubr.bf16.mxu0 0
        %4220 = vmatmul.mubr.bf16.gmra.mrb[0].mxu0 %v4077
        %v4221 = vpop.f32.mrb[0].mxu0
        %v4222 = vadd.f32 0.0, %v4221
        %v4223 = vpop.f32.mrb[0].mxu0
        %v4224 = vpop.f32.mrb[0].mxu0
        %v4225 = vadd.f32 0.0, %v4224
        %v4226 = vpop.f32.mrb[0].mxu0
        %4227 = vmatprep.mubr.bf16.mxu0 0
        %4228 = vmatmul.mubr.bf16.gmra.mrb[0].mxu0 %v4080
        %v4229 = vpop.f32.mrb[0].mxu0
        %v4230 = vadd.f32 0.0, %v4229
        %v4231 = vpop.f32.mrb[0].mxu0
        %v4232 = vpop.f32.mrb[0].mxu0
        %v4233 = vadd.f32 0.0, %v4232
        %v4234 = vpop.f32.mrb[0].mxu0
        %4235 = vmatprep.mubr.bf16.mxu0 0
        %4236 = vmatmul.mubr.bf16.gmra.mrb[0].mxu0 %v4083
        %v4237 = vpop.f32.mrb[0].mxu0
        %v4238 = vadd.f32 0.0, %v4237
        %v4239 = vpop.f32.mrb[0].mxu0
        %v4240 = vpop.f32.mrb[0].mxu0
        %v4241 = vadd.f32 0.0, %v4240
        %v4242 = vpop.f32.mrb[0].mxu0
        %4243 = vmatprep.mubr.bf16.mxu0 0
        %4244 = vmatmul.mubr.bf16.gmra.mrb[0].mxu0 %v4086
        %v4245 = vpop.f32.mrb[0].mxu0
        %v4246 = vadd.f32 0.0, %v4245
        %v4247 = vpop.f32.mrb[0].mxu0
        %v4248 = vpop.f32.mrb[0].mxu0
        %v4249 = vadd.f32 0.0, %v4248
        %v4250 = vpop.f32.mrb[0].mxu0
        %4251 = vdwg.mxu0
        %v4252 = vadd.f32 %v3526, %v4126
        %v4253 = vadd.f32 %v3527, %v4129
        %v4254 = vadd.f32 %v3528, %v4134
        %v4255 = vadd.f32 %v3529, %v4137
        %v4256 = vadd.f32 %v3530, %v4142
        %v4257 = vadd.f32 %v3531, %v4145
        %v4258 = vadd.f32 %v3532, %v4150
        %v4259 = vadd.f32 %v3533, %v4153
        %v4260 = vadd.f32 %v3534, %v4158
        %v4261 = vadd.f32 %v3535, %v4161
        %v4262 = vadd.f32 %v3536, %v4166
        %v4263 = vadd.f32 %v3537, %v4169
        %v4264 = vadd.f32 %v3538, %v4174
        %v4265 = vadd.f32 %v3539, %v4177
        %v4266 = vadd.f32 %v3540, %v4182
        %v4267 = vadd.f32 %v3541, %v4185
        %v4268 = vadd.f32 %v3542, %v4190
        %v4269 = vadd.f32 %v3543, %v4193
        %v4270 = vadd.f32 %v3544, %v4198
        %v4271 = vadd.f32 %v3545, %v4201
        %v4272 = vadd.f32 %v3546, %v4206
        %v4273 = vadd.f32 %v3547, %v4209
        %v4274 = vadd.f32 %v3548, %v4214
        %v4275 = vadd.f32 %v3549, %v4217
        %v4276 = vadd.f32 %v3550, %v4222
        %v4277 = vadd.f32 %v3551, %v4225
        %v4278 = vadd.f32 %v3552, %v4230
        %v4279 = vadd.f32 %v3553, %v4233
        %v4280 = vadd.f32 %v3554, %v4238
        %v4281 = vadd.f32 %v3555, %v4241
        %v4282 = vadd.f32 %v3556, %v4246
        %v4283 = vadd.f32 %v3557, %v4249
        %v4284 = vld [vmem:[%s3199] sm:$0xe]
        %v4285 = vld [vmem:[%s3199 + $0xc] sm:$0xe]
        %v4286 = vld [vmem:[%s3199 + $0x18] sm:$0xe]
        %v4287 = vld [vmem:[%s3199 + $0x24] sm:$0xe]
        %v4288 = vld [vmem:[%s3199 + $0x30] sm:$0xe]
        %v4289 = vld [vmem:[%s3199 + $0x3c] sm:$0xe]
        %v4290 = vld [vmem:[%s3199 + $0x48] sm:$0xe]
        %v4291 = vld [vmem:[%s3199 + $0x54] sm:$0xe]
        %v4292 = vld [vmem:[%s3199 + $0x60] sm:$0xe]
        %v4293 = vld [vmem:[%s3199 + $0x6c] sm:$0xe]
        %v4294 = vld [vmem:[%s3199 + $0x78] sm:$0xe]
        %v4295 = vld [vmem:[%s3199 + $0x84] sm:$0xe]
        %v4296 = vld [vmem:[%s3199 + $0x90] sm:$0xe]
        %v4297 = vld [vmem:[%s3199 + $0x9c] sm:$0xe]
        %v4298 = vld [vmem:[%s3199 + $0xa8] sm:$0xe]
        %v4299 = vld [vmem:[%s3199 + $0xb4] sm:$0xe]
        %v4348 = vrot.slane %v4284, 5
        %v4349 = vrot.slane %v4348, 4
        %v4350 = vrot.slane %v3559, 5
        %v4351 = vsel %vm1231, %v4349, %v4350
        %v4352 = vrot.slane %v4350, 4
        %v4353 = vrot.slane %v3560, 5
        %v4354 = vsel %vm1231, %v4352, %v4353
        %v4355 = vrot.slane %v4285, 5
        %v4356 = vrot.slane %v4355, 4
        %v4357 = vrot.slane %v3562, 5
        %v4358 = vsel %vm1231, %v4356, %v4357
        %v4359 = vrot.slane %v4357, 4
        %v4360 = vrot.slane %v3563, 5
        %v4361 = vsel %vm1231, %v4359, %v4360
        %v4362 = vrot.slane %v4286, 5
        %v4363 = vrot.slane %v4362, 4
        %v4364 = vrot.slane %v3565, 5
        %v4365 = vsel %vm1231, %v4363, %v4364
        %v4366 = vrot.slane %v4364, 4
        %v4367 = vrot.slane %v3566, 5
        %v4368 = vsel %vm1231, %v4366, %v4367
        %v4369 = vrot.slane %v4287, 5
        %v4370 = vrot.slane %v4369, 4
        %v4371 = vrot.slane %v3568, 5
        %v4372 = vsel %vm1231, %v4370, %v4371
        %v4373 = vrot.slane %v4371, 4
        %v4374 = vrot.slane %v3569, 5
        %v4375 = vsel %vm1231, %v4373, %v4374
        %v4376 = vrot.slane %v4288, 5
        %v4377 = vrot.slane %v4376, 4
        %v4378 = vrot.slane %v3571, 5
        %v4379 = vsel %vm1231, %v4377, %v4378
        %v4380 = vrot.slane %v4378, 4
        %v4381 = vrot.slane %v3572, 5
        %v4382 = vsel %vm1231, %v4380, %v4381
        %v4383 = vrot.slane %v4289, 5
        %v4384 = vrot.slane %v4383, 4
        %v4385 = vrot.slane %v3574, 5
        %v4386 = vsel %vm1231, %v4384, %v4385
        %v4387 = vrot.slane %v4385, 4
        %v4388 = vrot.slane %v3575, 5
        %v4389 = vsel %vm1231, %v4387, %v4388
        %v4390 = vrot.slane %v4290, 5
        %v4391 = vrot.slane %v4390, 4
        %v4392 = vrot.slane %v3577, 5
        %v4393 = vsel %vm1231, %v4391, %v4392
        %v4394 = vrot.slane %v4392, 4
        %v4395 = vrot.slane %v3578, 5
        %v4396 = vsel %vm1231, %v4394, %v4395
        %v4397 = vrot.slane %v4291, 5
        %v4398 = vrot.slane %v4397, 4
        %v4399 = vrot.slane %v3580, 5
        %v4400 = vsel %vm1231, %v4398, %v4399
        %v4401 = vrot.slane %v4399, 4
        %v4402 = vrot.slane %v3581, 5
        %v4403 = vsel %vm1231, %v4401, %v4402
        %v4404 = vrot.slane %v4292, 5
        %v4405 = vrot.slane %v4404, 4
        %v4406 = vrot.slane %v3583, 5
        %v4407 = vsel %vm1231, %v4405, %v4406
        %v4408 = vrot.slane %v4406, 4
        %v4409 = vrot.slane %v3584, 5
        %v4410 = vsel %vm1231, %v4408, %v4409
        %v4411 = vrot.slane %v4293, 5
        %v4412 = vrot.slane %v4411, 4
        %v4413 = vrot.slane %v3586, 5
        %v4414 = vsel %vm1231, %v4412, %v4413
        %v4415 = vrot.slane %v4413, 4
        %v4416 = vrot.slane %v3587, 5
        %v4417 = vsel %vm1231, %v4415, %v4416
        %v4418 = vrot.slane %v4294, 5
        %v4419 = vrot.slane %v4418, 4
        %v4420 = vrot.slane %v3589, 5
        %v4421 = vsel %vm1231, %v4419, %v4420
        %v4422 = vrot.slane %v4420, 4
        %v4423 = vrot.slane %v3590, 5
        %v4424 = vsel %vm1231, %v4422, %v4423
        %v4425 = vrot.slane %v4295, 5
        %v4426 = vrot.slane %v4425, 4
        %v4427 = vrot.slane %v3592, 5
        %v4428 = vsel %vm1231, %v4426, %v4427
        %v4429 = vrot.slane %v4427, 4
        %v4430 = vrot.slane %v3593, 5
        %v4431 = vsel %vm1231, %v4429, %v4430
        %v4432 = vrot.slane %v4296, 5
        %v4433 = vrot.slane %v4432, 4
        %v4434 = vrot.slane %v3595, 5
        %v4435 = vsel %vm1231, %v4433, %v4434
        %v4436 = vrot.slane %v4434, 4
        %v4437 = vrot.slane %v3596, 5
        %v4438 = vsel %vm1231, %v4436, %v4437
        %v4439 = vrot.slane %v4297, 5
        %v4440 = vrot.slane %v4439, 4
        %v4441 = vrot.slane %v3598, 5
        %v4442 = vsel %vm1231, %v4440, %v4441
        %v4443 = vrot.slane %v4441, 4
        %v4444 = vrot.slane %v3599, 5
        %v4445 = vsel %vm1231, %v4443, %v4444
        %v4446 = vrot.slane %v4298, 5
        %v4447 = vrot.slane %v4446, 4
        %v4448 = vrot.slane %v3601, 5
        %v4449 = vsel %vm1231, %v4447, %v4448
        %v4450 = vrot.slane %v4448, 4
        %v4451 = vrot.slane %v3602, 5
        %v4452 = vsel %vm1231, %v4450, %v4451
        %v4453 = vrot.slane %v4299, 5
        %v4454 = vrot.slane %v4453, 4
        %v4455 = vrot.slane %v3604, 5
        %v4456 = vsel %vm1231, %v4454, %v4455
        %v4457 = vrot.slane %v4455, 4
        %v4458 = vrot.slane %v3605, 5
        %v4459 = vsel %vm1231, %v4457, %v4458
        %s4460 = scalar_lea.vmem %s1, 16
        %v4461 = vld [vmem:[%s4460] sm:$0x3]
        %v4462 = vunpack.c.l.b16 %v4351
        %v4463 = vunpack.c.l.b16 %v4354
        %v4464 = vunpack.c.l.b16 %v4358
        %v4465 = vunpack.c.l.b16 %v4361
        %v4466 = vunpack.c.l.b16 %v4365
        %v4467 = vunpack.c.l.b16 %v4368
        %v4468 = vunpack.c.l.b16 %v4372
        %v4469 = vunpack.c.l.b16 %v4375
        %v4470 = vunpack.c.l.b16 %v4379
        %v4471 = vunpack.c.l.b16 %v4382
        %v4472 = vunpack.c.l.b16 %v4386
        %v4473 = vunpack.c.l.b16 %v4389
        %v4474 = vunpack.c.l.b16 %v4393
        %v4475 = vunpack.c.l.b16 %v4396
        %v4476 = vunpack.c.l.b16 %v4400
        %v4477 = vunpack.c.l.b16 %v4403
        %v4478 = vunpack.c.l.b16 %v4407
        %v4479 = vunpack.c.l.b16 %v4410
        %v4480 = vunpack.c.l.b16 %v4414
        %v4481 = vunpack.c.l.b16 %v4417
        %v4482 = vunpack.c.l.b16 %v4421
        %v4483 = vunpack.c.l.b16 %v4424
        %v4484 = vunpack.c.l.b16 %v4428
        %v4485 = vunpack.c.l.b16 %v4431
        %v4486 = vunpack.c.l.b16 %v4435
        %v4487 = vunpack.c.l.b16 %v4438
        %v4488 = vunpack.c.l.b16 %v4442
        %v4489 = vunpack.c.l.b16 %v4445
        %v4490 = vunpack.c.l.b16 %v4449
        %v4491 = vunpack.c.l.b16 %v4452
        %v4492 = vunpack.c.l.b16 %v4456
        %v4493 = vunpack.c.l.b16 %v4459
        %v4494 = vpack.c.b16 %v4463, %v4462
        %v4495 = vpack.c.b16 %v4465, %v4464
        %v4496 = vpack.c.b16 %v4467, %v4466
        %v4497 = vpack.c.b16 %v4469, %v4468
        %v4498 = vpack.c.b16 %v4471, %v4470
        %v4499 = vpack.c.b16 %v4473, %v4472
        %v4500 = vpack.c.b16 %v4475, %v4474
        %v4501 = vpack.c.b16 %v4477, %v4476
        %v4502 = vpack.c.b16 %v4479, %v4478
        %v4503 = vpack.c.b16 %v4481, %v4480
        %v4504 = vpack.c.b16 %v4483, %v4482
        %v4505 = vpack.c.b16 %v4485, %v4484
        %v4506 = vpack.c.b16 %v4487, %v4486
        %v4507 = vpack.c.b16 %v4489, %v4488
        %v4508 = vpack.c.b16 %v4491, %v4490
        %v4509 = vpack.c.b16 %v4493, %v4492
        %v4511 = vsel %vm675, %v4494, 0
        %v4514 = vsel %vm675, %v4495, 0
        %v4517 = vsel %vm675, %v4496, 0
        %v4520 = vsel %vm675, %v4497, 0
        %v4523 = vsel %vm675, %v4498, 0
        %v4526 = vsel %vm675, %v4499, 0
        %v4529 = vsel %vm675, %v4500, 0
        %v4532 = vsel %vm675, %v4501, 0
        %v4535 = vsel %vm675, %v4502, 0
        %v4538 = vsel %vm675, %v4503, 0
        %v4541 = vsel %vm675, %v4504, 0
        %v4544 = vsel %vm675, %v4505, 0
        %v4547 = vsel %vm675, %v4506, 0
        %v4550 = vsel %vm675, %v4507, 0
        %v4553 = vsel %vm675, %v4508, 0
        %v4556 = vsel %vm675, %v4509, 0
        %v4559 = vsel %vm724, %v4461, 0
        %4561 = vmatprep.subr.bf16.mxu0 0
        %4562 = vmatpush1.bf16.msra.mxu0 %v4559
        %4563 = vmatprep.subr.bf16.mxu0 0
        %4564 = vmatpush1.bf16.msra.mxu0 0
        %4565 = vmatprep.subr.bf16.mxu0 0
        %4566 = vmatpush1.bf16.msra.mxu0 0
        %4567 = vmatprep.subr.bf16.mxu0 0
        %4568 = vmatpush1.bf16.msra.mxu0 0
        %4569 = vmatprep.subr.bf16.mxu0 0
        %4570 = vmatpush1.bf16.msra.mxu0 0
        %4571 = vmatprep.subr.bf16.mxu0 0
        %4572 = vmatpush1.bf16.msra.mxu0 0
        %4573 = vmatprep.subr.bf16.mxu0 0
        %4574 = vmatpush1.bf16.msra.mxu0 0
        %4575 = vmatprep.subr.bf16.mxu0 0
        %4576 = vmatpush1.bf16.msra.mxu0 0
        %4577 = vmatprep.subr.bf16.mxu0 0
        %4578 = vmatpush1.bf16.msra.mxu0 0
        %4579 = vmatprep.subr.bf16.mxu0 0
        %4580 = vmatpush1.bf16.msra.mxu0 0
        %4581 = vmatprep.subr.bf16.mxu0 0
        %4582 = vmatpush1.bf16.msra.mxu0 0
        %4583 = vmatprep.subr.bf16.mxu0 0
        %4584 = vmatpush1.bf16.msra.mxu0 0
        %4585 = vmatprep.subr.bf16.mxu0 0
        %4586 = vmatpush1.bf16.msra.mxu0 0
        %4587 = vmatprep.subr.bf16.mxu0 0
        %4588 = vmatpush1.bf16.msra.mxu0 0
        %4589 = vmatprep.subr.bf16.mxu0 0
        %4590 = vmatpush1.bf16.msra.mxu0 0
        %4591 = vmatprep.subr.bf16.mxu0 0
        %4592 = vmatpush1.bf16.msra.mxu0 0
        %4593 = vmatprep.mubr.bf16.mxu0 0
        %4594 = vmatmul.mubr.bf16.gmra.mrb[0].mxu0 %v4511
        %v4595 = vpop.f32.mrb[0].mxu0
        %v4596 = vadd.f32 0.0, %v4595
        %v4597 = vpop.f32.mrb[0].mxu0
        %v4598 = vpop.f32.mrb[0].mxu0
        %v4599 = vadd.f32 0.0, %v4598
        %v4600 = vpop.f32.mrb[0].mxu0
        %4601 = vmatprep.mubr.bf16.mxu0 0
        %4602 = vmatmul.mubr.bf16.gmra.mrb[0].mxu0 %v4514
        %v4603 = vpop.f32.mrb[0].mxu0
        %v4604 = vadd.f32 0.0, %v4603
        %v4605 = vpop.f32.mrb[0].mxu0
        %v4606 = vpop.f32.mrb[0].mxu0
        %v4607 = vadd.f32 0.0, %v4606
        %v4608 = vpop.f32.mrb[0].mxu0
        %4609 = vmatprep.mubr.bf16.mxu0 0
        %4610 = vmatmul.mubr.bf16.gmra.mrb[0].mxu0 %v4517
        %v4611 = vpop.f32.mrb[0].mxu0
        %v4612 = vadd.f32 0.0, %v4611
        %v4613 = vpop.f32.mrb[0].mxu0
        %v4614 = vpop.f32.mrb[0].mxu0
        %v4615 = vadd.f32 0.0, %v4614
        %v4616 = vpop.f32.mrb[0].mxu0
        %4617 = vmatprep.mubr.bf16.mxu0 0
        %4618 = vmatmul.mubr.bf16.gmra.mrb[0].mxu0 %v4520
        %v4619 = vpop.f32.mrb[0].mxu0
        %v4620 = vadd.f32 0.0, %v4619
        %v4621 = vpop.f32.mrb[0].mxu0
        %v4622 = vpop.f32.mrb[0].mxu0
        %v4623 = vadd.f32 0.0, %v4622
        %v4624 = vpop.f32.mrb[0].mxu0
        %4625 = vmatprep.mubr.bf16.mxu0 0
        %4626 = vmatmul.mubr.bf16.gmra.mrb[0].mxu0 %v4523
        %v4627 = vpop.f32.mrb[0].mxu0
        %v4628 = vadd.f32 0.0, %v4627
        %v4629 = vpop.f32.mrb[0].mxu0
        %v4630 = vpop.f32.mrb[0].mxu0
        %v4631 = vadd.f32 0.0, %v4630
        %v4632 = vpop.f32.mrb[0].mxu0
        %4633 = vmatprep.mubr.bf16.mxu0 0
        %4634 = vmatmul.mubr.bf16.gmra.mrb[0].mxu0 %v4526
        %v4635 = vpop.f32.mrb[0].mxu0
        %v4636 = vadd.f32 0.0, %v4635
        %v4637 = vpop.f32.mrb[0].mxu0
        %v4638 = vpop.f32.mrb[0].mxu0
        %v4639 = vadd.f32 0.0, %v4638
        %v4640 = vpop.f32.mrb[0].mxu0
        %4641 = vmatprep.mubr.bf16.mxu0 0
        %4642 = vmatmul.mubr.bf16.gmra.mrb[0].mxu0 %v4529
        %v4643 = vpop.f32.mrb[0].mxu0
        %v4644 = vadd.f32 0.0, %v4643
        %v4645 = vpop.f32.mrb[0].mxu0
        %v4646 = vpop.f32.mrb[0].mxu0
        %v4647 = vadd.f32 0.0, %v4646
        %v4648 = vpop.f32.mrb[0].mxu0
        %4649 = vmatprep.mubr.bf16.mxu0 0
        %4650 = vmatmul.mubr.bf16.gmra.mrb[0].mxu0 %v4532
        %v4651 = vpop.f32.mrb[0].mxu0
        %v4652 = vadd.f32 0.0, %v4651
        %v4653 = vpop.f32.mrb[0].mxu0
        %v4654 = vpop.f32.mrb[0].mxu0
        %v4655 = vadd.f32 0.0, %v4654
        %v4656 = vpop.f32.mrb[0].mxu0
        %4657 = vmatprep.mubr.bf16.mxu0 0
        %4658 = vmatmul.mubr.bf16.gmra.mrb[0].mxu0 %v4535
        %v4659 = vpop.f32.mrb[0].mxu0
        %v4660 = vadd.f32 0.0, %v4659
        %v4661 = vpop.f32.mrb[0].mxu0
        %v4662 = vpop.f32.mrb[0].mxu0
        %v4663 = vadd.f32 0.0, %v4662
        %v4664 = vpop.f32.mrb[0].mxu0
        %4665 = vmatprep.mubr.bf16.mxu0 0
        %4666 = vmatmul.mubr.bf16.gmra.mrb[0].mxu0 %v4538
        %v4667 = vpop.f32.mrb[0].mxu0
        %v4668 = vadd.f32 0.0, %v4667
        %v4669 = vpop.f32.mrb[0].mxu0
        %v4670 = vpop.f32.mrb[0].mxu0
        %v4671 = vadd.f32 0.0, %v4670
        %v4672 = vpop.f32.mrb[0].mxu0
        %4673 = vmatprep.mubr.bf16.mxu0 0
        %4674 = vmatmul.mubr.bf16.gmra.mrb[0].mxu0 %v4541
        %v4675 = vpop.f32.mrb[0].mxu0
        %v4676 = vadd.f32 0.0, %v4675
        %v4677 = vpop.f32.mrb[0].mxu0
        %v4678 = vpop.f32.mrb[0].mxu0
        %v4679 = vadd.f32 0.0, %v4678
        %v4680 = vpop.f32.mrb[0].mxu0
        %4681 = vmatprep.mubr.bf16.mxu0 0
        %4682 = vmatmul.mubr.bf16.gmra.mrb[0].mxu0 %v4544
        %v4683 = vpop.f32.mrb[0].mxu0
        %v4684 = vadd.f32 0.0, %v4683
        %v4685 = vpop.f32.mrb[0].mxu0
        %v4686 = vpop.f32.mrb[0].mxu0
        %v4687 = vadd.f32 0.0, %v4686
        %v4688 = vpop.f32.mrb[0].mxu0
        %4689 = vmatprep.mubr.bf16.mxu0 0
        %4690 = vmatmul.mubr.bf16.gmra.mrb[0].mxu0 %v4547
        %v4691 = vpop.f32.mrb[0].mxu0
        %v4692 = vadd.f32 0.0, %v4691
        %v4693 = vpop.f32.mrb[0].mxu0
        %v4694 = vpop.f32.mrb[0].mxu0
        %v4695 = vadd.f32 0.0, %v4694
        %v4696 = vpop.f32.mrb[0].mxu0
        %4697 = vmatprep.mubr.bf16.mxu0 0
        %4698 = vmatmul.mubr.bf16.gmra.mrb[0].mxu0 %v4550
        %v4699 = vpop.f32.mrb[0].mxu0
        %v4700 = vadd.f32 0.0, %v4699
        %v4701 = vpop.f32.mrb[0].mxu0
        %v4702 = vpop.f32.mrb[0].mxu0
        %v4703 = vadd.f32 0.0, %v4702
        %v4704 = vpop.f32.mrb[0].mxu0
        %4705 = vmatprep.mubr.bf16.mxu0 0
        %4706 = vmatmul.mubr.bf16.gmra.mrb[0].mxu0 %v4553
        %v4707 = vpop.f32.mrb[0].mxu0
        %v4708 = vadd.f32 0.0, %v4707
        %v4709 = vpop.f32.mrb[0].mxu0
        %v4710 = vpop.f32.mrb[0].mxu0
        %v4711 = vadd.f32 0.0, %v4710
        %v4712 = vpop.f32.mrb[0].mxu0
        %4713 = vmatprep.mubr.bf16.mxu0 0
        %4714 = vmatmul.mubr.bf16.gmra.mrb[0].mxu0 %v4556
        %v4715 = vpop.f32.mrb[0].mxu0
        %v4716 = vadd.f32 0.0, %v4715
        %v4717 = vpop.f32.mrb[0].mxu0
        %v4718 = vpop.f32.mrb[0].mxu0
        %v4719 = vadd.f32 0.0, %v4718
        %v4720 = vpop.f32.mrb[0].mxu0
        %4721 = vdwg.mxu0
        %v4722 = vadd.f32 %v4252, %v4596
        %v4723 = vadd.f32 %v4253, %v4599
        %v4724 = vadd.f32 %v4254, %v4604
        %v4725 = vadd.f32 %v4255, %v4607
        %v4726 = vadd.f32 %v4256, %v4612
        %v4727 = vadd.f32 %v4257, %v4615
        %v4728 = vadd.f32 %v4258, %v4620
        %v4729 = vadd.f32 %v4259, %v4623
        %v4730 = vadd.f32 %v4260, %v4628
        %v4731 = vadd.f32 %v4261, %v4631
        %v4732 = vadd.f32 %v4262, %v4636
        %v4733 = vadd.f32 %v4263, %v4639
        %v4734 = vadd.f32 %v4264, %v4644
        %v4735 = vadd.f32 %v4265, %v4647
        %v4736 = vadd.f32 %v4266, %v4652
        %v4737 = vadd.f32 %v4267, %v4655
        %v4738 = vadd.f32 %v4268, %v4660
        %v4739 = vadd.f32 %v4269, %v4663
        %v4740 = vadd.f32 %v4270, %v4668
        %v4741 = vadd.f32 %v4271, %v4671
        %v4742 = vadd.f32 %v4272, %v4676
        %v4743 = vadd.f32 %v4273, %v4679
        %v4744 = vadd.f32 %v4274, %v4684
        %v4745 = vadd.f32 %v4275, %v4687
        %v4746 = vadd.f32 %v4276, %v4692
        %v4747 = vadd.f32 %v4277, %v4695
        %v4748 = vadd.f32 %v4278, %v4700
        %v4749 = vadd.f32 %v4279, %v4703
        %v4750 = vadd.f32 %v4280, %v4708
        %v4751 = vadd.f32 %v4281, %v4711
        %v4752 = vadd.f32 %v4282, %v4716
        %v4753 = vadd.f32 %v4283, %v4719
        %v4754 = vld [vmem:[%s2] sm:$0x1]
        %v4756 = vlaneseq
        %v4757 = vshrl.u32 %v4756, 7
        %v4758 = vsub.s32 0, %v4757
        %v4759 = vrot.slane %v4754, %v4758
        %v4761 = vadd.f32 %v4722, %v4759
        %v4762 = vadd.f32 %v4723, %v4759
        %v4763 = vadd.f32 %v4724, %v4759
        %v4764 = vadd.f32 %v4725, %v4759
        %v4765 = vadd.f32 %v4726, %v4759
        %v4766 = vadd.f32 %v4727, %v4759
        %v4767 = vadd.f32 %v4728, %v4759
        %v4768 = vadd.f32 %v4729, %v4759
        %v4769 = vadd.f32 %v4730, %v4759
        %v4770 = vadd.f32 %v4731, %v4759
        %v4771 = vadd.f32 %v4732, %v4759
        %v4772 = vadd.f32 %v4733, %v4759
        %v4773 = vadd.f32 %v4734, %v4759
        %v4774 = vadd.f32 %v4735, %v4759
        %v4775 = vadd.f32 %v4736, %v4759
        %v4776 = vadd.f32 %v4737, %v4759
        %v4777 = vadd.f32 %v4738, %v4759
        %v4778 = vadd.f32 %v4739, %v4759
        %v4779 = vadd.f32 %v4740, %v4759
        %v4780 = vadd.f32 %v4741, %v4759
        %v4781 = vadd.f32 %v4742, %v4759
        %v4782 = vadd.f32 %v4743, %v4759
        %v4783 = vadd.f32 %v4744, %v4759
        %v4784 = vadd.f32 %v4745, %v4759
        %v4785 = vadd.f32 %v4746, %v4759
        %v4786 = vadd.f32 %v4747, %v4759
        %v4787 = vadd.f32 %v4748, %v4759
        %v4788 = vadd.f32 %v4749, %v4759
        %v4789 = vadd.f32 %v4750, %v4759
        %v4790 = vadd.f32 %v4751, %v4759
        %v4791 = vadd.f32 %v4752, %v4759
        %v4792 = vadd.f32 %v4753, %v4759
        %v4793 = vmax.f32 %v4761, 0.0
        %v4794 = vmax.f32 %v4762, 0.0
        %v4795 = vmax.f32 %v4763, 0.0
        %v4796 = vmax.f32 %v4764, 0.0
        %v4797 = vmax.f32 %v4765, 0.0
        %v4798 = vmax.f32 %v4766, 0.0
        %v4799 = vmax.f32 %v4767, 0.0
        %v4800 = vmax.f32 %v4768, 0.0
        %v4801 = vmax.f32 %v4769, 0.0
        %v4802 = vmax.f32 %v4770, 0.0
        %v4803 = vmax.f32 %v4771, 0.0
        %v4804 = vmax.f32 %v4772, 0.0
        %v4805 = vmax.f32 %v4773, 0.0
        %v4806 = vmax.f32 %v4774, 0.0
        %v4807 = vmax.f32 %v4775, 0.0
        %v4808 = vmax.f32 %v4776, 0.0
        %v4809 = vmax.f32 %v4777, 0.0
        %v4810 = vmax.f32 %v4778, 0.0
        %v4811 = vmax.f32 %v4779, 0.0
        %v4812 = vmax.f32 %v4780, 0.0
        %v4813 = vmax.f32 %v4781, 0.0
        %v4814 = vmax.f32 %v4782, 0.0
        %v4815 = vmax.f32 %v4783, 0.0
        %v4816 = vmax.f32 %v4784, 0.0
        %v4817 = vmax.f32 %v4785, 0.0
        %v4818 = vmax.f32 %v4786, 0.0
        %v4819 = vmax.f32 %v4787, 0.0
        %v4820 = vmax.f32 %v4788, 0.0
        %v4821 = vmax.f32 %v4789, 0.0
        %v4822 = vmax.f32 %v4790, 0.0
        %v4823 = vmax.f32 %v4791, 0.0
        %v4824 = vmax.f32 %v4792, 0.0
        %v4825 = vpack.c.bf16 %v4794, %v4793
        %v4826 = vpack.c.bf16 %v4796, %v4795
        %v4827 = vpack.c.bf16 %v4798, %v4797
        %v4828 = vpack.c.bf16 %v4800, %v4799
        %v4829 = vpack.c.bf16 %v4802, %v4801
        %v4830 = vpack.c.bf16 %v4804, %v4803
        %v4831 = vpack.c.bf16 %v4806, %v4805
        %v4832 = vpack.c.bf16 %v4808, %v4807
        %v4833 = vpack.c.bf16 %v4810, %v4809
        %v4834 = vpack.c.bf16 %v4812, %v4811
        %v4835 = vpack.c.bf16 %v4814, %v4813
        %v4836 = vpack.c.bf16 %v4816, %v4815
        %v4837 = vpack.c.bf16 %v4818, %v4817
        %v4838 = vpack.c.bf16 %v4820, %v4819
        %v4839 = vpack.c.bf16 %v4822, %v4821
        %v4840 = vpack.c.bf16 %v4824, %v4823
        %v4857 = vunpack.c.l.b16 %v4825
        %v4858 = vunpack.c.h.b16 %v4825
        %v4859 = vunpack.c.l.b16 %v4826
        %v4860 = vunpack.c.h.b16 %v4826
        %v4861 = vunpack.c.l.b16 %v4827
        %v4862 = vunpack.c.h.b16 %v4827
        %v4863 = vunpack.c.l.b16 %v4828
        %v4864 = vunpack.c.h.b16 %v4828
        %v4865 = vunpack.c.l.b16 %v4829
        %v4866 = vunpack.c.h.b16 %v4829
        %v4867 = vunpack.c.l.b16 %v4830
        %v4868 = vunpack.c.h.b16 %v4830
        %v4869 = vunpack.c.l.b16 %v4831
        %v4870 = vunpack.c.h.b16 %v4831
        %v4871 = vunpack.c.l.b16 %v4832
        %v4872 = vunpack.c.h.b16 %v4832
        %v4873 = vunpack.c.l.b16 %v4833
        %v4874 = vunpack.c.h.b16 %v4833
        %v4875 = vunpack.c.l.b16 %v4834
        %v4876 = vunpack.c.h.b16 %v4834
        %v4877 = vunpack.c.l.b16 %v4835
        %v4878 = vunpack.c.h.b16 %v4835
        %v4879 = vunpack.c.l.b16 %v4836
        %v4880 = vunpack.c.h.b16 %v4836
        %v4881 = vunpack.c.l.b16 %v4837
        %v4882 = vunpack.c.h.b16 %v4837
        %v4883 = vunpack.c.l.b16 %v4838
        %v4884 = vunpack.c.h.b16 %v4838
        %v4885 = vunpack.c.l.b16 %v4839
        %v4886 = vunpack.c.h.b16 %v4839
        %v4887 = vunpack.c.l.b16 %v4840
        %v4888 = vunpack.c.h.b16 %v4840
        %v4889 = vpack.c.b16 %v4857, %v4857
        %v4890 = vpack.c.b16 %v4858, %v4858
        %v4891 = vpack.c.b16 %v4859, %v4859
        %v4892 = vpack.c.b16 %v4860, %v4860
        %v4893 = vpack.c.b16 %v4861, %v4861
        %v4894 = vpack.c.b16 %v4862, %v4862
        %v4895 = vpack.c.b16 %v4863, %v4863
        %v4896 = vpack.c.b16 %v4864, %v4864
        %v4897 = vpack.c.b16 %v4865, %v4865
        %v4898 = vpack.c.b16 %v4866, %v4866
        %v4899 = vpack.c.b16 %v4867, %v4867
        %v4900 = vpack.c.b16 %v4868, %v4868
        %v4901 = vpack.c.b16 %v4869, %v4869
        %v4902 = vpack.c.b16 %v4870, %v4870
        %v4903 = vpack.c.b16 %v4871, %v4871
        %v4904 = vpack.c.b16 %v4872, %v4872
        %v4905 = vpack.c.b16 %v4873, %v4873
        %v4906 = vpack.c.b16 %v4874, %v4874
        %v4907 = vpack.c.b16 %v4875, %v4875
        %v4908 = vpack.c.b16 %v4876, %v4876
        %v4909 = vpack.c.b16 %v4877, %v4877
        %v4910 = vpack.c.b16 %v4878, %v4878
        %v4911 = vpack.c.b16 %v4879, %v4879
        %v4912 = vpack.c.b16 %v4880, %v4880
        %v4913 = vpack.c.b16 %v4881, %v4881
        %v4914 = vpack.c.b16 %v4882, %v4882
        %v4915 = vpack.c.b16 %v4883, %v4883
        %v4916 = vpack.c.b16 %v4884, %v4884
        %v4917 = vpack.c.b16 %v4885, %v4885
        %v4918 = vpack.c.b16 %v4886, %v4886
        %v4919 = vpack.c.b16 %v4887, %v4887
        %v4920 = vpack.c.b16 %v4888, %v4888
        %4953 = vst [vmem:[%s177] sm:$0xf] %v4889
        %4954 = vst [vmem:[%s177 + $0x4] sm:$0xf] %v4890
        %4955 = vst [vmem:[%s177 + $0x8] sm:$0xf] %v4891
        %4956 = vst [vmem:[%s177 + $0xc] sm:$0xf] %v4892
        %4957 = vst [vmem:[%s177 + $0x10] sm:$0xf] %v4893
        %4958 = vst [vmem:[%s177 + $0x14] sm:$0xf] %v4894
        %4959 = vst [vmem:[%s177 + $0x18] sm:$0xf] %v4895
        %4960 = vst [vmem:[%s177 + $0x1c] sm:$0xf] %v4896
        %4961 = vst [vmem:[%s177 + $0x20] sm:$0xf] %v4897
        %4962 = vst [vmem:[%s177 + $0x24] sm:$0xf] %v4898
        %4963 = vst [vmem:[%s177 + $0x28] sm:$0xf] %v4899
        %4964 = vst [vmem:[%s177 + $0x2c] sm:$0xf] %v4900
        %4965 = vst [vmem:[%s177 + $0x30] sm:$0xf] %v4901
        %4966 = vst [vmem:[%s177 + $0x34] sm:$0xf] %v4902
        %4967 = vst [vmem:[%s177 + $0x38] sm:$0xf] %v4903
        %4968 = vst [vmem:[%s177 + $0x3c] sm:$0xf] %v4904
        %4969 = vst [vmem:[%s177 + $0x40] sm:$0xf] %v4905
        %4970 = vst [vmem:[%s177 + $0x44] sm:$0xf] %v4906
        %4971 = vst [vmem:[%s177 + $0x48] sm:$0xf] %v4907
        %4972 = vst [vmem:[%s177 + $0x4c] sm:$0xf] %v4908
        %4973 = vst [vmem:[%s177 + $0x50] sm:$0xf] %v4909
        %4974 = vst [vmem:[%s177 + $0x54] sm:$0xf] %v4910
        %4975 = vst [vmem:[%s177 + $0x58] sm:$0xf] %v4911
        %4976 = vst [vmem:[%s177 + $0x5c] sm:$0xf] %v4912
        %4977 = vst [vmem:[%s177 + $0x60] sm:$0xf] %v4913
        %4978 = vst [vmem:[%s177 + $0x64] sm:$0xf] %v4914
        %4979 = vst [vmem:[%s177 + $0x68] sm:$0xf] %v4915
        %4980 = vst [vmem:[%s177 + $0x6c] sm:$0xf] %v4916
        %4981 = vst [vmem:[%s177 + $0x70] sm:$0xf] %v4917
        %4982 = vst [vmem:[%s177 + $0x74] sm:$0xf] %v4918
        %4983 = vst [vmem:[%s177 + $0x78] sm:$0xf] %v4919
        %4984 = vst [vmem:[%s177 + $0x7c] sm:$0xf] %v4920
        %s4985 = sand.u32 %s107, 1
        %s4986 = scalar_lea.sflag [#allocation3], %s4985
        %s4987 = sand.u32 %s107, 1
        %s4988 = smul.addr %s4987, 128
        %s4989 = scalar_lea.vmem [#allocation2], %s4988
        // Predicated region
        $region33: #{tpu_custom_call.1} parent=31 // pred_check
          %p4990 = pneg %p117
        $region34: #{tpu_custom_call.1} parent=31 // pred_check_branch
          %4992 = sbr.rel (%p4990) target = $region36
        $region35: #{tpu_custom_call.1} parent=31 // pred_region
          %s4993 = smul.u32 32, %s22
          %s4995 = ssub.s32 2048, 2048
          %4996 = vsyncadd %s4986, %s4995
          %s4997 = smul.addr %s21, 32
          %s4998 = sadd.s32 %s4993, %s4997
          %s4999 = smul.addr %s4998, 64
          %s5000 = scalar_lea.hbm %s3, %s4999
          %s5001 = sshll.u32 %s4989, 4
          %s5002 = int_to_ptr.vmem [resolvable:$true] %s5001
          %5007 = dma.vmem_to_hbm [thread:$0]  %s5002, 2048, %s5000, %s4986, 64, 64, 4
        $region36: #{tpu_custom_call.1} parent=31 // pred_fallthru
          _
      $region32: #{tpu_custom_call.1} parent=5 // pred_fallthru
        _
      %p5008 = scmp.le.s32.totalorder 2, %s12
      // Predicated region
      $region37: #{tpu_custom_call.1} parent=5 // pred_check
        %p5009 = pneg %p5008
      $region38: #{tpu_custom_call.1} parent=5 // pred_check_branch
        %5011 = sbr.rel (%p5009) target = $region40
      $region39: #{tpu_custom_call.1} parent=5 // pred_region
        %s5012 = ssub.s32 %s12, 2
        // Predicated region
        $region41: #{tpu_custom_call.1} parent=39 // pred_check
          %p5013 = pneg %p123
        $region42: #{tpu_custom_call.1} parent=39 // pred_check_branch
          %5015 = sbr.rel (%p5013) target = $region44
        $region43: #{tpu_custom_call.1} parent=39 // pred_region
          %s5016 = sand.u32 %s108, 1
          %s5017 = scalar_lea.sflag [#allocation3], %s5016
          %s5018 = sand.u32 %s108, 1
          %s5019 = smul.addr %s5018, 128
          %s5020 = scalar_lea.vmem [#allocation2], %s5019
          %5021 = dma.done %s5017, 2048
        $region44: #{tpu_custom_call.1} parent=39 // pred_fallthru
          _
      $region40: #{tpu_custom_call.1} parent=5 // pred_fallthru
        _
    $region6: #{tpu_custom_call.1} parent=1 // loop_footer
      %s16 = sadd.s32 1, %s12
    $region7: #{tpu_custom_call.1} parent=1 // loop_footer_branch
      %11 = sbr.rel target = $region3
    $region8: #{tpu_custom_call.1} parent=1 // loop_exit
      _
    %5022 = vsyncpa [#allocation3], 1
    %s5023 = scalar_lea.sflag [#allocation3], 1
    %5024 = vsyncpa %s5023, 1

// kernel: tpu_custom_call.1
$region0: #{tpu_custom_call.1}
  #allocation0 [shape = 'u32[]', space=smem, size = 0x4, offset = 0x4, fixed_abs, tag = 'smem constant byte address 0x4 - core index']
  #allocation1 [shape = 'u32[144,128]{1,0:T(1,128)}', space=vmem, size = 0x12000, scoped, tag = 'internal scratch']
  %s0 = inlined_call_operand.vmem [shape: bf16[2,1,1,18,18,4], index: 0, kind: input, shape index: {}]
  %s1 = inlined_call_operand.vmem [shape: bf16[9,4,128], index: 1, kind: input, shape index: {}]
  %s2 = inlined_call_operand.vmem [shape: f32[1,128], index: 2, kind: input, shape index: {}]
  %s3 = inlined_call_operand.hbm [shape: bf16[2,256,128], index: 3, kind: output, shape index: {}]
  %s4 = sld [smem:[#allocation0]]
  $region45: #{tpu_custom_call.1} parent=0
    _
  %s6 = ssub.s32 1, %s4
  %s7 = scalar_select 0, %s6, %s4
  $region1: #{tpu_custom_call.1} parent=0
    #allocation2 [shape = 'u8[131072]{0}', space=vmem, size = 0x20000, scoped, tag = 'output window, operand 0']
    #allocation3 [shape = 's32[2]{0}', space=sflag, size = 0x8, scoped, tag = 'scoped memory for tpu_custom_call.1']
    %8 = vsyncpa [#allocation3], 0
    %s9 = scalar_lea.sflag [#allocation3], 1
    %10 = vsyncpa %s9, 0
    loop: start=0, step=1, limit=4
    $region2: #{tpu_custom_call.1} parent=1 // loop_pre_header
      _
    $region3: #{tpu_custom_call.1} parent=1 // loop_header
      %s12 = sphi 0, %s16
      %p13 = scmp.ge.s32.totalorder %s12, 4
      %s19 = sphi 0, %s31
      %s20 = sphi 0, %s27
      %s21 = sphi 0, %s19
      %s22 = sphi 0, %s20
      %s23 = sphi 0, %s21
      %s24 = sphi 0, %s22
      %s34 = sphi 0, %s36
      %s37 = sphi 0, %s34
      %s38 = sphi 0, %s37
      %s54 = sphi 0, %s38
      %s58 = sphi 0, %s58
      %s60 = sphi 0, %s58
      %s61 = sphi 0, %s60
      %s75 = sphi 0, %s61
      %s79 = sphi 0, %s79
      %s81 = sphi 0, %s79
      %s82 = sphi 0, %s81
      %s96 = sphi 0, %s82
      %s104 = sphi 0, %s106
      %s107 = sphi 0, %s104
      %s108 = sphi 0, %s107
      %s124 = sphi 0, %s108
    $region4: #{tpu_custom_call.1} parent=1 // loop_header_branch
      %15 = sbr.rel (%p13) target = $region8
    $region5: #{tpu_custom_call.1} parent=1 // loop_body
      %s17 = ssub.s32 %s12, 1
      %s18 = ssub.s32 %s12, 2
      %s25 = sadd.s32 1, %s20
      %p26 = scmp.ge.s32.totalorder %s25, 1
      %s27 = scalar_select %p26, 0, %s25
      %s28 = sadd.s32 1, %s19
      %s29 = scalar_select %p26, %s28, %s19
      %p30 = scmp.ge.s32.totalorder %s29, 2
      %s31 = scalar_select %p30, 0, %s29
      %s32 = ssub.s32 %s19, %s31
      %p33 = scmp.eq.s32.totalorder %s32, 0
      %s35 = sadd.s32 %s34, 1
      %s36 = scalar_select %p33, %s34, %s35
      %p39 = pneg %p33
      %p40 = scmp.eq.s32.totalorder %s12, 1
      %p41 = por %p39, %p40
      %p42 = scmp.ne.s32.totalorder %s34, %s37
      %p43 = scmp.eq.s32.totalorder %s12, 0
      %p44 = por %p42, %p43
      %p45 = scmp.ne.s32.totalorder %s34, %s37
      %p46 = scmp.eq.s32.totalorder %s17, 1
      %p47 = por %p45, %p46
      %p48 = scmp.ne.s32.totalorder %s37, %s38
      %p49 = scmp.eq.s32.totalorder %s17, 0
      %p50 = por %p48, %p49
      %p51 = scmp.ne.s32.totalorder %s37, %s38
      %p52 = scmp.eq.s32.totalorder %s18, 1
      %p53 = por %p51, %p52
      %p55 = scmp.ne.s32.totalorder %s38, %s54
      %p56 = scmp.eq.s32.totalorder %s18, 0
      %p57 = por %p55, %p56
      %s59 = sadd.s32 %s58, 1
      %p62 = scmp.eq.s32.totalorder %s12, 1
      %p63 = scmp.ne.s32.totalorder %s58, %s60
      %p64 = scmp.eq.s32.totalorder %s12, 0
      %p65 = por %p63, %p64
      %p66 = scmp.ne.s32.totalorder %s58, %s60
      %p67 = scmp.eq.s32.totalorder %s17, 1
      %p68 = por %p66, %p67
      %p69 = scmp.ne.s32.totalorder %s60, %s61
      %p70 = scmp.eq.s32.totalorder %s17, 0
      %p71 = por %p69, %p70
      %p72 = scmp.ne.s32.totalorder %s60, %s61
      %p73 = scmp.eq.s32.totalorder %s18, 1
      %p74 = por %p72, %p73
      %p76 = scmp.ne.s32.totalorder %s61, %s75
      %p77 = scmp.eq.s32.totalorder %s18, 0
      %p78 = por %p76, %p77
      %s80 = sadd.s32 %s79, 1
      %p83 = scmp.eq.s32.totalorder %s12, 1
      %p84 = scmp.ne.s32.totalorder %s79, %s81
      %p85 = scmp.eq.s32.totalorder %s12, 0
      %p86 = por %p84, %p85
      %p87 = scmp.ne.s32.totalorder %s79, %s81
      %p88 = scmp.eq.s32.totalorder %s17, 1
      %p89 = por %p87, %p88
      %p90 = scmp.ne.s32.totalorder %s81, %s82
      %p91 = scmp.eq.s32.totalorder %s17, 0
      %p92 = por %p90, %p91
      %p93 = scmp.ne.s32.totalorder %s81, %s82
      %p94 = scmp.eq.s32.totalorder %s18, 1
      %p95 = por %p93, %p94
      %p97 = scmp.ne.s32.totalorder %s82, %s96
      %p98 = scmp.eq.s32.totalorder %s18, 0
      %p99 = por %p97, %p98
      %s100 = ssub.s32 %s19, %s31
      %s101 = ssub.s32 %s20, %s27
      %s102 = sor.u32 %s100, %s101
      %p103 = scmp.eq.s32.totalorder %s102, 0
      %s105 = sadd.s32 %s104, 1
      %s106 = scalar_select %p103, %s104, %s105
      %p109 = pneg %p103
      %p110 = scmp.eq.s32.totalorder %s12, 1
      %p111 = por %p109, %p110
      %p112 = scmp.ne.s32.totalorder %s104, %s107
      %p113 = scmp.eq.s32.totalorder %s12, 0
      %p114 = por %p112, %p113
      %p115 = scmp.ne.s32.totalorder %s104, %s107
      %p116 = scmp.eq.s32.totalorder %s17, 1
      %p117 = por %p115, %p116
      %p118 = scmp.ne.s32.totalorder %s107, %s108
      %p119 = scmp.eq.s32.totalorder %s17, 0
      %p120 = por %p118, %p119
      %p121 = scmp.ne.s32.totalorder %s107, %s108
      %p122 = scmp.eq.s32.totalorder %s18, 1
      %p123 = por %p121, %p122
      %p125 = scmp.ne.s32.totalorder %s108, %s124
      %p126 = scmp.eq.s32.totalorder %s18, 0
      %p127 = por %p125, %p126
      %p128 = scmp.le.s32.totalorder 1, %s12
      %p129 = scmp.lt.s32.totalorder %s12, 3
      %p130 = pnand %p128, %p129
      %p131 = pneg %p130
      // Predicated region
      $region9: #{tpu_custom_call.1} parent=5 // pred_check
        _
      $region10: #{tpu_custom_call.1} parent=5 // pred_check_branch
        %133 = sbr.rel (%p130) target = $region12
      $region11: #{tpu_custom_call.1} parent=5 // pred_region
        %s134 = ssub.s32 %s12, 1
        // Predicated region
        $region13: #{tpu_custom_call.1} parent=11 // pred_check
          %p135 = pneg %p71
        $region14: #{tpu_custom_call.1} parent=11 // pred_check_branch
          %137 = sbr.rel (%p135) target = $region16
        $region15: #{tpu_custom_call.1} parent=11 // pred_region
          _
        $region16: #{tpu_custom_call.1} parent=11 // pred_fallthru
          _
        // Predicated region
        $region17: #{tpu_custom_call.1} parent=11 // pred_check
          %p138 = pneg %p92
        $region18: #{tpu_custom_call.1} parent=11 // pred_check_branch
          %140 = sbr.rel (%p138) target = $region20
        $region19: #{tpu_custom_call.1} parent=11 // pred_region
          _
        $region20: #{tpu_custom_call.1} parent=11 // pred_fallthru
          _
      $region12: #{tpu_custom_call.1} parent=5 // pred_fallthru
        _
      %p141 = scmp.lt.s32.totalorder %s12, 2
      // Predicated region
      $region21: #{tpu_custom_call.1} parent=5 // pred_check
        %p142 = pneg %p141
      $region22: #{tpu_custom_call.1} parent=5 // pred_check_branch
        %144 = sbr.rel (%p142) target = $region24
      $region23: #{tpu_custom_call.1} parent=5 // pred_region
        // Predicated region
        $region25: #{tpu_custom_call.1} parent=23 // pred_check
          %p145 = pneg %p44
        $region26: #{tpu_custom_call.1} parent=23 // pred_check_branch
          %147 = sbr.rel (%p145) target = $region28
        $region27: #{tpu_custom_call.1} parent=23 // pred_region
          %p148 = scmp.lt.s32.totalorder %s19, 1
          %s149 = scalar_select %p148, %s19, 1
          %s150 = smul.addr %s149, 54
          %s151 = smul.addr %s150, 4
          %s152 = scalar_lea.vmem %s0, %s151
        $region28: #{tpu_custom_call.1} parent=23 // pred_fallthru
          _
      $region24: #{tpu_custom_call.1} parent=5 // pred_fallthru
        _
      %p153 = scmp.le.s32.totalorder 1, %s12
      %p154 = scmp.lt.s32.totalorder %s12, 3
      %p155 = pnand %p153, %p154
      %p156 = pneg %p155
      // Predicated region
      $region29: #{tpu_custom_call.1} parent=5 // pred_check
        _
      $region30: #{tpu_custom_call.1} parent=5 // pred_check_branch
        %158 = sbr.rel (%p155) target = $region32
      $region31: #{tpu_custom_call.1} parent=5 // pred_region
        %s159 = ssub.s32 %s12, 1
        %p160 = scmp.lt.s32.totalorder %s21, 1
        %s161 = scalar_select %p160, %s21, 1
        %s162 = smul.addr %s161, 54
        %s163 = smul.addr %s162, 4
        %s164 = scalar_lea.vmem %s0, %s163
        %p165 = pneg %p50
        %p166 = pneg %p47
        %p167 = pneg %p71
        %p168 = pneg %p68
        %p169 = pneg %p92
        %p170 = pneg %p89
        %p171 = pneg %p120
        %p172 = pneg %p117
        %s173 = sand.u32 %s107, 1
        %s174 = scalar_lea.sflag [#allocation3], %s173
        %s175 = sand.u32 %s107, 1
        %s176 = smul.addr %s175, 128
        %s177 = scalar_lea.vmem [#allocation2], %s176
        %p178 = scmp.lt.s32.totalorder %s21, 1
        %s179 = scalar_select %p178, %s21, 1
        %s180 = smul.addr %s179, 54
        %s181 = smul.addr %s180, 4
        %s182 = scalar_lea.vmem %s0, %s181
        %s183 = smul.u32 32, %s22
        %s185 = smul.u32 %s22, 16
        %s186 = smul.u32 %s185, 3
        %s187 = smul.addr %s186, 4
        %s188 = scalar_lea.vmem %s182, %s187
        %v189 = vld [vmem:[%s188] sm:$0xf]
        %v190 = vld [vmem:[%s188 + $0x4] sm:$0xf]
        %v191 = vld [vmem:[%s188 + $0xc] sm:$0xf]
        %v192 = vld [vmem:[%s188 + $0x10] sm:$0xf]
        %v193 = vld [vmem:[%s188 + $0x18] sm:$0xf]
        %v194 = vld [vmem:[%s188 + $0x1c] sm:$0xf]
        %v195 = vld [vmem:[%s188 + $0x24] sm:$0xf]
        %v196 = vld [vmem:[%s188 + $0x28] sm:$0xf]
        %v197 = vld [vmem:[%s188 + $0x30] sm:$0xf]
        %v198 = vld [vmem:[%s188 + $0x34] sm:$0xf]
        %v199 = vld [vmem:[%s188 + $0x3c] sm:$0xf]
        %v200 = vld [vmem:[%s188 + $0x40] sm:$0xf]
        %v201 = vld [vmem:[%s188 + $0x48] sm:$0xf]
        %v202 = vld [vmem:[%s188 + $0x4c] sm:$0xf]
        %v203 = vld [vmem:[%s188 + $0x54] sm:$0xf]
        %v204 = vld [vmem:[%s188 + $0x58] sm:$0xf]
        %v205 = vld [vmem:[%s188 + $0x60] sm:$0xf]
        %v206 = vld [vmem:[%s188 + $0x64] sm:$0xf]
        %v207 = vld [vmem:[%s188 + $0x6c] sm:$0xf]
        %v208 = vld [vmem:[%s188 + $0x70] sm:$0xf]
        %v209 = vld [vmem:[%s188 + $0x78] sm:$0xf]
        %v210 = vld [vmem:[%s188 + $0x7c] sm:$0xf]
        %v211 = vld [vmem:[%s188 + $0x84] sm:$0xf]
        %v212 = vld [vmem:[%s188 + $0x88] sm:$0xf]
        %v213 = vld [vmem:[%s188 + $0x90] sm:$0xf]
        %v214 = vld [vmem:[%s188 + $0x94] sm:$0xf]
        %v215 = vld [vmem:[%s188 + $0x9c] sm:$0xf]
        %v216 = vld [vmem:[%s188 + $0xa0] sm:$0xf]
        %v217 = vld [vmem:[%s188 + $0xa8] sm:$0xf]
        %v218 = vld [vmem:[%s188 + $0xac] sm:$0xf]
        %v219 = vld [vmem:[%s188 + $0xb4] sm:$0xf]
        %v220 = vld [vmem:[%s188 + $0xb8] sm:$0xf]
        %v221 = vld [vmem:[%s1] sm:$0x3]
        %v222 = vld [vmem:[%s188 + $0x8] sm:$0x1]
        %v223 = vld [vmem:[%s188 + $0x14] sm:$0x1]
        %v224 = vld [vmem:[%s188 + $0x20] sm:$0x1]
        %v225 = vld [vmem:[%s188 + $0x2c] sm:$0x1]
        %v226 = vld [vmem:[%s188 + $0x38] sm:$0x1]
        %v227 = vld [vmem:[%s188 + $0x44] sm:$0x1]
        %v228 = vld [vmem:[%s188 + $0x50] sm:$0x1]
        %v229 = vld [vmem:[%s188 + $0x5c] sm:$0x1]
        %v230 = vld [vmem:[%s188 + $0x68] sm:$0x1]
        %v231 = vld [vmem:[%s188 + $0x74] sm:$0x1]
        %v232 = vld [vmem:[%s188 + $0x80] sm:$0x1]
        %v233 = vld [vmem:[%s188 + $0x8c] sm:$0x1]
        %v234 = vld [vmem:[%s188 + $0x98] sm:$0x1]
        %v235 = vld [vmem:[%s188 + $0xa4] sm:$0x1]
        %v236 = vld [vmem:[%s188 + $0xb0] sm:$0x1]
        %v237 = vld [vmem:[%s188 + $0xbc] sm:$0x1]
        %vm238 = vsmask.f32 3328
        %vm239 = vsmask.f32 7440
        %vm240 = vmor %vm238, %vm239
        %v242 = vshrl.u32 %v189, 16
        %v244 = vrot.slane %v242, 4
        %v245 = vshll.u32 %v189, 16
        %v247 = vrot.slane %v245, 5
        %v248 = vor.u32 %v244, %v247
        %v249 = vrot.slane %v248, 4
        %v251 = vshll.u32 %v190, 16
        %v253 = vrot.slane %v251, 5
        %v254 = vsel %vm240, %v249, %v253
        %v255 = vshrl.u32 %v190, 16
        %v257 = vrot.slane %v255, 4
        %v258 = vor.u32 %v257, %v253
        %v259 = vrot.slane %v258, 4
        %v261 = vshll.u32 %v222, 16
        %v263 = vrot.slane %v261, 5
        %v264 = vsel %vm240, %v259, %v263
        %v266 = vshrl.u32 %v191, 16
        %v268 = vrot.slane %v266, 4
        %v269 = vshll.u32 %v191, 16
        %v271 = vrot.slane %v269, 5
        %v272 = vor.u32 %v268, %v271
        %v273 = vrot.slane %v272, 4
        %v275 = vshll.u32 %v192, 16
        %v277 = vrot.slane %v275, 5
        %v278 = vsel %vm240, %v273, %v277
        %v279 = vshrl.u32 %v192, 16
        %v281 = vrot.slane %v279, 4
        %v282 = vor.u32 %v281, %v277
        %v283 = vrot.slane %v282, 4
        %v285 = vshll.u32 %v223, 16
        %v287 = vrot.slane %v285, 5
        %v288 = vsel %vm240, %v283, %v287
        %v290 = vshrl.u32 %v193, 16
        %v292 = vrot.slane %v290, 4
        %v293 = vshll.u32 %v193, 16
        %v295 = vrot.slane %v293, 5
        %v296 = vor.u32 %v292, %v295
        %v297 = vrot.slane %v296, 4
        %v299 = vshll.u32 %v194, 16
        %v301 = vrot.slane %v299, 5
        %v302 = vsel %vm240, %v297, %v301
        %v303 = vshrl.u32 %v194, 16
        %v305 = vrot.slane %v303, 4
        %v306 = vor.u32 %v305, %v301
        %v307 = vrot.slane %v306, 4
        %v309 = vshll.u32 %v224, 16
        %v311 = vrot.slane %v309, 5
        %v312 = vsel %vm240, %v307, %v311
        %v314 = vshrl.u32 %v195, 16
        %v316 = vrot.slane %v314, 4
        %v317 = vshll.u32 %v195, 16
        %v319 = vrot.slane %v317, 5
        %v320 = vor.u32 %v316, %v319
        %v321 = vrot.slane %v320, 4
        %v323 = vshll.u32 %v196, 16
        %v325 = vrot.slane %v323, 5
        %v326 = vsel %vm240, %v321, %v325
        %v327 = vshrl.u32 %v196, 16
        %v329 = vrot.slane %v327, 4
        %v330 = vor.u32 %v329, %v325
        %v331 = vrot.slane %v330, 4
        %v333 = vshll.u32 %v225, 16
        %v335 = vrot.slane %v333, 5
        %v336 = vsel %vm240, %v331, %v335
        %v338 = vshrl.u32 %v197, 16
        %v340 = vrot.slane %v338, 4
        %v341 = vshll.u32 %v197, 16
        %v343 = vrot.slane %v341, 5
        %v344 = vor.u32 %v340, %v343
        %v345 = vrot.slane %v344, 4
        %v347 = vshll.u32 %v198, 16
        %v349 = vrot.slane %v347, 5
        %v350 = vsel %vm240, %v345, %v349
        %v351 = vshrl.u32 %v198, 16
        %v353 = vrot.slane %v351, 4
        %v354 = vor.u32 %v353, %v349
        %v355 = vrot.slane %v354, 4
        %v357 = vshll.u32 %v226, 16
        %v359 = vrot.slane %v357, 5
        %v360 = vsel %vm240, %v355, %v359
        %v362 = vshrl.u32 %v199, 16
        %v364 = vrot.slane %v362, 4
        %v365 = vshll.u32 %v199, 16
        %v367 = vrot.slane %v365, 5
        %v368 = vor.u32 %v364, %v367
        %v369 = vrot.slane %v368, 4
        %v371 = vshll.u32 %v200, 16
        %v373 = vrot.slane %v371, 5
        %v374 = vsel %vm240, %v369, %v373
        %v375 = vshrl.u32 %v200, 16
        %v377 = vrot.slane %v375, 4
        %v378 = vor.u32 %v377, %v373
        %v379 = vrot.slane %v378, 4
        %v381 = vshll.u32 %v227, 16
        %v383 = vrot.slane %v381, 5
        %v384 = vsel %vm240, %v379, %v383
        %v386 = vshrl.u32 %v201, 16
        %v388 = vrot.slane %v386, 4
        %v389 = vshll.u32 %v201, 16
        %v391 = vrot.slane %v389, 5
        %v392 = vor.u32 %v388, %v391
        %v393 = vrot.slane %v392, 4
        %v395 = vshll.u32 %v202, 16
        %v397 = vrot.slane %v395, 5
        %v398 = vsel %vm240, %v393, %v397
        %v399 = vshrl.u32 %v202, 16
        %v401 = vrot.slane %v399, 4
        %v402 = vor.u32 %v401, %v397
        %v403 = vrot.slane %v402, 4
        %v405 = vshll.u32 %v228, 16
        %v407 = vrot.slane %v405, 5
        %v408 = vsel %vm240, %v403, %v407
        %v410 = vshrl.u32 %v203, 16
        %v412 = vrot.slane %v410, 4
        %v413 = vshll.u32 %v203, 16
        %v415 = vrot.slane %v413, 5
        %v416 = vor.u32 %v412, %v415
        %v417 = vrot.slane %v416, 4
        %v419 = vshll.u32 %v204, 16
        %v421 = vrot.slane %v419, 5
        %v422 = vsel %vm240, %v417, %v421
        %v423 = vshrl.u32 %v204, 16
        %v425 = vrot.slane %v423, 4
        %v426 = vor.u32 %v425, %v421
        %v427 = vrot.slane %v426, 4
        %v429 = vshll.u32 %v229, 16
        %v431 = vrot.slane %v429, 5
        %v432 = vsel %vm240, %v427, %v431
        %v434 = vshrl.u32 %v205, 16
        %v436 = vrot.slane %v434, 4
        %v437 = vshll.u32 %v205, 16
        %v439 = vrot.slane %v437, 5
        %v440 = vor.u32 %v436, %v439
        %v441 = vrot.slane %v440, 4
        %v443 = vshll.u32 %v206, 16
        %v445 = vrot.slane %v443, 5
        %v446 = vsel %vm240, %v441, %v445
        %v447 = vshrl.u32 %v206, 16
        %v449 = vrot.slane %v447, 4
        %v450 = vor.u32 %v449, %v445
        %v451 = vrot.slane %v450, 4
        %v453 = vshll.u32 %v230, 16
        %v455 = vrot.slane %v453, 5
        %v456 = vsel %vm240, %v451, %v455
        %v458 = vshrl.u32 %v207, 16
        %v460 = vrot.slane %v458, 4
        %v461 = vshll.u32 %v207, 16
        %v463 = vrot.slane %v461, 5
        %v464 = vor.u32 %v460, %v463
        %v465 = vrot.slane %v464, 4
        %v467 = vshll.u32 %v208, 16
        %v469 = vrot.slane %v467, 5
        %v470 = vsel %vm240, %v465, %v469
        %v471 = vshrl.u32 %v208, 16
        %v473 = vrot.slane %v471, 4
        %v474 = vor.u32 %v473, %v469
        %v475 = vrot.slane %v474, 4
        %v477 = vshll.u32 %v231, 16
        %v479 = vrot.slane %v477, 5
        %v480 = vsel %vm240, %v475, %v479
        %v482 = vshrl.u32 %v209, 16
        %v484 = vrot.slane %v482, 4
        %v485 = vshll.u32 %v209, 16
        %v487 = vrot.slane %v485, 5
        %v488 = vor.u32 %v484, %v487
        %v489 = vrot.slane %v488, 4
        %v491 = vshll.u32 %v210, 16
        %v493 = vrot.slane %v491, 5
        %v494 = vsel %vm240, %v489, %v493
        %v495 = vshrl.u32 %v210, 16
        %v497 = vrot.slane %v495, 4
        %v498 = vor.u32 %v497, %v493
        %v499 = vrot.slane %v498, 4
        %v501 = vshll.u32 %v232, 16
        %v503 = vrot.slane %v501, 5
        %v504 = vsel %vm240, %v499, %v503
        %v506 = vshrl.u32 %v211, 16
        %v508 = vrot.slane %v506, 4
        %v509 = vshll.u32 %v211, 16
        %v511 = vrot.slane %v509, 5
        %v512 = vor.u32 %v508, %v511
        %v513 = vrot.slane %v512, 4
        %v515 = vshll.u32 %v212, 16
        %v517 = vrot.slane %v515, 5
        %v518 = vsel %vm240, %v513, %v517
        %v519 = vshrl.u32 %v212, 16
        %v521 = vrot.slane %v519, 4
        %v522 = vor.u32 %v521, %v517
        %v523 = vrot.slane %v522, 4
        %v525 = vshll.u32 %v233, 16
        %v527 = vrot.slane %v525, 5
        %v528 = vsel %vm240, %v523, %v527
        %v530 = vshrl.u32 %v213, 16
        %v532 = vrot.slane %v530, 4
        %v533 = vshll.u32 %v213, 16
        %v535 = vrot.slane %v533, 5
        %v536 = vor.u32 %v532, %v535
        %v537 = vrot.slane %v536, 4
        %v539 = vshll.u32 %v214, 16
        %v541 = vrot.slane %v539, 5
        %v542 = vsel %vm240, %v537, %v541
        %v543 = vshrl.u32 %v214, 16
        %v545 = vrot.slane %v543, 4
        %v546 = vor.u32 %v545, %v541
        %v547 = vrot.slane %v546, 4
        %v549 = vshll.u32 %v234, 16
        %v551 = vrot.slane %v549, 5
        %v552 = vsel %vm240, %v547, %v551
        %v554 = vshrl.u32 %v215, 16
        %v556 = vrot.slane %v554, 4
        %v557 = vshll.u32 %v215, 16
        %v559 = vrot.slane %v557, 5
        %v560 = vor.u32 %v556, %v559
        %v561 = vrot.slane %v560, 4
        %v563 = vshll.u32 %v216, 16
        %v565 = vrot.slane %v563, 5
        %v566 = vsel %vm240, %v561, %v565
        %v567 = vshrl.u32 %v216, 16
        %v569 = vrot.slane %v567, 4
        %v570 = vor.u32 %v569, %v565
        %v571 = vrot.slane %v570, 4
        %v573 = vshll.u32 %v235, 16
        %v575 = vrot.slane %v573, 5
        %v576 = vsel %vm240, %v571, %v575
        %v578 = vshrl.u32 %v217, 16
        %v580 = vrot.slane %v578, 4
        %v581 = vshll.u32 %v217, 16
        %v583 = vrot.slane %v581, 5
        %v584 = vor.u32 %v580, %v583
        %v585 = vrot.slane %v584, 4
        %v587 = vshll.u32 %v218, 16
        %v589 = vrot.slane %v587, 5
        %v590 = vsel %vm240, %v585, %v589
        %v591 = vshrl.u32 %v218, 16
        %v593 = vrot.slane %v591, 4
        %v594 = vor.u32 %v593, %v589
        %v595 = vrot.slane %v594, 4
        %v597 = vshll.u32 %v236, 16
        %v599 = vrot.slane %v597, 5
        %v600 = vsel %vm240, %v595, %v599
        %v602 = vshrl.u32 %v219, 16
        %v604 = vrot.slane %v602, 4
        %v605 = vshll.u32 %v219, 16
        %v607 = vrot.slane %v605, 5
        %v608 = vor.u32 %v604, %v607
        %v609 = vrot.slane %v608, 4
        %v611 = vshll.u32 %v220, 16
        %v613 = vrot.slane %v611, 5
        %v614 = vsel %vm240, %v609, %v613
        %v615 = vshrl.u32 %v220, 16
        %v617 = vrot.slane %v615, 4
        %v618 = vor.u32 %v617, %v613
        %v619 = vrot.slane %v618, 4
        %v621 = vshll.u32 %v237, 16
        %v623 = vrot.slane %v621, 5
        %v624 = vsel %vm240, %v619, %v623
        %s625 = scalar_lea.vmem %s1, 2
        %v626 = vld [vmem:[%s625] sm:$0x3]
        %v627 = vunpack.c.l.b16 %v254
        %v628 = vunpack.c.l.b16 %v264
        %v629 = vunpack.c.l.b16 %v278
        %v630 = vunpack.c.l.b16 %v288
        %v631 = vunpack.c.l.b16 %v302
        %v632 = vunpack.c.l.b16 %v312
        %v633 = vunpack.c.l.b16 %v326
        %v634 = vunpack.c.l.b16 %v336
        %v635 = vunpack.c.l.b16 %v350
        %v636 = vunpack.c.l.b16 %v360
        %v637 = vunpack.c.l.b16 %v374
        %v638 = vunpack.c.l.b16 %v384
        %v639 = vunpack.c.l.b16 %v398
        %v640 = vunpack.c.l.b16 %v408
        %v641 = vunpack.c.l.b16 %v422
        %v642 = vunpack.c.l.b16 %v432
        %v643 = vunpack.c.l.b16 %v446
        %v644 = vunpack.c.l.b16 %v456
        %v645 = vunpack.c.l.b16 %v470
        %v646 = vunpack.c.l.b16 %v480
        %v647 = vunpack.c.l.b16 %v494
        %v648 = vunpack.c.l.b16 %v504
        %v649 = vunpack.c.l.b16 %v518
        %v650 = vunpack.c.l.b16 %v528
        %v651 = vunpack.c.l.b16 %v542
        %v652 = vunpack.c.l.b16 %v552
        %v653 = vunpack.c.l.b16 %v566
        %v654 = vunpack.c.l.b16 %v576
        %v655 = vunpack.c.l.b16 %v590
        %v656 = vunpack.c.l.b16 %v600
        %v657 = vunpack.c.l.b16 %v614
        %v658 = vunpack.c.l.b16 %v624
        %v659 = vpack.c.b16 %v628, %v627
        %v660 = vpack.c.b16 %v630, %v629
        %v661 = vpack.c.b16 %v632, %v631
        %v662 = vpack.c.b16 %v634, %v633
        %v663 = vpack.c.b16 %v636, %v635
        %v664 = vpack.c.b16 %v638, %v637
        %v665 = vpack.c.b16 %v640, %v639
        %v666 = vpack.c.b16 %v642, %v641
        %v667 = vpack.c.b16 %v644, %v643
        %v668 = vpack.c.b16 %v646, %v645
        %v669 = vpack.c.b16 %v648, %v647
        %v670 = vpack.c.b16 %v650, %v649
        %v671 = vpack.c.b16 %v652, %v651
        %v672 = vpack.c.b16 %v654, %v653
        %v673 = vpack.c.b16 %v656, %v655
        %v674 = vpack.c.b16 %v658, %v657
        %vm675 = vcmask 31744
        %v677 = vsel %vm675, %v659, 0
        %v680 = vsel %vm675, %v660, 0
        %v683 = vsel %vm675, %v661, 0
        %v686 = vsel %vm675, %v662, 0
        %v689 = vsel %vm675, %v663, 0
        %v692 = vsel %vm675, %v664, 0
        %v695 = vsel %vm675, %v665, 0
        %v698 = vsel %vm675, %v666, 0
        %v701 = vsel %vm675, %v667, 0
        %v704 = vsel %vm675, %v668, 0
        %v707 = vsel %vm675, %v669, 0
        %v710 = vsel %vm675, %v670, 0
        %v713 = vsel %vm675, %v671, 0
        %v716 = vsel %vm675, %v672, 0
        %v719 = vsel %vm675, %v673, 0
        %v722 = vsel %vm675, %v674, 0
        %vm724 = vcmask 1041408
        %v726 = vsel %vm724, %v626, 0
        %728 = vmatprep.subr.bf16.mxu0 0
        %729 = vmatpush1.bf16.msra.mxu0 %v726
        %730 = vmatprep.subr.bf16.mxu0 0
        %731 = vmatpush1.bf16.msra.mxu0 0
        %732 = vmatprep.subr.bf16.mxu0 0
        %733 = vmatpush1.bf16.msra.mxu0 0
        %734 = vmatprep.subr.bf16.mxu0 0
        %735 = vmatpush1.bf16.msra.mxu0 0
        %736 = vmatprep.subr.bf16.mxu0 0
        %737 = vmatpush1.bf16.msra.mxu0 0
        %738 = vmatprep.subr.bf16.mxu0 0
        %739 = vmatpush1.bf16.msra.mxu0 0
        %740 = vmatprep.subr.bf16.mxu0 0
        %741 = vmatpush1.bf16.msra.mxu0 0
        %742 = vmatprep.subr.bf16.mxu0 0
        %743 = vmatpush1.bf16.msra.mxu0 0
        %744 = vmatprep.subr.bf16.mxu0 0
        %745 = vmatpush1.bf16.msra.mxu0 0
        %746 = vmatprep.subr.bf16.mxu0 0
        %747 = vmatpush1.bf16.msra.mxu0 0
        %748 = vmatprep.subr.bf16.mxu0 0
        %749 = vmatpush1.bf16.msra.mxu0 0
        %750 = vmatprep.subr.bf16.mxu0 0
        %751 = vmatpush1.bf16.msra.mxu0 0
        %752 = vmatprep.subr.bf16.mxu0 0
        %753 = vmatpush1.bf16.msra.mxu0 0
        %754 = vmatprep.subr.bf16.mxu0 0
        %755 = vmatpush1.bf16.msra.mxu0 0
        %756 = vmatprep.subr.bf16.mxu0 0
        %757 = vmatpush1.bf16.msra.mxu0 0
        %758 = vmatprep.subr.bf16.mxu0 0
        %759 = vmatpush1.bf16.msra.mxu0 0
        %760 = vmatprep.mubr.bf16.mxu0 0
        %761 = vmatmul.mubr.bf16.gmra.mrb[0].mxu0 %v677
        %v762 = vpop.f32.mrb[0].mxu0
        %v763 = vadd.f32 0.0, %v762
        %v764 = vpop.f32.mrb[0].mxu0
        %v765 = vpop.f32.mrb[0].mxu0
        %v766 = vadd.f32 0.0, %v765
        %v767 = vpop.f32.mrb[0].mxu0
        %768 = vmatprep.mubr.bf16.mxu0 0
        %769 = vmatmul.mubr.bf16.gmra.mrb[0].mxu0 %v680
        %v770 = vpop.f32.mrb[0].mxu0
        %v771 = vadd.f32 0.0, %v770
        %v772 = vpop.f32.mrb[0].mxu0
        %v773 = vpop.f32.mrb[0].mxu0
        %v774 = vadd.f32 0.0, %v773
        %v775 = vpop.f32.mrb[0].mxu0
        %776 = vmatprep.mubr.bf16.mxu0 0
        %777 = vmatmul.mubr.bf16.gmra.mrb[0].mxu0 %v683
        %v778 = vpop.f32.mrb[0].mxu0
        %v779 = vadd.f32 0.0, %v778
        %v780 = vpop.f32.mrb[0].mxu0
        %v781 = vpop.f32.mrb[0].mxu0
        %v782 = vadd.f32 0.0, %v781
        %v783 = vpop.f32.mrb[0].mxu0
        %784 = vmatprep.mubr.bf16.mxu0 0
        %785 = vmatmul.mubr.bf16.gmra.mrb[0].mxu0 %v686
        %v786 = vpop.f32.mrb[0].mxu0
        %v787 = vadd.f32 0.0, %v786
        %v788 = vpop.f32.mrb[0].mxu0
        %v789 = vpop.f32.mrb[0].mxu0
        %v790 = vadd.f32 0.0, %v789
        %v791 = vpop.f32.mrb[0].mxu0
        %792 = vmatprep.mubr.bf16.mxu0 0
        %793 = vmatmul.mubr.bf16.gmra.mrb[0].mxu0 %v689
        %v794 = vpop.f32.mrb[0].mxu0
        %v795 = vadd.f32 0.0, %v794
        %v796 = vpop.f32.mrb[0].mxu0
        %v797 = vpop.f32.mrb[0].mxu0
        %v798 = vadd.f32 0.0, %v797
        %v799 = vpop.f32.mrb[0].mxu0
        %800 = vmatprep.mubr.bf16.mxu0 0
        %801 = vmatmul.mubr.bf16.gmra.mrb[0].mxu0 %v692
        %v802 = vpop.f32.mrb[0].mxu0
        %v803 = vadd.f32 0.0, %v802
        %v804 = vpop.f32.mrb[0].mxu0
        %v805 = vpop.f32.mrb[0].mxu0
        %v806 = vadd.f32 0.0, %v805
        %v807 = vpop.f32.mrb[0].mxu0
        %808 = vmatprep.mubr.bf16.mxu0 0
        %809 = vmatmul.mubr.bf16.gmra.mrb[0].mxu0 %v695
        %v810 = vpop.f32.mrb[0].mxu0
        %v811 = vadd.f32 0.0, %v810
        %v812 = vpop.f32.mrb[0].mxu0
        %v813 = vpop.f32.mrb[0].mxu0
        %v814 = vadd.f32 0.0, %v813
        %v815 = vpop.f32.mrb[0].mxu0
        %816 = vmatprep.mubr.bf16.mxu0 0
        %817 = vmatmul.mubr.bf16.gmra.mrb[0].mxu0 %v698
        %v818 = vpop.f32.mrb[0].mxu0
        %v819 = vadd.f32 0.0, %v818
        %v820 = vpop.f32.mrb[0].mxu0
        %v821 = vpop.f32.mrb[0].mxu0
        %v822 = vadd.f32 0.0, %v821
        %v823 = vpop.f32.mrb[0].mxu0
        %824 = vmatprep.mubr.bf16.mxu0 0
        %825 = vmatmul.mubr.bf16.gmra.mrb[0].mxu0 %v701
        %v826 = vpop.f32.mrb[0].mxu0
        %v827 = vadd.f32 0.0, %v826
        %v828 = vpop.f32.mrb[0].mxu0
        %v829 = vpop.f32.mrb[0].mxu0
        %v830 = vadd.f32 0.0, %v829
        %v831 = vpop.f32.mrb[0].mxu0
        %832 = vmatprep.mubr.bf16.mxu0 0
        %833 = vmatmul.mubr.bf16.gmra.mrb[0].mxu0 %v704
        %v834 = vpop.f32.mrb[0].mxu0
        %v835 = vadd.f32 0.0, %v834
        %v836 = vpop.f32.mrb[0].mxu0
        %v837 = vpop.f32.mrb[0].mxu0
        %v838 = vadd.f32 0.0, %v837
        %v839 = vpop.f32.mrb[0].mxu0
        %840 = vmatprep.mubr.bf16.mxu0 0
        %841 = vmatmul.mubr.bf16.gmra.mrb[0].mxu0 %v707
        %v842 = vpop.f32.mrb[0].mxu0
        %v843 = vadd.f32 0.0, %v842
        %v844 = vpop.f32.mrb[0].mxu0
        %v845 = vpop.f32.mrb[0].mxu0
        %v846 = vadd.f32 0.0, %v845
        %v847 = vpop.f32.mrb[0].mxu0
        %848 = vmatprep.mubr.bf16.mxu0 0
        %849 = vmatmul.mubr.bf16.gmra.mrb[0].mxu0 %v710
        %v850 = vpop.f32.mrb[0].mxu0
        %v851 = vadd.f32 0.0, %v850
        %v852 = vpop.f32.mrb[0].mxu0
        %v853 = vpop.f32.mrb[0].mxu0
        %v854 = vadd.f32 0.0, %v853
        %v855 = vpop.f32.mrb[0].mxu0
        %856 = vmatprep.mubr.bf16.mxu0 0
        %857 = vmatmul.mubr.bf16.gmra.mrb[0].mxu0 %v713
        %v858 = vpop.f32.mrb[0].mxu0
        %v859 = vadd.f32 0.0, %v858
        %v860 = vpop.f32.mrb[0].mxu0
        %v861 = vpop.f32.mrb[0].mxu0
        %v862 = vadd.f32 0.0, %v861
        %v863 = vpop.f32.mrb[0].mxu0
        %864 = vmatprep.mubr.bf16.mxu0 0
        %865 = vmatmul.mubr.bf16.gmra.mrb[0].mxu0 %v716
        %v866 = vpop.f32.mrb[0].mxu0
        %v867 = vadd.f32 0.0, %v866
        %v868 = vpop.f32.mrb[0].mxu0
        %v869 = vpop.f32.mrb[0].mxu0
        %v870 = vadd.f32 0.0, %v869
        %v871 = vpop.f32.mrb[0].mxu0
        %872 = vmatprep.mubr.bf16.mxu0 0
        %873 = vmatmul.mubr.bf16.gmra.mrb[0].mxu0 %v719
        %v874 = vpop.f32.mrb[0].mxu0
        %v875 = vadd.f32 0.0, %v874
        %v876 = vpop.f32.mrb[0].mxu0
        %v877 = vpop.f32.mrb[0].mxu0
        %v878 = vadd.f32 0.0, %v877
        %v879 = vpop.f32.mrb[0].mxu0
        %880 = vmatprep.mubr.bf16.mxu0 0
        %881 = vmatmul.mubr.bf16.gmra.mrb[0].mxu0 %v722
        %v882 = vpop.f32.mrb[0].mxu0
        %v883 = vadd.f32 0.0, %v882
        %v884 = vpop.f32.mrb[0].mxu0
        %v885 = vpop.f32.mrb[0].mxu0
        %v886 = vadd.f32 0.0, %v885
        %v887 = vpop.f32.mrb[0].mxu0
        %888 = vdwg.mxu0
        %v921 = vunpack.c.l.b16 %v189
        %v922 = vunpack.c.l.b16 %v190
        %v923 = vunpack.c.l.b16 %v191
        %v924 = vunpack.c.l.b16 %v192
        %v925 = vunpack.c.l.b16 %v193
        %v926 = vunpack.c.l.b16 %v194
        %v927 = vunpack.c.l.b16 %v195
        %v928 = vunpack.c.l.b16 %v196
        %v929 = vunpack.c.l.b16 %v197
        %v930 = vunpack.c.l.b16 %v198
        %v931 = vunpack.c.l.b16 %v199
        %v932 = vunpack.c.l.b16 %v200
        %v933 = vunpack.c.l.b16 %v201
        %v934 = vunpack.c.l.b16 %v202
        %v935 = vunpack.c.l.b16 %v203
        %v936 = vunpack.c.l.b16 %v204
        %v937 = vunpack.c.l.b16 %v205
        %v938 = vunpack.c.l.b16 %v206
        %v939 = vunpack.c.l.b16 %v207
        %v940 = vunpack.c.l.b16 %v208
        %v941 = vunpack.c.l.b16 %v209
        %v942 = vunpack.c.l.b16 %v210
        %v943 = vunpack.c.l.b16 %v211
        %v944 = vunpack.c.l.b16 %v212
        %v945 = vunpack.c.l.b16 %v213
        %v946 = vunpack.c.l.b16 %v214
        %v947 = vunpack.c.l.b16 %v215
        %v948 = vunpack.c.l.b16 %v216
        %v949 = vunpack.c.l.b16 %v217
        %v950 = vunpack.c.l.b16 %v218
        %v951 = vunpack.c.l.b16 %v219
        %v952 = vunpack.c.l.b16 %v220
        %v953 = vpack.c.b16 %v922, %v921
        %v954 = vpack.c.b16 %v924, %v923
        %v955 = vpack.c.b16 %v926, %v925
        %v956 = vpack.c.b16 %v928, %v927
        %v957 = vpack.c.b16 %v930, %v929
        %v958 = vpack.c.b16 %v932, %v931
        %v959 = vpack.c.b16 %v934, %v933
        %v960 = vpack.c.b16 %v936, %v935
        %v961 = vpack.c.b16 %v938, %v937
        %v962 = vpack.c.b16 %v940, %v939
        %v963 = vpack.c.b16 %v942, %v941
        %v964 = vpack.c.b16 %v944, %v943
        %v965 = vpack.c.b16 %v946, %v945
        %v966 = vpack.c.b16 %v948, %v947
        %v967 = vpack.c.b16 %v950, %v949
        %v968 = vpack.c.b16 %v952, %v951
        %v970 = vsel %vm675, %v953, 0
        %v973 = vsel %vm675, %v954, 0
        %v976 = vsel %vm675, %v955, 0
        %v979 = vsel %vm675, %v956, 0
        %v982 = vsel %vm675, %v957, 0
        %v985 = vsel %vm675, %v958, 0
        %v988 = vsel %vm675, %v959, 0
        %v991 = vsel %vm675, %v960, 0
        %v994 = vsel %vm675, %v961, 0
        %v997 = vsel %vm675, %v962, 0
        %v1000 = vsel %vm675, %v963, 0
        %v1003 = vsel %vm675, %v964, 0
        %v1006 = vsel %vm675, %v965, 0
        %v1009 = vsel %vm675, %v966, 0
        %v1012 = vsel %vm675, %v967, 0
        %v1015 = vsel %vm675, %v968, 0
        %v1018 = vsel %vm724, %v221, 0
        %1020 = vmatprep.subr.bf16.mxu0 0
        %1021 = vmatpush1.bf16.msra.mxu0 %v1018
        %1022 = vmatprep.subr.bf16.mxu0 0
        %1023 = vmatpush1.bf16.msra.mxu0 0
        %1024 = vmatprep.subr.bf16.mxu0 0
        %1025 = vmatpush1.bf16.msra.mxu0 0
        %1026 = vmatprep.subr.bf16.mxu0 0
        %1027 = vmatpush1.bf16.msra.mxu0 0
        %1028 = vmatprep.subr.bf16.mxu0 0
        %1029 = vmatpush1.bf16.msra.mxu0 0
        %1030 = vmatprep.subr.bf16.mxu0 0
        %1031 = vmatpush1.bf16.msra.mxu0 0
        %1032 = vmatprep.subr.bf16.mxu0 0
        %1033 = vmatpush1.bf16.msra.mxu0 0
        %1034 = vmatprep.subr.bf16.mxu0 0
        %1035 = vmatpush1.bf16.msra.mxu0 0
        %1036 = vmatprep.subr.bf16.mxu0 0
        %1037 = vmatpush1.bf16.msra.mxu0 0
        %1038 = vmatprep.subr.bf16.mxu0 0
        %1039 = vmatpush1.bf16.msra.mxu0 0
        %1040 = vmatprep.subr.bf16.mxu0 0
        %1041 = vmatpush1.bf16.msra.mxu0 0
        %1042 = vmatprep.subr.bf16.mxu0 0
        %1043 = vmatpush1.bf16.msra.mxu0 0
        %1044 = vmatprep.subr.bf16.mxu0 0
        %1045 = vmatpush1.bf16.msra.mxu0 0
        %1046 = vmatprep.subr.bf16.mxu0 0
        %1047 = vmatpush1.bf16.msra.mxu0 0
        %1048 = vmatprep.subr.bf16.mxu0 0
        %1049 = vmatpush1.bf16.msra.mxu0 0
        %1050 = vmatprep.subr.bf16.mxu0 0
        %1051 = vmatpush1.bf16.msra.mxu0 0
        %1052 = vmatprep.mubr.bf16.mxu0 0
        %1053 = vmatmul.mubr.bf16.gmra.mrb[0].mxu0 %v970
        %v1054 = vpop.f32.mrb[0].mxu0
        %v1055 = vadd.f32 %v763, %v1054
        %v1056 = vpop.f32.mrb[0].mxu0
        %v1057 = vpop.f32.mrb[0].mxu0
        %v1058 = vadd.f32 %v766, %v1057
        %v1059 = vpop.f32.mrb[0].mxu0
        %1060 = vmatprep.mubr.bf16.mxu0 0
        %1061 = vmatmul.mubr.bf16.gmra.mrb[0].mxu0 %v973
        %v1062 = vpop.f32.mrb[0].mxu0
        %v1063 = vadd.f32 %v771, %v1062
        %v1064 = vpop.f32.mrb[0].mxu0
        %v1065 = vpop.f32.mrb[0].mxu0
        %v1066 = vadd.f32 %v774, %v1065
        %v1067 = vpop.f32.mrb[0].mxu0
        %1068 = vmatprep.mubr.bf16.mxu0 0
        %1069 = vmatmul.mubr.bf16.gmra.mrb[0].mxu0 %v976
        %v1070 = vpop.f32.mrb[0].mxu0
        %v1071 = vadd.f32 %v779, %v1070
        %v1072 = vpop.f32.mrb[0].mxu0
        %v1073 = vpop.f32.mrb[0].mxu0
        %v1074 = vadd.f32 %v782, %v1073
        %v1075 = vpop.f32.mrb[0].mxu0
        %1076 = vmatprep.mubr.bf16.mxu0 0
        %1077 = vmatmul.mubr.bf16.gmra.mrb[0].mxu0 %v979
        %v1078 = vpop.f32.mrb[0].mxu0
        %v1079 = vadd.f32 %v787, %v1078
        %v1080 = vpop.f32.mrb[0].mxu0
        %v1081 = vpop.f32.mrb[0].mxu0
        %v1082 = vadd.f32 %v790, %v1081
        %v1083 = vpop.f32.mrb[0].mxu0
        %1084 = vmatprep.mubr.bf16.mxu0 0
        %1085 = vmatmul.mubr.bf16.gmra.mrb[0].mxu0 %v982
        %v1086 = vpop.f32.mrb[0].mxu0
        %v1087 = vadd.f32 %v795, %v1086
        %v1088 = vpop.f32.mrb[0].mxu0
        %v1089 = vpop.f32.mrb[0].mxu0
        %v1090 = vadd.f32 %v798, %v1089
        %v1091 = vpop.f32.mrb[0].mxu0
        %1092 = vmatprep.mubr.bf16.mxu0 0
        %1093 = vmatmul.mubr.bf16.gmra.mrb[0].mxu0 %v985
        %v1094 = vpop.f32.mrb[0].mxu0
        %v1095 = vadd.f32 %v803, %v1094
        %v1096 = vpop.f32.mrb[0].mxu0
        %v1097 = vpop.f32.mrb[0].mxu0
        %v1098 = vadd.f32 %v806, %v1097
        %v1099 = vpop.f32.mrb[0].mxu0
        %1100 = vmatprep.mubr.bf16.mxu0 0
        %1101 = vmatmul.mubr.bf16.gmra.mrb[0].mxu0 %v988
        %v1102 = vpop.f32.mrb[0].mxu0
        %v1103 = vadd.f32 %v811, %v1102
        %v1104 = vpop.f32.mrb[0].mxu0
        %v1105 = vpop.f32.mrb[0].mxu0
        %v1106 = vadd.f32 %v814, %v1105
        %v1107 = vpop.f32.mrb[0].mxu0
        %1108 = vmatprep.mubr.bf16.mxu0 0
        %1109 = vmatmul.mubr.bf16.gmra.mrb[0].mxu0 %v991
        %v1110 = vpop.f32.mrb[0].mxu0
        %v1111 = vadd.f32 %v819, %v1110
        %v1112 = vpop.f32.mrb[0].mxu0
        %v1113 = vpop.f32.mrb[0].mxu0
        %v1114 = vadd.f32 %v822, %v1113
        %v1115 = vpop.f32.mrb[0].mxu0
        %1116 = vmatprep.mubr.bf16.mxu0 0
        %1117 = vmatmul.mubr.bf16.gmra.mrb[0].mxu0 %v994
        %v1118 = vpop.f32.mrb[0].mxu0
        %v1119 = vadd.f32 %v827, %v1118
        %v1120 = vpop.f32.mrb[0].mxu0
        %v1121 = vpop.f32.mrb[0].mxu0
        %v1122 = vadd.f32 %v830, %v1121
        %v1123 = vpop.f32.mrb[0].mxu0
        %1124 = vmatprep.mubr.bf16.mxu0 0
        %1125 = vmatmul.mubr.bf16.gmra.mrb[0].mxu0 %v997
        %v1126 = vpop.f32.mrb[0].mxu0
        %v1127 = vadd.f32 %v835, %v1126
        %v1128 = vpop.f32.mrb[0].mxu0
        %v1129 = vpop.f32.mrb[0].mxu0
        %v1130 = vadd.f32 %v838, %v1129
        %v1131 = vpop.f32.mrb[0].mxu0
        %1132 = vmatprep.mubr.bf16.mxu0 0
        %1133 = vmatmul.mubr.bf16.gmra.mrb[0].mxu0 %v1000
        %v1134 = vpop.f32.mrb[0].mxu0
        %v1135 = vadd.f32 %v843, %v1134
        %v1136 = vpop.f32.mrb[0].mxu0
        %v1137 = vpop.f32.mrb[0].mxu0
        %v1138 = vadd.f32 %v846, %v1137
        %v1139 = vpop.f32.mrb[0].mxu0
        %1140 = vmatprep.mubr.bf16.mxu0 0
        %1141 = vmatmul.mubr.bf16.gmra.mrb[0].mxu0 %v1003
        %v1142 = vpop.f32.mrb[0].mxu0
        %v1143 = vadd.f32 %v851, %v1142
        %v1144 = vpop.f32.mrb[0].mxu0
        %v1145 = vpop.f32.mrb[0].mxu0
        %v1146 = vadd.f32 %v854, %v1145
        %v1147 = vpop.f32.mrb[0].mxu0
        %1148 = vmatprep.mubr.bf16.mxu0 0
        %1149 = vmatmul.mubr.bf16.gmra.mrb[0].mxu0 %v1006
        %v1150 = vpop.f32.mrb[0].mxu0
        %v1151 = vadd.f32 %v859, %v1150
        %v1152 = vpop.f32.mrb[0].mxu0
        %v1153 = vpop.f32.mrb[0].mxu0
        %v1154 = vadd.f32 %v862, %v1153
        %v1155 = vpop.f32.mrb[0].mxu0
        %1156 = vmatprep.mubr.bf16.mxu0 0
        %1157 = vmatmul.mubr.bf16.gmra.mrb[0].mxu0 %v1009
        %v1158 = vpop.f32.mrb[0].mxu0
        %v1159 = vadd.f32 %v867, %v1158
        %v1160 = vpop.f32.mrb[0].mxu0
        %v1161 = vpop.f32.mrb[0].mxu0
        %v1162 = vadd.f32 %v870, %v1161
        %v1163 = vpop.f32.mrb[0].mxu0
        %1164 = vmatprep.mubr.bf16.mxu0 0
        %1165 = vmatmul.mubr.bf16.gmra.mrb[0].mxu0 %v1012
        %v1166 = vpop.f32.mrb[0].mxu0
        %v1167 = vadd.f32 %v875, %v1166
        %v1168 = vpop.f32.mrb[0].mxu0
        %v1169 = vpop.f32.mrb[0].mxu0
        %v1170 = vadd.f32 %v878, %v1169
        %v1171 = vpop.f32.mrb[0].mxu0
        %1172 = vmatprep.mubr.bf16.mxu0 0
        %1173 = vmatmul.mubr.bf16.gmra.mrb[0].mxu0 %v1015
        %v1174 = vpop.f32.mrb[0].mxu0
        %v1175 = vadd.f32 %v883, %v1174
        %v1176 = vpop.f32.mrb[0].mxu0
        %v1177 = vpop.f32.mrb[0].mxu0
        %v1178 = vadd.f32 %v886, %v1177
        %v1179 = vpop.f32.mrb[0].mxu0
        %1180 = vdwg.mxu0
        %v1181 = vld [vmem:[%s188] sm:$0xe]
        %v1182 = vld [vmem:[%s188 + $0xc] sm:$0xe]
        %v1183 = vld [vmem:[%s188 + $0x18] sm:$0xe]
        %v1184 = vld [vmem:[%s188 + $0x24] sm:$0xe]
        %v1185 = vld [vmem:[%s188 + $0x30] sm:$0xe]
        %v1186 = vld [vmem:[%s188 + $0x3c] sm:$0xe]
        %v1187 = vld [vmem:[%s188 + $0x48] sm:$0xe]
        %v1188 = vld [vmem:[%s188 + $0x54] sm:$0xe]
        %v1189 = vld [vmem:[%s188 + $0x60] sm:$0xe]
        %v1190 = vld [vmem:[%s188 + $0x6c] sm:$0xe]
        %v1191 = vld [vmem:[%s188 + $0x78] sm:$0xe]
        %v1192 = vld [vmem:[%s188 + $0x84] sm:$0xe]
        %v1193 = vld [vmem:[%s188 + $0x90] sm:$0xe]
        %v1194 = vld [vmem:[%s188 + $0x9c] sm:$0xe]
        %v1195 = vld [vmem:[%s188 + $0xa8] sm:$0xe]
        %v1196 = vld [vmem:[%s188 + $0xb4] sm:$0xe]
        %vm1229 = vcmask 1042432
        %vm1230 = vcmask 1046532
        %vm1231 = vmor %vm1229, %vm1230
        %v1232 = vrot.slane %v1181, 5
        %v1233 = vrot.slane %v1232, 4
        %v1234 = vrot.slane %v190, 5
        %v1235 = vsel %vm1231, %v1233, %v1234
        %v1236 = vrot.slane %v1234, 4
        %v1237 = vrot.slane %v222, 5
        %v1238 = vsel %vm1231, %v1236, %v1237
        %v1239 = vrot.slane %v1182, 5
        %v1240 = vrot.slane %v1239, 4
        %v1241 = vrot.slane %v192, 5
        %v1242 = vsel %vm1231, %v1240, %v1241
        %v1243 = vrot.slane %v1241, 4
        %v1244 = vrot.slane %v223, 5
        %v1245 = vsel %vm1231, %v1243, %v1244
        %v1246 = vrot.slane %v1183, 5
        %v1247 = vrot.slane %v1246, 4
        %v1248 = vrot.slane %v194, 5
        %v1249 = vsel %vm1231, %v1247, %v1248
        %v1250 = vrot.slane %v1248, 4
        %v1251 = vrot.slane %v224, 5
        %v1252 = vsel %vm1231, %v1250, %v1251
        %v1253 = vrot.slane %v1184, 5
        %v1254 = vrot.slane %v1253, 4
        %v1255 = vrot.slane %v196, 5
        %v1256 = vsel %vm1231, %v1254, %v1255
        %v1257 = vrot.slane %v1255, 4
        %v1258 = vrot.slane %v225, 5
        %v1259 = vsel %vm1231, %v1257, %v1258
        %v1260 = vrot.slane %v1185, 5
        %v1261 = vrot.slane %v1260, 4
        %v1262 = vrot.slane %v198, 5
        %v1263 = vsel %vm1231, %v1261, %v1262
        %v1264 = vrot.slane %v1262, 4
        %v1265 = vrot.slane %v226, 5
        %v1266 = vsel %vm1231, %v1264, %v1265
        %v1267 = vrot.slane %v1186, 5
        %v1268 = vrot.slane %v1267, 4
        %v1269 = vrot.slane %v200, 5
        %v1270 = vsel %vm1231, %v1268, %v1269
        %v1271 = vrot.slane %v1269, 4
        %v1272 = vrot.slane %v227, 5
        %v1273 = vsel %vm1231, %v1271, %v1272
        %v1274 = vrot.slane %v1187, 5
        %v1275 = vrot.slane %v1274, 4
        %v1276 = vrot.slane %v202, 5
        %v1277 = vsel %vm1231, %v1275, %v1276
        %v1278 = vrot.slane %v1276, 4
        %v1279 = vrot.slane %v228, 5
        %v1280 = vsel %vm1231, %v1278, %v1279
        %v1281 = vrot.slane %v1188, 5
        %v1282 = vrot.slane %v1281, 4
        %v1283 = vrot.slane %v204, 5
        %v1284 = vsel %vm1231, %v1282, %v1283
        %v1285 = vrot.slane %v1283, 4
        %v1286 = vrot.slane %v229, 5
        %v1287 = vsel %vm1231, %v1285, %v1286
        %v1288 = vrot.slane %v1189, 5
        %v1289 = vrot.slane %v1288, 4
        %v1290 = vrot.slane %v206, 5
        %v1291 = vsel %vm1231, %v1289, %v1290
        %v1292 = vrot.slane %v1290, 4
        %v1293 = vrot.slane %v230, 5
        %v1294 = vsel %vm1231, %v1292, %v1293
        %v1295 = vrot.slane %v1190, 5
        %v1296 = vrot.slane %v1295, 4
        %v1297 = vrot.slane %v208, 5
        %v1298 = vsel %vm1231, %v1296, %v1297
        %v1299 = vrot.slane %v1297, 4
        %v1300 = vrot.slane %v231, 5
        %v1301 = vsel %vm1231, %v1299, %v1300
        %v1302 = vrot.slane %v1191, 5
        %v1303 = vrot.slane %v1302, 4
        %v1304 = vrot.slane %v210, 5
        %v1305 = vsel %vm1231, %v1303, %v1304
        %v1306 = vrot.slane %v1304, 4
        %v1307 = vrot.slane %v232, 5
        %v1308 = vsel %vm1231, %v1306, %v1307
        %v1309 = vrot.slane %v1192, 5
        %v1310 = vrot.slane %v1309, 4
        %v1311 = vrot.slane %v212, 5
        %v1312 = vsel %vm1231, %v1310, %v1311
        %v1313 = vrot.slane %v1311, 4
        %v1314 = vrot.slane %v233, 5
        %v1315 = vsel %vm1231, %v1313, %v1314
        %v1316 = vrot.slane %v1193, 5
        %v1317 = vrot.slane %v1316, 4
        %v1318 = vrot.slane %v214, 5
        %v1319 = vsel %vm1231, %v1317, %v1318
        %v1320 = vrot.slane %v1318, 4
        %v1321 = vrot.slane %v234, 5
        %v1322 = vsel %vm1231, %v1320, %v1321
        %v1323 = vrot.slane %v1194, 5
        %v1324 = vrot.slane %v1323, 4
        %v1325 = vrot.slane %v216, 5
        %v1326 = vsel %vm1231, %v1324, %v1325
        %v1327 = vrot.slane %v1325, 4
        %v1328 = vrot.slane %v235, 5
        %v1329 = vsel %vm1231, %v1327, %v1328
        %v1330 = vrot.slane %v1195, 5
        %v1331 = vrot.slane %v1330, 4
        %v1332 = vrot.slane %v218, 5
        %v1333 = vsel %vm1231, %v1331, %v1332
        %v1334 = vrot.slane %v1332, 4
        %v1335 = vrot.slane %v236, 5
        %v1336 = vsel %vm1231, %v1334, %v1335
        %v1337 = vrot.slane %v1196, 5
        %v1338 = vrot.slane %v1337, 4
        %v1339 = vrot.slane %v220, 5
        %v1340 = vsel %vm1231, %v1338, %v1339
        %v1341 = vrot.slane %v1339, 4
        %v1342 = vrot.slane %v237, 5
        %v1343 = vsel %vm1231, %v1341, %v1342
        %s1344 = scalar_lea.vmem %s1, 4
        %v1345 = vld [vmem:[%s1344] sm:$0x3]
        %v1346 = vunpack.c.l.b16 %v1235
        %v1347 = vunpack.c.l.b16 %v1238
        %v1348 = vunpack.c.l.b16 %v1242
        %v1349 = vunpack.c.l.b16 %v1245
        %v1350 = vunpack.c.l.b16 %v1249
        %v1351 = vunpack.c.l.b16 %v1252
        %v1352 = vunpack.c.l.b16 %v1256
        %v1353 = vunpack.c.l.b16 %v1259
        %v1354 = vunpack.c.l.b16 %v1263
        %v1355 = vunpack.c.l.b16 %v1266
        %v1356 = vunpack.c.l.b16 %v1270
        %v1357 = vunpack.c.l.b16 %v1273
        %v1358 = vunpack.c.l.b16 %v1277
        %v1359 = vunpack.c.l.b16 %v1280
        %v1360 = vunpack.c.l.b16 %v1284
        %v1361 = vunpack.c.l.b16 %v1287
        %v1362 = vunpack.c.l.b16 %v1291
        %v1363 = vunpack.c.l.b16 %v1294
        %v1364 = vunpack.c.l.b16 %v1298
        %v1365 = vunpack.c.l.b16 %v1301
        %v1366 = vunpack.c.l.b16 %v1305
        %v1367 = vunpack.c.l.b16 %v1308
        %v1368 = vunpack.c.l.b16 %v1312
        %v1369 = vunpack.c.l.b16 %v1315
        %v1370 = vunpack.c.l.b16 %v1319
        %v1371 = vunpack.c.l.b16 %v1322
        %v1372 = vunpack.c.l.b16 %v1326
        %v1373 = vunpack.c.l.b16 %v1329
        %v1374 = vunpack.c.l.b16 %v1333
        %v1375 = vunpack.c.l.b16 %v1336
        %v1376 = vunpack.c.l.b16 %v1340
        %v1377 = vunpack.c.l.b16 %v1343
        %v1378 = vpack.c.b16 %v1347, %v1346
        %v1379 = vpack.c.b16 %v1349, %v1348
        %v1380 = vpack.c.b16 %v1351, %v1350
        %v1381 = vpack.c.b16 %v1353, %v1352
        %v1382 = vpack.c.b16 %v1355, %v1354
        %v1383 = vpack.c.b16 %v1357, %v1356
        %v1384 = vpack.c.b16 %v1359, %v1358
        %v1385 = vpack.c.b16 %v1361, %v1360
        %v1386 = vpack.c.b16 %v1363, %v1362
        %v1387 = vpack.c.b16 %v1365, %v1364
        %v1388 = vpack.c.b16 %v1367, %v1366
        %v1389 = vpack.c.b16 %v1369, %v1368
        %v1390 = vpack.c.b16 %v1371, %v1370
        %v1391 = vpack.c.b16 %v1373, %v1372
        %v1392 = vpack.c.b16 %v1375, %v1374
        %v1393 = vpack.c.b16 %v1377, %v1376
        %v1395 = vsel %vm675, %v1378, 0
        %v1398 = vsel %vm675, %v1379, 0
        %v1401 = vsel %vm675, %v1380, 0
        %v1404 = vsel %vm675, %v1381, 0
        %v1407 = vsel %vm675, %v1382, 0
        %v1410 = vsel %vm675, %v1383, 0
        %v1413 = vsel %vm675, %v1384, 0
        %v1416 = vsel %vm675, %v1385, 0
        %v1419 = vsel %vm675, %v1386, 0
        %v1422 = vsel %vm675, %v1387, 0
        %v1425 = vsel %vm675, %v1388, 0
        %v1428 = vsel %vm675, %v1389, 0
        %v1431 = vsel %vm675, %v1390, 0
        %v1434 = vsel %vm675, %v1391, 0
        %v1437 = vsel %vm675, %v1392, 0
        %v1440 = vsel %vm675, %v1393, 0
        %v1443 = vsel %vm724, %v1345, 0
        %1445 = vmatprep.subr.bf16.mxu0 0
        %1446 = vmatpush1.bf16.msra.mxu0 %v1443
        %1447 = vmatprep.subr.bf16.mxu0 0
        %1448 = vmatpush1.bf16.msra.mxu0 0
        %1449 = vmatprep.subr.bf16.mxu0 0
        %1450 = vmatpush1.bf16.msra.mxu0 0
        %1451 = vmatprep.subr.bf16.mxu0 0
        %1452 = vmatpush1.bf16.msra.mxu0 0
        %1453 = vmatprep.subr.bf16.mxu0 0
        %1454 = vmatpush1.bf16.msra.mxu0 0
        %1455 = vmatprep.subr.bf16.mxu0 0
        %1456 = vmatpush1.bf16.msra.mxu0 0
        %1457 = vmatprep.subr.bf16.mxu0 0
        %1458 = vmatpush1.bf16.msra.mxu0 0
        %1459 = vmatprep.subr.bf16.mxu0 0
        %1460 = vmatpush1.bf16.msra.mxu0 0
        %1461 = vmatprep.subr.bf16.mxu0 0
        %1462 = vmatpush1.bf16.msra.mxu0 0
        %1463 = vmatprep.subr.bf16.mxu0 0
        %1464 = vmatpush1.bf16.msra.mxu0 0
        %1465 = vmatprep.subr.bf16.mxu0 0
        %1466 = vmatpush1.bf16.msra.mxu0 0
        %1467 = vmatprep.subr.bf16.mxu0 0
        %1468 = vmatpush1.bf16.msra.mxu0 0
        %1469 = vmatprep.subr.bf16.mxu0 0
        %1470 = vmatpush1.bf16.msra.mxu0 0
        %1471 = vmatprep.subr.bf16.mxu0 0
        %1472 = vmatpush1.bf16.msra.mxu0 0
        %1473 = vmatprep.subr.bf16.mxu0 0
        %1474 = vmatpush1.bf16.msra.mxu0 0
        %1475 = vmatprep.subr.bf16.mxu0 0
        %1476 = vmatpush1.bf16.msra.mxu0 0
        %1477 = vmatprep.mubr.bf16.mxu0 0
        %1478 = vmatmul.mubr.bf16.gmra.mrb[0].mxu0 %v1395
        %v1479 = vpop.f32.mrb[0].mxu0
        %v1480 = vadd.f32 0.0, %v1479
        %v1481 = vpop.f32.mrb[0].mxu0
        %v1482 = vpop.f32.mrb[0].mxu0
        %v1483 = vadd.f32 0.0, %v1482
        %v1484 = vpop.f32.mrb[0].mxu0
        %1485 = vmatprep.mubr.bf16.mxu0 0
        %1486 = vmatmul.mubr.bf16.gmra.mrb[0].mxu0 %v1398
        %v1487 = vpop.f32.mrb[0].mxu0
        %v1488 = vadd.f32 0.0, %v1487
        %v1489 = vpop.f32.mrb[0].mxu0
        %v1490 = vpop.f32.mrb[0].mxu0
        %v1491 = vadd.f32 0.0, %v1490
        %v1492 = vpop.f32.mrb[0].mxu0
        %1493 = vmatprep.mubr.bf16.mxu0 0
        %1494 = vmatmul.mubr.bf16.gmra.mrb[0].mxu0 %v1401
        %v1495 = vpop.f32.mrb[0].mxu0
        %v1496 = vadd.f32 0.0, %v1495
        %v1497 = vpop.f32.mrb[0].mxu0
        %v1498 = vpop.f32.mrb[0].mxu0
        %v1499 = vadd.f32 0.0, %v1498
        %v1500 = vpop.f32.mrb[0].mxu0
        %1501 = vmatprep.mubr.bf16.mxu0 0
        %1502 = vmatmul.mubr.bf16.gmra.mrb[0].mxu0 %v1404
        %v1503 = vpop.f32.mrb[0].mxu0
        %v1504 = vadd.f32 0.0, %v1503
        %v1505 = vpop.f32.mrb[0].mxu0
        %v1506 = vpop.f32.mrb[0].mxu0
        %v1507 = vadd.f32 0.0, %v1506
        %v1508 = vpop.f32.mrb[0].mxu0
        %1509 = vmatprep.mubr.bf16.mxu0 0
        %1510 = vmatmul.mubr.bf16.gmra.mrb[0].mxu0 %v1407
        %v1511 = vpop.f32.mrb[0].mxu0
        %v1512 = vadd.f32 0.0, %v1511
        %v1513 = vpop.f32.mrb[0].mxu0
        %v1514 = vpop.f32.mrb[0].mxu0
        %v1515 = vadd.f32 0.0, %v1514
        %v1516 = vpop.f32.mrb[0].mxu0
        %1517 = vmatprep.mubr.bf16.mxu0 0
        %1518 = vmatmul.mubr.bf16.gmra.mrb[0].mxu0 %v1410
        %v1519 = vpop.f32.mrb[0].mxu0
        %v1520 = vadd.f32 0.0, %v1519
        %v1521 = vpop.f32.mrb[0].mxu0
        %v1522 = vpop.f32.mrb[0].mxu0
        %v1523 = vadd.f32 0.0, %v1522
        %v1524 = vpop.f32.mrb[0].mxu0
        %1525 = vmatprep.mubr.bf16.mxu0 0
        %1526 = vmatmul.mubr.bf16.gmra.mrb[0].mxu0 %v1413
        %v1527 = vpop.f32.mrb[0].mxu0
        %v1528 = vadd.f32 0.0, %v1527
        %v1529 = vpop.f32.mrb[0].mxu0
        %v1530 = vpop.f32.mrb[0].mxu0
        %v1531 = vadd.f32 0.0, %v1530
        %v1532 = vpop.f32.mrb[0].mxu0
        %1533 = vmatprep.mubr.bf16.mxu0 0
        %1534 = vmatmul.mubr.bf16.gmra.mrb[0].mxu0 %v1416
        %v1535 = vpop.f32.mrb[0].mxu0
        %v1536 = vadd.f32 0.0, %v1535
        %v1537 = vpop.f32.mrb[0].mxu0
        %v1538 = vpop.f32.mrb[0].mxu0
        %v1539 = vadd.f32 0.0, %v1538
        %v1540 = vpop.f32.mrb[0].mxu0
        %1541 = vmatprep.mubr.bf16.mxu0 0
        %1542 = vmatmul.mubr.bf16.gmra.mrb[0].mxu0 %v1419
        %v1543 = vpop.f32.mrb[0].mxu0
        %v1544 = vadd.f32 0.0, %v1543
        %v1545 = vpop.f32.mrb[0].mxu0
        %v1546 = vpop.f32.mrb[0].mxu0
        %v1547 = vadd.f32 0.0, %v1546
        %v1548 = vpop.f32.mrb[0].mxu0
        %1549 = vmatprep.mubr.bf16.mxu0 0
        %1550 = vmatmul.mubr.bf16.gmra.mrb[0].mxu0 %v1422
        %v1551 = vpop.f32.mrb[0].mxu0
        %v1552 = vadd.f32 0.0, %v1551
        %v1553 = vpop.f32.mrb[0].mxu0
        %v1554 = vpop.f32.mrb[0].mxu0
        %v1555 = vadd.f32 0.0, %v1554
        %v1556 = vpop.f32.mrb[0].mxu0
        %1557 = vmatprep.mubr.bf16.mxu0 0
        %1558 = vmatmul.mubr.bf16.gmra.mrb[0].mxu0 %v1425
        %v1559 = vpop.f32.mrb[0].mxu0
        %v1560 = vadd.f32 0.0, %v1559
        %v1561 = vpop.f32.mrb[0].mxu0
        %v1562 = vpop.f32.mrb[0].mxu0
        %v1563 = vadd.f32 0.0, %v1562
        %v1564 = vpop.f32.mrb[0].mxu0
        %1565 = vmatprep.mubr.bf16.mxu0 0
        %1566 = vmatmul.mubr.bf16.gmra.mrb[0].mxu0 %v1428
        %v1567 = vpop.f32.mrb[0].mxu0
        %v1568 = vadd.f32 0.0, %v1567
        %v1569 = vpop.f32.mrb[0].mxu0
        %v1570 = vpop.f32.mrb[0].mxu0
        %v1571 = vadd.f32 0.0, %v1570
        %v1572 = vpop.f32.mrb[0].mxu0
        %1573 = vmatprep.mubr.bf16.mxu0 0
        %1574 = vmatmul.mubr.bf16.gmra.mrb[0].mxu0 %v1431
        %v1575 = vpop.f32.mrb[0].mxu0
        %v1576 = vadd.f32 0.0, %v1575
        %v1577 = vpop.f32.mrb[0].mxu0
        %v1578 = vpop.f32.mrb[0].mxu0
        %v1579 = vadd.f32 0.0, %v1578
        %v1580 = vpop.f32.mrb[0].mxu0
        %1581 = vmatprep.mubr.bf16.mxu0 0
        %1582 = vmatmul.mubr.bf16.gmra.mrb[0].mxu0 %v1434
        %v1583 = vpop.f32.mrb[0].mxu0
        %v1584 = vadd.f32 0.0, %v1583
        %v1585 = vpop.f32.mrb[0].mxu0
        %v1586 = vpop.f32.mrb[0].mxu0
        %v1587 = vadd.f32 0.0, %v1586
        %v1588 = vpop.f32.mrb[0].mxu0
        %1589 = vmatprep.mubr.bf16.mxu0 0
        %1590 = vmatmul.mubr.bf16.gmra.mrb[0].mxu0 %v1437
        %v1591 = vpop.f32.mrb[0].mxu0
        %v1592 = vadd.f32 0.0, %v1591
        %v1593 = vpop.f32.mrb[0].mxu0
        %v1594 = vpop.f32.mrb[0].mxu0
        %v1595 = vadd.f32 0.0, %v1594
        %v1596 = vpop.f32.mrb[0].mxu0
        %1597 = vmatprep.mubr.bf16.mxu0 0
        %1598 = vmatmul.mubr.bf16.gmra.mrb[0].mxu0 %v1440
        %v1599 = vpop.f32.mrb[0].mxu0
        %v1600 = vadd.f32 0.0, %v1599
        %v1601 = vpop.f32.mrb[0].mxu0
        %v1602 = vpop.f32.mrb[0].mxu0
        %v1603 = vadd.f32 0.0, %v1602
        %v1604 = vpop.f32.mrb[0].mxu0
        %1605 = vdwg.mxu0
        %v1606 = vadd.f32 %v1055, %v1480
        %v1607 = vadd.f32 %v1058, %v1483
        %v1608 = vadd.f32 %v1063, %v1488
        %v1609 = vadd.f32 %v1066, %v1491
        %v1610 = vadd.f32 %v1071, %v1496
        %v1611 = vadd.f32 %v1074, %v1499
        %v1612 = vadd.f32 %v1079, %v1504
        %v1613 = vadd.f32 %v1082, %v1507
        %v1614 = vadd.f32 %v1087, %v1512
        %v1615 = vadd.f32 %v1090, %v1515
        %v1616 = vadd.f32 %v1095, %v1520
        %v1617 = vadd.f32 %v1098, %v1523
        %v1618 = vadd.f32 %v1103, %v1528
        %v1619 = vadd.f32 %v1106, %v1531
        %v1620 = vadd.f32 %v1111, %v1536
        %v1621 = vadd.f32 %v1114, %v1539
        %v1622 = vadd.f32 %v1119, %v1544
        %v1623 = vadd.f32 %v1122, %v1547
        %v1624 = vadd.f32 %v1127, %v1552
        %v1625 = vadd.f32 %v1130, %v1555
        %v1626 = vadd.f32 %v1135, %v1560
        %v1627 = vadd.f32 %v1138, %v1563
        %v1628 = vadd.f32 %v1143, %v1568
        %v1629 = vadd.f32 %v1146, %v1571
        %v1630 = vadd.f32 %v1151, %v1576
        %v1631 = vadd.f32 %v1154, %v1579
        %v1632 = vadd.f32 %v1159, %v1584
        %v1633 = vadd.f32 %v1162, %v1587
        %v1634 = vadd.f32 %v1167, %v1592
        %v1635 = vadd.f32 %v1170, %v1595
        %v1636 = vadd.f32 %v1175, %v1600
        %v1637 = vadd.f32 %v1178, %v1603
        %s1638 = sadd.s32 %s185, 1
        %s1639 = smul.u32 %s1638, 3
        %s1640 = smul.addr %s1639, 4
        %s1641 = scalar_lea.vmem %s182, %s1640
        %v1642 = vld [vmem:[%s1641] sm:$0xf]
        %v1643 = vld [vmem:[%s1641 + $0x4] sm:$0xf]
        %v1644 = vld [vmem:[%s1641 + $0xc] sm:$0xf]
        %v1645 = vld [vmem:[%s1641 + $0x10] sm:$0xf]
        %v1646 = vld [vmem:[%s1641 + $0x18] sm:$0xf]
        %v1647 = vld [vmem:[%s1641 + $0x1c] sm:$0xf]
        %v1648 = vld [vmem:[%s1641 + $0x24] sm:$0xf]
        %v1649 = vld [vmem:[%s1641 + $0x28] sm:$0xf]
        %v1650 = vld [vmem:[%s1641 + $0x30] sm:$0xf]
        %v1651 = vld [vmem:[%s1641 + $0x34] sm:$0xf]
        %v1652 = vld [vmem:[%s1641 + $0x3c] sm:$0xf]
        %v1653 = vld [vmem:[%s1641 + $0x40] sm:$0xf]
        %v1654 = vld [vmem:[%s1641 + $0x48] sm:$0xf]
        %v1655 = vld [vmem:[%s1641 + $0x4c] sm:$0xf]
        %v1656 = vld [vmem:[%s1641 + $0x54] sm:$0xf]
        %v1657 = vld [vmem:[%s1641 + $0x58] sm:$0xf]
        %v1658 = vld [vmem:[%s1641 + $0x60] sm:$0xf]
        %v1659 = vld [vmem:[%s1641 + $0x64] sm:$0xf]
        %v1660 = vld [vmem:[%s1641 + $0x6c] sm:$0xf]
        %v1661 = vld [vmem:[%s1641 + $0x70] sm:$0xf]
        %v1662 = vld [vmem:[%s1641 + $0x78] sm:$0xf]
        %v1663 = vld [vmem:[%s1641 + $0x7c] sm:$0xf]
        %v1664 = vld [vmem:[%s1641 + $0x84] sm:$0xf]
        %v1665 = vld [vmem:[%s1641 + $0x88] sm:$0xf]
        %v1666 = vld [vmem:[%s1641 + $0x90] sm:$0xf]
        %v1667 = vld [vmem:[%s1641 + $0x94] sm:$0xf]
        %v1668 = vld [vmem:[%s1641 + $0x9c] sm:$0xf]
        %v1669 = vld [vmem:[%s1641 + $0xa0] sm:$0xf]
        %v1670 = vld [vmem:[%s1641 + $0xa8] sm:$0xf]
        %v1671 = vld [vmem:[%s1641 + $0xac] sm:$0xf]
        %v1672 = vld [vmem:[%s1641 + $0xb4] sm:$0xf]
        %v1673 = vld [vmem:[%s1641 + $0xb8] sm:$0xf]
        %s1674 = scalar_lea.vmem %s1, 6
        %v1675 = vld [vmem:[%s1674] sm:$0x3]
        %v1708 = vunpack.c.l.b16 %v1642
        %v1709 = vunpack.c.l.b16 %v1643
        %v1710 = vunpack.c.l.b16 %v1644
        %v1711 = vunpack.c.l.b16 %v1645
        %v1712 = vunpack.c.l.b16 %v1646
        %v1713 = vunpack.c.l.b16 %v1647
        %v1714 = vunpack.c.l.b16 %v1648
        %v1715 = vunpack.c.l.b16 %v1649
        %v1716 = vunpack.c.l.b16 %v1650
        %v1717 = vunpack.c.l.b16 %v1651
        %v1718 = vunpack.c.l.b16 %v1652
        %v1719 = vunpack.c.l.b16 %v1653
        %v1720 = vunpack.c.l.b16 %v1654
        %v1721 = vunpack.c.l.b16 %v1655
        %v1722 = vunpack.c.l.b16 %v1656
        %v1723 = vunpack.c.l.b16 %v1657
        %v1724 = vunpack.c.l.b16 %v1658
        %v1725 = vunpack.c.l.b16 %v1659
        %v1726 = vunpack.c.l.b16 %v1660
        %v1727 = vunpack.c.l.b16 %v1661
        %v1728 = vunpack.c.l.b16 %v1662
        %v1729 = vunpack.c.l.b16 %v1663
        %v1730 = vunpack.c.l.b16 %v1664
        %v1731 = vunpack.c.l.b16 %v1665
        %v1732 = vunpack.c.l.b16 %v1666
        %v1733 = vunpack.c.l.b16 %v1667
        %v1734 = vunpack.c.l.b16 %v1668
        %v1735 = vunpack.c.l.b16 %v1669
        %v1736 = vunpack.c.l.b16 %v1670
        %v1737 = vunpack.c.l.b16 %v1671
        %v1738 = vunpack.c.l.b16 %v1672
        %v1739 = vunpack.c.l.b16 %v1673
        %v1740 = vpack.c.b16 %v1709, %v1708
        %v1741 = vpack.c.b16 %v1711, %v1710
        %v1742 = vpack.c.b16 %v1713, %v1712
        %v1743 = vpack.c.b16 %v1715, %v1714
        %v1744 = vpack.c.b16 %v1717, %v1716
        %v1745 = vpack.c.b16 %v1719, %v1718
        %v1746 = vpack.c.b16 %v1721, %v1720
        %v1747 = vpack.c.b16 %v1723, %v1722
        %v1748 = vpack.c.b16 %v1725, %v1724
        %v1749 = vpack.c.b16 %v1727, %v1726
        %v1750 = vpack.c.b16 %v1729, %v1728
        %v1751 = vpack.c.b16 %v1731, %v1730
        %v1752 = vpack.c.b16 %v1733, %v1732
        %v1753 = vpack.c.b16 %v1735, %v1734
        %v1754 = vpack.c.b16 %v1737, %v1736
        %v1755 = vpack.c.b16 %v1739, %v1738
        %v1757 = vsel %vm675, %v1740, 0
        %v1760 = vsel %vm675, %v1741, 0
        %v1763 = vsel %vm675, %v1742, 0
        %v1766 = vsel %vm675, %v1743, 0
        %v1769 = vsel %vm675, %v1744, 0
        %v1772 = vsel %vm675, %v1745, 0
        %v1775 = vsel %vm675, %v1746, 0
        %v1778 = vsel %vm675, %v1747, 0
        %v1781 = vsel %vm675, %v1748, 0
        %v1784 = vsel %vm675, %v1749, 0
        %v1787 = vsel %vm675, %v1750, 0
        %v1790 = vsel %vm675, %v1751, 0
        %v1793 = vsel %vm675, %v1752, 0
        %v1796 = vsel %vm675, %v1753, 0
        %v1799 = vsel %vm675, %v1754, 0
        %v1802 = vsel %vm675, %v1755, 0
        %v1805 = vsel %vm724, %v1675, 0
        %1807 = vmatprep.subr.bf16.mxu0 0
        %1808 = vmatpush1.bf16.msra.mxu0 %v1805
        %1809 = vmatprep.subr.bf16.mxu0 0
        %1810 = vmatpush1.bf16.msra.mxu0 0
        %1811 = vmatprep.subr.bf16.mxu0 0
        %1812 = vmatpush1.bf16.msra.mxu0 0
        %1813 = vmatprep.subr.bf16.mxu0 0
        %1814 = vmatpush1.bf16.msra.mxu0 0
        %1815 = vmatprep.subr.bf16.mxu0 0
        %1816 = vmatpush1.bf16.msra.mxu0 0
        %1817 = vmatprep.subr.bf16.mxu0 0
        %1818 = vmatpush1.bf16.msra.mxu0 0
        %1819 = vmatprep.subr.bf16.mxu0 0
        %1820 = vmatpush1.bf16.msra.mxu0 0
        %1821 = vmatprep.subr.bf16.mxu0 0
        %1822 = vmatpush1.bf16.msra.mxu0 0
        %1823 = vmatprep.subr.bf16.mxu0 0
        %1824 = vmatpush1.bf16.msra.mxu0 0
        %1825 = vmatprep.subr.bf16.mxu0 0
        %1826 = vmatpush1.bf16.msra.mxu0 0
        %1827 = vmatprep.subr.bf16.mxu0 0
        %1828 = vmatpush1.bf16.msra.mxu0 0
        %1829 = vmatprep.subr.bf16.mxu0 0
        %1830 = vmatpush1.bf16.msra.mxu0 0
        %1831 = vmatprep.subr.bf16.mxu0 0
        %1832 = vmatpush1.bf16.msra.mxu0 0
        %1833 = vmatprep.subr.bf16.mxu0 0
        %1834 = vmatpush1.bf16.msra.mxu0 0
        %1835 = vmatprep.subr.bf16.mxu0 0
        %1836 = vmatpush1.bf16.msra.mxu0 0
        %1837 = vmatprep.subr.bf16.mxu0 0
        %1838 = vmatpush1.bf16.msra.mxu0 0
        %1839 = vmatprep.mubr.bf16.mxu0 0
        %1840 = vmatmul.mubr.bf16.gmra.mrb[0].mxu0 %v1757
        %v1841 = vpop.f32.mrb[0].mxu0
        %v1842 = vadd.f32 0.0, %v1841
        %v1843 = vpop.f32.mrb[0].mxu0
        %v1844 = vpop.f32.mrb[0].mxu0
        %v1845 = vadd.f32 0.0, %v1844
        %v1846 = vpop.f32.mrb[0].mxu0
        %1847 = vmatprep.mubr.bf16.mxu0 0
        %1848 = vmatmul.mubr.bf16.gmra.mrb[0].mxu0 %v1760
        %v1849 = vpop.f32.mrb[0].mxu0
        %v1850 = vadd.f32 0.0, %v1849
        %v1851 = vpop.f32.mrb[0].mxu0
        %v1852 = vpop.f32.mrb[0].mxu0
        %v1853 = vadd.f32 0.0, %v1852
        %v1854 = vpop.f32.mrb[0].mxu0
        %1855 = vmatprep.mubr.bf16.mxu0 0
        %1856 = vmatmul.mubr.bf16.gmra.mrb[0].mxu0 %v1763
        %v1857 = vpop.f32.mrb[0].mxu0
        %v1858 = vadd.f32 0.0, %v1857
        %v1859 = vpop.f32.mrb[0].mxu0
        %v1860 = vpop.f32.mrb[0].mxu0
        %v1861 = vadd.f32 0.0, %v1860
        %v1862 = vpop.f32.mrb[0].mxu0
        %1863 = vmatprep.mubr.bf16.mxu0 0
        %1864 = vmatmul.mubr.bf16.gmra.mrb[0].mxu0 %v1766
        %v1865 = vpop.f32.mrb[0].mxu0
        %v1866 = vadd.f32 0.0, %v1865
        %v1867 = vpop.f32.mrb[0].mxu0
        %v1868 = vpop.f32.mrb[0].mxu0
        %v1869 = vadd.f32 0.0, %v1868
        %v1870 = vpop.f32.mrb[0].mxu0
        %1871 = vmatprep.mubr.bf16.mxu0 0
        %1872 = vmatmul.mubr.bf16.gmra.mrb[0].mxu0 %v1769
        %v1873 = vpop.f32.mrb[0].mxu0
        %v1874 = vadd.f32 0.0, %v1873
        %v1875 = vpop.f32.mrb[0].mxu0
        %v1876 = vpop.f32.mrb[0].mxu0
        %v1877 = vadd.f32 0.0, %v1876
        %v1878 = vpop.f32.mrb[0].mxu0
        %1879 = vmatprep.mubr.bf16.mxu0 0
        %1880 = vmatmul.mubr.bf16.gmra.mrb[0].mxu0 %v1772
        %v1881 = vpop.f32.mrb[0].mxu0
        %v1882 = vadd.f32 0.0, %v1881
        %v1883 = vpop.f32.mrb[0].mxu0
        %v1884 = vpop.f32.mrb[0].mxu0
        %v1885 = vadd.f32 0.0, %v1884
        %v1886 = vpop.f32.mrb[0].mxu0
        %1887 = vmatprep.mubr.bf16.mxu0 0
        %1888 = vmatmul.mubr.bf16.gmra.mrb[0].mxu0 %v1775
        %v1889 = vpop.f32.mrb[0].mxu0
        %v1890 = vadd.f32 0.0, %v1889
        %v1891 = vpop.f32.mrb[0].mxu0
        %v1892 = vpop.f32.mrb[0].mxu0
        %v1893 = vadd.f32 0.0, %v1892
        %v1894 = vpop.f32.mrb[0].mxu0
        %1895 = vmatprep.mubr.bf16.mxu0 0
        %1896 = vmatmul.mubr.bf16.gmra.mrb[0].mxu0 %v1778
        %v1897 = vpop.f32.mrb[0].mxu0
        %v1898 = vadd.f32 0.0, %v1897
        %v1899 = vpop.f32.mrb[0].mxu0
        %v1900 = vpop.f32.mrb[0].mxu0
        %v1901 = vadd.f32 0.0, %v1900
        %v1902 = vpop.f32.mrb[0].mxu0
        %1903 = vmatprep.mubr.bf16.mxu0 0
        %1904 = vmatmul.mubr.bf16.gmra.mrb[0].mxu0 %v1781
        %v1905 = vpop.f32.mrb[0].mxu0
        %v1906 = vadd.f32 0.0, %v1905
        %v1907 = vpop.f32.mrb[0].mxu0
        %v1908 = vpop.f32.mrb[0].mxu0
        %v1909 = vadd.f32 0.0, %v1908
        %v1910 = vpop.f32.mrb[0].mxu0
        %1911 = vmatprep.mubr.bf16.mxu0 0
        %1912 = vmatmul.mubr.bf16.gmra.mrb[0].mxu0 %v1784
        %v1913 = vpop.f32.mrb[0].mxu0
        %v1914 = vadd.f32 0.0, %v1913
        %v1915 = vpop.f32.mrb[0].mxu0
        %v1916 = vpop.f32.mrb[0].mxu0
        %v1917 = vadd.f32 0.0, %v1916
        %v1918 = vpop.f32.mrb[0].mxu0
        %1919 = vmatprep.mubr.bf16.mxu0 0
        %1920 = vmatmul.mubr.bf16.gmra.mrb[0].mxu0 %v1787
        %v1921 = vpop.f32.mrb[0].mxu0
        %v1922 = vadd.f32 0.0, %v1921
        %v1923 = vpop.f32.mrb[0].mxu0
        %v1924 = vpop.f32.mrb[0].mxu0
        %v1925 = vadd.f32 0.0, %v1924
        %v1926 = vpop.f32.mrb[0].mxu0
        %1927 = vmatprep.mubr.bf16.mxu0 0
        %1928 = vmatmul.mubr.bf16.gmra.mrb[0].mxu0 %v1790
        %v1929 = vpop.f32.mrb[0].mxu0
        %v1930 = vadd.f32 0.0, %v1929
        %v1931 = vpop.f32.mrb[0].mxu0
        %v1932 = vpop.f32.mrb[0].mxu0
        %v1933 = vadd.f32 0.0, %v1932
        %v1934 = vpop.f32.mrb[0].mxu0
        %1935 = vmatprep.mubr.bf16.mxu0 0
        %1936 = vmatmul.mubr.bf16.gmra.mrb[0].mxu0 %v1793
        %v1937 = vpop.f32.mrb[0].mxu0
        %v1938 = vadd.f32 0.0, %v1937
        %v1939 = vpop.f32.mrb[0].mxu0
        %v1940 = vpop.f32.mrb[0].mxu0
        %v1941 = vadd.f32 0.0, %v1940
        %v1942 = vpop.f32.mrb[0].mxu0
        %1943 = vmatprep.mubr.bf16.mxu0 0
        %1944 = vmatmul.mubr.bf16.gmra.mrb[0].mxu0 %v1796
        %v1945 = vpop.f32.mrb[0].mxu0
        %v1946 = vadd.f32 0.0, %v1945
        %v1947 = vpop.f32.mrb[0].mxu0
        %v1948 = vpop.f32.mrb[0].mxu0
        %v1949 = vadd.f32 0.0, %v1948
        %v1950 = vpop.f32.mrb[0].mxu0
        %1951 = vmatprep.mubr.bf16.mxu0 0
        %1952 = vmatmul.mubr.bf16.gmra.mrb[0].mxu0 %v1799
        %v1953 = vpop.f32.mrb[0].mxu0
        %v1954 = vadd.f32 0.0, %v1953
        %v1955 = vpop.f32.mrb[0].mxu0
        %v1956 = vpop.f32.mrb[0].mxu0
        %v1957 = vadd.f32 0.0, %v1956
        %v1958 = vpop.f32.mrb[0].mxu0
        %1959 = vmatprep.mubr.bf16.mxu0 0
        %1960 = vmatmul.mubr.bf16.gmra.mrb[0].mxu0 %v1802
        %v1961 = vpop.f32.mrb[0].mxu0
        %v1962 = vadd.f32 0.0, %v1961
        %v1963 = vpop.f32.mrb[0].mxu0
        %v1964 = vpop.f32.mrb[0].mxu0
        %v1965 = vadd.f32 0.0, %v1964
        %v1966 = vpop.f32.mrb[0].mxu0
        %1967 = vdwg.mxu0
        %v1968 = vadd.f32 %v1606, %v1842
        %v1969 = vadd.f32 %v1607, %v1845
        %v1970 = vadd.f32 %v1608, %v1850
        %v1971 = vadd.f32 %v1609, %v1853
        %v1972 = vadd.f32 %v1610, %v1858
        %v1973 = vadd.f32 %v1611, %v1861
        %v1974 = vadd.f32 %v1612, %v1866
        %v1975 = vadd.f32 %v1613, %v1869
        %v1976 = vadd.f32 %v1614, %v1874
        %v1977 = vadd.f32 %v1615, %v1877
        %v1978 = vadd.f32 %v1616, %v1882
        %v1979 = vadd.f32 %v1617, %v1885
        %v1980 = vadd.f32 %v1618, %v1890
        %v1981 = vadd.f32 %v1619, %v1893
        %v1982 = vadd.f32 %v1620, %v1898
        %v1983 = vadd.f32 %v1621, %v1901
        %v1984 = vadd.f32 %v1622, %v1906
        %v1985 = vadd.f32 %v1623, %v1909
        %v1986 = vadd.f32 %v1624, %v1914
        %v1987 = vadd.f32 %v1625, %v1917
        %v1988 = vadd.f32 %v1626, %v1922
        %v1989 = vadd.f32 %v1627, %v1925
        %v1990 = vadd.f32 %v1628, %v1930
        %v1991 = vadd.f32 %v1629, %v1933
        %v1992 = vadd.f32 %v1630, %v1938
        %v1993 = vadd.f32 %v1631, %v1941
        %v1994 = vadd.f32 %v1632, %v1946
        %v1995 = vadd.f32 %v1633, %v1949
        %v1996 = vadd.f32 %v1634, %v1954
        %v1997 = vadd.f32 %v1635, %v1957
        %v1998 = vadd.f32 %v1636, %v1962
        %v1999 = vadd.f32 %v1637, %v1965
        %v2000 = vld [vmem:[%s1641] sm:$0xf]
        %v2001 = vld [vmem:[%s1641 + $0x4] sm:$0xf]
        %v2002 = vld [vmem:[%s1641 + $0x8] sm:$0x1]
        %v2003 = vld [vmem:[%s1641 + $0xc] sm:$0xf]
        %v2004 = vld [vmem:[%s1641 + $0x10] sm:$0xf]
        %v2005 = vld [vmem:[%s1641 + $0x14] sm:$0x1]
        %v2006 = vld [vmem:[%s1641 + $0x18] sm:$0xf]
        %v2007 = vld [vmem:[%s1641 + $0x1c] sm:$0xf]
        %v2008 = vld [vmem:[%s1641 + $0x20] sm:$0x1]
        %v2009 = vld [vmem:[%s1641 + $0x24] sm:$0xf]
        %v2010 = vld [vmem:[%s1641 + $0x28] sm:$0xf]
        %v2011 = vld [vmem:[%s1641 + $0x2c] sm:$0x1]
        %v2012 = vld [vmem:[%s1641 + $0x30] sm:$0xf]
        %v2013 = vld [vmem:[%s1641 + $0x34] sm:$0xf]
        %v2014 = vld [vmem:[%s1641 + $0x38] sm:$0x1]
        %v2015 = vld [vmem:[%s1641 + $0x3c] sm:$0xf]
        %v2016 = vld [vmem:[%s1641 + $0x40] sm:$0xf]
        %v2017 = vld [vmem:[%s1641 + $0x44] sm:$0x1]
        %v2018 = vld [vmem:[%s1641 + $0x48] sm:$0xf]
        %v2019 = vld [vmem:[%s1641 + $0x4c] sm:$0xf]
        %v2020 = vld [vmem:[%s1641 + $0x50] sm:$0x1]
        %v2021 = vld [vmem:[%s1641 + $0x54] sm:$0xf]
        %v2022 = vld [vmem:[%s1641 + $0x58] sm:$0xf]
        %v2023 = vld [vmem:[%s1641 + $0x5c] sm:$0x1]
        %v2024 = vld [vmem:[%s1641 + $0x60] sm:$0xf]
        %v2025 = vld [vmem:[%s1641 + $0x64] sm:$0xf]
        %v2026 = vld [vmem:[%s1641 + $0x68] sm:$0x1]
        %v2027 = vld [vmem:[%s1641 + $0x6c] sm:$0xf]
        %v2028 = vld [vmem:[%s1641 + $0x70] sm:$0xf]
        %v2029 = vld [vmem:[%s1641 + $0x74] sm:$0x1]
        %v2030 = vld [vmem:[%s1641 + $0x78] sm:$0xf]
        %v2031 = vld [vmem:[%s1641 + $0x7c] sm:$0xf]
        %v2032 = vld [vmem:[%s1641 + $0x80] sm:$0x1]
        %v2033 = vld [vmem:[%s1641 + $0x84] sm:$0xf]
        %v2034 = vld [vmem:[%s1641 + $0x88] sm:$0xf]
        %v2035 = vld [vmem:[%s1641 + $0x8c] sm:$0x1]
        %v2036 = vld [vmem:[%s1641 + $0x90] sm:$0xf]
        %v2037 = vld [vmem:[%s1641 + $0x94] sm:$0xf]
        %v2038 = vld [vmem:[%s1641 + $0x98] sm:$0x1]
        %v2039 = vld [vmem:[%s1641 + $0x9c] sm:$0xf]
        %v2040 = vld [vmem:[%s1641 + $0xa0] sm:$0xf]
        %v2041 = vld [vmem:[%s1641 + $0xa4] sm:$0x1]
        %v2042 = vld [vmem:[%s1641 + $0xa8] sm:$0xf]
        %v2043 = vld [vmem:[%s1641 + $0xac] sm:$0xf]
        %v2044 = vld [vmem:[%s1641 + $0xb0] sm:$0x1]
        %v2045 = vld [vmem:[%s1641 + $0xb4] sm:$0xf]
        %v2046 = vld [vmem:[%s1641 + $0xb8] sm:$0xf]
        %v2047 = vld [vmem:[%s1641 + $0xbc] sm:$0x1]
        %v2049 = vshrl.u32 %v2000, 16
        %v2051 = vrot.slane %v2049, 4
        %v2052 = vshll.u32 %v2000, 16
        %v2054 = vrot.slane %v2052, 5
        %v2055 = vor.u32 %v2051, %v2054
        %v2056 = vrot.slane %v2055, 4
        %v2058 = vshll.u32 %v2001, 16
        %v2060 = vrot.slane %v2058, 5
        %v2061 = vsel %vm240, %v2056, %v2060
        %v2062 = vshrl.u32 %v2001, 16
        %v2064 = vrot.slane %v2062, 4
        %v2065 = vor.u32 %v2064, %v2060
        %v2066 = vrot.slane %v2065, 4
        %v2068 = vshll.u32 %v2002, 16
        %v2070 = vrot.slane %v2068, 5
        %v2071 = vsel %vm240, %v2066, %v2070
        %v2073 = vshrl.u32 %v2003, 16
        %v2075 = vrot.slane %v2073, 4
        %v2076 = vshll.u32 %v2003, 16
        %v2078 = vrot.slane %v2076, 5
        %v2079 = vor.u32 %v2075, %v2078
        %v2080 = vrot.slane %v2079, 4
        %v2082 = vshll.u32 %v2004, 16
        %v2084 = vrot.slane %v2082, 5
        %v2085 = vsel %vm240, %v2080, %v2084
        %v2086 = vshrl.u32 %v2004, 16
        %v2088 = vrot.slane %v2086, 4
        %v2089 = vor.u32 %v2088, %v2084
        %v2090 = vrot.slane %v2089, 4
        %v2092 = vshll.u32 %v2005, 16
        %v2094 = vrot.slane %v2092, 5
        %v2095 = vsel %vm240, %v2090, %v2094
        %v2097 = vshrl.u32 %v2006, 16
        %v2099 = vrot.slane %v2097, 4
        %v2100 = vshll.u32 %v2006, 16
        %v2102 = vrot.slane %v2100, 5
        %v2103 = vor.u32 %v2099, %v2102
        %v2104 = vrot.slane %v2103, 4
        %v2106 = vshll.u32 %v2007, 16
        %v2108 = vrot.slane %v2106, 5
        %v2109 = vsel %vm240, %v2104, %v2108
        %v2110 = vshrl.u32 %v2007, 16
        %v2112 = vrot.slane %v2110, 4
        %v2113 = vor.u32 %v2112, %v2108
        %v2114 = vrot.slane %v2113, 4
        %v2116 = vshll.u32 %v2008, 16
        %v2118 = vrot.slane %v2116, 5
        %v2119 = vsel %vm240, %v2114, %v2118
        %v2121 = vshrl.u32 %v2009, 16
        %v2123 = vrot.slane %v2121, 4
        %v2124 = vshll.u32 %v2009, 16
        %v2126 = vrot.slane %v2124, 5
        %v2127 = vor.u32 %v2123, %v2126
        %v2128 = vrot.slane %v2127, 4
        %v2130 = vshll.u32 %v2010, 16
        %v2132 = vrot.slane %v2130, 5
        %v2133 = vsel %vm240, %v2128, %v2132
        %v2134 = vshrl.u32 %v2010, 16
        %v2136 = vrot.slane %v2134, 4
        %v2137 = vor.u32 %v2136, %v2132
        %v2138 = vrot.slane %v2137, 4
        %v2140 = vshll.u32 %v2011, 16
        %v2142 = vrot.slane %v2140, 5
        %v2143 = vsel %vm240, %v2138, %v2142
        %v2145 = vshrl.u32 %v2012, 16
        %v2147 = vrot.slane %v2145, 4
        %v2148 = vshll.u32 %v2012, 16
        %v2150 = vrot.slane %v2148, 5
        %v2151 = vor.u32 %v2147, %v2150
        %v2152 = vrot.slane %v2151, 4
        %v2154 = vshll.u32 %v2013, 16
        %v2156 = vrot.slane %v2154, 5
        %v2157 = vsel %vm240, %v2152, %v2156
        %v2158 = vshrl.u32 %v2013, 16
        %v2160 = vrot.slane %v2158, 4
        %v2161 = vor.u32 %v2160, %v2156
        %v2162 = vrot.slane %v2161, 4
        %v2164 = vshll.u32 %v2014, 16
        %v2166 = vrot.slane %v2164, 5
        %v2167 = vsel %vm240, %v2162, %v2166
        %v2169 = vshrl.u32 %v2015, 16
        %v2171 = vrot.slane %v2169, 4
        %v2172 = vshll.u32 %v2015, 16
        %v2174 = vrot.slane %v2172, 5
        %v2175 = vor.u32 %v2171, %v2174
        %v2176 = vrot.slane %v2175, 4
        %v2178 = vshll.u32 %v2016, 16
        %v2180 = vrot.slane %v2178, 5
        %v2181 = vsel %vm240, %v2176, %v2180
        %v2182 = vshrl.u32 %v2016, 16
        %v2184 = vrot.slane %v2182, 4
        %v2185 = vor.u32 %v2184, %v2180
        %v2186 = vrot.slane %v2185, 4
        %v2188 = vshll.u32 %v2017, 16
        %v2190 = vrot.slane %v2188, 5
        %v2191 = vsel %vm240, %v2186, %v2190
        %v2193 = vshrl.u32 %v2018, 16
        %v2195 = vrot.slane %v2193, 4
        %v2196 = vshll.u32 %v2018, 16
        %v2198 = vrot.slane %v2196, 5
        %v2199 = vor.u32 %v2195, %v2198
        %v2200 = vrot.slane %v2199, 4
        %v2202 = vshll.u32 %v2019, 16
        %v2204 = vrot.slane %v2202, 5
        %v2205 = vsel %vm240, %v2200, %v2204
        %v2206 = vshrl.u32 %v2019, 16
        %v2208 = vrot.slane %v2206, 4
        %v2209 = vor.u32 %v2208, %v2204
        %v2210 = vrot.slane %v2209, 4
        %v2212 = vshll.u32 %v2020, 16
        %v2214 = vrot.slane %v2212, 5
        %v2215 = vsel %vm240, %v2210, %v2214
        %v2217 = vshrl.u32 %v2021, 16
        %v2219 = vrot.slane %v2217, 4
        %v2220 = vshll.u32 %v2021, 16
        %v2222 = vrot.slane %v2220, 5
        %v2223 = vor.u32 %v2219, %v2222
        %v2224 = vrot.slane %v2223, 4
        %v2226 = vshll.u32 %v2022, 16
        %v2228 = vrot.slane %v2226, 5
        %v2229 = vsel %vm240, %v2224, %v2228
        %v2230 = vshrl.u32 %v2022, 16
        %v2232 = vrot.slane %v2230, 4
        %v2233 = vor.u32 %v2232, %v2228
        %v2234 = vrot.slane %v2233, 4
        %v2236 = vshll.u32 %v2023, 16
        %v2238 = vrot.slane %v2236, 5
        %v2239 = vsel %vm240, %v2234, %v2238
        %v2241 = vshrl.u32 %v2024, 16
        %v2243 = vrot.slane %v2241, 4
        %v2244 = vshll.u32 %v2024, 16
        %v2246 = vrot.slane %v2244, 5
        %v2247 = vor.u32 %v2243, %v2246
        %v2248 = vrot.slane %v2247, 4
        %v2250 = vshll.u32 %v2025, 16
        %v2252 = vrot.slane %v2250, 5
        %v2253 = vsel %vm240, %v2248, %v2252
        %v2254 = vshrl.u32 %v2025, 16
        %v2256 = vrot.slane %v2254, 4
        %v2257 = vor.u32 %v2256, %v2252
        %v2258 = vrot.slane %v2257, 4
        %v2260 = vshll.u32 %v2026, 16
        %v2262 = vrot.slane %v2260, 5
        %v2263 = vsel %vm240, %v2258, %v2262
        %v2265 = vshrl.u32 %v2027, 16
        %v2267 = vrot.slane %v2265, 4
        %v2268 = vshll.u32 %v2027, 16
        %v2270 = vrot.slane %v2268, 5
        %v2271 = vor.u32 %v2267, %v2270
        %v2272 = vrot.slane %v2271, 4
        %v2274 = vshll.u32 %v2028, 16
        %v2276 = vrot.slane %v2274, 5
        %v2277 = vsel %vm240, %v2272, %v2276
        %v2278 = vshrl.u32 %v2028, 16
        %v2280 = vrot.slane %v2278, 4
        %v2281 = vor.u32 %v2280, %v2276
        %v2282 = vrot.slane %v2281, 4
        %v2284 = vshll.u32 %v2029, 16
        %v2286 = vrot.slane %v2284, 5
        %v2287 = vsel %vm240, %v2282, %v2286
        %v2289 = vshrl.u32 %v2030, 16
        %v2291 = vrot.slane %v2289, 4
        %v2292 = vshll.u32 %v2030, 16
        %v2294 = vrot.slane %v2292, 5
        %v2295 = vor.u32 %v2291, %v2294
        %v2296 = vrot.slane %v2295, 4
        %v2298 = vshll.u32 %v2031, 16
        %v2300 = vrot.slane %v2298, 5
        %v2301 = vsel %vm240, %v2296, %v2300
        %v2302 = vshrl.u32 %v2031, 16
        %v2304 = vrot.slane %v2302, 4
        %v2305 = vor.u32 %v2304, %v2300
        %v2306 = vrot.slane %v2305, 4
        %v2308 = vshll.u32 %v2032, 16
        %v2310 = vrot.slane %v2308, 5
        %v2311 = vsel %vm240, %v2306, %v2310
        %v2313 = vshrl.u32 %v2033, 16
        %v2315 = vrot.slane %v2313, 4
        %v2316 = vshll.u32 %v2033, 16
        %v2318 = vrot.slane %v2316, 5
        %v2319 = vor.u32 %v2315, %v2318
        %v2320 = vrot.slane %v2319, 4
        %v2322 = vshll.u32 %v2034, 16
        %v2324 = vrot.slane %v2322, 5
        %v2325 = vsel %vm240, %v2320, %v2324
        %v2326 = vshrl.u32 %v2034, 16
        %v2328 = vrot.slane %v2326, 4
        %v2329 = vor.u32 %v2328, %v2324
        %v2330 = vrot.slane %v2329, 4
        %v2332 = vshll.u32 %v2035, 16
        %v2334 = vrot.slane %v2332, 5
        %v2335 = vsel %vm240, %v2330, %v2334
        %v2337 = vshrl.u32 %v2036, 16
        %v2339 = vrot.slane %v2337, 4
        %v2340 = vshll.u32 %v2036, 16
        %v2342 = vrot.slane %v2340, 5
        %v2343 = vor.u32 %v2339, %v2342
        %v2344 = vrot.slane %v2343, 4
        %v2346 = vshll.u32 %v2037, 16
        %v2348 = vrot.slane %v2346, 5
        %v2349 = vsel %vm240, %v2344, %v2348
        %v2350 = vshrl.u32 %v2037, 16
        %v2352 = vrot.slane %v2350, 4
        %v2353 = vor.u32 %v2352, %v2348
        %v2354 = vrot.slane %v2353, 4
        %v2356 = vshll.u32 %v2038, 16
        %v2358 = vrot.slane %v2356, 5
        %v2359 = vsel %vm240, %v2354, %v2358
        %v2361 = vshrl.u32 %v2039, 16
        %v2363 = vrot.slane %v2361, 4
        %v2364 = vshll.u32 %v2039, 16
        %v2366 = vrot.slane %v2364, 5
        %v2367 = vor.u32 %v2363, %v2366
        %v2368 = vrot.slane %v2367, 4
        %v2370 = vshll.u32 %v2040, 16
        %v2372 = vrot.slane %v2370, 5
        %v2373 = vsel %vm240, %v2368, %v2372
        %v2374 = vshrl.u32 %v2040, 16
        %v2376 = vrot.slane %v2374, 4
        %v2377 = vor.u32 %v2376, %v2372
        %v2378 = vrot.slane %v2377, 4
        %v2380 = vshll.u32 %v2041, 16
        %v2382 = vrot.slane %v2380, 5
        %v2383 = vsel %vm240, %v2378, %v2382
        %v2385 = vshrl.u32 %v2042, 16
        %v2387 = vrot.slane %v2385, 4
        %v2388 = vshll.u32 %v2042, 16
        %v2390 = vrot.slane %v2388, 5
        %v2391 = vor.u32 %v2387, %v2390
        %v2392 = vrot.slane %v2391, 4
        %v2394 = vshll.u32 %v2043, 16
        %v2396 = vrot.slane %v2394, 5
        %v2397 = vsel %vm240, %v2392, %v2396
        %v2398 = vshrl.u32 %v2043, 16
        %v2400 = vrot.slane %v2398, 4
        %v2401 = vor.u32 %v2400, %v2396
        %v2402 = vrot.slane %v2401, 4
        %v2404 = vshll.u32 %v2044, 16
        %v2406 = vrot.slane %v2404, 5
        %v2407 = vsel %vm240, %v2402, %v2406
        %v2409 = vshrl.u32 %v2045, 16
        %v2411 = vrot.slane %v2409, 4
        %v2412 = vshll.u32 %v2045, 16
        %v2414 = vrot.slane %v2412, 5
        %v2415 = vor.u32 %v2411, %v2414
        %v2416 = vrot.slane %v2415, 4
        %v2418 = vshll.u32 %v2046, 16
        %v2420 = vrot.slane %v2418, 5
        %v2421 = vsel %vm240, %v2416, %v2420
        %v2422 = vshrl.u32 %v2046, 16
        %v2424 = vrot.slane %v2422, 4
        %v2425 = vor.u32 %v2424, %v2420
        %v2426 = vrot.slane %v2425, 4
        %v2428 = vshll.u32 %v2047, 16
        %v2430 = vrot.slane %v2428, 5
        %v2431 = vsel %vm240, %v2426, %v2430
        %s2432 = scalar_lea.vmem %s1, 8
        %v2433 = vld [vmem:[%s2432] sm:$0x3]
        %v2434 = vunpack.c.l.b16 %v2061
        %v2435 = vunpack.c.l.b16 %v2071
        %v2436 = vunpack.c.l.b16 %v2085
        %v2437 = vunpack.c.l.b16 %v2095
        %v2438 = vunpack.c.l.b16 %v2109
        %v2439 = vunpack.c.l.b16 %v2119
        %v2440 = vunpack.c.l.b16 %v2133
        %v2441 = vunpack.c.l.b16 %v2143
        %v2442 = vunpack.c.l.b16 %v2157
        %v2443 = vunpack.c.l.b16 %v2167
        %v2444 = vunpack.c.l.b16 %v2181
        %v2445 = vunpack.c.l.b16 %v2191
        %v2446 = vunpack.c.l.b16 %v2205
        %v2447 = vunpack.c.l.b16 %v2215
        %v2448 = vunpack.c.l.b16 %v2229
        %v2449 = vunpack.c.l.b16 %v2239
        %v2450 = vunpack.c.l.b16 %v2253
        %v2451 = vunpack.c.l.b16 %v2263
        %v2452 = vunpack.c.l.b16 %v2277
        %v2453 = vunpack.c.l.b16 %v2287
        %v2454 = vunpack.c.l.b16 %v2301
        %v2455 = vunpack.c.l.b16 %v2311
        %v2456 = vunpack.c.l.b16 %v2325
        %v2457 = vunpack.c.l.b16 %v2335
        %v2458 = vunpack.c.l.b16 %v2349
        %v2459 = vunpack.c.l.b16 %v2359
        %v2460 = vunpack.c.l.b16 %v2373
        %v2461 = vunpack.c.l.b16 %v2383
        %v2462 = vunpack.c.l.b16 %v2397
        %v2463 = vunpack.c.l.b16 %v2407
        %v2464 = vunpack.c.l.b16 %v2421
        %v2465 = vunpack.c.l.b16 %v2431
        %v2466 = vpack.c.b16 %v2435, %v2434
        %v2467 = vpack.c.b16 %v2437, %v2436
        %v2468 = vpack.c.b16 %v2439, %v2438
        %v2469 = vpack.c.b16 %v2441, %v2440
        %v2470 = vpack.c.b16 %v2443, %v2442
        %v2471 = vpack.c.b16 %v2445, %v2444
        %v2472 = vpack.c.b16 %v2447, %v2446
        %v2473 = vpack.c.b16 %v2449, %v2448
        %v2474 = vpack.c.b16 %v2451, %v2450
        %v2475 = vpack.c.b16 %v2453, %v2452
        %v2476 = vpack.c.b16 %v2455, %v2454
        %v2477 = vpack.c.b16 %v2457, %v2456
        %v2478 = vpack.c.b16 %v2459, %v2458
        %v2479 = vpack.c.b16 %v2461, %v2460
        %v2480 = vpack.c.b16 %v2463, %v2462
        %v2481 = vpack.c.b16 %v2465, %v2464
        %v2483 = vsel %vm675, %v2466, 0
        %v2486 = vsel %vm675, %v2467, 0
        %v2489 = vsel %vm675, %v2468, 0
        %v2492 = vsel %vm675, %v2469, 0
        %v2495 = vsel %vm675, %v2470, 0
        %v2498 = vsel %vm675, %v2471, 0
        %v2501 = vsel %vm675, %v2472, 0
        %v2504 = vsel %vm675, %v2473, 0
        %v2507 = vsel %vm675, %v2474, 0
        %v2510 = vsel %vm675, %v2475, 0
        %v2513 = vsel %vm675, %v2476, 0
        %v2516 = vsel %vm675, %v2477, 0
        %v2519 = vsel %vm675, %v2478, 0
        %v2522 = vsel %vm675, %v2479, 0
        %v2525 = vsel %vm675, %v2480, 0
        %v2528 = vsel %vm675, %v2481, 0
        %v2531 = vsel %vm724, %v2433, 0
        %2533 = vmatprep.subr.bf16.mxu0 0
        %2534 = vmatpush1.bf16.msra.mxu0 %v2531
        %2535 = vmatprep.subr.bf16.mxu0 0
        %2536 = vmatpush1.bf16.msra.mxu0 0
        %2537 = vmatprep.subr.bf16.mxu0 0
        %2538 = vmatpush1.bf16.msra.mxu0 0
        %2539 = vmatprep.subr.bf16.mxu0 0
        %2540 = vmatpush1.bf16.msra.mxu0 0
        %2541 = vmatprep.subr.bf16.mxu0 0
        %2542 = vmatpush1.bf16.msra.mxu0 0
        %2543 = vmatprep.subr.bf16.mxu0 0
        %2544 = vmatpush1.bf16.msra.mxu0 0
        %2545 = vmatprep.subr.bf16.mxu0 0
        %2546 = vmatpush1.bf16.msra.mxu0 0
        %2547 = vmatprep.subr.bf16.mxu0 0
        %2548 = vmatpush1.bf16.msra.mxu0 0
        %2549 = vmatprep.subr.bf16.mxu0 0
        %2550 = vmatpush1.bf16.msra.mxu0 0
        %2551 = vmatprep.subr.bf16.mxu0 0
        %2552 = vmatpush1.bf16.msra.mxu0 0
        %2553 = vmatprep.subr.bf16.mxu0 0
        %2554 = vmatpush1.bf16.msra.mxu0 0
        %2555 = vmatprep.subr.bf16.mxu0 0
        %2556 = vmatpush1.bf16.msra.mxu0 0
        %2557 = vmatprep.subr.bf16.mxu0 0
        %2558 = vmatpush1.bf16.msra.mxu0 0
        %2559 = vmatprep.subr.bf16.mxu0 0
        %2560 = vmatpush1.bf16.msra.mxu0 0
        %2561 = vmatprep.subr.bf16.mxu0 0
        %2562 = vmatpush1.bf16.msra.mxu0 0
        %2563 = vmatprep.subr.bf16.mxu0 0
        %2564 = vmatpush1.bf16.msra.mxu0 0
        %2565 = vmatprep.mubr.bf16.mxu0 0
        %2566 = vmatmul.mubr.bf16.gmra.mrb[0].mxu0 %v2483
        %v2567 = vpop.f32.mrb[0].mxu0
        %v2568 = vadd.f32 0.0, %v2567
        %v2569 = vpop.f32.mrb[0].mxu0
        %v2570 = vpop.f32.mrb[0].mxu0
        %v2571 = vadd.f32 0.0, %v2570
        %v2572 = vpop.f32.mrb[0].mxu0
        %2573 = vmatprep.mubr.bf16.mxu0 0
        %2574 = vmatmul.mubr.bf16.gmra.mrb[0].mxu0 %v2486
        %v2575 = vpop.f32.mrb[0].mxu0
        %v2576 = vadd.f32 0.0, %v2575
        %v2577 = vpop.f32.mrb[0].mxu0
        %v2578 = vpop.f32.mrb[0].mxu0
        %v2579 = vadd.f32 0.0, %v2578
        %v2580 = vpop.f32.mrb[0].mxu0
        %2581 = vmatprep.mubr.bf16.mxu0 0
        %2582 = vmatmul.mubr.bf16.gmra.mrb[0].mxu0 %v2489
        %v2583 = vpop.f32.mrb[0].mxu0
        %v2584 = vadd.f32 0.0, %v2583
        %v2585 = vpop.f32.mrb[0].mxu0
        %v2586 = vpop.f32.mrb[0].mxu0
        %v2587 = vadd.f32 0.0, %v2586
        %v2588 = vpop.f32.mrb[0].mxu0
        %2589 = vmatprep.mubr.bf16.mxu0 0
        %2590 = vmatmul.mubr.bf16.gmra.mrb[0].mxu0 %v2492
        %v2591 = vpop.f32.mrb[0].mxu0
        %v2592 = vadd.f32 0.0, %v2591
        %v2593 = vpop.f32.mrb[0].mxu0
        %v2594 = vpop.f32.mrb[0].mxu0
        %v2595 = vadd.f32 0.0, %v2594
        %v2596 = vpop.f32.mrb[0].mxu0
        %2597 = vmatprep.mubr.bf16.mxu0 0
        %2598 = vmatmul.mubr.bf16.gmra.mrb[0].mxu0 %v2495
        %v2599 = vpop.f32.mrb[0].mxu0
        %v2600 = vadd.f32 0.0, %v2599
        %v2601 = vpop.f32.mrb[0].mxu0
        %v2602 = vpop.f32.mrb[0].mxu0
        %v2603 = vadd.f32 0.0, %v2602
        %v2604 = vpop.f32.mrb[0].mxu0
        %2605 = vmatprep.mubr.bf16.mxu0 0
        %2606 = vmatmul.mubr.bf16.gmra.mrb[0].mxu0 %v2498
        %v2607 = vpop.f32.mrb[0].mxu0
        %v2608 = vadd.f32 0.0, %v2607
        %v2609 = vpop.f32.mrb[0].mxu0
        %v2610 = vpop.f32.mrb[0].mxu0
        %v2611 = vadd.f32 0.0, %v2610
        %v2612 = vpop.f32.mrb[0].mxu0
        %2613 = vmatprep.mubr.bf16.mxu0 0
        %2614 = vmatmul.mubr.bf16.gmra.mrb[0].mxu0 %v2501
        %v2615 = vpop.f32.mrb[0].mxu0
        %v2616 = vadd.f32 0.0, %v2615
        %v2617 = vpop.f32.mrb[0].mxu0
        %v2618 = vpop.f32.mrb[0].mxu0
        %v2619 = vadd.f32 0.0, %v2618
        %v2620 = vpop.f32.mrb[0].mxu0
        %2621 = vmatprep.mubr.bf16.mxu0 0
        %2622 = vmatmul.mubr.bf16.gmra.mrb[0].mxu0 %v2504
        %v2623 = vpop.f32.mrb[0].mxu0
        %v2624 = vadd.f32 0.0, %v2623
        %v2625 = vpop.f32.mrb[0].mxu0
        %v2626 = vpop.f32.mrb[0].mxu0
        %v2627 = vadd.f32 0.0, %v2626
        %v2628 = vpop.f32.mrb[0].mxu0
        %2629 = vmatprep.mubr.bf16.mxu0 0
        %2630 = vmatmul.mubr.bf16.gmra.mrb[0].mxu0 %v2507
        %v2631 = vpop.f32.mrb[0].mxu0
        %v2632 = vadd.f32 0.0, %v2631
        %v2633 = vpop.f32.mrb[0].mxu0
        %v2634 = vpop.f32.mrb[0].mxu0
        %v2635 = vadd.f32 0.0, %v2634
        %v2636 = vpop.f32.mrb[0].mxu0
        %2637 = vmatprep.mubr.bf16.mxu0 0
        %2638 = vmatmul.mubr.bf16.gmra.mrb[0].mxu0 %v2510
        %v2639 = vpop.f32.mrb[0].mxu0
        %v2640 = vadd.f32 0.0, %v2639
        %v2641 = vpop.f32.mrb[0].mxu0
        %v2642 = vpop.f32.mrb[0].mxu0
        %v2643 = vadd.f32 0.0, %v2642
        %v2644 = vpop.f32.mrb[0].mxu0
        %2645 = vmatprep.mubr.bf16.mxu0 0
        %2646 = vmatmul.mubr.bf16.gmra.mrb[0].mxu0 %v2513
        %v2647 = vpop.f32.mrb[0].mxu0
        %v2648 = vadd.f32 0.0, %v2647
        %v2649 = vpop.f32.mrb[0].mxu0
        %v2650 = vpop.f32.mrb[0].mxu0
        %v2651 = vadd.f32 0.0, %v2650
        %v2652 = vpop.f32.mrb[0].mxu0
        %2653 = vmatprep.mubr.bf16.mxu0 0
        %2654 = vmatmul.mubr.bf16.gmra.mrb[0].mxu0 %v2516
        %v2655 = vpop.f32.mrb[0].mxu0
        %v2656 = vadd.f32 0.0, %v2655
        %v2657 = vpop.f32.mrb[0].mxu0
        %v2658 = vpop.f32.mrb[0].mxu0
        %v2659 = vadd.f32 0.0, %v2658
        %v2660 = vpop.f32.mrb[0].mxu0
        %2661 = vmatprep.mubr.bf16.mxu0 0
        %2662 = vmatmul.mubr.bf16.gmra.mrb[0].mxu0 %v2519
        %v2663 = vpop.f32.mrb[0].mxu0
        %v2664 = vadd.f32 0.0, %v2663
        %v2665 = vpop.f32.mrb[0].mxu0
        %v2666 = vpop.f32.mrb[0].mxu0
        %v2667 = vadd.f32 0.0, %v2666
        %v2668 = vpop.f32.mrb[0].mxu0
        %2669 = vmatprep.mubr.bf16.mxu0 0
        %2670 = vmatmul.mubr.bf16.gmra.mrb[0].mxu0 %v2522
        %v2671 = vpop.f32.mrb[0].mxu0
        %v2672 = vadd.f32 0.0, %v2671
        %v2673 = vpop.f32.mrb[0].mxu0
        %v2674 = vpop.f32.mrb[0].mxu0
        %v2675 = vadd.f32 0.0, %v2674
        %v2676 = vpop.f32.mrb[0].mxu0
        %2677 = vmatprep.mubr.bf16.mxu0 0
        %2678 = vmatmul.mubr.bf16.gmra.mrb[0].mxu0 %v2525
        %v2679 = vpop.f32.mrb[0].mxu0
        %v2680 = vadd.f32 0.0, %v2679
        %v2681 = vpop.f32.mrb[0].mxu0
        %v2682 = vpop.f32.mrb[0].mxu0
        %v2683 = vadd.f32 0.0, %v2682
        %v2684 = vpop.f32.mrb[0].mxu0
        %2685 = vmatprep.mubr.bf16.mxu0 0
        %2686 = vmatmul.mubr.bf16.gmra.mrb[0].mxu0 %v2528
        %v2687 = vpop.f32.mrb[0].mxu0
        %v2688 = vadd.f32 0.0, %v2687
        %v2689 = vpop.f32.mrb[0].mxu0
        %v2690 = vpop.f32.mrb[0].mxu0
        %v2691 = vadd.f32 0.0, %v2690
        %v2692 = vpop.f32.mrb[0].mxu0
        %2693 = vdwg.mxu0
        %v2694 = vadd.f32 %v1968, %v2568
        %v2695 = vadd.f32 %v1969, %v2571
        %v2696 = vadd.f32 %v1970, %v2576
        %v2697 = vadd.f32 %v1971, %v2579
        %v2698 = vadd.f32 %v1972, %v2584
        %v2699 = vadd.f32 %v1973, %v2587
        %v2700 = vadd.f32 %v1974, %v2592
        %v2701 = vadd.f32 %v1975, %v2595
        %v2702 = vadd.f32 %v1976, %v2600
        %v2703 = vadd.f32 %v1977, %v2603
        %v2704 = vadd.f32 %v1978, %v2608
        %v2705 = vadd.f32 %v1979, %v2611
        %v2706 = vadd.f32 %v1980, %v2616
        %v2707 = vadd.f32 %v1981, %v2619
        %v2708 = vadd.f32 %v1982, %v2624
        %v2709 = vadd.f32 %v1983, %v2627
        %v2710 = vadd.f32 %v1984, %v2632
        %v2711 = vadd.f32 %v1985, %v2635
        %v2712 = vadd.f32 %v1986, %v2640
        %v2713 = vadd.f32 %v1987, %v2643
        %v2714 = vadd.f32 %v1988, %v2648
        %v2715 = vadd.f32 %v1989, %v2651
        %v2716 = vadd.f32 %v1990, %v2656
        %v2717 = vadd.f32 %v1991, %v2659
        %v2718 = vadd.f32 %v1992, %v2664
        %v2719 = vadd.f32 %v1993, %v2667
        %v2720 = vadd.f32 %v1994, %v2672
        %v2721 = vadd.f32 %v1995, %v2675
        %v2722 = vadd.f32 %v1996, %v2680
        %v2723 = vadd.f32 %v1997, %v2683
        %v2724 = vadd.f32 %v1998, %v2688
        %v2725 = vadd.f32 %v1999, %v2691
        %v2726 = vld [vmem:[%s1641] sm:$0xe]
        %v2727 = vld [vmem:[%s1641 + $0xc] sm:$0xe]
        %v2728 = vld [vmem:[%s1641 + $0x18] sm:$0xe]
        %v2729 = vld [vmem:[%s1641 + $0x24] sm:$0xe]
        %v2730 = vld [vmem:[%s1641 + $0x30] sm:$0xe]
        %v2731 = vld [vmem:[%s1641 + $0x3c] sm:$0xe]
        %v2732 = vld [vmem:[%s1641 + $0x48] sm:$0xe]
        %v2733 = vld [vmem:[%s1641 + $0x54] sm:$0xe]
        %v2734 = vld [vmem:[%s1641 + $0x60] sm:$0xe]
        %v2735 = vld [vmem:[%s1641 + $0x6c] sm:$0xe]
        %v2736 = vld [vmem:[%s1641 + $0x78] sm:$0xe]
        %v2737 = vld [vmem:[%s1641 + $0x84] sm:$0xe]
        %v2738 = vld [vmem:[%s1641 + $0x90] sm:$0xe]
        %v2739 = vld [vmem:[%s1641 + $0x9c] sm:$0xe]
        %v2740 = vld [vmem:[%s1641 + $0xa8] sm:$0xe]
        %v2741 = vld [vmem:[%s1641 + $0xb4] sm:$0xe]
        %v2790 = vrot.slane %v2726, 5
        %v2791 = vrot.slane %v2790, 4
        %v2792 = vrot.slane %v2001, 5
        %v2793 = vsel %vm1231, %v2791, %v2792
        %v2794 = vrot.slane %v2792, 4
        %v2795 = vrot.slane %v2002, 5
        %v2796 = vsel %vm1231, %v2794, %v2795
        %v2797 = vrot.slane %v2727, 5
        %v2798 = vrot.slane %v2797, 4
        %v2799 = vrot.slane %v2004, 5
        %v2800 = vsel %vm1231, %v2798, %v2799
        %v2801 = vrot.slane %v2799, 4
        %v2802 = vrot.slane %v2005, 5
        %v2803 = vsel %vm1231, %v2801, %v2802
        %v2804 = vrot.slane %v2728, 5
        %v2805 = vrot.slane %v2804, 4
        %v2806 = vrot.slane %v2007, 5
        %v2807 = vsel %vm1231, %v2805, %v2806
        %v2808 = vrot.slane %v2806, 4
        %v2809 = vrot.slane %v2008, 5
        %v2810 = vsel %vm1231, %v2808, %v2809
        %v2811 = vrot.slane %v2729, 5
        %v2812 = vrot.slane %v2811, 4
        %v2813 = vrot.slane %v2010, 5
        %v2814 = vsel %vm1231, %v2812, %v2813
        %v2815 = vrot.slane %v2813, 4
        %v2816 = vrot.slane %v2011, 5
        %v2817 = vsel %vm1231, %v2815, %v2816
        %v2818 = vrot.slane %v2730, 5
        %v2819 = vrot.slane %v2818, 4
        %v2820 = vrot.slane %v2013, 5
        %v2821 = vsel %vm1231, %v2819, %v2820
        %v2822 = vrot.slane %v2820, 4
        %v2823 = vrot.slane %v2014, 5
        %v2824 = vsel %vm1231, %v2822, %v2823
        %v2825 = vrot.slane %v2731, 5
        %v2826 = vrot.slane %v2825, 4
        %v2827 = vrot.slane %v2016, 5
        %v2828 = vsel %vm1231, %v2826, %v2827
        %v2829 = vrot.slane %v2827, 4
        %v2830 = vrot.slane %v2017, 5
        %v2831 = vsel %vm1231, %v2829, %v2830
        %v2832 = vrot.slane %v2732, 5
        %v2833 = vrot.slane %v2832, 4
        %v2834 = vrot.slane %v2019, 5
        %v2835 = vsel %vm1231, %v2833, %v2834
        %v2836 = vrot.slane %v2834, 4
        %v2837 = vrot.slane %v2020, 5
        %v2838 = vsel %vm1231, %v2836, %v2837
        %v2839 = vrot.slane %v2733, 5
        %v2840 = vrot.slane %v2839, 4
        %v2841 = vrot.slane %v2022, 5
        %v2842 = vsel %vm1231, %v2840, %v2841
        %v2843 = vrot.slane %v2841, 4
        %v2844 = vrot.slane %v2023, 5
        %v2845 = vsel %vm1231, %v2843, %v2844
        %v2846 = vrot.slane %v2734, 5
        %v2847 = vrot.slane %v2846, 4
        %v2848 = vrot.slane %v2025, 5
        %v2849 = vsel %vm1231, %v2847, %v2848
        %v2850 = vrot.slane %v2848, 4
        %v2851 = vrot.slane %v2026, 5
        %v2852 = vsel %vm1231, %v2850, %v2851
        %v2853 = vrot.slane %v2735, 5
        %v2854 = vrot.slane %v2853, 4
        %v2855 = vrot.slane %v2028, 5
        %v2856 = vsel %vm1231, %v2854, %v2855
        %v2857 = vrot.slane %v2855, 4
        %v2858 = vrot.slane %v2029, 5
        %v2859 = vsel %vm1231, %v2857, %v2858
        %v2860 = vrot.slane %v2736, 5
        %v2861 = vrot.slane %v2860, 4
        %v2862 = vrot.slane %v2031, 5
        %v2863 = vsel %vm1231, %v2861, %v2862
        %v2864 = vrot.slane %v2862, 4
        %v2865 = vrot.slane %v2032, 5
        %v2866 = vsel %vm1231, %v2864, %v2865
        %v2867 = vrot.slane %v2737, 5
        %v2868 = vrot.slane %v2867, 4
        %v2869 = vrot.slane %v2034, 5
        %v2870 = vsel %vm1231, %v2868, %v2869
        %v2871 = vrot.slane %v2869, 4
        %v2872 = vrot.slane %v2035, 5
        %v2873 = vsel %vm1231, %v2871, %v2872
        %v2874 = vrot.slane %v2738, 5
        %v2875 = vrot.slane %v2874, 4
        %v2876 = vrot.slane %v2037, 5
        %v2877 = vsel %vm1231, %v2875, %v2876
        %v2878 = vrot.slane %v2876, 4
        %v2879 = vrot.slane %v2038, 5
        %v2880 = vsel %vm1231, %v2878, %v2879
        %v2881 = vrot.slane %v2739, 5
        %v2882 = vrot.slane %v2881, 4
        %v2883 = vrot.slane %v2040, 5
        %v2884 = vsel %vm1231, %v2882, %v2883
        %v2885 = vrot.slane %v2883, 4
        %v2886 = vrot.slane %v2041, 5
        %v2887 = vsel %vm1231, %v2885, %v2886
        %v2888 = vrot.slane %v2740, 5
        %v2889 = vrot.slane %v2888, 4
        %v2890 = vrot.slane %v2043, 5
        %v2891 = vsel %vm1231, %v2889, %v2890
        %v2892 = vrot.slane %v2890, 4
        %v2893 = vrot.slane %v2044, 5
        %v2894 = vsel %vm1231, %v2892, %v2893
        %v2895 = vrot.slane %v2741, 5
        %v2896 = vrot.slane %v2895, 4
        %v2897 = vrot.slane %v2046, 5
        %v2898 = vsel %vm1231, %v2896, %v2897
        %v2899 = vrot.slane %v2897, 4
        %v2900 = vrot.slane %v2047, 5
        %v2901 = vsel %vm1231, %v2899, %v2900
        %s2902 = scalar_lea.vmem %s1, 10
        %v2903 = vld [vmem:[%s2902] sm:$0x3]
        %v2904 = vunpack.c.l.b16 %v2793
        %v2905 = vunpack.c.l.b16 %v2796
        %v2906 = vunpack.c.l.b16 %v2800
        %v2907 = vunpack.c.l.b16 %v2803
        %v2908 = vunpack.c.l.b16 %v2807
        %v2909 = vunpack.c.l.b16 %v2810
        %v2910 = vunpack.c.l.b16 %v2814
        %v2911 = vunpack.c.l.b16 %v2817
        %v2912 = vunpack.c.l.b16 %v2821
        %v2913 = vunpack.c.l.b16 %v2824
        %v2914 = vunpack.c.l.b16 %v2828
        %v2915 = vunpack.c.l.b16 %v2831
        %v2916 = vunpack.c.l.b16 %v2835
        %v2917 = vunpack.c.l.b16 %v2838
        %v2918 = vunpack.c.l.b16 %v2842
        %v2919 = vunpack.c.l.b16 %v2845
        %v2920 = vunpack.c.l.b16 %v2849
        %v2921 = vunpack.c.l.b16 %v2852
        %v2922 = vunpack.c.l.b16 %v2856
        %v2923 = vunpack.c.l.b16 %v2859
        %v2924 = vunpack.c.l.b16 %v2863
        %v2925 = vunpack.c.l.b16 %v2866
        %v2926 = vunpack.c.l.b16 %v2870
        %v2927 = vunpack.c.l.b16 %v2873
        %v2928 = vunpack.c.l.b16 %v2877
        %v2929 = vunpack.c.l.b16 %v2880
        %v2930 = vunpack.c.l.b16 %v2884
        %v2931 = vunpack.c.l.b16 %v2887
        %v2932 = vunpack.c.l.b16 %v2891
        %v2933 = vunpack.c.l.b16 %v2894
        %v2934 = vunpack.c.l.b16 %v2898
        %v2935 = vunpack.c.l.b16 %v2901
        %v2936 = vpack.c.b16 %v2905, %v2904
        %v2937 = vpack.c.b16 %v2907, %v2906
        %v2938 = vpack.c.b16 %v2909, %v2908
        %v2939 = vpack.c.b16 %v2911, %v2910
        %v2940 = vpack.c.b16 %v2913, %v2912
        %v2941 = vpack.c.b16 %v2915, %v2914
        %v2942 = vpack.c.b16 %v2917, %v2916
        %v2943 = vpack.c.b16 %v2919, %v2918
        %v2944 = vpack.c.b16 %v2921, %v2920
        %v2945 = vpack.c.b16 %v2923, %v2922
        %v2946 = vpack.c.b16 %v2925, %v2924
        %v2947 = vpack.c.b16 %v2927, %v2926
        %v2948 = vpack.c.b16 %v2929, %v2928
        %v2949 = vpack.c.b16 %v2931, %v2930
        %v2950 = vpack.c.b16 %v2933, %v2932
        %v2951 = vpack.c.b16 %v2935, %v2934
        %v2953 = vsel %vm675, %v2936, 0
        %v2956 = vsel %vm675, %v2937, 0
        %v2959 = vsel %vm675, %v2938, 0
        %v2962 = vsel %vm675, %v2939, 0
        %v2965 = vsel %vm675, %v2940, 0
        %v2968 = vsel %vm675, %v2941, 0
        %v2971 = vsel %vm675, %v2942, 0
        %v2974 = vsel %vm675, %v2943, 0
        %v2977 = vsel %vm675, %v2944, 0
        %v2980 = vsel %vm675, %v2945, 0
        %v2983 = vsel %vm675, %v2946, 0
        %v2986 = vsel %vm675, %v2947, 0
        %v2989 = vsel %vm675, %v2948, 0
        %v2992 = vsel %vm675, %v2949, 0
        %v2995 = vsel %vm675, %v2950, 0
        %v2998 = vsel %vm675, %v2951, 0
        %v3001 = vsel %vm724, %v2903, 0
        %3003 = vmatprep.subr.bf16.mxu0 0
        %3004 = vmatpush1.bf16.msra.mxu0 %v3001
        %3005 = vmatprep.subr.bf16.mxu0 0
        %3006 = vmatpush1.bf16.msra.mxu0 0
        %3007 = vmatprep.subr.bf16.mxu0 0
        %3008 = vmatpush1.bf16.msra.mxu0 0
        %3009 = vmatprep.subr.bf16.mxu0 0
        %3010 = vmatpush1.bf16.msra.mxu0 0
        %3011 = vmatprep.subr.bf16.mxu0 0
        %3012 = vmatpush1.bf16.msra.mxu0 0
        %3013 = vmatprep.subr.bf16.mxu0 0
        %3014 = vmatpush1.bf16.msra.mxu0 0
        %3015 = vmatprep.subr.bf16.mxu0 0
        %3016 = vmatpush1.bf16.msra.mxu0 0
        %3017 = vmatprep.subr.bf16.mxu0 0
        %3018 = vmatpush1.bf16.msra.mxu0 0
        %3019 = vmatprep.subr.bf16.mxu0 0
        %3020 = vmatpush1.bf16.msra.mxu0 0
        %3021 = vmatprep.subr.bf16.mxu0 0
        %3022 = vmatpush1.bf16.msra.mxu0 0
        %3023 = vmatprep.subr.bf16.mxu0 0
        %3024 = vmatpush1.bf16.msra.mxu0 0
        %3025 = vmatprep.subr.bf16.mxu0 0
        %3026 = vmatpush1.bf16.msra.mxu0 0
        %3027 = vmatprep.subr.bf16.mxu0 0
        %3028 = vmatpush1.bf16.msra.mxu0 0
        %3029 = vmatprep.subr.bf16.mxu0 0
        %3030 = vmatpush1.bf16.msra.mxu0 0
        %3031 = vmatprep.subr.bf16.mxu0 0
        %3032 = vmatpush1.bf16.msra.mxu0 0
        %3033 = vmatprep.subr.bf16.mxu0 0
        %3034 = vmatpush1.bf16.msra.mxu0 0
        %3035 = vmatprep.mubr.bf16.mxu0 0
        %3036 = vmatmul.mubr.bf16.gmra.mrb[0].mxu0 %v2953
        %v3037 = vpop.f32.mrb[0].mxu0
        %v3038 = vadd.f32 0.0, %v3037
        %v3039 = vpop.f32.mrb[0].mxu0
        %v3040 = vpop.f32.mrb[0].mxu0
        %v3041 = vadd.f32 0.0, %v3040
        %v3042 = vpop.f32.mrb[0].mxu0
        %3043 = vmatprep.mubr.bf16.mxu0 0
        %3044 = vmatmul.mubr.bf16.gmra.mrb[0].mxu0 %v2956
        %v3045 = vpop.f32.mrb[0].mxu0
        %v3046 = vadd.f32 0.0, %v3045
        %v3047 = vpop.f32.mrb[0].mxu0
        %v3048 = vpop.f32.mrb[0].mxu0
        %v3049 = vadd.f32 0.0, %v3048
        %v3050 = vpop.f32.mrb[0].mxu0
        %3051 = vmatprep.mubr.bf16.mxu0 0
        %3052 = vmatmul.mubr.bf16.gmra.mrb[0].mxu0 %v2959
        %v3053 = vpop.f32.mrb[0].mxu0
        %v3054 = vadd.f32 0.0, %v3053
        %v3055 = vpop.f32.mrb[0].mxu0
        %v3056 = vpop.f32.mrb[0].mxu0
        %v3057 = vadd.f32 0.0, %v3056
        %v3058 = vpop.f32.mrb[0].mxu0
        %3059 = vmatprep.mubr.bf16.mxu0 0
        %3060 = vmatmul.mubr.bf16.gmra.mrb[0].mxu0 %v2962
        %v3061 = vpop.f32.mrb[0].mxu0
        %v3062 = vadd.f32 0.0, %v3061
        %v3063 = vpop.f32.mrb[0].mxu0
        %v3064 = vpop.f32.mrb[0].mxu0
        %v3065 = vadd.f32 0.0, %v3064
        %v3066 = vpop.f32.mrb[0].mxu0
        %3067 = vmatprep.mubr.bf16.mxu0 0
        %3068 = vmatmul.mubr.bf16.gmra.mrb[0].mxu0 %v2965
        %v3069 = vpop.f32.mrb[0].mxu0
        %v3070 = vadd.f32 0.0, %v3069
        %v3071 = vpop.f32.mrb[0].mxu0
        %v3072 = vpop.f32.mrb[0].mxu0
        %v3073 = vadd.f32 0.0, %v3072
        %v3074 = vpop.f32.mrb[0].mxu0
        %3075 = vmatprep.mubr.bf16.mxu0 0
        %3076 = vmatmul.mubr.bf16.gmra.mrb[0].mxu0 %v2968
        %v3077 = vpop.f32.mrb[0].mxu0
        %v3078 = vadd.f32 0.0, %v3077
        %v3079 = vpop.f32.mrb[0].mxu0
        %v3080 = vpop.f32.mrb[0].mxu0
        %v3081 = vadd.f32 0.0, %v3080
        %v3082 = vpop.f32.mrb[0].mxu0
        %3083 = vmatprep.mubr.bf16.mxu0 0
        %3084 = vmatmul.mubr.bf16.gmra.mrb[0].mxu0 %v2971
        %v3085 = vpop.f32.mrb[0].mxu0
        %v3086 = vadd.f32 0.0, %v3085
        %v3087 = vpop.f32.mrb[0].mxu0
        %v3088 = vpop.f32.mrb[0].mxu0
        %v3089 = vadd.f32 0.0, %v3088
        %v3090 = vpop.f32.mrb[0].mxu0
        %3091 = vmatprep.mubr.bf16.mxu0 0
        %3092 = vmatmul.mubr.bf16.gmra.mrb[0].mxu0 %v2974
        %v3093 = vpop.f32.mrb[0].mxu0
        %v3094 = vadd.f32 0.0, %v3093
        %v3095 = vpop.f32.mrb[0].mxu0
        %v3096 = vpop.f32.mrb[0].mxu0
        %v3097 = vadd.f32 0.0, %v3096
        %v3098 = vpop.f32.mrb[0].mxu0
        %3099 = vmatprep.mubr.bf16.mxu0 0
        %3100 = vmatmul.mubr.bf16.gmra.mrb[0].mxu0 %v2977
        %v3101 = vpop.f32.mrb[0].mxu0
        %v3102 = vadd.f32 0.0, %v3101
        %v3103 = vpop.f32.mrb[0].mxu0
        %v3104 = vpop.f32.mrb[0].mxu0
        %v3105 = vadd.f32 0.0, %v3104
        %v3106 = vpop.f32.mrb[0].mxu0
        %3107 = vmatprep.mubr.bf16.mxu0 0
        %3108 = vmatmul.mubr.bf16.gmra.mrb[0].mxu0 %v2980
        %v3109 = vpop.f32.mrb[0].mxu0
        %v3110 = vadd.f32 0.0, %v3109
        %v3111 = vpop.f32.mrb[0].mxu0
        %v3112 = vpop.f32.mrb[0].mxu0
        %v3113 = vadd.f32 0.0, %v3112
        %v3114 = vpop.f32.mrb[0].mxu0
        %3115 = vmatprep.mubr.bf16.mxu0 0
        %3116 = vmatmul.mubr.bf16.gmra.mrb[0].mxu0 %v2983
        %v3117 = vpop.f32.mrb[0].mxu0
        %v3118 = vadd.f32 0.0, %v3117
        %v3119 = vpop.f32.mrb[0].mxu0
        %v3120 = vpop.f32.mrb[0].mxu0
        %v3121 = vadd.f32 0.0, %v3120
        %v3122 = vpop.f32.mrb[0].mxu0
        %3123 = vmatprep.mubr.bf16.mxu0 0
        %3124 = vmatmul.mubr.bf16.gmra.mrb[0].mxu0 %v2986
        %v3125 = vpop.f32.mrb[0].mxu0
        %v3126 = vadd.f32 0.0, %v3125
        %v3127 = vpop.f32.mrb[0].mxu0
        %v3128 = vpop.f32.mrb[0].mxu0
        %v3129 = vadd.f32 0.0, %v3128
        %v3130 = vpop.f32.mrb[0].mxu0
        %3131 = vmatprep.mubr.bf16.mxu0 0
        %3132 = vmatmul.mubr.bf16.gmra.mrb[0].mxu0 %v2989
        %v3133 = vpop.f32.mrb[0].mxu0
        %v3134 = vadd.f32 0.0, %v3133
        %v3135 = vpop.f32.mrb[0].mxu0
        %v3136 = vpop.f32.mrb[0].mxu0
        %v3137 = vadd.f32 0.0, %v3136
        %v3138 = vpop.f32.mrb[0].mxu0
        %3139 = vmatprep.mubr.bf16.mxu0 0
        %3140 = vmatmul.mubr.bf16.gmra.mrb[0].mxu0 %v2992
        %v3141 = vpop.f32.mrb[0].mxu0
        %v3142 = vadd.f32 0.0, %v3141
        %v3143 = vpop.f32.mrb[0].mxu0
        %v3144 = vpop.f32.mrb[0].mxu0
        %v3145 = vadd.f32 0.0, %v3144
        %v3146 = vpop.f32.mrb[0].mxu0
        %3147 = vmatprep.mubr.bf16.mxu0 0
        %3148 = vmatmul.mubr.bf16.gmra.mrb[0].mxu0 %v2995
        %v3149 = vpop.f32.mrb[0].mxu0
        %v3150 = vadd.f32 0.0, %v3149
        %v3151 = vpop.f32.mrb[0].mxu0
        %v3152 = vpop.f32.mrb[0].mxu0
        %v3153 = vadd.f32 0.0, %v3152
        %v3154 = vpop.f32.mrb[0].mxu0
        %3155 = vmatprep.mubr.bf16.mxu0 0
        %3156 = vmatmul.mubr.bf16.gmra.mrb[0].mxu0 %v2998
        %v3157 = vpop.f32.mrb[0].mxu0
        %v3158 = vadd.f32 0.0, %v3157
        %v3159 = vpop.f32.mrb[0].mxu0
        %v3160 = vpop.f32.mrb[0].mxu0
        %v3161 = vadd.f32 0.0, %v3160
        %v3162 = vpop.f32.mrb[0].mxu0
        %3163 = vdwg.mxu0
        %v3164 = vadd.f32 %v2694, %v3038
        %v3165 = vadd.f32 %v2695, %v3041
        %v3166 = vadd.f32 %v2696, %v3046
        %v3167 = vadd.f32 %v2697, %v3049
        %v3168 = vadd.f32 %v2698, %v3054
        %v3169 = vadd.f32 %v2699, %v3057
        %v3170 = vadd.f32 %v2700, %v3062
        %v3171 = vadd.f32 %v2701, %v3065
        %v3172 = vadd.f32 %v2702, %v3070
        %v3173 = vadd.f32 %v2703, %v3073
        %v3174 = vadd.f32 %v2704, %v3078
        %v3175 = vadd.f32 %v2705, %v3081
        %v3176 = vadd.f32 %v2706, %v3086
        %v3177 = vadd.f32 %v2707, %v3089
        %v3178 = vadd.f32 %v2708, %v3094
        %v3179 = vadd.f32 %v2709, %v3097
        %v3180 = vadd.f32 %v2710, %v3102
        %v3181 = vadd.f32 %v2711, %v3105
        %v3182 = vadd.f32 %v2712, %v3110
        %v3183 = vadd.f32 %v2713, %v3113
        %v3184 = vadd.f32 %v2714, %v3118
        %v3185 = vadd.f32 %v2715, %v3121
        %v3186 = vadd.f32 %v2716, %v3126
        %v3187 = vadd.f32 %v2717, %v3129
        %v3188 = vadd.f32 %v2718, %v3134
        %v3189 = vadd.f32 %v2719, %v3137
        %v3190 = vadd.f32 %v2720, %v3142
        %v3191 = vadd.f32 %v2721, %v3145
        %v3192 = vadd.f32 %v2722, %v3150
        %v3193 = vadd.f32 %v2723, %v3153
        %v3194 = vadd.f32 %v2724, %v3158
        %v3195 = vadd.f32 %v2725, %v3161
        %s3196 = sadd.s32 %s185, 2
        %s3197 = smul.u32 %s3196, 3
        %s3198 = smul.addr %s3197, 4
        %s3199 = scalar_lea.vmem %s182, %s3198
        %v3200 = vld [vmem:[%s3199] sm:$0xf]
        %v3201 = vld [vmem:[%s3199 + $0x4] sm:$0xf]
        %v3202 = vld [vmem:[%s3199 + $0xc] sm:$0xf]
        %v3203 = vld [vmem:[%s3199 + $0x10] sm:$0xf]
        %v3204 = vld [vmem:[%s3199 + $0x18] sm:$0xf]
        %v3205 = vld [vmem:[%s3199 + $0x1c] sm:$0xf]
        %v3206 = vld [vmem:[%s3199 + $0x24] sm:$0xf]
        %v3207 = vld [vmem:[%s3199 + $0x28] sm:$0xf]
        %v3208 = vld [vmem:[%s3199 + $0x30] sm:$0xf]
        %v3209 = vld [vmem:[%s3199 + $0x34] sm:$0xf]
        %v3210 = vld [vmem:[%s3199 + $0x3c] sm:$0xf]
        %v3211 = vld [vmem:[%s3199 + $0x40] sm:$0xf]
        %v3212 = vld [vmem:[%s3199 + $0x48] sm:$0xf]
        %v3213 = vld [vmem:[%s3199 + $0x4c] sm:$0xf]
        %v3214 = vld [vmem:[%s3199 + $0x54] sm:$0xf]
        %v3215 = vld [vmem:[%s3199 + $0x58] sm:$0xf]
        %v3216 = vld [vmem:[%s3199 + $0x60] sm:$0xf]
        %v3217 = vld [vmem:[%s3199 + $0x64] sm:$0xf]
        %v3218 = vld [vmem:[%s3199 + $0x6c] sm:$0xf]
        %v3219 = vld [vmem:[%s3199 + $0x70] sm:$0xf]
        %v3220 = vld [vmem:[%s3199 + $0x78] sm:$0xf]
        %v3221 = vld [vmem:[%s3199 + $0x7c] sm:$0xf]
        %v3222 = vld [vmem:[%s3199 + $0x84] sm:$0xf]
        %v3223 = vld [vmem:[%s3199 + $0x88] sm:$0xf]
        %v3224 = vld [vmem:[%s3199 + $0x90] sm:$0xf]
        %v3225 = vld [vmem:[%s3199 + $0x94] sm:$0xf]
        %v3226 = vld [vmem:[%s3199 + $0x9c] sm:$0xf]
        %v3227 = vld [vmem:[%s3199 + $0xa0] sm:$0xf]
        %v3228 = vld [vmem:[%s3199 + $0xa8] sm:$0xf]
        %v3229 = vld [vmem:[%s3199 + $0xac] sm:$0xf]
        %v3230 = vld [vmem:[%s3199 + $0xb4] sm:$0xf]
        %v3231 = vld [vmem:[%s3199 + $0xb8] sm:$0xf]
        %s3232 = scalar_lea.vmem %s1, 12
        %v3233 = vld [vmem:[%s3232] sm:$0x3]
        %v3266 = vunpack.c.l.b16 %v3200
        %v3267 = vunpack.c.l.b16 %v3201
        %v3268 = vunpack.c.l.b16 %v3202
        %v3269 = vunpack.c.l.b16 %v3203
        %v3270 = vunpack.c.l.b16 %v3204
        %v3271 = vunpack.c.l.b16 %v3205
        %v3272 = vunpack.c.l.b16 %v3206
        %v3273 = vunpack.c.l.b16 %v3207
        %v3274 = vunpack.c.l.b16 %v3208
        %v3275 = vunpack.c.l.b16 %v3209
        %v3276 = vunpack.c.l.b16 %v3210
        %v3277 = vunpack.c.l.b16 %v3211
        %v3278 = vunpack.c.l.b16 %v3212
        %v3279 = vunpack.c.l.b16 %v3213
        %v3280 = vunpack.c.l.b16 %v3214
        %v3281 = vunpack.c.l.b16 %v3215
        %v3282 = vunpack.c.l.b16 %v3216
        %v3283 = vunpack.c.l.b16 %v3217
        %v3284 = vunpack.c.l.b16 %v3218
        %v3285 = vunpack.c.l.b16 %v3219
        %v3286 = vunpack.c.l.b16 %v3220
        %v3287 = vunpack.c.l.b16 %v3221
        %v3288 = vunpack.c.l.b16 %v3222
        %v3289 = vunpack.c.l.b16 %v3223
        %v3290 = vunpack.c.l.b16 %v3224
        %v3291 = vunpack.c.l.b16 %v3225
        %v3292 = vunpack.c.l.b16 %v3226
        %v3293 = vunpack.c.l.b16 %v3227
        %v3294 = vunpack.c.l.b16 %v3228
        %v3295 = vunpack.c.l.b16 %v3229
        %v3296 = vunpack.c.l.b16 %v3230
        %v3297 = vunpack.c.l.b16 %v3231
        %v3298 = vpack.c.b16 %v3267, %v3266
        %v3299 = vpack.c.b16 %v3269, %v3268
        %v3300 = vpack.c.b16 %v3271, %v3270
        %v3301 = vpack.c.b16 %v3273, %v3272
        %v3302 = vpack.c.b16 %v3275, %v3274
        %v3303 = vpack.c.b16 %v3277, %v3276
        %v3304 = vpack.c.b16 %v3279, %v3278
        %v3305 = vpack.c.b16 %v3281, %v3280
        %v3306 = vpack.c.b16 %v3283, %v3282
        %v3307 = vpack.c.b16 %v3285, %v3284
        %v3308 = vpack.c.b16 %v3287, %v3286
        %v3309 = vpack.c.b16 %v3289, %v3288
        %v3310 = vpack.c.b16 %v3291, %v3290
        %v3311 = vpack.c.b16 %v3293, %v3292
        %v3312 = vpack.c.b16 %v3295, %v3294
        %v3313 = vpack.c.b16 %v3297, %v3296
        %v3315 = vsel %vm675, %v3298, 0
        %v3318 = vsel %vm675, %v3299, 0
        %v3321 = vsel %vm675, %v3300, 0
        %v3324 = vsel %vm675, %v3301, 0
        %v3327 = vsel %vm675, %v3302, 0
        %v3330 = vsel %vm675, %v3303, 0
        %v3333 = vsel %vm675, %v3304, 0
        %v3336 = vsel %vm675, %v3305, 0
        %v3339 = vsel %vm675, %v3306, 0
        %v3342 = vsel %vm675, %v3307, 0
        %v3345 = vsel %vm675, %v3308, 0
        %v3348 = vsel %vm675, %v3309, 0
        %v3351 = vsel %vm675, %v3310, 0
        %v3354 = vsel %vm675, %v3311, 0
        %v3357 = vsel %vm675, %v3312, 0
        %v3360 = vsel %vm675, %v3313, 0
        %v3363 = vsel %vm724, %v3233, 0
        %3365 = vmatprep.subr.bf16.mxu0 0
        %3366 = vmatpush1.bf16.msra.mxu0 %v3363
        %3367 = vmatprep.subr.bf16.mxu0 0
        %3368 = vmatpush1.bf16.msra.mxu0 0
        %3369 = vmatprep.subr.bf16.mxu0 0
        %3370 = vmatpush1.bf16.msra.mxu0 0
        %3371 = vmatprep.subr.bf16.mxu0 0
        %3372 = vmatpush1.bf16.msra.mxu0 0
        %3373 = vmatprep.subr.bf16.mxu0 0
        %3374 = vmatpush1.bf16.msra.mxu0 0
        %3375 = vmatprep.subr.bf16.mxu0 0
        %3376 = vmatpush1.bf16.msra.mxu0 0
        %3377 = vmatprep.subr.bf16.mxu0 0
        %3378 = vmatpush1.bf16.msra.mxu0 0
        %3379 = vmatprep.subr.bf16.mxu0 0
        %3380 = vmatpush1.bf16.msra.mxu0 0
        %3381 = vmatprep.subr.bf16.mxu0 0
        %3382 = vmatpush1.bf16.msra.mxu0 0
        %3383 = vmatprep.subr.bf16.mxu0 0
        %3384 = vmatpush1.bf16.msra.mxu0 0
        %3385 = vmatprep.subr.bf16.mxu0 0
        %3386 = vmatpush1.bf16.msra.mxu0 0
        %3387 = vmatprep.subr.bf16.mxu0 0
        %3388 = vmatpush1.bf16.msra.mxu0 0
        %3389 = vmatprep.subr.bf16.mxu0 0
        %3390 = vmatpush1.bf16.msra.mxu0 0
        %3391 = vmatprep.subr.bf16.mxu0 0
        %3392 = vmatpush1.bf16.msra.mxu0 0
        %3393 = vmatprep.subr.bf16.mxu0 0
        %3394 = vmatpush1.bf16.msra.mxu0 0
        %3395 = vmatprep.subr.bf16.mxu0 0
        %3396 = vmatpush1.bf16.msra.mxu0 0
        %3397 = vmatprep.mubr.bf16.mxu0 0
        %3398 = vmatmul.mubr.bf16.gmra.mrb[0].mxu0 %v3315
        %v3399 = vpop.f32.mrb[0].mxu0
        %v3400 = vadd.f32 0.0, %v3399
        %v3401 = vpop.f32.mrb[0].mxu0
        %v3402 = vpop.f32.mrb[0].mxu0
        %v3403 = vadd.f32 0.0, %v3402
        %v3404 = vpop.f32.mrb[0].mxu0
        %3405 = vmatprep.mubr.bf16.mxu0 0
        %3406 = vmatmul.mubr.bf16.gmra.mrb[0].mxu0 %v3318
        %v3407 = vpop.f32.mrb[0].mxu0
        %v3408 = vadd.f32 0.0, %v3407
        %v3409 = vpop.f32.mrb[0].mxu0
        %v3410 = vpop.f32.mrb[0].mxu0
        %v3411 = vadd.f32 0.0, %v3410
        %v3412 = vpop.f32.mrb[0].mxu0
        %3413 = vmatprep.mubr.bf16.mxu0 0
        %3414 = vmatmul.mubr.bf16.gmra.mrb[0].mxu0 %v3321
        %v3415 = vpop.f32.mrb[0].mxu0
        %v3416 = vadd.f32 0.0, %v3415
        %v3417 = vpop.f32.mrb[0].mxu0
        %v3418 = vpop.f32.mrb[0].mxu0
        %v3419 = vadd.f32 0.0, %v3418
        %v3420 = vpop.f32.mrb[0].mxu0
        %3421 = vmatprep.mubr.bf16.mxu0 0
        %3422 = vmatmul.mubr.bf16.gmra.mrb[0].mxu0 %v3324
        %v3423 = vpop.f32.mrb[0].mxu0
        %v3424 = vadd.f32 0.0, %v3423
        %v3425 = vpop.f32.mrb[0].mxu0
        %v3426 = vpop.f32.mrb[0].mxu0
        %v3427 = vadd.f32 0.0, %v3426
        %v3428 = vpop.f32.mrb[0].mxu0
        %3429 = vmatprep.mubr.bf16.mxu0 0
        %3430 = vmatmul.mubr.bf16.gmra.mrb[0].mxu0 %v3327
        %v3431 = vpop.f32.mrb[0].mxu0
        %v3432 = vadd.f32 0.0, %v3431
        %v3433 = vpop.f32.mrb[0].mxu0
        %v3434 = vpop.f32.mrb[0].mxu0
        %v3435 = vadd.f32 0.0, %v3434
        %v3436 = vpop.f32.mrb[0].mxu0
        %3437 = vmatprep.mubr.bf16.mxu0 0
        %3438 = vmatmul.mubr.bf16.gmra.mrb[0].mxu0 %v3330
        %v3439 = vpop.f32.mrb[0].mxu0
        %v3440 = vadd.f32 0.0, %v3439
        %v3441 = vpop.f32.mrb[0].mxu0
        %v3442 = vpop.f32.mrb[0].mxu0
        %v3443 = vadd.f32 0.0, %v3442
        %v3444 = vpop.f32.mrb[0].mxu0
        %3445 = vmatprep.mubr.bf16.mxu0 0
        %3446 = vmatmul.mubr.bf16.gmra.mrb[0].mxu0 %v3333
        %v3447 = vpop.f32.mrb[0].mxu0
        %v3448 = vadd.f32 0.0, %v3447
        %v3449 = vpop.f32.mrb[0].mxu0
        %v3450 = vpop.f32.mrb[0].mxu0
        %v3451 = vadd.f32 0.0, %v3450
        %v3452 = vpop.f32.mrb[0].mxu0
        %3453 = vmatprep.mubr.bf16.mxu0 0
        %3454 = vmatmul.mubr.bf16.gmra.mrb[0].mxu0 %v3336
        %v3455 = vpop.f32.mrb[0].mxu0
        %v3456 = vadd.f32 0.0, %v3455
        %v3457 = vpop.f32.mrb[0].mxu0
        %v3458 = vpop.f32.mrb[0].mxu0
        %v3459 = vadd.f32 0.0, %v3458
        %v3460 = vpop.f32.mrb[0].mxu0
        %3461 = vmatprep.mubr.bf16.mxu0 0
        %3462 = vmatmul.mubr.bf16.gmra.mrb[0].mxu0 %v3339
        %v3463 = vpop.f32.mrb[0].mxu0
        %v3464 = vadd.f32 0.0, %v3463
        %v3465 = vpop.f32.mrb[0].mxu0
        %v3466 = vpop.f32.mrb[0].mxu0
        %v3467 = vadd.f32 0.0, %v3466
        %v3468 = vpop.f32.mrb[0].mxu0
        %3469 = vmatprep.mubr.bf16.mxu0 0
        %3470 = vmatmul.mubr.bf16.gmra.mrb[0].mxu0 %v3342
        %v3471 = vpop.f32.mrb[0].mxu0
        %v3472 = vadd.f32 0.0, %v3471
        %v3473 = vpop.f32.mrb[0].mxu0
        %v3474 = vpop.f32.mrb[0].mxu0
        %v3475 = vadd.f32 0.0, %v3474
        %v3476 = vpop.f32.mrb[0].mxu0
        %3477 = vmatprep.mubr.bf16.mxu0 0
        %3478 = vmatmul.mubr.bf16.gmra.mrb[0].mxu0 %v3345
        %v3479 = vpop.f32.mrb[0].mxu0
        %v3480 = vadd.f32 0.0, %v3479
        %v3481 = vpop.f32.mrb[0].mxu0
        %v3482 = vpop.f32.mrb[0].mxu0
        %v3483 = vadd.f32 0.0, %v3482
        %v3484 = vpop.f32.mrb[0].mxu0
        %3485 = vmatprep.mubr.bf16.mxu0 0
        %3486 = vmatmul.mubr.bf16.gmra.mrb[0].mxu0 %v3348
        %v3487 = vpop.f32.mrb[0].mxu0
        %v3488 = vadd.f32 0.0, %v3487
        %v3489 = vpop.f32.mrb[0].mxu0
        %v3490 = vpop.f32.mrb[0].mxu0
        %v3491 = vadd.f32 0.0, %v3490
        %v3492 = vpop.f32.mrb[0].mxu0
        %3493 = vmatprep.mubr.bf16.mxu0 0
        %3494 = vmatmul.mubr.bf16.gmra.mrb[0].mxu0 %v3351
        %v3495 = vpop.f32.mrb[0].mxu0
        %v3496 = vadd.f32 0.0, %v3495
        %v3497 = vpop.f32.mrb[0].mxu0
        %v3498 = vpop.f32.mrb[0].mxu0
        %v3499 = vadd.f32 0.0, %v3498
        %v3500 = vpop.f32.mrb[0].mxu0
        %3501 = vmatprep.mubr.bf16.mxu0 0
        %3502 = vmatmul.mubr.bf16.gmra.mrb[0].mxu0 %v3354
        %v3503 = vpop.f32.mrb[0].mxu0
        %v3504 = vadd.f32 0.0, %v3503
        %v3505 = vpop.f32.mrb[0].mxu0
        %v3506 = vpop.f32.mrb[0].mxu0
        %v3507 = vadd.f32 0.0, %v3506
        %v3508 = vpop.f32.mrb[0].mxu0
        %3509 = vmatprep.mubr.bf16.mxu0 0
        %3510 = vmatmul.mubr.bf16.gmra.mrb[0].mxu0 %v3357
        %v3511 = vpop.f32.mrb[0].mxu0
        %v3512 = vadd.f32 0.0, %v3511
        %v3513 = vpop.f32.mrb[0].mxu0
        %v3514 = vpop.f32.mrb[0].mxu0
        %v3515 = vadd.f32 0.0, %v3514
        %v3516 = vpop.f32.mrb[0].mxu0
        %3517 = vmatprep.mubr.bf16.mxu0 0
        %3518 = vmatmul.mubr.bf16.gmra.mrb[0].mxu0 %v3360
        %v3519 = vpop.f32.mrb[0].mxu0
        %v3520 = vadd.f32 0.0, %v3519
        %v3521 = vpop.f32.mrb[0].mxu0
        %v3522 = vpop.f32.mrb[0].mxu0
        %v3523 = vadd.f32 0.0, %v3522
        %v3524 = vpop.f32.mrb[0].mxu0
        %3525 = vdwg.mxu0
        %v3526 = vadd.f32 %v3164, %v3400
        %v3527 = vadd.f32 %v3165, %v3403
        %v3528 = vadd.f32 %v3166, %v3408
        %v3529 = vadd.f32 %v3167, %v3411
        %v3530 = vadd.f32 %v3168, %v3416
        %v3531 = vadd.f32 %v3169, %v3419
        %v3532 = vadd.f32 %v3170, %v3424
        %v3533 = vadd.f32 %v3171, %v3427
        %v3534 = vadd.f32 %v3172, %v3432
        %v3535 = vadd.f32 %v3173, %v3435
        %v3536 = vadd.f32 %v3174, %v3440
        %v3537 = vadd.f32 %v3175, %v3443
        %v3538 = vadd.f32 %v3176, %v3448
        %v3539 = vadd.f32 %v3177, %v3451
        %v3540 = vadd.f32 %v3178, %v3456
        %v3541 = vadd.f32 %v3179, %v3459
        %v3542 = vadd.f32 %v3180, %v3464
        %v3543 = vadd.f32 %v3181, %v3467
        %v3544 = vadd.f32 %v3182, %v3472
        %v3545 = vadd.f32 %v3183, %v3475
        %v3546 = vadd.f32 %v3184, %v3480
        %v3547 = vadd.f32 %v3185, %v3483
        %v3548 = vadd.f32 %v3186, %v3488
        %v3549 = vadd.f32 %v3187, %v3491
        %v3550 = vadd.f32 %v3188, %v3496
        %v3551 = vadd.f32 %v3189, %v3499
        %v3552 = vadd.f32 %v3190, %v3504
        %v3553 = vadd.f32 %v3191, %v3507
        %v3554 = vadd.f32 %v3192, %v3512
        %v3555 = vadd.f32 %v3193, %v3515
        %v3556 = vadd.f32 %v3194, %v3520
        %v3557 = vadd.f32 %v3195, %v3523
        %v3558 = vld [vmem:[%s3199] sm:$0xf]
        %v3559 = vld [vmem:[%s3199 + $0x4] sm:$0xf]
        %v3560 = vld [vmem:[%s3199 + $0x8] sm:$0x1]
        %v3561 = vld [vmem:[%s3199 + $0xc] sm:$0xf]
        %v3562 = vld [vmem:[%s3199 + $0x10] sm:$0xf]
        %v3563 = vld [vmem:[%s3199 + $0x14] sm:$0x1]
        %v3564 = vld [vmem:[%s3199 + $0x18] sm:$0xf]
        %v3565 = vld [vmem:[%s3199 + $0x1c] sm:$0xf]
        %v3566 = vld [vmem:[%s3199 + $0x20] sm:$0x1]
        %v3567 = vld [vmem:[%s3199 + $0x24] sm:$0xf]
        %v3568 = vld [vmem:[%s3199 + $0x28] sm:$0xf]
        %v3569 = vld [vmem:[%s3199 + $0x2c] sm:$0x1]
        %v3570 = vld [vmem:[%s3199 + $0x30] sm:$0xf]
        %v3571 = vld [vmem:[%s3199 + $0x34] sm:$0xf]
        %v3572 = vld [vmem:[%s3199 + $0x38] sm:$0x1]
        %v3573 = vld [vmem:[%s3199 + $0x3c] sm:$0xf]
        %v3574 = vld [vmem:[%s3199 + $0x40] sm:$0xf]
        %v3575 = vld [vmem:[%s3199 + $0x44] sm:$0x1]
        %v3576 = vld [vmem:[%s3199 + $0x48] sm:$0xf]
        %v3577 = vld [vmem:[%s3199 + $0x4c] sm:$0xf]
        %v3578 = vld [vmem:[%s3199 + $0x50] sm:$0x1]
        %v3579 = vld [vmem:[%s3199 + $0x54] sm:$0xf]
        %v3580 = vld [vmem:[%s3199 + $0x58] sm:$0xf]
        %v3581 = vld [vmem:[%s3199 + $0x5c] sm:$0x1]
        %v3582 = vld [vmem:[%s3199 + $0x60] sm:$0xf]
        %v3583 = vld [vmem:[%s3199 + $0x64] sm:$0xf]
        %v3584 = vld [vmem:[%s3199 + $0x68] sm:$0x1]
        %v3585 = vld [vmem:[%s3199 + $0x6c] sm:$0xf]
        %v3586 = vld [vmem:[%s3199 + $0x70] sm:$0xf]
        %v3587 = vld [vmem:[%s3199 + $0x74] sm:$0x1]
        %v3588 = vld [vmem:[%s3199 + $0x78] sm:$0xf]
        %v3589 = vld [vmem:[%s3199 + $0x7c] sm:$0xf]
        %v3590 = vld [vmem:[%s3199 + $0x80] sm:$0x1]
        %v3591 = vld [vmem:[%s3199 + $0x84] sm:$0xf]
        %v3592 = vld [vmem:[%s3199 + $0x88] sm:$0xf]
        %v3593 = vld [vmem:[%s3199 + $0x8c] sm:$0x1]
        %v3594 = vld [vmem:[%s3199 + $0x90] sm:$0xf]
        %v3595 = vld [vmem:[%s3199 + $0x94] sm:$0xf]
        %v3596 = vld [vmem:[%s3199 + $0x98] sm:$0x1]
        %v3597 = vld [vmem:[%s3199 + $0x9c] sm:$0xf]
        %v3598 = vld [vmem:[%s3199 + $0xa0] sm:$0xf]
        %v3599 = vld [vmem:[%s3199 + $0xa4] sm:$0x1]
        %v3600 = vld [vmem:[%s3199 + $0xa8] sm:$0xf]
        %v3601 = vld [vmem:[%s3199 + $0xac] sm:$0xf]
        %v3602 = vld [vmem:[%s3199 + $0xb0] sm:$0x1]
        %v3603 = vld [vmem:[%s3199 + $0xb4] sm:$0xf]
        %v3604 = vld [vmem:[%s3199 + $0xb8] sm:$0xf]
        %v3605 = vld [vmem:[%s3199 + $0xbc] sm:$0x1]
        %v3607 = vshrl.u32 %v3558, 16
        %v3609 = vrot.slane %v3607, 4
        %v3610 = vshll.u32 %v3558, 16
        %v3612 = vrot.slane %v3610, 5
        %v3613 = vor.u32 %v3609, %v3612
        %v3614 = vrot.slane %v3613, 4
        %v3616 = vshll.u32 %v3559, 16
        %v3618 = vrot.slane %v3616, 5
        %v3619 = vsel %vm240, %v3614, %v3618
        %v3620 = vshrl.u32 %v3559, 16
        %v3622 = vrot.slane %v3620, 4
        %v3623 = vor.u32 %v3622, %v3618
        %v3624 = vrot.slane %v3623, 4
        %v3626 = vshll.u32 %v3560, 16
        %v3628 = vrot.slane %v3626, 5
        %v3629 = vsel %vm240, %v3624, %v3628
        %v3631 = vshrl.u32 %v3561, 16
        %v3633 = vrot.slane %v3631, 4
        %v3634 = vshll.u32 %v3561, 16
        %v3636 = vrot.slane %v3634, 5
        %v3637 = vor.u32 %v3633, %v3636
        %v3638 = vrot.slane %v3637, 4
        %v3640 = vshll.u32 %v3562, 16
        %v3642 = vrot.slane %v3640, 5
        %v3643 = vsel %vm240, %v3638, %v3642
        %v3644 = vshrl.u32 %v3562, 16
        %v3646 = vrot.slane %v3644, 4
        %v3647 = vor.u32 %v3646, %v3642
        %v3648 = vrot.slane %v3647, 4
        %v3650 = vshll.u32 %v3563, 16
        %v3652 = vrot.slane %v3650, 5
        %v3653 = vsel %vm240, %v3648, %v3652
        %v3655 = vshrl.u32 %v3564, 16
        %v3657 = vrot.slane %v3655, 4
        %v3658 = vshll.u32 %v3564, 16
        %v3660 = vrot.slane %v3658, 5
        %v3661 = vor.u32 %v3657, %v3660
        %v3662 = vrot.slane %v3661, 4
        %v3664 = vshll.u32 %v3565, 16
        %v3666 = vrot.slane %v3664, 5
        %v3667 = vsel %vm240, %v3662, %v3666
        %v3668 = vshrl.u32 %v3565, 16
        %v3670 = vrot.slane %v3668, 4
        %v3671 = vor.u32 %v3670, %v3666
        %v3672 = vrot.slane %v3671, 4
        %v3674 = vshll.u32 %v3566, 16
        %v3676 = vrot.slane %v3674, 5
        %v3677 = vsel %vm240, %v3672, %v3676
        %v3679 = vshrl.u32 %v3567, 16
        %v3681 = vrot.slane %v3679, 4
        %v3682 = vshll.u32 %v3567, 16
        %v3684 = vrot.slane %v3682, 5
        %v3685 = vor.u32 %v3681, %v3684
        %v3686 = vrot.slane %v3685, 4
        %v3688 = vshll.u32 %v3568, 16
        %v3690 = vrot.slane %v3688, 5
        %v3691 = vsel %vm240, %v3686, %v3690
        %v3692 = vshrl.u32 %v3568, 16
        %v3694 = vrot.slane %v3692, 4
        %v3695 = vor.u32 %v3694, %v3690
        %v3696 = vrot.slane %v3695, 4
        %v3698 = vshll.u32 %v3569, 16
        %v3700 = vrot.slane %v3698, 5
        %v3701 = vsel %vm240, %v3696, %v3700
        %v3703 = vshrl.u32 %v3570, 16
        %v3705 = vrot.slane %v3703, 4
        %v3706 = vshll.u32 %v3570, 16
        %v3708 = vrot.slane %v3706, 5
        %v3709 = vor.u32 %v3705, %v3708
        %v3710 = vrot.slane %v3709, 4
        %v3712 = vshll.u32 %v3571, 16
        %v3714 = vrot.slane %v3712, 5
        %v3715 = vsel %vm240, %v3710, %v3714
        %v3716 = vshrl.u32 %v3571, 16
        %v3718 = vrot.slane %v3716, 4
        %v3719 = vor.u32 %v3718, %v3714
        %v3720 = vrot.slane %v3719, 4
        %v3722 = vshll.u32 %v3572, 16
        %v3724 = vrot.slane %v3722, 5
        %v3725 = vsel %vm240, %v3720, %v3724
        %v3727 = vshrl.u32 %v3573, 16
        %v3729 = vrot.slane %v3727, 4
        %v3730 = vshll.u32 %v3573, 16
        %v3732 = vrot.slane %v3730, 5
        %v3733 = vor.u32 %v3729, %v3732
        %v3734 = vrot.slane %v3733, 4
        %v3736 = vshll.u32 %v3574, 16
        %v3738 = vrot.slane %v3736, 5
        %v3739 = vsel %vm240, %v3734, %v3738
        %v3740 = vshrl.u32 %v3574, 16
        %v3742 = vrot.slane %v3740, 4
        %v3743 = vor.u32 %v3742, %v3738
        %v3744 = vrot.slane %v3743, 4
        %v3746 = vshll.u32 %v3575, 16
        %v3748 = vrot.slane %v3746, 5
        %v3749 = vsel %vm240, %v3744, %v3748
        %v3751 = vshrl.u32 %v3576, 16
        %v3753 = vrot.slane %v3751, 4
        %v3754 = vshll.u32 %v3576, 16
        %v3756 = vrot.slane %v3754, 5
        %v3757 = vor.u32 %v3753, %v3756
        %v3758 = vrot.slane %v3757, 4
        %v3760 = vshll.u32 %v3577, 16
        %v3762 = vrot.slane %v3760, 5
        %v3763 = vsel %vm240, %v3758, %v3762
        %v3764 = vshrl.u32 %v3577, 16
        %v3766 = vrot.slane %v3764, 4
        %v3767 = vor.u32 %v3766, %v3762
        %v3768 = vrot.slane %v3767, 4
        %v3770 = vshll.u32 %v3578, 16
        %v3772 = vrot.slane %v3770, 5
        %v3773 = vsel %vm240, %v3768, %v3772
        %v3775 = vshrl.u32 %v3579, 16
        %v3777 = vrot.slane %v3775, 4
        %v3778 = vshll.u32 %v3579, 16
        %v3780 = vrot.slane %v3778, 5
        %v3781 = vor.u32 %v3777, %v3780
        %v3782 = vrot.slane %v3781, 4
        %v3784 = vshll.u32 %v3580, 16
        %v3786 = vrot.slane %v3784, 5
        %v3787 = vsel %vm240, %v3782, %v3786
        %v3788 = vshrl.u32 %v3580, 16
        %v3790 = vrot.slane %v3788, 4
        %v3791 = vor.u32 %v3790, %v3786
        %v3792 = vrot.slane %v3791, 4
        %v3794 = vshll.u32 %v3581, 16
        %v3796 = vrot.slane %v3794, 5
        %v3797 = vsel %vm240, %v3792, %v3796
        %v3799 = vshrl.u32 %v3582, 16
        %v3801 = vrot.slane %v3799, 4
        %v3802 = vshll.u32 %v3582, 16
        %v3804 = vrot.slane %v3802, 5
        %v3805 = vor.u32 %v3801, %v3804
        %v3806 = vrot.slane %v3805, 4
        %v3808 = vshll.u32 %v3583, 16
        %v3810 = vrot.slane %v3808, 5
        %v3811 = vsel %vm240, %v3806, %v3810
        %v3812 = vshrl.u32 %v3583, 16
        %v3814 = vrot.slane %v3812, 4
        %v3815 = vor.u32 %v3814, %v3810
        %v3816 = vrot.slane %v3815, 4
        %v3818 = vshll.u32 %v3584, 16
        %v3820 = vrot.slane %v3818, 5
        %v3821 = vsel %vm240, %v3816, %v3820
        %v3823 = vshrl.u32 %v3585, 16
        %v3825 = vrot.slane %v3823, 4
        %v3826 = vshll.u32 %v3585, 16
        %v3828 = vrot.slane %v3826, 5
        %v3829 = vor.u32 %v3825, %v3828
        %v3830 = vrot.slane %v3829, 4
        %v3832 = vshll.u32 %v3586, 16
        %v3834 = vrot.slane %v3832, 5
        %v3835 = vsel %vm240, %v3830, %v3834
        %v3836 = vshrl.u32 %v3586, 16
        %v3838 = vrot.slane %v3836, 4
        %v3839 = vor.u32 %v3838, %v3834
        %v3840 = vrot.slane %v3839, 4
        %v3842 = vshll.u32 %v3587, 16
        %v3844 = vrot.slane %v3842, 5
        %v3845 = vsel %vm240, %v3840, %v3844
        %v3847 = vshrl.u32 %v3588, 16
        %v3849 = vrot.slane %v3847, 4
        %v3850 = vshll.u32 %v3588, 16
        %v3852 = vrot.slane %v3850, 5
        %v3853 = vor.u32 %v3849, %v3852
        %v3854 = vrot.slane %v3853, 4
        %v3856 = vshll.u32 %v3589, 16
        %v3858 = vrot.slane %v3856, 5
        %v3859 = vsel %vm240, %v3854, %v3858
        %v3860 = vshrl.u32 %v3589, 16
        %v3862 = vrot.slane %v3860, 4
        %v3863 = vor.u32 %v3862, %v3858
        %v3864 = vrot.slane %v3863, 4
        %v3866 = vshll.u32 %v3590, 16
        %v3868 = vrot.slane %v3866, 5
        %v3869 = vsel %vm240, %v3864, %v3868
        %v3871 = vshrl.u32 %v3591, 16
        %v3873 = vrot.slane %v3871, 4
        %v3874 = vshll.u32 %v3591, 16
        %v3876 = vrot.slane %v3874, 5
        %v3877 = vor.u32 %v3873, %v3876
        %v3878 = vrot.slane %v3877, 4
        %v3880 = vshll.u32 %v3592, 16
        %v3882 = vrot.slane %v3880, 5
        %v3883 = vsel %vm240, %v3878, %v3882
        %v3884 = vshrl.u32 %v3592, 16
        %v3886 = vrot.slane %v3884, 4
        %v3887 = vor.u32 %v3886, %v3882
        %v3888 = vrot.slane %v3887, 4
        %v3890 = vshll.u32 %v3593, 16
        %v3892 = vrot.slane %v3890, 5
        %v3893 = vsel %vm240, %v3888, %v3892
        %v3895 = vshrl.u32 %v3594, 16
        %v3897 = vrot.slane %v3895, 4
        %v3898 = vshll.u32 %v3594, 16
        %v3900 = vrot.slane %v3898, 5
        %v3901 = vor.u32 %v3897, %v3900
        %v3902 = vrot.slane %v3901, 4
        %v3904 = vshll.u32 %v3595, 16
        %v3906 = vrot.slane %v3904, 5
        %v3907 = vsel %vm240, %v3902, %v3906
        %v3908 = vshrl.u32 %v3595, 16
        %v3910 = vrot.slane %v3908, 4
        %v3911 = vor.u32 %v3910, %v3906
        %v3912 = vrot.slane %v3911, 4
        %v3914 = vshll.u32 %v3596, 16
        %v3916 = vrot.slane %v3914, 5
        %v3917 = vsel %vm240, %v3912, %v3916
        %v3919 = vshrl.u32 %v3597, 16
        %v3921 = vrot.slane %v3919, 4
        %v3922 = vshll.u32 %v3597, 16
        %v3924 = vrot.slane %v3922, 5
        %v3925 = vor.u32 %v3921, %v3924
        %v3926 = vrot.slane %v3925, 4
        %v3928 = vshll.u32 %v3598, 16
        %v3930 = vrot.slane %v3928, 5
        %v3931 = vsel %vm240, %v3926, %v3930
        %v3932 = vshrl.u32 %v3598, 16
        %v3934 = vrot.slane %v3932, 4
        %v3935 = vor.u32 %v3934, %v3930
        %v3936 = vrot.slane %v3935, 4
        %v3938 = vshll.u32 %v3599, 16
        %v3940 = vrot.slane %v3938, 5
        %v3941 = vsel %vm240, %v3936, %v3940
        %v3943 = vshrl.u32 %v3600, 16
        %v3945 = vrot.slane %v3943, 4
        %v3946 = vshll.u32 %v3600, 16
        %v3948 = vrot.slane %v3946, 5
        %v3949 = vor.u32 %v3945, %v3948
        %v3950 = vrot.slane %v3949, 4
        %v3952 = vshll.u32 %v3601, 16
        %v3954 = vrot.slane %v3952, 5
        %v3955 = vsel %vm240, %v3950, %v3954
        %v3956 = vshrl.u32 %v3601, 16
        %v3958 = vrot.slane %v3956, 4
        %v3959 = vor.u32 %v3958, %v3954
        %v3960 = vrot.slane %v3959, 4
        %v3962 = vshll.u32 %v3602, 16
        %v3964 = vrot.slane %v3962, 5
        %v3965 = vsel %vm240, %v3960, %v3964
        %v3967 = vshrl.u32 %v3603, 16
        %v3969 = vrot.slane %v3967, 4
        %v3970 = vshll.u32 %v3603, 16
        %v3972 = vrot.slane %v3970, 5
        %v3973 = vor.u32 %v3969, %v3972
        %v3974 = vrot.slane %v3973, 4
        %v3976 = vshll.u32 %v3604, 16
        %v3978 = vrot.slane %v3976, 5
        %v3979 = vsel %vm240, %v3974, %v3978
        %v3980 = vshrl.u32 %v3604, 16
        %v3982 = vrot.slane %v3980, 4
        %v3983 = vor.u32 %v3982, %v3978
        %v3984 = vrot.slane %v3983, 4
        %v3986 = vshll.u32 %v3605, 16
        %v3988 = vrot.slane %v3986, 5
        %v3989 = vsel %vm240, %v3984, %v3988
        %s3990 = scalar_lea.vmem %s1, 14
        %v3991 = vld [vmem:[%s3990] sm:$0x3]
        %v3992 = vunpack.c.l.b16 %v3619
        %v3993 = vunpack.c.l.b16 %v3629
        %v3994 = vunpack.c.l.b16 %v3643
        %v3995 = vunpack.c.l.b16 %v3653
        %v3996 = vunpack.c.l.b16 %v3667
        %v3997 = vunpack.c.l.b16 %v3677
        %v3998 = vunpack.c.l.b16 %v3691
        %v3999 = vunpack.c.l.b16 %v3701
        %v4000 = vunpack.c.l.b16 %v3715
        %v4001 = vunpack.c.l.b16 %v3725
        %v4002 = vunpack.c.l.b16 %v3739
        %v4003 = vunpack.c.l.b16 %v3749
        %v4004 = vunpack.c.l.b16 %v3763
        %v4005 = vunpack.c.l.b16 %v3773
        %v4006 = vunpack.c.l.b16 %v3787
        %v4007 = vunpack.c.l.b16 %v3797
        %v4008 = vunpack.c.l.b16 %v3811
        %v4009 = vunpack.c.l.b16 %v3821
        %v4010 = vunpack.c.l.b16 %v3835
        %v4011 = vunpack.c.l.b16 %v3845
        %v4012 = vunpack.c.l.b16 %v3859
        %v4013 = vunpack.c.l.b16 %v3869
        %v4014 = vunpack.c.l.b16 %v3883
        %v4015 = vunpack.c.l.b16 %v3893
        %v4016 = vunpack.c.l.b16 %v3907
        %v4017 = vunpack.c.l.b16 %v3917
        %v4018 = vunpack.c.l.b16 %v3931
        %v4019 = vunpack.c.l.b16 %v3941
        %v4020 = vunpack.c.l.b16 %v3955
        %v4021 = vunpack.c.l.b16 %v3965
        %v4022 = vunpack.c.l.b16 %v3979
        %v4023 = vunpack.c.l.b16 %v3989
        %v4024 = vpack.c.b16 %v3993, %v3992
        %v4025 = vpack.c.b16 %v3995, %v3994
        %v4026 = vpack.c.b16 %v3997, %v3996
        %v4027 = vpack.c.b16 %v3999, %v3998
        %v4028 = vpack.c.b16 %v4001, %v4000
        %v4029 = vpack.c.b16 %v4003, %v4002
        %v4030 = vpack.c.b16 %v4005, %v4004
        %v4031 = vpack.c.b16 %v4007, %v4006
        %v4032 = vpack.c.b16 %v4009, %v4008
        %v4033 = vpack.c.b16 %v4011, %v4010
        %v4034 = vpack.c.b16 %v4013, %v4012
        %v4035 = vpack.c.b16 %v4015, %v4014
        %v4036 = vpack.c.b16 %v4017, %v4016
        %v4037 = vpack.c.b16 %v4019, %v4018
        %v4038 = vpack.c.b16 %v4021, %v4020
        %v4039 = vpack.c.b16 %v4023, %v4022
        %v4041 = vsel %vm675, %v4024, 0
        %v4044 = vsel %vm675, %v4025, 0
        %v4047 = vsel %vm675, %v4026, 0
        %v4050 = vsel %vm675, %v4027, 0
        %v4053 = vsel %vm675, %v4028, 0
        %v4056 = vsel %vm675, %v4029, 0
        %v4059 = vsel %vm675, %v4030, 0
        %v4062 = vsel %vm675, %v4031, 0
        %v4065 = vsel %vm675, %v4032, 0
        %v4068 = vsel %vm675, %v4033, 0
        %v4071 = vsel %vm675, %v4034, 0
        %v4074 = vsel %vm675, %v4035, 0
        %v4077 = vsel %vm675, %v4036, 0
        %v4080 = vsel %vm675, %v4037, 0
        %v4083 = vsel %vm675, %v4038, 0
        %v4086 = vsel %vm675, %v4039, 0
        %v4089 = vsel %vm724, %v3991, 0
        %4091 = vmatprep.subr.bf16.mxu0 0
        %4092 = vmatpush1.bf16.msra.mxu0 %v4089
        %4093 = vmatprep.subr.bf16.mxu0 0
        %4094 = vmatpush1.bf16.msra.mxu0 0
        %4095 = vmatprep.subr.bf16.mxu0 0
        %4096 = vmatpush1.bf16.msra.mxu0 0
        %4097 = vmatprep.subr.bf16.mxu0 0
        %4098 = vmatpush1.bf16.msra.mxu0 0
        %4099 = vmatprep.subr.bf16.mxu0 0
        %4100 = vmatpush1.bf16.msra.mxu0 0
        %4101 = vmatprep.subr.bf16.mxu0 0
        %4102 = vmatpush1.bf16.msra.mxu0 0
        %4103 = vmatprep.subr.bf16.mxu0 0
        %4104 = vmatpush1.bf16.msra.mxu0 0
        %4105 = vmatprep.subr.bf16.mxu0 0
        %4106 = vmatpush1.bf16.msra.mxu0 0
        %4107 = vmatprep.subr.bf16.mxu0 0
        %4108 = vmatpush1.bf16.msra.mxu0 0
        %4109 = vmatprep.subr.bf16.mxu0 0
        %4110 = vmatpush1.bf16.msra.mxu0 0
        %4111 = vmatprep.subr.bf16.mxu0 0
        %4112 = vmatpush1.bf16.msra.mxu0 0
        %4113 = vmatprep.subr.bf16.mxu0 0
        %4114 = vmatpush1.bf16.msra.mxu0 0
        %4115 = vmatprep.subr.bf16.mxu0 0
        %4116 = vmatpush1.bf16.msra.mxu0 0
        %4117 = vmatprep.subr.bf16.mxu0 0
        %4118 = vmatpush1.bf16.msra.mxu0 0
        %4119 = vmatprep.subr.bf16.mxu0 0
        %4120 = vmatpush1.bf16.msra.mxu0 0
        %4121 = vmatprep.subr.bf16.mxu0 0
        %4122 = vmatpush1.bf16.msra.mxu0 0
        %4123 = vmatprep.mubr.bf16.mxu0 0
        %4124 = vmatmul.mubr.bf16.gmra.mrb[0].mxu0 %v4041
        %v4125 = vpop.f32.mrb[0].mxu0
        %v4126 = vadd.f32 0.0, %v4125
        %v4127 = vpop.f32.mrb[0].mxu0
        %v4128 = vpop.f32.mrb[0].mxu0
        %v4129 = vadd.f32 0.0, %v4128
        %v4130 = vpop.f32.mrb[0].mxu0
        %4131 = vmatprep.mubr.bf16.mxu0 0
        %4132 = vmatmul.mubr.bf16.gmra.mrb[0].mxu0 %v4044
        %v4133 = vpop.f32.mrb[0].mxu0
        %v4134 = vadd.f32 0.0, %v4133
        %v4135 = vpop.f32.mrb[0].mxu0
        %v4136 = vpop.f32.mrb[0].mxu0
        %v4137 = vadd.f32 0.0, %v4136
        %v4138 = vpop.f32.mrb[0].mxu0
        %4139 = vmatprep.mubr.bf16.mxu0 0
        %4140 = vmatmul.mubr.bf16.gmra.mrb[0].mxu0 %v4047
        %v4141 = vpop.f32.mrb[0].mxu0
        %v4142 = vadd.f32 0.0, %v4141
        %v4143 = vpop.f32.mrb[0].mxu0
        %v4144 = vpop.f32.mrb[0].mxu0
        %v4145 = vadd.f32 0.0, %v4144
        %v4146 = vpop.f32.mrb[0].mxu0
        %4147 = vmatprep.mubr.bf16.mxu0 0
        %4148 = vmatmul.mubr.bf16.gmra.mrb[0].mxu0 %v4050
        %v4149 = vpop.f32.mrb[0].mxu0
        %v4150 = vadd.f32 0.0, %v4149
        %v4151 = vpop.f32.mrb[0].mxu0
        %v4152 = vpop.f32.mrb[0].mxu0
        %v4153 = vadd.f32 0.0, %v4152
        %v4154 = vpop.f32.mrb[0].mxu0
        %4155 = vmatprep.mubr.bf16.mxu0 0
        %4156 = vmatmul.mubr.bf16.gmra.mrb[0].mxu0 %v4053
        %v4157 = vpop.f32.mrb[0].mxu0
        %v4158 = vadd.f32 0.0, %v4157
        %v4159 = vpop.f32.mrb[0].mxu0
        %v4160 = vpop.f32.mrb[0].mxu0
        %v4161 = vadd.f32 0.0, %v4160
        %v4162 = vpop.f32.mrb[0].mxu0
        %4163 = vmatprep.mubr.bf16.mxu0 0
        %4164 = vmatmul.mubr.bf16.gmra.mrb[0].mxu0 %v4056
        %v4165 = vpop.f32.mrb[0].mxu0
        %v4166 = vadd.f32 0.0, %v4165
        %v4167 = vpop.f32.mrb[0].mxu0
        %v4168 = vpop.f32.mrb[0].mxu0
        %v4169 = vadd.f32 0.0, %v4168
        %v4170 = vpop.f32.mrb[0].mxu0
        %4171 = vmatprep.mubr.bf16.mxu0 0
        %4172 = vmatmul.mubr.bf16.gmra.mrb[0].mxu0 %v4059
        %v4173 = vpop.f32.mrb[0].mxu0
        %v4174 = vadd.f32 0.0, %v4173
        %v4175 = vpop.f32.mrb[0].mxu0
        %v4176 = vpop.f32.mrb[0].mxu0
        %v4177 = vadd.f32 0.0, %v4176
        %v4178 = vpop.f32.mrb[0].mxu0
        %4179 = vmatprep.mubr.bf16.mxu0 0
        %4180 = vmatmul.mubr.bf16.gmra.mrb[0].mxu0 %v4062
        %v4181 = vpop.f32.mrb[0].mxu0
        %v4182 = vadd.f32 0.0, %v4181
        %v4183 = vpop.f32.mrb[0].mxu0
        %v4184 = vpop.f32.mrb[0].mxu0
        %v4185 = vadd.f32 0.0, %v4184
        %v4186 = vpop.f32.mrb[0].mxu0
        %4187 = vmatprep.mubr.bf16.mxu0 0
        %4188 = vmatmul.mubr.bf16.gmra.mrb[0].mxu0 %v4065
        %v4189 = vpop.f32.mrb[0].mxu0
        %v4190 = vadd.f32 0.0, %v4189
        %v4191 = vpop.f32.mrb[0].mxu0
        %v4192 = vpop.f32.mrb[0].mxu0
        %v4193 = vadd.f32 0.0, %v4192
        %v4194 = vpop.f32.mrb[0].mxu0
        %4195 = vmatprep.mubr.bf16.mxu0 0
        %4196 = vmatmul.mubr.bf16.gmra.mrb[0].mxu0 %v4068
        %v4197 = vpop.f32.mrb[0].mxu0
        %v4198 = vadd.f32 0.0, %v4197
        %v4199 = vpop.f32.mrb[0].mxu0
        %v4200 = vpop.f32.mrb[0].mxu0
        %v4201 = vadd.f32 0.0, %v4200
        %v4202 = vpop.f32.mrb[0].mxu0
        %4203 = vmatprep.mubr.bf16.mxu0 0
        %4204 = vmatmul.mubr.bf16.gmra.mrb[0].mxu0 %v4071
        %v4205 = vpop.f32.mrb[0].mxu0
        %v4206 = vadd.f32 0.0, %v4205
        %v4207 = vpop.f32.mrb[0].mxu0
        %v4208 = vpop.f32.mrb[0].mxu0
        %v4209 = vadd.f32 0.0, %v4208
        %v4210 = vpop.f32.mrb[0].mxu0
        %4211 = vmatprep.mubr.bf16.mxu0 0
        %4212 = vmatmul.mubr.bf16.gmra.mrb[0].mxu0 %v4074
        %v4213 = vpop.f32.mrb[0].mxu0
        %v4214 = vadd.f32 0.0, %v4213
        %v4215 = vpop.f32.mrb[0].mxu0
        %v4216 = vpop.f32.mrb[0].mxu0
        %v4217 = vadd.f32 0.0, %v4216
        %v4218 = vpop.f32.mrb[0].mxu0
        %4219 = vmatprep.mubr.bf16.mxu0 0
        %4220 = vmatmul.mubr.bf16.gmra.mrb[0].mxu0 %v4077
        %v4221 = vpop.f32.mrb[0].mxu0
        %v4222 = vadd.f32 0.0, %v4221
        %v4223 = vpop.f32.mrb[0].mxu0
        %v4224 = vpop.f32.mrb[0].mxu0
        %v4225 = vadd.f32 0.0, %v4224
        %v4226 = vpop.f32.mrb[0].mxu0
        %4227 = vmatprep.mubr.bf16.mxu0 0
        %4228 = vmatmul.mubr.bf16.gmra.mrb[0].mxu0 %v4080
        %v4229 = vpop.f32.mrb[0].mxu0
        %v4230 = vadd.f32 0.0, %v4229
        %v4231 = vpop.f32.mrb[0].mxu0
        %v4232 = vpop.f32.mrb[0].mxu0
        %v4233 = vadd.f32 0.0, %v4232
        %v4234 = vpop.f32.mrb[0].mxu0
        %4235 = vmatprep.mubr.bf16.mxu0 0
        %4236 = vmatmul.mubr.bf16.gmra.mrb[0].mxu0 %v4083
        %v4237 = vpop.f32.mrb[0].mxu0
        %v4238 = vadd.f32 0.0, %v4237
        %v4239 = vpop.f32.mrb[0].mxu0
        %v4240 = vpop.f32.mrb[0].mxu0
        %v4241 = vadd.f32 0.0, %v4240
        %v4242 = vpop.f32.mrb[0].mxu0
        %4243 = vmatprep.mubr.bf16.mxu0 0
        %4244 = vmatmul.mubr.bf16.gmra.mrb[0].mxu0 %v4086
        %v4245 = vpop.f32.mrb[0].mxu0
        %v4246 = vadd.f32 0.0, %v4245
        %v4247 = vpop.f32.mrb[0].mxu0
        %v4248 = vpop.f32.mrb[0].mxu0
        %v4249 = vadd.f32 0.0, %v4248
        %v4250 = vpop.f32.mrb[0].mxu0
        %4251 = vdwg.mxu0
        %v4252 = vadd.f32 %v3526, %v4126
        %v4253 = vadd.f32 %v3527, %v4129
        %v4254 = vadd.f32 %v3528, %v4134
        %v4255 = vadd.f32 %v3529, %v4137
        %v4256 = vadd.f32 %v3530, %v4142
        %v4257 = vadd.f32 %v3531, %v4145
        %v4258 = vadd.f32 %v3532, %v4150
        %v4259 = vadd.f32 %v3533, %v4153
        %v4260 = vadd.f32 %v3534, %v4158
        %v4261 = vadd.f32 %v3535, %v4161
        %v4262 = vadd.f32 %v3536, %v4166
        %v4263 = vadd.f32 %v3537, %v4169
        %v4264 = vadd.f32 %v3538, %v4174
        %v4265 = vadd.f32 %v3539, %v4177
        %v4266 = vadd.f32 %v3540, %v4182
        %v4267 = vadd.f32 %v3541, %v4185
        %v4268 = vadd.f32 %v3542, %v4190
        %v4269 = vadd.f32 %v3543, %v4193
        %v4270 = vadd.f32 %v3544, %v4198
        %v4271 = vadd.f32 %v3545, %v4201
        %v4272 = vadd.f32 %v3546, %v4206
        %v4273 = vadd.f32 %v3547, %v4209
        %v4274 = vadd.f32 %v3548, %v4214
        %v4275 = vadd.f32 %v3549, %v4217
        %v4276 = vadd.f32 %v3550, %v4222
        %v4277 = vadd.f32 %v3551, %v4225
        %v4278 = vadd.f32 %v3552, %v4230
        %v4279 = vadd.f32 %v3553, %v4233
        %v4280 = vadd.f32 %v3554, %v4238
        %v4281 = vadd.f32 %v3555, %v4241
        %v4282 = vadd.f32 %v3556, %v4246
        %v4283 = vadd.f32 %v3557, %v4249
        %v4284 = vld [vmem:[%s3199] sm:$0xe]
        %v4285 = vld [vmem:[%s3199 + $0xc] sm:$0xe]
        %v4286 = vld [vmem:[%s3199 + $0x18] sm:$0xe]
        %v4287 = vld [vmem:[%s3199 + $0x24] sm:$0xe]
        %v4288 = vld [vmem:[%s3199 + $0x30] sm:$0xe]
        %v4289 = vld [vmem:[%s3199 + $0x3c] sm:$0xe]
        %v4290 = vld [vmem:[%s3199 + $0x48] sm:$0xe]
        %v4291 = vld [vmem:[%s3199 + $0x54] sm:$0xe]
        %v4292 = vld [vmem:[%s3199 + $0x60] sm:$0xe]
        %v4293 = vld [vmem:[%s3199 + $0x6c] sm:$0xe]
        %v4294 = vld [vmem:[%s3199 + $0x78] sm:$0xe]
        %v4295 = vld [vmem:[%s3199 + $0x84] sm:$0xe]
        %v4296 = vld [vmem:[%s3199 + $0x90] sm:$0xe]
        %v4297 = vld [vmem:[%s3199 + $0x9c] sm:$0xe]
        %v4298 = vld [vmem:[%s3199 + $0xa8] sm:$0xe]
        %v4299 = vld [vmem:[%s3199 + $0xb4] sm:$0xe]
        %v4348 = vrot.slane %v4284, 5
        %v4349 = vrot.slane %v4348, 4
        %v4350 = vrot.slane %v3559, 5
        %v4351 = vsel %vm1231, %v4349, %v4350
        %v4352 = vrot.slane %v4350, 4
        %v4353 = vrot.slane %v3560, 5
        %v4354 = vsel %vm1231, %v4352, %v4353
        %v4355 = vrot.slane %v4285, 5
        %v4356 = vrot.slane %v4355, 4
        %v4357 = vrot.slane %v3562, 5
        %v4358 = vsel %vm1231, %v4356, %v4357
        %v4359 = vrot.slane %v4357, 4
        %v4360 = vrot.slane %v3563, 5
        %v4361 = vsel %vm1231, %v4359, %v4360
        %v4362 = vrot.slane %v4286, 5
        %v4363 = vrot.slane %v4362, 4
        %v4364 = vrot.slane %v3565, 5
        %v4365 = vsel %vm1231, %v4363, %v4364
        %v4366 = vrot.slane %v4364, 4
        %v4367 = vrot.slane %v3566, 5
        %v4368 = vsel %vm1231, %v4366, %v4367
        %v4369 = vrot.slane %v4287, 5
        %v4370 = vrot.slane %v4369, 4
        %v4371 = vrot.slane %v3568, 5
        %v4372 = vsel %vm1231, %v4370, %v4371
        %v4373 = vrot.slane %v4371, 4
        %v4374 = vrot.slane %v3569, 5
        %v4375 = vsel %vm1231, %v4373, %v4374
        %v4376 = vrot.slane %v4288, 5
        %v4377 = vrot.slane %v4376, 4
        %v4378 = vrot.slane %v3571, 5
        %v4379 = vsel %vm1231, %v4377, %v4378
        %v4380 = vrot.slane %v4378, 4
        %v4381 = vrot.slane %v3572, 5
        %v4382 = vsel %vm1231, %v4380, %v4381
        %v4383 = vrot.slane %v4289, 5
        %v4384 = vrot.slane %v4383, 4
        %v4385 = vrot.slane %v3574, 5
        %v4386 = vsel %vm1231, %v4384, %v4385
        %v4387 = vrot.slane %v4385, 4
        %v4388 = vrot.slane %v3575, 5
        %v4389 = vsel %vm1231, %v4387, %v4388
        %v4390 = vrot.slane %v4290, 5
        %v4391 = vrot.slane %v4390, 4
        %v4392 = vrot.slane %v3577, 5
        %v4393 = vsel %vm1231, %v4391, %v4392
        %v4394 = vrot.slane %v4392, 4
        %v4395 = vrot.slane %v3578, 5
        %v4396 = vsel %vm1231, %v4394, %v4395
        %v4397 = vrot.slane %v4291, 5
        %v4398 = vrot.slane %v4397, 4
        %v4399 = vrot.slane %v3580, 5
        %v4400 = vsel %vm1231, %v4398, %v4399
        %v4401 = vrot.slane %v4399, 4
        %v4402 = vrot.slane %v3581, 5
        %v4403 = vsel %vm1231, %v4401, %v4402
        %v4404 = vrot.slane %v4292, 5
        %v4405 = vrot.slane %v4404, 4
        %v4406 = vrot.slane %v3583, 5
        %v4407 = vsel %vm1231, %v4405, %v4406
        %v4408 = vrot.slane %v4406, 4
        %v4409 = vrot.slane %v3584, 5
        %v4410 = vsel %vm1231, %v4408, %v4409
        %v4411 = vrot.slane %v4293, 5
        %v4412 = vrot.slane %v4411, 4
        %v4413 = vrot.slane %v3586, 5
        %v4414 = vsel %vm1231, %v4412, %v4413
        %v4415 = vrot.slane %v4413, 4
        %v4416 = vrot.slane %v3587, 5
        %v4417 = vsel %vm1231, %v4415, %v4416
        %v4418 = vrot.slane %v4294, 5
        %v4419 = vrot.slane %v4418, 4
        %v4420 = vrot.slane %v3589, 5
        %v4421 = vsel %vm1231, %v4419, %v4420
        %v4422 = vrot.slane %v4420, 4
        %v4423 = vrot.slane %v3590, 5
        %v4424 = vsel %vm1231, %v4422, %v4423
        %v4425 = vrot.slane %v4295, 5
        %v4426 = vrot.slane %v4425, 4
        %v4427 = vrot.slane %v3592, 5
        %v4428 = vsel %vm1231, %v4426, %v4427
        %v4429 = vrot.slane %v4427, 4
        %v4430 = vrot.slane %v3593, 5
        %v4431 = vsel %vm1231, %v4429, %v4430
        %v4432 = vrot.slane %v4296, 5
        %v4433 = vrot.slane %v4432, 4
        %v4434 = vrot.slane %v3595, 5
        %v4435 = vsel %vm1231, %v4433, %v4434
        %v4436 = vrot.slane %v4434, 4
        %v4437 = vrot.slane %v3596, 5
        %v4438 = vsel %vm1231, %v4436, %v4437
        %v4439 = vrot.slane %v4297, 5
        %v4440 = vrot.slane %v4439, 4
        %v4441 = vrot.slane %v3598, 5
        %v4442 = vsel %vm1231, %v4440, %v4441
        %v4443 = vrot.slane %v4441, 4
        %v4444 = vrot.slane %v3599, 5
        %v4445 = vsel %vm1231, %v4443, %v4444
        %v4446 = vrot.slane %v4298, 5
        %v4447 = vrot.slane %v4446, 4
        %v4448 = vrot.slane %v3601, 5
        %v4449 = vsel %vm1231, %v4447, %v4448
        %v4450 = vrot.slane %v4448, 4
        %v4451 = vrot.slane %v3602, 5
        %v4452 = vsel %vm1231, %v4450, %v4451
        %v4453 = vrot.slane %v4299, 5
        %v4454 = vrot.slane %v4453, 4
        %v4455 = vrot.slane %v3604, 5
        %v4456 = vsel %vm1231, %v4454, %v4455
        %v4457 = vrot.slane %v4455, 4
        %v4458 = vrot.slane %v3605, 5
        %v4459 = vsel %vm1231, %v4457, %v4458
        %s4460 = scalar_lea.vmem %s1, 16
        %v4461 = vld [vmem:[%s4460] sm:$0x3]
        %v4462 = vunpack.c.l.b16 %v4351
        %v4463 = vunpack.c.l.b16 %v4354
        %v4464 = vunpack.c.l.b16 %v4358
        %v4465 = vunpack.c.l.b16 %v4361
        %v4466 = vunpack.c.l.b16 %v4365
        %v4467 = vunpack.c.l.b16 %v4368
        %v4468 = vunpack.c.l.b16 %v4372
        %v4469 = vunpack.c.l.b16 %v4375
        %v4470 = vunpack.c.l.b16 %v4379
        %v4471 = vunpack.c.l.b16 %v4382
        %v4472 = vunpack.c.l.b16 %v4386
        %v4473 = vunpack.c.l.b16 %v4389
        %v4474 = vunpack.c.l.b16 %v4393
        %v4475 = vunpack.c.l.b16 %v4396
        %v4476 = vunpack.c.l.b16 %v4400
        %v4477 = vunpack.c.l.b16 %v4403
        %v4478 = vunpack.c.l.b16 %v4407
        %v4479 = vunpack.c.l.b16 %v4410
        %v4480 = vunpack.c.l.b16 %v4414
        %v4481 = vunpack.c.l.b16 %v4417
        %v4482 = vunpack.c.l.b16 %v4421
        %v4483 = vunpack.c.l.b16 %v4424
        %v4484 = vunpack.c.l.b16 %v4428
        %v4485 = vunpack.c.l.b16 %v4431
        %v4486 = vunpack.c.l.b16 %v4435
        %v4487 = vunpack.c.l.b16 %v4438
        %v4488 = vunpack.c.l.b16 %v4442
        %v4489 = vunpack.c.l.b16 %v4445
        %v4490 = vunpack.c.l.b16 %v4449
        %v4491 = vunpack.c.l.b16 %v4452
        %v4492 = vunpack.c.l.b16 %v4456
        %v4493 = vunpack.c.l.b16 %v4459
        %v4494 = vpack.c.b16 %v4463, %v4462
        %v4495 = vpack.c.b16 %v4465, %v4464
        %v4496 = vpack.c.b16 %v4467, %v4466
        %v4497 = vpack.c.b16 %v4469, %v4468
        %v4498 = vpack.c.b16 %v4471, %v4470
        %v4499 = vpack.c.b16 %v4473, %v4472
        %v4500 = vpack.c.b16 %v4475, %v4474
        %v4501 = vpack.c.b16 %v4477, %v4476
        %v4502 = vpack.c.b16 %v4479, %v4478
        %v4503 = vpack.c.b16 %v4481, %v4480
        %v4504 = vpack.c.b16 %v4483, %v4482
        %v4505 = vpack.c.b16 %v4485, %v4484
        %v4506 = vpack.c.b16 %v4487, %v4486
        %v4507 = vpack.c.b16 %v4489, %v4488
        %v4508 = vpack.c.b16 %v4491, %v4490
        %v4509 = vpack.c.b16 %v4493, %v4492
        %v4511 = vsel %vm675, %v4494, 0
        %v4514 = vsel %vm675, %v4495, 0
        %v4517 = vsel %vm675, %v4496, 0
        %v4520 = vsel %vm675, %v4497, 0
        %v4523 = vsel %vm675, %v4498, 0
        %v4526 = vsel %vm675, %v4499, 0
        %v4529 = vsel %vm675, %v4500, 0
        %v4532 = vsel %vm675, %v4501, 0
        %v4535 = vsel %vm675, %v4502, 0
        %v4538 = vsel %vm675, %v4503, 0
        %v4541 = vsel %vm675, %v4504, 0
        %v4544 = vsel %vm675, %v4505, 0
        %v4547 = vsel %vm675, %v4506, 0
        %v4550 = vsel %vm675, %v4507, 0
        %v4553 = vsel %vm675, %v4508, 0
        %v4556 = vsel %vm675, %v4509, 0
        %v4559 = vsel %vm724, %v4461, 0
        %4561 = vmatprep.subr.bf16.mxu0 0
        %4562 = vmatpush1.bf16.msra.mxu0 %v4559
        %4563 = vmatprep.subr.bf16.mxu0 0
        %4564 = vmatpush1.bf16.msra.mxu0 0
        %4565 = vmatprep.subr.bf16.mxu0 0
        %4566 = vmatpush1.bf16.msra.mxu0 0
        %4567 = vmatprep.subr.bf16.mxu0 0
        %4568 = vmatpush1.bf16.msra.mxu0 0
        %4569 = vmatprep.subr.bf16.mxu0 0
        %4570 = vmatpush1.bf16.msra.mxu0 0
        %4571 = vmatprep.subr.bf16.mxu0 0
        %4572 = vmatpush1.bf16.msra.mxu0 0
        %4573 = vmatprep.subr.bf16.mxu0 0
        %4574 = vmatpush1.bf16.msra.mxu0 0
        %4575 = vmatprep.subr.bf16.mxu0 0
        %4576 = vmatpush1.bf16.msra.mxu0 0
        %4577 = vmatprep.subr.bf16.mxu0 0
        %4578 = vmatpush1.bf16.msra.mxu0 0
        %4579 = vmatprep.subr.bf16.mxu0 0
        %4580 = vmatpush1.bf16.msra.mxu0 0
        %4581 = vmatprep.subr.bf16.mxu0 0
        %4582 = vmatpush1.bf16.msra.mxu0 0
        %4583 = vmatprep.subr.bf16.mxu0 0
        %4584 = vmatpush1.bf16.msra.mxu0 0
        %4585 = vmatprep.subr.bf16.mxu0 0
        %4586 = vmatpush1.bf16.msra.mxu0 0
        %4587 = vmatprep.subr.bf16.mxu0 0
        %4588 = vmatpush1.bf16.msra.mxu0 0
        %4589 = vmatprep.subr.bf16.mxu0 0
        %4590 = vmatpush1.bf16.msra.mxu0 0
        %4591 = vmatprep.subr.bf16.mxu0 0
        %4592 = vmatpush1.bf16.msra.mxu0 0
        %4593 = vmatprep.mubr.bf16.mxu0 0
        %4594 = vmatmul.mubr.bf16.gmra.mrb[0].mxu0 %v4511
        %v4595 = vpop.f32.mrb[0].mxu0
        %v4596 = vadd.f32 0.0, %v4595
        %v4597 = vpop.f32.mrb[0].mxu0
        %v4598 = vpop.f32.mrb[0].mxu0
        %v4599 = vadd.f32 0.0, %v4598
        %v4600 = vpop.f32.mrb[0].mxu0
        %4601 = vmatprep.mubr.bf16.mxu0 0
        %4602 = vmatmul.mubr.bf16.gmra.mrb[0].mxu0 %v4514
        %v4603 = vpop.f32.mrb[0].mxu0
        %v4604 = vadd.f32 0.0, %v4603
        %v4605 = vpop.f32.mrb[0].mxu0
        %v4606 = vpop.f32.mrb[0].mxu0
        %v4607 = vadd.f32 0.0, %v4606
        %v4608 = vpop.f32.mrb[0].mxu0
        %4609 = vmatprep.mubr.bf16.mxu0 0
        %4610 = vmatmul.mubr.bf16.gmra.mrb[0].mxu0 %v4517
        %v4611 = vpop.f32.mrb[0].mxu0
        %v4612 = vadd.f32 0.0, %v4611
        %v4613 = vpop.f32.mrb[0].mxu0
        %v4614 = vpop.f32.mrb[0].mxu0
        %v4615 = vadd.f32 0.0, %v4614
        %v4616 = vpop.f32.mrb[0].mxu0
        %4617 = vmatprep.mubr.bf16.mxu0 0
        %4618 = vmatmul.mubr.bf16.gmra.mrb[0].mxu0 %v4520
        %v4619 = vpop.f32.mrb[0].mxu0
        %v4620 = vadd.f32 0.0, %v4619
        %v4621 = vpop.f32.mrb[0].mxu0
        %v4622 = vpop.f32.mrb[0].mxu0
        %v4623 = vadd.f32 0.0, %v4622
        %v4624 = vpop.f32.mrb[0].mxu0
        %4625 = vmatprep.mubr.bf16.mxu0 0
        %4626 = vmatmul.mubr.bf16.gmra.mrb[0].mxu0 %v4523
        %v4627 = vpop.f32.mrb[0].mxu0
        %v4628 = vadd.f32 0.0, %v4627
        %v4629 = vpop.f32.mrb[0].mxu0
        %v4630 = vpop.f32.mrb[0].mxu0
        %v4631 = vadd.f32 0.0, %v4630
        %v4632 = vpop.f32.mrb[0].mxu0
        %4633 = vmatprep.mubr.bf16.mxu0 0
        %4634 = vmatmul.mubr.bf16.gmra.mrb[0].mxu0 %v4526
        %v4635 = vpop.f32.mrb[0].mxu0
        %v4636 = vadd.f32 0.0, %v4635
        %v4637 = vpop.f32.mrb[0].mxu0
        %v4638 = vpop.f32.mrb[0].mxu0
        %v4639 = vadd.f32 0.0, %v4638
        %v4640 = vpop.f32.mrb[0].mxu0
        %4641 = vmatprep.mubr.bf16.mxu0 0
        %4642 = vmatmul.mubr.bf16.gmra.mrb[0].mxu0 %v4529
        %v4643 = vpop.f32.mrb[0].mxu0
        %v4644 = vadd.f32 0.0, %v4643
        %v4645 = vpop.f32.mrb[0].mxu0
        %v4646 = vpop.f32.mrb[0].mxu0
        %v4647 = vadd.f32 0.0, %v4646
        %v4648 = vpop.f32.mrb[0].mxu0
        %4649 = vmatprep.mubr.bf16.mxu0 0
        %4650 = vmatmul.mubr.bf16.gmra.mrb[0].mxu0 %v4532
        %v4651 = vpop.f32.mrb[0].mxu0
        %v4652 = vadd.f32 0.0, %v4651
        %v4653 = vpop.f32.mrb[0].mxu0
        %v4654 = vpop.f32.mrb[0].mxu0
        %v4655 = vadd.f32 0.0, %v4654
        %v4656 = vpop.f32.mrb[0].mxu0
        %4657 = vmatprep.mubr.bf16.mxu0 0
        %4658 = vmatmul.mubr.bf16.gmra.mrb[0].mxu0 %v4535
        %v4659 = vpop.f32.mrb[0].mxu0
        %v4660 = vadd.f32 0.0, %v4659
        %v4661 = vpop.f32.mrb[0].mxu0
        %v4662 = vpop.f32.mrb[0].mxu0
        %v4663 = vadd.f32 0.0, %v4662
        %v4664 = vpop.f32.mrb[0].mxu0
        %4665 = vmatprep.mubr.bf16.mxu0 0
        %4666 = vmatmul.mubr.bf16.gmra.mrb[0].mxu0 %v4538
        %v4667 = vpop.f32.mrb[0].mxu0
        %v4668 = vadd.f32 0.0, %v4667
        %v4669 = vpop.f32.mrb[0].mxu0
        %v4670 = vpop.f32.mrb[0].mxu0
        %v4671 = vadd.f32 0.0, %v4670
        %v4672 = vpop.f32.mrb[0].mxu0
        %4673 = vmatprep.mubr.bf16.mxu0 0
        %4674 = vmatmul.mubr.bf16.gmra.mrb[0].mxu0 %v4541
        %v4675 = vpop.f32.mrb[0].mxu0
        %v4676 = vadd.f32 0.0, %v4675
        %v4677 = vpop.f32.mrb[0].mxu0
        %v4678 = vpop.f32.mrb[0].mxu0
        %v4679 = vadd.f32 0.0, %v4678
        %v4680 = vpop.f32.mrb[0].mxu0
        %4681 = vmatprep.mubr.bf16.mxu0 0
        %4682 = vmatmul.mubr.bf16.gmra.mrb[0].mxu0 %v4544
        %v4683 = vpop.f32.mrb[0].mxu0
        %v4684 = vadd.f32 0.0, %v4683
        %v4685 = vpop.f32.mrb[0].mxu0
        %v4686 = vpop.f32.mrb[0].mxu0
        %v4687 = vadd.f32 0.0, %v4686
        %v4688 = vpop.f32.mrb[0].mxu0
        %4689 = vmatprep.mubr.bf16.mxu0 0
        %4690 = vmatmul.mubr.bf16.gmra.mrb[0].mxu0 %v4547
        %v4691 = vpop.f32.mrb[0].mxu0
        %v4692 = vadd.f32 0.0, %v4691
        %v4693 = vpop.f32.mrb[0].mxu0
        %v4694 = vpop.f32.mrb[0].mxu0
        %v4695 = vadd.f32 0.0, %v4694
        %v4696 = vpop.f32.mrb[0].mxu0
        %4697 = vmatprep.mubr.bf16.mxu0 0
        %4698 = vmatmul.mubr.bf16.gmra.mrb[0].mxu0 %v4550
        %v4699 = vpop.f32.mrb[0].mxu0
        %v4700 = vadd.f32 0.0, %v4699
        %v4701 = vpop.f32.mrb[0].mxu0
        %v4702 = vpop.f32.mrb[0].mxu0
        %v4703 = vadd.f32 0.0, %v4702
        %v4704 = vpop.f32.mrb[0].mxu0
        %4705 = vmatprep.mubr.bf16.mxu0 0
        %4706 = vmatmul.mubr.bf16.gmra.mrb[0].mxu0 %v4553
        %v4707 = vpop.f32.mrb[0].mxu0
        %v4708 = vadd.f32 0.0, %v4707
        %v4709 = vpop.f32.mrb[0].mxu0
        %v4710 = vpop.f32.mrb[0].mxu0
        %v4711 = vadd.f32 0.0, %v4710
        %v4712 = vpop.f32.mrb[0].mxu0
        %4713 = vmatprep.mubr.bf16.mxu0 0
        %4714 = vmatmul.mubr.bf16.gmra.mrb[0].mxu0 %v4556
        %v4715 = vpop.f32.mrb[0].mxu0
        %v4716 = vadd.f32 0.0, %v4715
        %v4717 = vpop.f32.mrb[0].mxu0
        %v4718 = vpop.f32.mrb[0].mxu0
        %v4719 = vadd.f32 0.0, %v4718
        %v4720 = vpop.f32.mrb[0].mxu0
        %4721 = vdwg.mxu0
        %v4722 = vadd.f32 %v4252, %v4596
        %v4723 = vadd.f32 %v4253, %v4599
        %v4724 = vadd.f32 %v4254, %v4604
        %v4725 = vadd.f32 %v4255, %v4607
        %v4726 = vadd.f32 %v4256, %v4612
        %v4727 = vadd.f32 %v4257, %v4615
        %v4728 = vadd.f32 %v4258, %v4620
        %v4729 = vadd.f32 %v4259, %v4623
        %v4730 = vadd.f32 %v4260, %v4628
        %v4731 = vadd.f32 %v4261, %v4631
        %v4732 = vadd.f32 %v4262, %v4636
        %v4733 = vadd.f32 %v4263, %v4639
        %v4734 = vadd.f32 %v4264, %v4644
        %v4735 = vadd.f32 %v4265, %v4647
        %v4736 = vadd.f32 %v4266, %v4652
        %v4737 = vadd.f32 %v4267, %v4655
        %v4738 = vadd.f32 %v4268, %v4660
        %v4739 = vadd.f32 %v4269, %v4663
        %v4740 = vadd.f32 %v4270, %v4668
        %v4741 = vadd.f32 %v4271, %v4671
        %v4742 = vadd.f32 %v4272, %v4676
        %v4743 = vadd.f32 %v4273, %v4679
        %v4744 = vadd.f32 %v4274, %v4684
        %v4745 = vadd.f32 %v4275, %v4687
        %v4746 = vadd.f32 %v4276, %v4692
        %v4747 = vadd.f32 %v4277, %v4695
        %v4748 = vadd.f32 %v4278, %v4700
        %v4749 = vadd.f32 %v4279, %v4703
        %v4750 = vadd.f32 %v4280, %v4708
        %v4751 = vadd.f32 %v4281, %v4711
        %v4752 = vadd.f32 %v4282, %v4716
        %v4753 = vadd.f32 %v4283, %v4719
        %v4754 = vld [vmem:[%s2] sm:$0x1]
        %v4756 = vlaneseq
        %v4757 = vshrl.u32 %v4756, 7
        %v4758 = vsub.s32 0, %v4757
        %v4759 = vrot.slane %v4754, %v4758
        %v4761 = vadd.f32 %v4722, %v4759
        %v4762 = vadd.f32 %v4723, %v4759
        %v4763 = vadd.f32 %v4724, %v4759
        %v4764 = vadd.f32 %v4725, %v4759
        %v4765 = vadd.f32 %v4726, %v4759
        %v4766 = vadd.f32 %v4727, %v4759
        %v4767 = vadd.f32 %v4728, %v4759
        %v4768 = vadd.f32 %v4729, %v4759
        %v4769 = vadd.f32 %v4730, %v4759
        %v4770 = vadd.f32 %v4731, %v4759
        %v4771 = vadd.f32 %v4732, %v4759
        %v4772 = vadd.f32 %v4733, %v4759
        %v4773 = vadd.f32 %v4734, %v4759
        %v4774 = vadd.f32 %v4735, %v4759
        %v4775 = vadd.f32 %v4736, %v4759
        %v4776 = vadd.f32 %v4737, %v4759
        %v4777 = vadd.f32 %v4738, %v4759
        %v4778 = vadd.f32 %v4739, %v4759
        %v4779 = vadd.f32 %v4740, %v4759
        %v4780 = vadd.f32 %v4741, %v4759
        %v4781 = vadd.f32 %v4742, %v4759
        %v4782 = vadd.f32 %v4743, %v4759
        %v4783 = vadd.f32 %v4744, %v4759
        %v4784 = vadd.f32 %v4745, %v4759
        %v4785 = vadd.f32 %v4746, %v4759
        %v4786 = vadd.f32 %v4747, %v4759
        %v4787 = vadd.f32 %v4748, %v4759
        %v4788 = vadd.f32 %v4749, %v4759
        %v4789 = vadd.f32 %v4750, %v4759
        %v4790 = vadd.f32 %v4751, %v4759
        %v4791 = vadd.f32 %v4752, %v4759
        %v4792 = vadd.f32 %v4753, %v4759
        %v4793 = vmax.f32 %v4761, 0.0
        %v4794 = vmax.f32 %v4762, 0.0
        %v4795 = vmax.f32 %v4763, 0.0
        %v4796 = vmax.f32 %v4764, 0.0
        %v4797 = vmax.f32 %v4765, 0.0
        %v4798 = vmax.f32 %v4766, 0.0
        %v4799 = vmax.f32 %v4767, 0.0
        %v4800 = vmax.f32 %v4768, 0.0
        %v4801 = vmax.f32 %v4769, 0.0
        %v4802 = vmax.f32 %v4770, 0.0
        %v4803 = vmax.f32 %v4771, 0.0
        %v4804 = vmax.f32 %v4772, 0.0
        %v4805 = vmax.f32 %v4773, 0.0
        %v4806 = vmax.f32 %v4774, 0.0
        %v4807 = vmax.f32 %v4775, 0.0
        %v4808 = vmax.f32 %v4776, 0.0
        %v4809 = vmax.f32 %v4777, 0.0
        %v4810 = vmax.f32 %v4778, 0.0
        %v4811 = vmax.f32 %v4779, 0.0
        %v4812 = vmax.f32 %v4780, 0.0
        %v4813 = vmax.f32 %v4781, 0.0
        %v4814 = vmax.f32 %v4782, 0.0
        %v4815 = vmax.f32 %v4783, 0.0
        %v4816 = vmax.f32 %v4784, 0.0
        %v4817 = vmax.f32 %v4785, 0.0
        %v4818 = vmax.f32 %v4786, 0.0
        %v4819 = vmax.f32 %v4787, 0.0
        %v4820 = vmax.f32 %v4788, 0.0
        %v4821 = vmax.f32 %v4789, 0.0
        %v4822 = vmax.f32 %v4790, 0.0
        %v4823 = vmax.f32 %v4791, 0.0
        %v4824 = vmax.f32 %v4792, 0.0
        %v4825 = vpack.c.bf16 %v4794, %v4793
        %v4826 = vpack.c.bf16 %v4796, %v4795
        %v4827 = vpack.c.bf16 %v4798, %v4797
        %v4828 = vpack.c.bf16 %v4800, %v4799
        %v4829 = vpack.c.bf16 %v4802, %v4801
        %v4830 = vpack.c.bf16 %v4804, %v4803
        %v4831 = vpack.c.bf16 %v4806, %v4805
        %v4832 = vpack.c.bf16 %v4808, %v4807
        %v4833 = vpack.c.bf16 %v4810, %v4809
        %v4834 = vpack.c.bf16 %v4812, %v4811
        %v4835 = vpack.c.bf16 %v4814, %v4813
        %v4836 = vpack.c.bf16 %v4816, %v4815
        %v4837 = vpack.c.bf16 %v4818, %v4817
        %v4838 = vpack.c.bf16 %v4820, %v4819
        %v4839 = vpack.c.bf16 %v4822, %v4821
        %v4840 = vpack.c.bf16 %v4824, %v4823
        %v4857 = vunpack.c.l.b16 %v4825
        %v4858 = vunpack.c.h.b16 %v4825
        %v4859 = vunpack.c.l.b16 %v4826
        %v4860 = vunpack.c.h.b16 %v4826
        %v4861 = vunpack.c.l.b16 %v4827
        %v4862 = vunpack.c.h.b16 %v4827
        %v4863 = vunpack.c.l.b16 %v4828
        %v4864 = vunpack.c.h.b16 %v4828
        %v4865 = vunpack.c.l.b16 %v4829
        %v4866 = vunpack.c.h.b16 %v4829
        %v4867 = vunpack.c.l.b16 %v4830
        %v4868 = vunpack.c.h.b16 %v4830
        %v4869 = vunpack.c.l.b16 %v4831
        %v4870 = vunpack.c.h.b16 %v4831
        %v4871 = vunpack.c.l.b16 %v4832
        %v4872 = vunpack.c.h.b16 %v4832
        %v4873 = vunpack.c.l.b16 %v4833
        %v4874 = vunpack.c.h.b16 %v4833
        %v4875 = vunpack.c.l.b16 %v4834
        %v4876 = vunpack.c.h.b16 %v4834
        %v4877 = vunpack.c.l.b16 %v4835
        %v4878 = vunpack.c.h.b16 %v4835
        %v4879 = vunpack.c.l.b16 %v4836
        %v4880 = vunpack.c.h.b16 %v4836
        %v4881 = vunpack.c.l.b16 %v4837
        %v4882 = vunpack.c.h.b16 %v4837
        %v4883 = vunpack.c.l.b16 %v4838
        %v4884 = vunpack.c.h.b16 %v4838
        %v4885 = vunpack.c.l.b16 %v4839
        %v4886 = vunpack.c.h.b16 %v4839
        %v4887 = vunpack.c.l.b16 %v4840
        %v4888 = vunpack.c.h.b16 %v4840
        %v4889 = vpack.c.b16 %v4857, %v4857
        %v4890 = vpack.c.b16 %v4858, %v4858
        %v4891 = vpack.c.b16 %v4859, %v4859
        %v4892 = vpack.c.b16 %v4860, %v4860
        %v4893 = vpack.c.b16 %v4861, %v4861
        %v4894 = vpack.c.b16 %v4862, %v4862
        %v4895 = vpack.c.b16 %v4863, %v4863
        %v4896 = vpack.c.b16 %v4864, %v4864
        %v4897 = vpack.c.b16 %v4865, %v4865
        %v4898 = vpack.c.b16 %v4866, %v4866
        %v4899 = vpack.c.b16 %v4867, %v4867
        %v4900 = vpack.c.b16 %v4868, %v4868
        %v4901 = vpack.c.b16 %v4869, %v4869
        %v4902 = vpack.c.b16 %v4870, %v4870
        %v4903 = vpack.c.b16 %v4871, %v4871
        %v4904 = vpack.c.b16 %v4872, %v4872
        %v4905 = vpack.c.b16 %v4873, %v4873
        %v4906 = vpack.c.b16 %v4874, %v4874
        %v4907 = vpack.c.b16 %v4875, %v4875
        %v4908 = vpack.c.b16 %v4876, %v4876
        %v4909 = vpack.c.b16 %v4877, %v4877
        %v4910 = vpack.c.b16 %v4878, %v4878
        %v4911 = vpack.c.b16 %v4879, %v4879
        %v4912 = vpack.c.b16 %v4880, %v4880
        %v4913 = vpack.c.b16 %v4881, %v4881
        %v4914 = vpack.c.b16 %v4882, %v4882
        %v4915 = vpack.c.b16 %v4883, %v4883
        %v4916 = vpack.c.b16 %v4884, %v4884
        %v4917 = vpack.c.b16 %v4885, %v4885
        %v4918 = vpack.c.b16 %v4886, %v4886
        %v4919 = vpack.c.b16 %v4887, %v4887
        %v4920 = vpack.c.b16 %v4888, %v4888
        %4953 = vst [vmem:[%s177] sm:$0xf] %v4889
        %4954 = vst [vmem:[%s177 + $0x4] sm:$0xf] %v4890
        %4955 = vst [vmem:[%s177 + $0x8] sm:$0xf] %v4891
        %4956 = vst [vmem:[%s177 + $0xc] sm:$0xf] %v4892
        %4957 = vst [vmem:[%s177 + $0x10] sm:$0xf] %v4893
        %4958 = vst [vmem:[%s177 + $0x14] sm:$0xf] %v4894
        %4959 = vst [vmem:[%s177 + $0x18] sm:$0xf] %v4895
        %4960 = vst [vmem:[%s177 + $0x1c] sm:$0xf] %v4896
        %4961 = vst [vmem:[%s177 + $0x20] sm:$0xf] %v4897
        %4962 = vst [vmem:[%s177 + $0x24] sm:$0xf] %v4898
        %4963 = vst [vmem:[%s177 + $0x28] sm:$0xf] %v4899
        %4964 = vst [vmem:[%s177 + $0x2c] sm:$0xf] %v4900
        %4965 = vst [vmem:[%s177 + $0x30] sm:$0xf] %v4901
        %4966 = vst [vmem:[%s177 + $0x34] sm:$0xf] %v4902
        %4967 = vst [vmem:[%s177 + $0x38] sm:$0xf] %v4903
        %4968 = vst [vmem:[%s177 + $0x3c] sm:$0xf] %v4904
        %4969 = vst [vmem:[%s177 + $0x40] sm:$0xf] %v4905
        %4970 = vst [vmem:[%s177 + $0x44] sm:$0xf] %v4906
        %4971 = vst [vmem:[%s177 + $0x48] sm:$0xf] %v4907
        %4972 = vst [vmem:[%s177 + $0x4c] sm:$0xf] %v4908
        %4973 = vst [vmem:[%s177 + $0x50] sm:$0xf] %v4909
        %4974 = vst [vmem:[%s177 + $0x54] sm:$0xf] %v4910
        %4975 = vst [vmem:[%s177 + $0x58] sm:$0xf] %v4911
        %4976 = vst [vmem:[%s177 + $0x5c] sm:$0xf] %v4912
        %4977 = vst [vmem:[%s177 + $0x60] sm:$0xf] %v4913
        %4978 = vst [vmem:[%s177 + $0x64] sm:$0xf] %v4914
        %4979 = vst [vmem:[%s177 + $0x68] sm:$0xf] %v4915
        %4980 = vst [vmem:[%s177 + $0x6c] sm:$0xf] %v4916
        %4981 = vst [vmem:[%s177 + $0x70] sm:$0xf] %v4917
        %4982 = vst [vmem:[%s177 + $0x74] sm:$0xf] %v4918
        %4983 = vst [vmem:[%s177 + $0x78] sm:$0xf] %v4919
        %4984 = vst [vmem:[%s177 + $0x7c] sm:$0xf] %v4920
        %s4985 = sand.u32 %s107, 1
        %s4986 = scalar_lea.sflag [#allocation3], %s4985
        %s4987 = sand.u32 %s107, 1
        %s4988 = smul.addr %s4987, 128
        %s4989 = scalar_lea.vmem [#allocation2], %s4988
        // Predicated region
        $region33: #{tpu_custom_call.1} parent=31 // pred_check
          %p4990 = pneg %p117
        $region34: #{tpu_custom_call.1} parent=31 // pred_check_branch
          %4992 = sbr.rel (%p4990) target = $region36
        $region35: #{tpu_custom_call.1} parent=31 // pred_region
          %s4993 = smul.u32 32, %s22
          %s4995 = ssub.s32 2048, 2048
          %4996 = vsyncadd %s4986, %s4995
          %s4997 = smul.addr %s21, 32
          %s4998 = sadd.s32 %s4993, %s4997
          %s4999 = smul.addr %s4998, 64
          %s5000 = scalar_lea.hbm %s3, %s4999
          %s5001 = sshll.u32 %s4989, 4
          %s5002 = int_to_ptr.vmem [resolvable:$true] %s5001
          %5007 = dma.vmem_to_hbm [thread:$0]  %s5002, 2048, %s5000, %s4986, 64, 64, 4
        $region36: #{tpu_custom_call.1} parent=31 // pred_fallthru
          _
      $region32: #{tpu_custom_call.1} parent=5 // pred_fallthru
        _
      %p5008 = scmp.le.s32.totalorder 2, %s12
      // Predicated region
      $region37: #{tpu_custom_call.1} parent=5 // pred_check
        %p5009 = pneg %p5008
      $region38: #{tpu_custom_call.1} parent=5 // pred_check_branch
        %5011 = sbr.rel (%p5009) target = $region40
      $region39: #{tpu_custom_call.1} parent=5 // pred_region
        %s5012 = ssub.s32 %s12, 2
        // Predicated region
        $region41: #{tpu_custom_call.1} parent=39 // pred_check
          %p5013 = pneg %p123
        $region42: #{tpu_custom_call.1} parent=39 // pred_check_branch
          %5015 = sbr.rel (%p5013) target = $region44
        $region43: #{tpu_custom_call.1} parent=39 // pred_region
          %s5016 = sand.u32 %s108, 1
          %s5017 = scalar_lea.sflag [#allocation3], %s5016
          %s5018 = sand.u32 %s108, 1
          %s5019 = smul.addr %s5018, 128
          %s5020 = scalar_lea.vmem [#allocation2], %s5019
          %5021 = dma.done %s5017, 2048
        $region44: #{tpu_custom_call.1} parent=39 // pred_fallthru
          _
      $region40: #{tpu_custom_call.1} parent=5 // pred_fallthru
        _
    $region6: #{tpu_custom_call.1} parent=1 // loop_footer
      %s16 = sadd.s32 1, %s12
    $region7: #{tpu_custom_call.1} parent=1 // loop_footer_branch
      %11 = sbr.rel target = $region3
    $region8: #{tpu_custom_call.1} parent=1 // loop_exit
      _
    %5022 = vsyncpa [#allocation3], 1
    %s5023 = scalar_lea.sflag [#allocation3], 1
    %5024 = vsyncpa %s5023, 1

</llo_original>
